<compile_context>
chip_gen: v7x
topology: tpu7x:2x2x1
jax: 0.10.0
libtpu: 0.0.40
codegen_flags: <defaults>
</compile_context>

<pallas_src>
import functools

import jax
import jax.numpy as jnp
from jax.experimental import pallas as pl
from jax.experimental.pallas import tpu as pltpu

NUM_CLASSES = 3
IMAGE_SIZE = (62, 48)
IMG_SHAPE = (3, *IMAGE_SIZE)                    # (3, 62, 48)
CLASS_DIM = 10
HIDDEN = 512
OUT_PAD = 128                                   # lane-dense padded output width (real out = 1)

IN_FEATURES = IMG_SHAPE[0] * IMG_SHAPE[1] * IMG_SHAPE[2] + CLASS_DIM   # 8938
D_PAD = 8960                                    # next multiple of 128 >= 8938
TK = 4480                                       # 2 K-steps; bf16 tile = 4.6 MB/buffer
N_K = D_PAD // TK


def _round_up(x, m):
    return (x + m - 1) // m * m


def disc_kernel(x_ref, w1_ref, b1_ref, w2_ref, b2_ref, o_ref, acc_ref):
    """Fused MLP:  sigmoid(leaky_relu(x @ W1 + b1, 0.2) @ W2 + b2).

    Grid axis 0 iterates over K-tiles of the (large) first matmul; the tiny
    second matmul, bias adds and activations run on the last grid step.
    x / W1 stream in bf16, accumulation is f32.
    """
    k = pl.program_id(0)

    @pl.when(k == 0)
    def _():
        acc_ref[...] = jnp.zeros_like(acc_ref)

    acc_ref[...] += jnp.dot(
        x_ref[...], w1_ref[...], preferred_element_type=jnp.float32
    )

    @pl.when(k == pl.num_programs(0) - 1)
    def _():
        h = acc_ref[...] + b1_ref[...]
        h = jnp.where(h > 0.0, h, 0.2 * h)                        # LeakyReLU(0.2)
        z = jnp.dot(h, w2_ref[...], preferred_element_type=jnp.float32) + b2_ref[...]
        o_ref[...] = jax.nn.sigmoid(z)                            # Sigmoid


def prepare_params(params):
    """One-time setup: pad + cast weights so the per-call path does no weight copies."""
    return {
        "emb": params["emb"].astype(jnp.float32),
        # W1 padded along K to D_PAD and streamed as bf16.
        "w1": jnp.zeros((D_PAD, HIDDEN), jnp.float32)
              .at[:IN_FEATURES, :].set(params["w1"])
              .astype(jnp.bfloat16),
        "b1": params["b1"].reshape(1, HIDDEN).astype(jnp.float32),
        # W2 / b2 padded to a lane-dense 128-wide output (real column 0).
        "w2": jnp.zeros((HIDDEN, OUT_PAD), jnp.float32).at[:, :1].set(params["w2"]),
        "b2": jnp.zeros((1, OUT_PAD), jnp.float32).at[:, :1].set(
            params["b2"].reshape(1, 1)),
    }


@jax.jit
def discriminator_forward(img, labels, prep):
    """JAX/Pallas equivalent of Discriminator.forward(img, labels)."""
    b = img.shape[0]
    b_pad = _round_up(max(b, 8), 8)

    # --- glue: embedding lookup + flatten + concat (plain JAX, tiny) ---------
    c = prep["emb"][labels]                                       # (B, class_dim)
    x = jnp.concatenate([img.reshape(b, -1).astype(jnp.float32), c], axis=1)

    # Only the (tiny) activations are padded/cast per call.
    x_p = (jnp.zeros((b_pad, D_PAD), jnp.float32)
           .at[:b, :IN_FEATURES].set(x)
           .astype(jnp.bfloat16))

    bytes_accessed = (
        D_PAD * HIDDEN * 2                 # W1 (bf16)
        + b_pad * D_PAD * 2                # x  (bf16)
        + HIDDEN * OUT_PAD * 4             # W2
        + (HIDDEN + OUT_PAD) * 4           # biases
        + b_pad * OUT_PAD * 4              # out
    )
    cost = pl.CostEstimate(
        flops=2 * b_pad * D_PAD * HIDDEN + 2 * b_pad * HIDDEN * OUT_PAD,
        transcendentals=b_pad * OUT_PAD,
        bytes_accessed=bytes_accessed,
    )

    out_p = pl.pallas_call(
        disc_kernel,
        out_shape=jax.ShapeDtypeStruct((b_pad, OUT_PAD), jnp.float32),
        grid_spec=pltpu.PrefetchScalarGridSpec(
            num_scalar_prefetch=0,
            grid=(N_K,),
            in_specs=[
                pl.BlockSpec((b_pad, TK), lambda k: (0, k)),       # x tile (bf16)
                pl.BlockSpec((TK, HIDDEN), lambda k: (k, 0)),      # W1 tile (bf16)
                pl.BlockSpec((1, HIDDEN), lambda k: (0, 0)),       # b1 (resident)
                pl.BlockSpec((HIDDEN, OUT_PAD), lambda k: (0, 0)), # W2 (resident)
                pl.BlockSpec((1, OUT_PAD), lambda k: (0, 0)),      # b2 (resident)
            ],
            out_specs=pl.BlockSpec((b_pad, OUT_PAD), lambda k: (0, 0)),
            scratch_shapes=[pltpu.VMEM((b_pad, HIDDEN), jnp.float32)],
        ),
        compiler_params=pltpu.CompilerParams(
            dimension_semantics=("arbitrary",),
            vmem_limit_bytes=48 << 20,     # headroom for 2x bf16 W1 tiles on all gens
        ),
        cost_estimate=cost,
    )(x_p, prep["w1"], prep["b1"], prep["w2"], prep["b2"])

    return out_p[:b, :1]                                           # (B, 1)


def init_params(key, class_dim=CLASS_DIM, img_shape=IMG_SHAPE):
    """Deterministic synthetic parameters matching the nn.Module shapes."""
    in_features = int(jnp.prod(jnp.array(img_shape))) + class_dim
    k_emb, k_w1, k_b1, k_w2, k_b2 = jax.random.split(key, 5)
    # Stored (in, out): equivalent to PyTorch (out, in) weights transposed.
    return {
        "emb": jax.random.normal(k_emb, (NUM_CLASSES, class_dim), jnp.float32),
        "w1": jax.random.normal(k_w1, (in_features, HIDDEN), jnp.float32) * 0.02,
        "b1": jax.random.normal(k_b1, (HIDDEN,), jnp.float32) * 0.02,
        "w2": jax.random.normal(k_w2, (HIDDEN, 1), jnp.float32) * 0.02,
        "b2": jax.random.normal(k_b2, (1,), jnp.float32) * 0.02,
    }


if __name__ == "__main__":
    key = jax.random.PRNGKey(0)
    k_params, k_img, k_lab = jax.random.split(key, 3)

    params = init_params(k_params)
    prep = jax.tree_util.tree_map(jax.block_until_ready, prepare_params(params))

    batch = 2
    img = jax.random.normal(k_img, (batch, *IMG_SHAPE), jnp.float32)   # NCHW
    labels = jax.random.randint(k_lab, (batch,), 0, NUM_CLASSES, jnp.int32)

    out = discriminator_forward(img, labels, prep)
    out = jax.block_until_ready(out)

    # Pure-JAX f32 reference check (same math, no Pallas).  bf16 weight/activation
    # streaming introduces ~1e-3 level differences, hence the looser tolerance.
    c = params["emb"][labels]
    x = jnp.concatenate([img.reshape(batch, -1), c], axis=1)
    h = x @ params["w1"] + params["b1"]
    h = jnp.where(h > 0, h, 0.2 * h)
    ref = jax.nn.sigmoid(h @ params["w2"] + params["b2"])
    assert out.shape == (batch, 1)
    assert jnp.allclose(out, ref, atol=2e-2, rtol=2e-2)

    print("KERNEL_OK")
</pallas_src>

<mosaic_0001>
module attributes {stable_mosaic.version = 11 : i64} {
  func.func @disc_kernel(%arg0: i32, %arg1: memref<8x4480xbf16, #tpu.memory_space<vmem>>, %arg2: memref<4480x512xbf16, #tpu.memory_space<vmem>>, %arg3: memref<1x512xf32, #tpu.memory_space<vmem>>, %arg4: memref<512x128xf32, #tpu.memory_space<vmem>>, %arg5: memref<1x128xf32, #tpu.memory_space<vmem>>, %arg6: memref<8x128xf32, #tpu.memory_space<vmem>>, %arg7: memref<8x512xf32, #tpu.memory_space<vmem>>) attributes {dimension_semantics = [#tpu.dimension_semantics<arbitrary>], iteration_bounds = array<i64: 2>, scalar_prefetch = 0 : i64, scratch_operands = 1 : i64, tpu.core_type = #tpu.core_type<tc>, window_params = [{transform_indices = @transform_0, window_bounds = array<i64: 8, 4480>}, {transform_indices = @transform_1, window_bounds = array<i64: 4480, 512>}, {pipeline_mode = #tpu.pipeline_mode<synchronous>, transform_indices = @transform_2, window_bounds = array<i64: 1, 512>}, {pipeline_mode = #tpu.pipeline_mode<synchronous>, transform_indices = @transform_3, window_bounds = array<i64: 512, 128>}, {pipeline_mode = #tpu.pipeline_mode<synchronous>, transform_indices = @transform_4, window_bounds = array<i64: 1, 128>}, {pipeline_mode = #tpu.pipeline_mode<synchronous>, transform_indices = @transform_5, window_bounds = array<i64: 8, 128>}]} {
    %c0_i32 = arith.constant 0 : i32
    %0 = arith.cmpi eq, %arg0, %c0_i32 : i32
    %1 = arith.extui %0 : i1 to i32
    %c0_i32_0 = arith.constant 0 : i32
    %2 = arith.cmpi ne, %1, %c0_i32_0 : i32
    scf.if %2 {
      %cst_9 = arith.constant 0.000000e+00 : f32
      %12 = vector.broadcast %cst_9 : f32 to vector<8x512xf32>
      %c0_10 = arith.constant 0 : index
      %c0_11 = arith.constant 0 : index
      %13 = vector.load %arg7[%c0_10, %c0_11] : memref<8x512xf32, #tpu.memory_space<vmem>>, vector<8x512xf32>
      tpu.vector_store %arg7[%c0_10, %c0_11], %12 {strides = array<i32>} : memref<8x512xf32, #tpu.memory_space<vmem>>, vector<8x512xf32>,
    } else {
    }
    %c0 = arith.constant 0 : index
    %c0_1 = arith.constant 0 : index
    %3 = vector.load %arg7[%c0, %c0_1] : memref<8x512xf32, #tpu.memory_space<vmem>>, vector<8x512xf32>
    %c0_2 = arith.constant 0 : index
    %c0_3 = arith.constant 0 : index
    %4 = vector.load %arg1[%c0_2, %c0_3] : memref<8x4480xbf16, #tpu.memory_space<vmem>>, vector<8x4480xbf16>
    %c0_4 = arith.constant 0 : index
    %c0_5 = arith.constant 0 : index
    %5 = vector.load %arg2[%c0_4, %c0_5] : memref<4480x512xbf16, #tpu.memory_space<vmem>>, vector<4480x512xbf16>
    %cst = arith.constant dense<0.000000e+00> : vector<8x512xf32>
    %6 = tpu.matmul %4, %5, %cst {dimension_numbers = #tpu.dot_dimension_numbers<[1], [0], [0], [1], [0, 0, 1, 1], [], []>} : vector<8x4480xbf16>, vector<4480x512xbf16>, vector<8x512xf32> -> vector<8x512xf32>
    %7 = arith.addf %3, %6 : vector<8x512xf32>
    %c0_6 = arith.constant 0 : index
    %c0_7 = arith.constant 0 : index
    %8 = vector.load %arg7[%c0_6, %c0_7] : memref<8x512xf32, #tpu.memory_space<vmem>>, vector<8x512xf32>
    tpu.vector_store %arg7[%c0_6, %c0_7], %7 {strides = array<i32>} : memref<8x512xf32, #tpu.memory_space<vmem>>, vector<8x512xf32>,
    %c1_i32 = arith.constant 1 : i32
    %9 = arith.cmpi eq, %arg0, %c1_i32 : i32
    %10 = arith.extui %9 : i1 to i32
    %c0_i32_8 = arith.constant 0 : i32
    %11 = arith.cmpi ne, %10, %c0_i32_8 : i32
    scf.if %11 {
      %c0_9 = arith.constant 0 : index
      %c0_10 = arith.constant 0 : index
      %12 = vector.load %arg7[%c0_9, %c0_10] : memref<8x512xf32, #tpu.memory_space<vmem>>, vector<8x512xf32>
      %c0_11 = arith.constant 0 : index
      %c0_12 = arith.constant 0 : index
      %13 = vector.load %arg3[%c0_11, %c0_12] : memref<1x512xf32, #tpu.memory_space<vmem>>, vector<1x512xf32>
      %14 = vector.broadcast %13 : vector<1x512xf32> to vector<8x512xf32>
      %15 = arith.addf %12, %14 : vector<8x512xf32>
      %cst_13 = arith.constant 0.000000e+00 : f32
      %16 = vector.broadcast %cst_13 : f32 to vector<8x512xf32>
      %17 = arith.cmpf ogt, %15, %16 : vector<8x512xf32>
      %cst_14 = arith.constant 2.000000e-01 : f32
      %18 = vector.broadcast %cst_14 : f32 to vector<8x512xf32>
      %19 = arith.mulf %18, %15 : vector<8x512xf32>
      %20 = arith.select %17, %15, %19 : vector<8x512xi1>, vector<8x512xf32>
      %c0_15 = arith.constant 0 : index
      %c0_16 = arith.constant 0 : index
      %21 = vector.load %arg4[%c0_15, %c0_16] : memref<512x128xf32, #tpu.memory_space<vmem>>, vector<512x128xf32>
      %cst_17 = arith.constant dense<0.000000e+00> : vector<8x128xf32>
      %22 = tpu.matmul %20, %21, %cst_17 {dimension_numbers = #tpu.dot_dimension_numbers<[1], [0], [0], [1], [0, 0, 1, 1], [], []>} : vector<8x512xf32>, vector<512x128xf32>, vector<8x128xf32> -> vector<8x128xf32>
      %c0_18 = arith.constant 0 : index
      %c0_19 = arith.constant 0 : index
      %23 = vector.load %arg5[%c0_18, %c0_19] : memref<1x128xf32, #tpu.memory_space<vmem>>, vector<1x128xf32>
      %24 = vector.broadcast %23 : vector<1x128xf32> to vector<8x128xf32>
      %25 = arith.addf %22, %24 : vector<8x128xf32>
      %26 = arith.negf %25 : vector<8x128xf32>
      %27 = math.exp %26 : vector<8x128xf32>
      %cst_20 = arith.constant 1.000000e+00 : f32
      %28 = vector.broadcast %cst_20 : f32 to vector<8x128xf32>
      %29 = arith.addf %28, %27 : vector<8x128xf32>
      %30 = arith.divf %28, %29 : vector<8x128xf32>
      %c0_21 = arith.constant 0 : index
      %c0_22 = arith.constant 0 : index
      %31 = vector.load %arg6[%c0_21, %c0_22] : memref<8x128xf32, #tpu.memory_space<vmem>>, vector<8x128xf32>
      tpu.vector_store %arg6[%c0_21, %c0_22], %30 {strides = array<i32>} : memref<8x128xf32, #tpu.memory_space<vmem>>, vector<8x128xf32>,
    } else {
    }
    return
  }
  func.func @transform_0(%arg0: i32) -> (i32, i32) {
    %c0_i32 = arith.constant 0 : i32
    %c0_i32_0 = arith.constant 0 : i32
    return %c0_i32, %arg0 : i32, i32
  }
  func.func @transform_1(%arg0: i32) -> (i32, i32) {
    %c0_i32 = arith.constant 0 : i32
    %c0_i32_0 = arith.constant 0 : i32
    return %arg0, %c0_i32 : i32, i32
  }
  func.func @transform_2(%arg0: i32) -> (i32, i32) {
    %c0_i32 = arith.constant 0 : i32
    %c0_i32_0 = arith.constant 0 : i32
    %c0_i32_1 = arith.constant 0 : i32
    return %c0_i32, %c0_i32_0 : i32, i32
  }
  func.func @transform_3(%arg0: i32) -> (i32, i32) {
    %c0_i32 = arith.constant 0 : i32
    %c0_i32_0 = arith.constant 0 : i32
    %c0_i32_1 = arith.constant 0 : i32
    return %c0_i32, %c0_i32_0 : i32, i32
  }
  func.func @transform_4(%arg0: i32) -> (i32, i32) {
    %c0_i32 = arith.constant 0 : i32
    %c0_i32_0 = arith.constant 0 : i32
    %c0_i32_1 = arith.constant 0 : i32
    return %c0_i32, %c0_i32_0 : i32, i32
  }
  func.func @transform_5(%arg0: i32) -> (i32, i32) {
    %c0_i32 = arith.constant 0 : i32
    %c0_i32_0 = arith.constant 0 : i32
    %c0_i32_1 = arith.constant 0 : i32
    return %c0_i32, %c0_i32_0 : i32, i32
  }
}

</mosaic_0001>

<llo_original>
// kernel: discriminator_forward.1
$region0: #{discriminator_forward.1}
  #allocation0 [shape = 'u32[]', space=smem, size = 0x4, offset = 0x4, fixed_abs, tag = 'smem constant byte address 0x4 - core index']
  #allocation1 [shape = 'u32[144,128]{1,0:T(1,128)}', space=vmem, size = 0x12000, scoped, tag = 'internal scratch']
  #allocation2 [shape = 'f32[8,512]{1,0:T(8,128)}', space=vmem, size = 0x4000, scoped, tag = 'scratch operand']
  %s0 = inlined_call_operand.vmem [shape: bf16[8,8960], index: 0, kind: input, shape index: {}]
  %s1 = inlined_call_operand.hbm [shape: bf16[8960,512], index: 1, kind: input, shape index: {}]
  %s2 = inlined_call_operand.hbm [shape: f32[1,512], index: 2, kind: input, shape index: {}]
  %s3 = inlined_call_operand.hbm [shape: f32[512,128], index: 3, kind: input, shape index: {}]
  %s4 = inlined_call_operand.hbm [shape: f32[1,128], index: 4, kind: input, shape index: {}]
  %s5 = inlined_call_operand.vmem [shape: f32[8,128], index: 5, kind: output, shape index: {}]
  %s6 = sld [smem:[#allocation0]]
  $region77: #{discriminator_forward.1} parent=0
    _
  %s8 = ssub.s32 1, %s6
  %s9 = scalar_select 0, %s8, %s6
  $region1: #{discriminator_forward.1} parent=0
    #allocation3 [shape = 'u8[9175040]{0}', space=vmem, size = 0x8c0000, scoped, tag = 'input window, operand 1']
    #allocation4 [shape = 's32[2]{0}', space=sflag, size = 0x8, scoped, tag = 'scoped memory for discriminator_forward.1']
    #allocation5 [shape = 'u8[2048]{0}', space=vmem, size = 0x800, scoped, tag = 'input window, operand 2, single buffered']
    #allocation6 [shape = 's32[1]{0}', space=sflag, size = 0x4, scoped, tag = 'scoped memory for discriminator_forward.1']
    #allocation7 [shape = 'u8[262144]{0}', space=vmem, size = 0x40000, scoped, tag = 'input window, operand 3, single buffered']
    #allocation8 [shape = 'u8[512]{0}', space=vmem, size = 0x400, scoped, tag = 'input window, operand 4, single buffered']
    #allocation9 [shape = 's32[1]{0}', space=sflag, size = 0x4, scoped, tag = 'scoped memory for discriminator_forward.1']
    %10 = vsyncpa [#allocation4], 0
    %s11 = scalar_lea.sflag [#allocation4], 1
    %12 = vsyncpa %s11, 0
    %13 = vsyncpa [#allocation6], 0
    %14 = vsyncpa [#allocation9], 0
    loop: start=0, step=1, limit=4
    $region2: #{discriminator_forward.1} parent=1 // loop_pre_header
      _
    $region3: #{discriminator_forward.1} parent=1 // loop_header
      %s16 = sphi 0, %s20
      %p17 = scmp.ge.s32.totalorder %s16, 4
      %s26 = sphi 0, %s28
      %s29 = sphi 0, %s26
      %s30 = sphi 0, %s29
      %s46 = sphi 0, %s30
      %s52 = sphi 0, %s54
      %s55 = sphi 0, %s52
      %s56 = sphi 0, %s55
      %s72 = sphi 0, %s56
      %s76 = sphi 0, %s76
      %s78 = sphi 0, %s76
      %s79 = sphi 0, %s78
      %s93 = sphi 0, %s79
      %s97 = sphi 0, %s97
      %s99 = sphi 0, %s97
      %s100 = sphi 0, %s99
      %s114 = sphi 0, %s100
      %s118 = sphi 0, %s118
      %s120 = sphi 0, %s118
      %s121 = sphi 0, %s120
      %s135 = sphi 0, %s121
      %s139 = sphi 0, %s139
      %s141 = sphi 0, %s139
      %s142 = sphi 0, %s141
      %s156 = sphi 0, %s142
    $region4: #{discriminator_forward.1} parent=1 // loop_header_branch
      %19 = sbr.rel (%p17) target = $region8
    $region5: #{discriminator_forward.1} parent=1 // loop_body
      %s21 = ssub.s32 %s16, 1
      %s22 = ssub.s32 %s16, 2
      %s23 = sadd.s32 %s16, 1
      %s24 = ssub.s32 %s16, %s23
      %p25 = scmp.eq.s32.totalorder %s24, 0
      %s27 = sadd.s32 %s26, 1
      %s28 = scalar_select %p25, %s26, %s27
      %p31 = pneg %p25
      %p32 = scmp.eq.s32.totalorder %s16, 1
      %p33 = por %p31, %p32
      %p34 = scmp.ne.s32.totalorder %s26, %s29
      %p35 = scmp.eq.s32.totalorder %s16, 0
      %p36 = por %p34, %p35
      %p37 = scmp.ne.s32.totalorder %s26, %s29
      %p38 = scmp.eq.s32.totalorder %s21, 1
      %p39 = por %p37, %p38
      %p40 = scmp.ne.s32.totalorder %s29, %s30
      %p41 = scmp.eq.s32.totalorder %s21, 0
      %p42 = por %p40, %p41
      %p43 = scmp.ne.s32.totalorder %s29, %s30
      %p44 = scmp.eq.s32.totalorder %s22, 1
      %p45 = por %p43, %p44
      %p47 = scmp.ne.s32.totalorder %s30, %s46
      %p48 = scmp.eq.s32.totalorder %s22, 0
      %p49 = por %p47, %p48
      %s50 = ssub.s32 %s16, %s23
      %p51 = scmp.eq.s32.totalorder %s50, 0
      %s53 = sadd.s32 %s52, 1
      %s54 = scalar_select %p51, %s52, %s53
      %p57 = pneg %p51
      %p58 = scmp.eq.s32.totalorder %s16, 1
      %p59 = por %p57, %p58
      %p60 = scmp.ne.s32.totalorder %s52, %s55
      %p61 = scmp.eq.s32.totalorder %s16, 0
      %p62 = por %p60, %p61
      %p63 = scmp.ne.s32.totalorder %s52, %s55
      %p64 = scmp.eq.s32.totalorder %s21, 1
      %p65 = por %p63, %p64
      %p66 = scmp.ne.s32.totalorder %s55, %s56
      %p67 = scmp.eq.s32.totalorder %s21, 0
      %p68 = por %p66, %p67
      %p69 = scmp.ne.s32.totalorder %s55, %s56
      %p70 = scmp.eq.s32.totalorder %s22, 1
      %p71 = por %p69, %p70
      %p73 = scmp.ne.s32.totalorder %s56, %s72
      %p74 = scmp.eq.s32.totalorder %s22, 0
      %p75 = por %p73, %p74
      %s77 = sadd.s32 %s76, 1
      %p80 = scmp.eq.s32.totalorder %s16, 1
      %p81 = scmp.ne.s32.totalorder %s76, %s78
      %p82 = scmp.eq.s32.totalorder %s16, 0
      %p83 = por %p81, %p82
      %p84 = scmp.ne.s32.totalorder %s76, %s78
      %p85 = scmp.eq.s32.totalorder %s21, 1
      %p86 = por %p84, %p85
      %p87 = scmp.ne.s32.totalorder %s78, %s79
      %p88 = scmp.eq.s32.totalorder %s21, 0
      %p89 = por %p87, %p88
      %p90 = scmp.ne.s32.totalorder %s78, %s79
      %p91 = scmp.eq.s32.totalorder %s22, 1
      %p92 = por %p90, %p91
      %p94 = scmp.ne.s32.totalorder %s79, %s93
      %p95 = scmp.eq.s32.totalorder %s22, 0
      %p96 = por %p94, %p95
      %s98 = sadd.s32 %s97, 1
      %p101 = scmp.eq.s32.totalorder %s16, 1
      %p102 = scmp.ne.s32.totalorder %s97, %s99
      %p103 = scmp.eq.s32.totalorder %s16, 0
      %p104 = por %p102, %p103
      %p105 = scmp.ne.s32.totalorder %s97, %s99
      %p106 = scmp.eq.s32.totalorder %s21, 1
      %p107 = por %p105, %p106
      %p108 = scmp.ne.s32.totalorder %s99, %s100
      %p109 = scmp.eq.s32.totalorder %s21, 0
      %p110 = por %p108, %p109
      %p111 = scmp.ne.s32.totalorder %s99, %s100
      %p112 = scmp.eq.s32.totalorder %s22, 1
      %p113 = por %p111, %p112
      %p115 = scmp.ne.s32.totalorder %s100, %s114
      %p116 = scmp.eq.s32.totalorder %s22, 0
      %p117 = por %p115, %p116
      %s119 = sadd.s32 %s118, 1
      %p122 = scmp.eq.s32.totalorder %s16, 1
      %p123 = scmp.ne.s32.totalorder %s118, %s120
      %p124 = scmp.eq.s32.totalorder %s16, 0
      %p125 = por %p123, %p124
      %p126 = scmp.ne.s32.totalorder %s118, %s120
      %p127 = scmp.eq.s32.totalorder %s21, 1
      %p128 = por %p126, %p127
      %p129 = scmp.ne.s32.totalorder %s120, %s121
      %p130 = scmp.eq.s32.totalorder %s21, 0
      %p131 = por %p129, %p130
      %p132 = scmp.ne.s32.totalorder %s120, %s121
      %p133 = scmp.eq.s32.totalorder %s22, 1
      %p134 = por %p132, %p133
      %p136 = scmp.ne.s32.totalorder %s121, %s135
      %p137 = scmp.eq.s32.totalorder %s22, 0
      %p138 = por %p136, %p137
      %s140 = sadd.s32 %s139, 1
      %p143 = scmp.eq.s32.totalorder %s16, 1
      %p144 = scmp.ne.s32.totalorder %s139, %s141
      %p145 = scmp.eq.s32.totalorder %s16, 0
      %p146 = por %p144, %p145
      %p147 = scmp.ne.s32.totalorder %s139, %s141
      %p148 = scmp.eq.s32.totalorder %s21, 1
      %p149 = por %p147, %p148
      %p150 = scmp.ne.s32.totalorder %s141, %s142
      %p151 = scmp.eq.s32.totalorder %s21, 0
      %p152 = por %p150, %p151
      %p153 = scmp.ne.s32.totalorder %s141, %s142
      %p154 = scmp.eq.s32.totalorder %s22, 1
      %p155 = por %p153, %p154
      %p157 = scmp.ne.s32.totalorder %s142, %s156
      %p158 = scmp.eq.s32.totalorder %s22, 0
      %p159 = por %p157, %p158
      %p160 = scmp.le.s32.totalorder 1, %s16
      %p161 = scmp.lt.s32.totalorder %s16, 3
      %p162 = pnand %p160, %p161
      %p163 = pneg %p162
      // Predicated region
      $region9: #{discriminator_forward.1} parent=5 // pred_check
        _
      $region10: #{discriminator_forward.1} parent=5 // pred_check_branch
        %165 = sbr.rel (%p162) target = $region12
      $region11: #{discriminator_forward.1} parent=5 // pred_region
        %s166 = ssub.s32 %s16, 1
        // Predicated region
        $region13: #{discriminator_forward.1} parent=11 // pred_check
          %p167 = pneg %p89
        $region14: #{discriminator_forward.1} parent=11 // pred_check_branch
          %169 = sbr.rel (%p167) target = $region16
        $region15: #{discriminator_forward.1} parent=11 // pred_region
          %s171 = ssub.s32 64, 64
          %172 = vsyncadd [#allocation6], %s171
          %s174 = sshll.u32 [#allocation5], 4
          %s175 = int_to_ptr.vmem [resolvable:$true] %s174
          %177 = dma.hbm_to_vmem [thread:$0]  %s2, 64, %s175, [#allocation6]
        $region16: #{discriminator_forward.1} parent=11 // pred_fallthru
          _
        // Predicated region
        $region17: #{discriminator_forward.1} parent=11 // pred_check
          %p178 = pneg %p110
        $region18: #{discriminator_forward.1} parent=11 // pred_check_branch
          %180 = sbr.rel (%p178) target = $region20
        $region19: #{discriminator_forward.1} parent=11 // pred_region
          %s182 = ssub.s32 8192, 8192
          %183 = vsyncadd [#allocation6], %s182
          %s184 = sshll.u32 [#allocation7], 4
          %s185 = int_to_ptr.vmem [resolvable:$true] %s184
          %190 = dma.hbm_to_vmem [thread:$0]  %s3, 8192, %s185, [#allocation6], 128, 128, 8
        $region20: #{discriminator_forward.1} parent=11 // pred_fallthru
          _
        // Predicated region
        $region21: #{discriminator_forward.1} parent=11 // pred_check
          %p191 = pneg %p131
        $region22: #{discriminator_forward.1} parent=11 // pred_check_branch
          %193 = sbr.rel (%p191) target = $region24
        $region23: #{discriminator_forward.1} parent=11 // pred_region
          %s195 = ssub.s32 16, 16
          %196 = vsyncadd [#allocation9], %s195
          %s198 = sshll.u32 [#allocation8], 4
          %s199 = int_to_ptr.vmem [resolvable:$true] %s198
          %201 = dma.hbm_to_vmem [thread:$0]  %s4, 16, %s199, [#allocation9]
        $region24: #{discriminator_forward.1} parent=11 // pred_fallthru
          _
      $region12: #{discriminator_forward.1} parent=5 // pred_fallthru
        _
      %p202 = scmp.lt.s32.totalorder %s16, 2
      // Predicated region
      $region25: #{discriminator_forward.1} parent=5 // pred_check
        %p203 = pneg %p202
      $region26: #{discriminator_forward.1} parent=5 // pred_check_branch
        %205 = sbr.rel (%p203) target = $region28
      $region27: #{discriminator_forward.1} parent=5 // pred_region
        // Predicated region
        $region29: #{discriminator_forward.1} parent=27 // pred_check
          %p206 = pneg %p36
        $region30: #{discriminator_forward.1} parent=27 // pred_check_branch
          %208 = sbr.rel (%p206) target = $region32
        $region31: #{discriminator_forward.1} parent=27 // pred_region
          %s209 = smul.u32 35, %s16
          %p210 = scmp.lt.s32.totalorder %s209, 69
          %s211 = scalar_select %p210, %s209, 69
          %s212 = smul.addr %s211, 4
          %s213 = scalar_lea.vmem %s0, %s212
          %s214 = smul.u32 35, %s16
        $region32: #{discriminator_forward.1} parent=27 // pred_fallthru
          _
        // Predicated region
        $region33: #{discriminator_forward.1} parent=27 // pred_check
          %p215 = pneg %p62
        $region34: #{discriminator_forward.1} parent=27 // pred_check_branch
          %217 = sbr.rel (%p215) target = $region36
        $region35: #{discriminator_forward.1} parent=27 // pred_region
          %s218 = sand.u32 %s52, 1
          %s219 = scalar_lea.sflag [#allocation4], %s218
          %s220 = sand.u32 %s52, 1
          %s221 = smul.addr %s220, 8960
          %s222 = scalar_lea.vmem [#allocation3], %s221
          %s223 = smul.u32 560, %s16
          %s225 = ssub.s32 143360, 143360
          %226 = vsyncadd %s219, %s225
          %s227 = smul.addr %s223, 4
          %s228 = smul.addr %s227, 64
          %s229 = scalar_lea.hbm %s1, %s228
          %s230 = sshll.u32 %s222, 4
          %s231 = int_to_ptr.vmem [resolvable:$true] %s230
          %236 = dma.hbm_to_vmem [thread:$0]  %s229, 143360, %s231, %s219, 256, 256, 16
        $region36: #{discriminator_forward.1} parent=27 // pred_fallthru
          _
      $region28: #{discriminator_forward.1} parent=5 // pred_fallthru
        _
      %p237 = scmp.le.s32.totalorder 1, %s16
      %p238 = scmp.lt.s32.totalorder %s16, 3
      %p239 = pnand %p237, %p238
      %p240 = pneg %p239
      // Predicated region
      $region37: #{discriminator_forward.1} parent=5 // pred_check
        _
      $region38: #{discriminator_forward.1} parent=5 // pred_check_branch
        %242 = sbr.rel (%p239) target = $region40
      $region39: #{discriminator_forward.1} parent=5 // pred_region
        %s243 = ssub.s32 %s16, 1
        %s244 = sand.u32 %s55, 1
        %s245 = scalar_lea.sflag [#allocation4], %s244
        %s246 = sand.u32 %s55, 1
        %s247 = smul.addr %s246, 8960
        %s248 = scalar_lea.vmem [#allocation3], %s247
        // Predicated region
        $region41: #{discriminator_forward.1} parent=39 // pred_check
          %p249 = pneg %p68
        $region42: #{discriminator_forward.1} parent=39 // pred_check_branch
          %251 = sbr.rel (%p249) target = $region44
        $region43: #{discriminator_forward.1} parent=39 // pred_region
          %252 = dma.done %s245, 143360
        $region44: #{discriminator_forward.1} parent=39 // pred_fallthru
          _
        // Predicated region
        $region45: #{discriminator_forward.1} parent=39 // pred_check
          %p253 = pneg %p89
        $region46: #{discriminator_forward.1} parent=39 // pred_check_branch
          %255 = sbr.rel (%p253) target = $region48
        $region47: #{discriminator_forward.1} parent=39 // pred_region
          %256 = dma.done [#allocation6], 64
        $region48: #{discriminator_forward.1} parent=39 // pred_fallthru
          _
        // Predicated region
        $region49: #{discriminator_forward.1} parent=39 // pred_check
          %p257 = pneg %p110
        $region50: #{discriminator_forward.1} parent=39 // pred_check_branch
          %259 = sbr.rel (%p257) target = $region52
        $region51: #{discriminator_forward.1} parent=39 // pred_region
          %260 = dma.done [#allocation6], 8192
        $region52: #{discriminator_forward.1} parent=39 // pred_fallthru
          _
        // Predicated region
        $region53: #{discriminator_forward.1} parent=39 // pred_check
          %p261 = pneg %p131
        $region54: #{discriminator_forward.1} parent=39 // pred_check_branch
          %263 = sbr.rel (%p261) target = $region56
        $region55: #{discriminator_forward.1} parent=39 // pred_region
          %264 = dma.done [#allocation9], 16
        $region56: #{discriminator_forward.1} parent=39 // pred_fallthru
          _
        %s265 = smul.u32 35, %s21
        %p266 = scmp.lt.s32.totalorder %s265, 69
        %s267 = scalar_select %p266, %s265, 69
        %s268 = smul.addr %s267, 4
        %s269 = scalar_lea.vmem %s0, %s268
        %p270 = pneg %p42
        %p271 = pneg %p39
        %s272 = sand.u32 %s55, 1
        %s273 = scalar_lea.sflag [#allocation4], %s272
        %s274 = sand.u32 %s55, 1
        %s275 = smul.addr %s274, 8960
        %s276 = scalar_lea.vmem [#allocation3], %s275
        %p277 = pneg %p68
        %p278 = pneg %p65
        %p279 = pneg %p89
        %p280 = pneg %p86
        %p281 = pneg %p110
        %p282 = pneg %p107
        %p283 = pneg %p131
        %p284 = pneg %p128
        %p285 = pneg %p152
        %p286 = pneg %p149
        %s287 = smul.u32 35, %s21
        %p288 = scmp.lt.s32.totalorder %s287, 69
        %s289 = scalar_select %p288, %s287, 69
        %s290 = smul.addr %s289, 4
        %s291 = scalar_lea.vmem %s0, %s290
        %s292 = smul.u32 35, %s21
        %s293 = smul.u32 560, %s21
        %p295 = scmp.eq.s32.totalorder %s21, 0
        // Predicated region
        $region57: #{discriminator_forward.1} parent=39 // pred_check
          %p296 = pneg %p295
        $region58: #{discriminator_forward.1} parent=39 // pred_check_branch
          %298 = sbr.rel (%p296) target = $region60
        $region59: #{discriminator_forward.1} parent=39 // pred_region
          %299 = vst [vmem:[#allocation2] sm:$0xff] 0.0
          %300 = vst [vmem:[#allocation2 + $0x8] sm:$0xff] 0.0
          %301 = vst [vmem:[#allocation2 + $0x10] sm:$0xff] 0.0
          %302 = vst [vmem:[#allocation2 + $0x18] sm:$0xff] 0.0
        $region60: #{discriminator_forward.1} parent=39 // pred_fallthru
          _
        %v303 = vld [vmem:[#allocation2] sm:$0xff]
        %v304 = vld [vmem:[#allocation2 + $0x8] sm:$0xff]
        %v305 = vld [vmem:[#allocation2 + $0x10] sm:$0xff]
        %v306 = vld [vmem:[#allocation2 + $0x18] sm:$0xff]
        %v307 = vld [vmem:[%s291] sm:$0xff]
        %v308 = vld [vmem:[%s291 + $0x8] sm:$0xff]
        %v309 = vld [vmem:[%s291 + $0x10] sm:$0xff]
        %v310 = vld [vmem:[%s291 + $0x18] sm:$0xff]
        %v311 = vld [vmem:[%s291 + $0x20] sm:$0xff]
        %v312 = vld [vmem:[%s291 + $0x28] sm:$0xff]
        %v313 = vld [vmem:[%s291 + $0x30] sm:$0xff]
        %v314 = vld [vmem:[%s291 + $0x38] sm:$0xff]
        %v315 = vld [vmem:[%s291 + $0x40] sm:$0xff]
        %v316 = vld [vmem:[%s291 + $0x48] sm:$0xff]
        %v317 = vld [vmem:[%s291 + $0x50] sm:$0xff]
        %v318 = vld [vmem:[%s291 + $0x58] sm:$0xff]
        %v319 = vld [vmem:[%s291 + $0x60] sm:$0xff]
        %v320 = vld [vmem:[%s291 + $0x68] sm:$0xff]
        %v321 = vld [vmem:[%s291 + $0x70] sm:$0xff]
        %v322 = vld [vmem:[%s291 + $0x78] sm:$0xff]
        %v323 = vld [vmem:[%s291 + $0x80] sm:$0xff]
        %v324 = vld [vmem:[%s291 + $0x88] sm:$0xf]
        %v325 = vld [vmem:[%s248] sm:$0xff]
        %v326 = vld [vmem:[%s248 + $0x8] sm:$0xff]
        %v327 = vld [vmem:[%s248 + $0x10] sm:$0xff]
        %v328 = vld [vmem:[%s248 + $0x18] sm:$0xff]
        %v329 = vld [vmem:[%s248 + $0x20] sm:$0xff]
        %v330 = vld [vmem:[%s248 + $0x28] sm:$0xff]
        %v331 = vld [vmem:[%s248 + $0x30] sm:$0xff]
        %v332 = vld [vmem:[%s248 + $0x38] sm:$0xff]
        %v333 = vld [vmem:[%s248 + $0x40] sm:$0xff]
        %v334 = vld [vmem:[%s248 + $0x48] sm:$0xff]
        %v335 = vld [vmem:[%s248 + $0x50] sm:$0xff]
        %v336 = vld [vmem:[%s248 + $0x58] sm:$0xff]
        %v337 = vld [vmem:[%s248 + $0x60] sm:$0xff]
        %v338 = vld [vmem:[%s248 + $0x68] sm:$0xff]
        %v339 = vld [vmem:[%s248 + $0x70] sm:$0xff]
        %v340 = vld [vmem:[%s248 + $0x78] sm:$0xff]
        %v341 = vld [vmem:[%s248 + $0x80] sm:$0xff]
        %v342 = vld [vmem:[%s248 + $0x88] sm:$0xff]
        %v343 = vld [vmem:[%s248 + $0x90] sm:$0xff]
        %v344 = vld [vmem:[%s248 + $0x98] sm:$0xff]
        %v345 = vld [vmem:[%s248 + $0xa0] sm:$0xff]
        %v346 = vld [vmem:[%s248 + $0xa8] sm:$0xff]
        %v347 = vld [vmem:[%s248 + $0xb0] sm:$0xff]
        %v348 = vld [vmem:[%s248 + $0xb8] sm:$0xff]
        %v349 = vld [vmem:[%s248 + $0xc0] sm:$0xff]
        %v350 = vld [vmem:[%s248 + $0xc8] sm:$0xff]
        %v351 = vld [vmem:[%s248 + $0xd0] sm:$0xff]
        %v352 = vld [vmem:[%s248 + $0xd8] sm:$0xff]
        %v353 = vld [vmem:[%s248 + $0xe0] sm:$0xff]
        %v354 = vld [vmem:[%s248 + $0xe8] sm:$0xff]
        %v355 = vld [vmem:[%s248 + $0xf0] sm:$0xff]
        %v356 = vld [vmem:[%s248 + $0xf8] sm:$0xff]
        %v357 = vld [vmem:[%s248 + $0x100] sm:$0xff]
        %v358 = vld [vmem:[%s248 + $0x108] sm:$0xff]
        %v359 = vld [vmem:[%s248 + $0x110] sm:$0xff]
        %v360 = vld [vmem:[%s248 + $0x118] sm:$0xff]
        %v361 = vld [vmem:[%s248 + $0x120] sm:$0xff]
        %v362 = vld [vmem:[%s248 + $0x128] sm:$0xff]
        %v363 = vld [vmem:[%s248 + $0x130] sm:$0xff]
        %v364 = vld [vmem:[%s248 + $0x138] sm:$0xff]
        %v365 = vld [vmem:[%s248 + $0x140] sm:$0xff]
        %v366 = vld [vmem:[%s248 + $0x148] sm:$0xff]
        %v367 = vld [vmem:[%s248 + $0x150] sm:$0xff]
        %v368 = vld [vmem:[%s248 + $0x158] sm:$0xff]
        %v369 = vld [vmem:[%s248 + $0x160] sm:$0xff]
        %v370 = vld [vmem:[%s248 + $0x168] sm:$0xff]
        %v371 = vld [vmem:[%s248 + $0x170] sm:$0xff]
        %v372 = vld [vmem:[%s248 + $0x178] sm:$0xff]
        %v373 = vld [vmem:[%s248 + $0x180] sm:$0xff]
        %v374 = vld [vmem:[%s248 + $0x188] sm:$0xff]
        %v375 = vld [vmem:[%s248 + $0x190] sm:$0xff]
        %v376 = vld [vmem:[%s248 + $0x198] sm:$0xff]
        %v377 = vld [vmem:[%s248 + $0x1a0] sm:$0xff]
        %v378 = vld [vmem:[%s248 + $0x1a8] sm:$0xff]
        %v379 = vld [vmem:[%s248 + $0x1b0] sm:$0xff]
        %v380 = vld [vmem:[%s248 + $0x1b8] sm:$0xff]
        %v381 = vld [vmem:[%s248 + $0x1c0] sm:$0xff]
        %v382 = vld [vmem:[%s248 + $0x1c8] sm:$0xff]
        %v383 = vld [vmem:[%s248 + $0x1d0] sm:$0xff]
        %v384 = vld [vmem:[%s248 + $0x1d8] sm:$0xff]
        %v385 = vld [vmem:[%s248 + $0x1e0] sm:$0xff]
        %v386 = vld [vmem:[%s248 + $0x1e8] sm:$0xff]
        %v387 = vld [vmem:[%s248 + $0x1f0] sm:$0xff]
        %v388 = vld [vmem:[%s248 + $0x1f8] sm:$0xff]
        %v389 = vld [vmem:[%s248 + $0x200] sm:$0xff]
        %v390 = vld [vmem:[%s248 + $0x208] sm:$0xff]
        %v391 = vld [vmem:[%s248 + $0x210] sm:$0xff]
        %v392 = vld [vmem:[%s248 + $0x218] sm:$0xff]
        %v393 = vld [vmem:[%s248 + $0x220] sm:$0xff]
        %v394 = vld [vmem:[%s248 + $0x228] sm:$0xff]
        %v395 = vld [vmem:[%s248 + $0x230] sm:$0xff]
        %v396 = vld [vmem:[%s248 + $0x238] sm:$0xff]
        %v397 = vld [vmem:[%s248 + $0x240] sm:$0xff]
        %v398 = vld [vmem:[%s248 + $0x248] sm:$0xff]
        %v399 = vld [vmem:[%s248 + $0x250] sm:$0xff]
        %v400 = vld [vmem:[%s248 + $0x258] sm:$0xff]
        %v401 = vld [vmem:[%s248 + $0x260] sm:$0xff]
        %v402 = vld [vmem:[%s248 + $0x268] sm:$0xff]
        %v403 = vld [vmem:[%s248 + $0x270] sm:$0xff]
        %v404 = vld [vmem:[%s248 + $0x278] sm:$0xff]
        %v405 = vld [vmem:[%s248 + $0x280] sm:$0xff]
        %v406 = vld [vmem:[%s248 + $0x288] sm:$0xff]
        %v407 = vld [vmem:[%s248 + $0x290] sm:$0xff]
        %v408 = vld [vmem:[%s248 + $0x298] sm:$0xff]
        %v409 = vld [vmem:[%s248 + $0x2a0] sm:$0xff]
        %v410 = vld [vmem:[%s248 + $0x2a8] sm:$0xff]
        %v411 = vld [vmem:[%s248 + $0x2b0] sm:$0xff]
        %v412 = vld [vmem:[%s248 + $0x2b8] sm:$0xff]
        %v413 = vld [vmem:[%s248 + $0x2c0] sm:$0xff]
        %v414 = vld [vmem:[%s248 + $0x2c8] sm:$0xff]
        %v415 = vld [vmem:[%s248 + $0x2d0] sm:$0xff]
        %v416 = vld [vmem:[%s248 + $0x2d8] sm:$0xff]
        %v417 = vld [vmem:[%s248 + $0x2e0] sm:$0xff]
        %v418 = vld [vmem:[%s248 + $0x2e8] sm:$0xff]
        %v419 = vld [vmem:[%s248 + $0x2f0] sm:$0xff]
        %v420 = vld [vmem:[%s248 + $0x2f8] sm:$0xff]
        %v421 = vld [vmem:[%s248 + $0x300] sm:$0xff]
        %v422 = vld [vmem:[%s248 + $0x308] sm:$0xff]
        %v423 = vld [vmem:[%s248 + $0x310] sm:$0xff]
        %v424 = vld [vmem:[%s248 + $0x318] sm:$0xff]
        %v425 = vld [vmem:[%s248 + $0x320] sm:$0xff]
        %v426 = vld [vmem:[%s248 + $0x328] sm:$0xff]
        %v427 = vld [vmem:[%s248 + $0x330] sm:$0xff]
        %v428 = vld [vmem:[%s248 + $0x338] sm:$0xff]
        %v429 = vld [vmem:[%s248 + $0x340] sm:$0xff]
        %v430 = vld [vmem:[%s248 + $0x348] sm:$0xff]
        %v431 = vld [vmem:[%s248 + $0x350] sm:$0xff]
        %v432 = vld [vmem:[%s248 + $0x358] sm:$0xff]
        %v433 = vld [vmem:[%s248 + $0x360] sm:$0xff]
        %v434 = vld [vmem:[%s248 + $0x368] sm:$0xff]
        %v435 = vld [vmem:[%s248 + $0x370] sm:$0xff]
        %v436 = vld [vmem:[%s248 + $0x378] sm:$0xff]
        %v437 = vld [vmem:[%s248 + $0x380] sm:$0xff]
        %v438 = vld [vmem:[%s248 + $0x388] sm:$0xff]
        %v439 = vld [vmem:[%s248 + $0x390] sm:$0xff]
        %v440 = vld [vmem:[%s248 + $0x398] sm:$0xff]
        %v441 = vld [vmem:[%s248 + $0x3a0] sm:$0xff]
        %v442 = vld [vmem:[%s248 + $0x3a8] sm:$0xff]
        %v443 = vld [vmem:[%s248 + $0x3b0] sm:$0xff]
        %v444 = vld [vmem:[%s248 + $0x3b8] sm:$0xff]
        %v445 = vld [vmem:[%s248 + $0x3c0] sm:$0xff]
        %v446 = vld [vmem:[%s248 + $0x3c8] sm:$0xff]
        %v447 = vld [vmem:[%s248 + $0x3d0] sm:$0xff]
        %v448 = vld [vmem:[%s248 + $0x3d8] sm:$0xff]
        %v449 = vld [vmem:[%s248 + $0x3e0] sm:$0xff]
        %v450 = vld [vmem:[%s248 + $0x3e8] sm:$0xff]
        %v451 = vld [vmem:[%s248 + $0x3f0] sm:$0xff]
        %v452 = vld [vmem:[%s248 + $0x3f8] sm:$0xff]
        %v453 = vld [vmem:[%s248 + $0x400] sm:$0xff]
        %v454 = vld [vmem:[%s248 + $0x408] sm:$0xff]
        %v455 = vld [vmem:[%s248 + $0x410] sm:$0xff]
        %v456 = vld [vmem:[%s248 + $0x418] sm:$0xff]
        %v457 = vld [vmem:[%s248 + $0x420] sm:$0xff]
        %v458 = vld [vmem:[%s248 + $0x428] sm:$0xff]
        %v459 = vld [vmem:[%s248 + $0x430] sm:$0xff]
        %v460 = vld [vmem:[%s248 + $0x438] sm:$0xff]
        %v461 = vld [vmem:[%s248 + $0x440] sm:$0xff]
        %v462 = vld [vmem:[%s248 + $0x448] sm:$0xff]
        %v463 = vld [vmem:[%s248 + $0x450] sm:$0xff]
        %v464 = vld [vmem:[%s248 + $0x458] sm:$0xff]
        %v465 = vld [vmem:[%s248 + $0x460] sm:$0xff]
        %v466 = vld [vmem:[%s248 + $0x468] sm:$0xff]
        %v467 = vld [vmem:[%s248 + $0x470] sm:$0xff]
        %v468 = vld [vmem:[%s248 + $0x478] sm:$0xff]
        %v469 = vld [vmem:[%s248 + $0x480] sm:$0xff]
        %v470 = vld [vmem:[%s248 + $0x488] sm:$0xff]
        %v471 = vld [vmem:[%s248 + $0x490] sm:$0xff]
        %v472 = vld [vmem:[%s248 + $0x498] sm:$0xff]
        %v473 = vld [vmem:[%s248 + $0x4a0] sm:$0xff]
        %v474 = vld [vmem:[%s248 + $0x4a8] sm:$0xff]
        %v475 = vld [vmem:[%s248 + $0x4b0] sm:$0xff]
        %v476 = vld [vmem:[%s248 + $0x4b8] sm:$0xff]
        %v477 = vld [vmem:[%s248 + $0x4c0] sm:$0xff]
        %v478 = vld [vmem:[%s248 + $0x4c8] sm:$0xff]
        %v479 = vld [vmem:[%s248 + $0x4d0] sm:$0xff]
        %v480 = vld [vmem:[%s248 + $0x4d8] sm:$0xff]
        %v481 = vld [vmem:[%s248 + $0x4e0] sm:$0xff]
        %v482 = vld [vmem:[%s248 + $0x4e8] sm:$0xff]
        %v483 = vld [vmem:[%s248 + $0x4f0] sm:$0xff]
        %v484 = vld [vmem:[%s248 + $0x4f8] sm:$0xff]
        %v485 = vld [vmem:[%s248 + $0x500] sm:$0xff]
        %v486 = vld [vmem:[%s248 + $0x508] sm:$0xff]
        %v487 = vld [vmem:[%s248 + $0x510] sm:$0xff]
        %v488 = vld [vmem:[%s248 + $0x518] sm:$0xff]
        %v489 = vld [vmem:[%s248 + $0x520] sm:$0xff]
        %v490 = vld [vmem:[%s248 + $0x528] sm:$0xff]
        %v491 = vld [vmem:[%s248 + $0x530] sm:$0xff]
        %v492 = vld [vmem:[%s248 + $0x538] sm:$0xff]
        %v493 = vld [vmem:[%s248 + $0x540] sm:$0xff]
        %v494 = vld [vmem:[%s248 + $0x548] sm:$0xff]
        %v495 = vld [vmem:[%s248 + $0x550] sm:$0xff]
        %v496 = vld [vmem:[%s248 + $0x558] sm:$0xff]
        %v497 = vld [vmem:[%s248 + $0x560] sm:$0xff]
        %v498 = vld [vmem:[%s248 + $0x568] sm:$0xff]
        %v499 = vld [vmem:[%s248 + $0x570] sm:$0xff]
        %v500 = vld [vmem:[%s248 + $0x578] sm:$0xff]
        %v501 = vld [vmem:[%s248 + $0x580] sm:$0xff]
        %v502 = vld [vmem:[%s248 + $0x588] sm:$0xff]
        %v503 = vld [vmem:[%s248 + $0x590] sm:$0xff]
        %v504 = vld [vmem:[%s248 + $0x598] sm:$0xff]
        %v505 = vld [vmem:[%s248 + $0x5a0] sm:$0xff]
        %v506 = vld [vmem:[%s248 + $0x5a8] sm:$0xff]
        %v507 = vld [vmem:[%s248 + $0x5b0] sm:$0xff]
        %v508 = vld [vmem:[%s248 + $0x5b8] sm:$0xff]
        %v509 = vld [vmem:[%s248 + $0x5c0] sm:$0xff]
        %v510 = vld [vmem:[%s248 + $0x5c8] sm:$0xff]
        %v511 = vld [vmem:[%s248 + $0x5d0] sm:$0xff]
        %v512 = vld [vmem:[%s248 + $0x5d8] sm:$0xff]
        %v513 = vld [vmem:[%s248 + $0x5e0] sm:$0xff]
        %v514 = vld [vmem:[%s248 + $0x5e8] sm:$0xff]
        %v515 = vld [vmem:[%s248 + $0x5f0] sm:$0xff]
        %v516 = vld [vmem:[%s248 + $0x5f8] sm:$0xff]
        %v517 = vld [vmem:[%s248 + $0x600] sm:$0xff]
        %v518 = vld [vmem:[%s248 + $0x608] sm:$0xff]
        %v519 = vld [vmem:[%s248 + $0x610] sm:$0xff]
        %v520 = vld [vmem:[%s248 + $0x618] sm:$0xff]
        %v521 = vld [vmem:[%s248 + $0x620] sm:$0xff]
        %v522 = vld [vmem:[%s248 + $0x628] sm:$0xff]
        %v523 = vld [vmem:[%s248 + $0x630] sm:$0xff]
        %v524 = vld [vmem:[%s248 + $0x638] sm:$0xff]
        %v525 = vld [vmem:[%s248 + $0x640] sm:$0xff]
        %v526 = vld [vmem:[%s248 + $0x648] sm:$0xff]
        %v527 = vld [vmem:[%s248 + $0x650] sm:$0xff]
        %v528 = vld [vmem:[%s248 + $0x658] sm:$0xff]
        %v529 = vld [vmem:[%s248 + $0x660] sm:$0xff]
        %v530 = vld [vmem:[%s248 + $0x668] sm:$0xff]
        %v531 = vld [vmem:[%s248 + $0x670] sm:$0xff]
        %v532 = vld [vmem:[%s248 + $0x678] sm:$0xff]
        %v533 = vld [vmem:[%s248 + $0x680] sm:$0xff]
        %v534 = vld [vmem:[%s248 + $0x688] sm:$0xff]
        %v535 = vld [vmem:[%s248 + $0x690] sm:$0xff]
        %v536 = vld [vmem:[%s248 + $0x698] sm:$0xff]
        %v537 = vld [vmem:[%s248 + $0x6a0] sm:$0xff]
        %v538 = vld [vmem:[%s248 + $0x6a8] sm:$0xff]
        %v539 = vld [vmem:[%s248 + $0x6b0] sm:$0xff]
        %v540 = vld [vmem:[%s248 + $0x6b8] sm:$0xff]
        %v541 = vld [vmem:[%s248 + $0x6c0] sm:$0xff]
        %v542 = vld [vmem:[%s248 + $0x6c8] sm:$0xff]
        %v543 = vld [vmem:[%s248 + $0x6d0] sm:$0xff]
        %v544 = vld [vmem:[%s248 + $0x6d8] sm:$0xff]
        %v545 = vld [vmem:[%s248 + $0x6e0] sm:$0xff]
        %v546 = vld [vmem:[%s248 + $0x6e8] sm:$0xff]
        %v547 = vld [vmem:[%s248 + $0x6f0] sm:$0xff]
        %v548 = vld [vmem:[%s248 + $0x6f8] sm:$0xff]
        %v549 = vld [vmem:[%s248 + $0x700] sm:$0xff]
        %v550 = vld [vmem:[%s248 + $0x708] sm:$0xff]
        %v551 = vld [vmem:[%s248 + $0x710] sm:$0xff]
        %v552 = vld [vmem:[%s248 + $0x718] sm:$0xff]
        %v553 = vld [vmem:[%s248 + $0x720] sm:$0xff]
        %v554 = vld [vmem:[%s248 + $0x728] sm:$0xff]
        %v555 = vld [vmem:[%s248 + $0x730] sm:$0xff]
        %v556 = vld [vmem:[%s248 + $0x738] sm:$0xff]
        %v557 = vld [vmem:[%s248 + $0x740] sm:$0xff]
        %v558 = vld [vmem:[%s248 + $0x748] sm:$0xff]
        %v559 = vld [vmem:[%s248 + $0x750] sm:$0xff]
        %v560 = vld [vmem:[%s248 + $0x758] sm:$0xff]
        %v561 = vld [vmem:[%s248 + $0x760] sm:$0xff]
        %v562 = vld [vmem:[%s248 + $0x768] sm:$0xff]
        %v563 = vld [vmem:[%s248 + $0x770] sm:$0xff]
        %v564 = vld [vmem:[%s248 + $0x778] sm:$0xff]
        %v565 = vld [vmem:[%s248 + $0x780] sm:$0xff]
        %v566 = vld [vmem:[%s248 + $0x788] sm:$0xff]
        %v567 = vld [vmem:[%s248 + $0x790] sm:$0xff]
        %v568 = vld [vmem:[%s248 + $0x798] sm:$0xff]
        %v569 = vld [vmem:[%s248 + $0x7a0] sm:$0xff]
        %v570 = vld [vmem:[%s248 + $0x7a8] sm:$0xff]
        %v571 = vld [vmem:[%s248 + $0x7b0] sm:$0xff]
        %v572 = vld [vmem:[%s248 + $0x7b8] sm:$0xff]
        %v573 = vld [vmem:[%s248 + $0x7c0] sm:$0xff]
        %v574 = vld [vmem:[%s248 + $0x7c8] sm:$0xff]
        %v575 = vld [vmem:[%s248 + $0x7d0] sm:$0xff]
        %v576 = vld [vmem:[%s248 + $0x7d8] sm:$0xff]
        %v577 = vld [vmem:[%s248 + $0x7e0] sm:$0xff]
        %v578 = vld [vmem:[%s248 + $0x7e8] sm:$0xff]
        %v579 = vld [vmem:[%s248 + $0x7f0] sm:$0xff]
        %v580 = vld [vmem:[%s248 + $0x7f8] sm:$0xff]
        %v581 = vld [vmem:[%s248 + $0x800] sm:$0xff]
        %v582 = vld [vmem:[%s248 + $0x808] sm:$0xff]
        %v583 = vld [vmem:[%s248 + $0x810] sm:$0xff]
        %v584 = vld [vmem:[%s248 + $0x818] sm:$0xff]
        %v585 = vld [vmem:[%s248 + $0x820] sm:$0xff]
        %v586 = vld [vmem:[%s248 + $0x828] sm:$0xff]
        %v587 = vld [vmem:[%s248 + $0x830] sm:$0xff]
        %v588 = vld [vmem:[%s248 + $0x838] sm:$0xff]
        %v589 = vld [vmem:[%s248 + $0x840] sm:$0xff]
        %v590 = vld [vmem:[%s248 + $0x848] sm:$0xff]
        %v591 = vld [vmem:[%s248 + $0x850] sm:$0xff]
        %v592 = vld [vmem:[%s248 + $0x858] sm:$0xff]
        %v593 = vld [vmem:[%s248 + $0x860] sm:$0xff]
        %v594 = vld [vmem:[%s248 + $0x868] sm:$0xff]
        %v595 = vld [vmem:[%s248 + $0x870] sm:$0xff]
        %v596 = vld [vmem:[%s248 + $0x878] sm:$0xff]
        %v597 = vld [vmem:[%s248 + $0x880] sm:$0xff]
        %v598 = vld [vmem:[%s248 + $0x888] sm:$0xff]
        %v599 = vld [vmem:[%s248 + $0x890] sm:$0xff]
        %v600 = vld [vmem:[%s248 + $0x898] sm:$0xff]
        %v601 = vld [vmem:[%s248 + $0x8a0] sm:$0xff]
        %v602 = vld [vmem:[%s248 + $0x8a8] sm:$0xff]
        %v603 = vld [vmem:[%s248 + $0x8b0] sm:$0xff]
        %v604 = vld [vmem:[%s248 + $0x8b8] sm:$0xff]
        %v605 = vld [vmem:[%s248 + $0x8c0] sm:$0xff]
        %v606 = vld [vmem:[%s248 + $0x8c8] sm:$0xff]
        %v607 = vld [vmem:[%s248 + $0x8d0] sm:$0xff]
        %v608 = vld [vmem:[%s248 + $0x8d8] sm:$0xff]
        %v609 = vld [vmem:[%s248 + $0x8e0] sm:$0xff]
        %v610 = vld [vmem:[%s248 + $0x8e8] sm:$0xff]
        %v611 = vld [vmem:[%s248 + $0x8f0] sm:$0xff]
        %v612 = vld [vmem:[%s248 + $0x8f8] sm:$0xff]
        %v613 = vld [vmem:[%s248 + $0x900] sm:$0xff]
        %v614 = vld [vmem:[%s248 + $0x908] sm:$0xff]
        %v615 = vld [vmem:[%s248 + $0x910] sm:$0xff]
        %v616 = vld [vmem:[%s248 + $0x918] sm:$0xff]
        %v617 = vld [vmem:[%s248 + $0x920] sm:$0xff]
        %v618 = vld [vmem:[%s248 + $0x928] sm:$0xff]
        %v619 = vld [vmem:[%s248 + $0x930] sm:$0xff]
        %v620 = vld [vmem:[%s248 + $0x938] sm:$0xff]
        %v621 = vld [vmem:[%s248 + $0x940] sm:$0xff]
        %v622 = vld [vmem:[%s248 + $0x948] sm:$0xff]
        %v623 = vld [vmem:[%s248 + $0x950] sm:$0xff]
        %v624 = vld [vmem:[%s248 + $0x958] sm:$0xff]
        %v625 = vld [vmem:[%s248 + $0x960] sm:$0xff]
        %v626 = vld [vmem:[%s248 + $0x968] sm:$0xff]
        %v627 = vld [vmem:[%s248 + $0x970] sm:$0xff]
        %v628 = vld [vmem:[%s248 + $0x978] sm:$0xff]
        %v629 = vld [vmem:[%s248 + $0x980] sm:$0xff]
        %v630 = vld [vmem:[%s248 + $0x988] sm:$0xff]
        %v631 = vld [vmem:[%s248 + $0x990] sm:$0xff]
        %v632 = vld [vmem:[%s248 + $0x998] sm:$0xff]
        %v633 = vld [vmem:[%s248 + $0x9a0] sm:$0xff]
        %v634 = vld [vmem:[%s248 + $0x9a8] sm:$0xff]
        %v635 = vld [vmem:[%s248 + $0x9b0] sm:$0xff]
        %v636 = vld [vmem:[%s248 + $0x9b8] sm:$0xff]
        %v637 = vld [vmem:[%s248 + $0x9c0] sm:$0xff]
        %v638 = vld [vmem:[%s248 + $0x9c8] sm:$0xff]
        %v639 = vld [vmem:[%s248 + $0x9d0] sm:$0xff]
        %v640 = vld [vmem:[%s248 + $0x9d8] sm:$0xff]
        %v641 = vld [vmem:[%s248 + $0x9e0] sm:$0xff]
        %v642 = vld [vmem:[%s248 + $0x9e8] sm:$0xff]
        %v643 = vld [vmem:[%s248 + $0x9f0] sm:$0xff]
        %v644 = vld [vmem:[%s248 + $0x9f8] sm:$0xff]
        %v645 = vld [vmem:[%s248 + $0xa00] sm:$0xff]
        %v646 = vld [vmem:[%s248 + $0xa08] sm:$0xff]
        %v647 = vld [vmem:[%s248 + $0xa10] sm:$0xff]
        %v648 = vld [vmem:[%s248 + $0xa18] sm:$0xff]
        %v649 = vld [vmem:[%s248 + $0xa20] sm:$0xff]
        %v650 = vld [vmem:[%s248 + $0xa28] sm:$0xff]
        %v651 = vld [vmem:[%s248 + $0xa30] sm:$0xff]
        %v652 = vld [vmem:[%s248 + $0xa38] sm:$0xff]
        %v653 = vld [vmem:[%s248 + $0xa40] sm:$0xff]
        %v654 = vld [vmem:[%s248 + $0xa48] sm:$0xff]
        %v655 = vld [vmem:[%s248 + $0xa50] sm:$0xff]
        %v656 = vld [vmem:[%s248 + $0xa58] sm:$0xff]
        %v657 = vld [vmem:[%s248 + $0xa60] sm:$0xff]
        %v658 = vld [vmem:[%s248 + $0xa68] sm:$0xff]
        %v659 = vld [vmem:[%s248 + $0xa70] sm:$0xff]
        %v660 = vld [vmem:[%s248 + $0xa78] sm:$0xff]
        %v661 = vld [vmem:[%s248 + $0xa80] sm:$0xff]
        %v662 = vld [vmem:[%s248 + $0xa88] sm:$0xff]
        %v663 = vld [vmem:[%s248 + $0xa90] sm:$0xff]
        %v664 = vld [vmem:[%s248 + $0xa98] sm:$0xff]
        %v665 = vld [vmem:[%s248 + $0xaa0] sm:$0xff]
        %v666 = vld [vmem:[%s248 + $0xaa8] sm:$0xff]
        %v667 = vld [vmem:[%s248 + $0xab0] sm:$0xff]
        %v668 = vld [vmem:[%s248 + $0xab8] sm:$0xff]
        %v669 = vld [vmem:[%s248 + $0xac0] sm:$0xff]
        %v670 = vld [vmem:[%s248 + $0xac8] sm:$0xff]
        %v671 = vld [vmem:[%s248 + $0xad0] sm:$0xff]
        %v672 = vld [vmem:[%s248 + $0xad8] sm:$0xff]
        %v673 = vld [vmem:[%s248 + $0xae0] sm:$0xff]
        %v674 = vld [vmem:[%s248 + $0xae8] sm:$0xff]
        %v675 = vld [vmem:[%s248 + $0xaf0] sm:$0xff]
        %v676 = vld [vmem:[%s248 + $0xaf8] sm:$0xff]
        %v677 = vld [vmem:[%s248 + $0xb00] sm:$0xff]
        %v678 = vld [vmem:[%s248 + $0xb08] sm:$0xff]
        %v679 = vld [vmem:[%s248 + $0xb10] sm:$0xff]
        %v680 = vld [vmem:[%s248 + $0xb18] sm:$0xff]
        %v681 = vld [vmem:[%s248 + $0xb20] sm:$0xff]
        %v682 = vld [vmem:[%s248 + $0xb28] sm:$0xff]
        %v683 = vld [vmem:[%s248 + $0xb30] sm:$0xff]
        %v684 = vld [vmem:[%s248 + $0xb38] sm:$0xff]
        %v685 = vld [vmem:[%s248 + $0xb40] sm:$0xff]
        %v686 = vld [vmem:[%s248 + $0xb48] sm:$0xff]
        %v687 = vld [vmem:[%s248 + $0xb50] sm:$0xff]
        %v688 = vld [vmem:[%s248 + $0xb58] sm:$0xff]
        %v689 = vld [vmem:[%s248 + $0xb60] sm:$0xff]
        %v690 = vld [vmem:[%s248 + $0xb68] sm:$0xff]
        %v691 = vld [vmem:[%s248 + $0xb70] sm:$0xff]
        %v692 = vld [vmem:[%s248 + $0xb78] sm:$0xff]
        %v693 = vld [vmem:[%s248 + $0xb80] sm:$0xff]
        %v694 = vld [vmem:[%s248 + $0xb88] sm:$0xff]
        %v695 = vld [vmem:[%s248 + $0xb90] sm:$0xff]
        %v696 = vld [vmem:[%s248 + $0xb98] sm:$0xff]
        %v697 = vld [vmem:[%s248 + $0xba0] sm:$0xff]
        %v698 = vld [vmem:[%s248 + $0xba8] sm:$0xff]
        %v699 = vld [vmem:[%s248 + $0xbb0] sm:$0xff]
        %v700 = vld [vmem:[%s248 + $0xbb8] sm:$0xff]
        %v701 = vld [vmem:[%s248 + $0xbc0] sm:$0xff]
        %v702 = vld [vmem:[%s248 + $0xbc8] sm:$0xff]
        %v703 = vld [vmem:[%s248 + $0xbd0] sm:$0xff]
        %v704 = vld [vmem:[%s248 + $0xbd8] sm:$0xff]
        %v705 = vld [vmem:[%s248 + $0xbe0] sm:$0xff]
        %v706 = vld [vmem:[%s248 + $0xbe8] sm:$0xff]
        %v707 = vld [vmem:[%s248 + $0xbf0] sm:$0xff]
        %v708 = vld [vmem:[%s248 + $0xbf8] sm:$0xff]
        %v709 = vld [vmem:[%s248 + $0xc00] sm:$0xff]
        %v710 = vld [vmem:[%s248 + $0xc08] sm:$0xff]
        %v711 = vld [vmem:[%s248 + $0xc10] sm:$0xff]
        %v712 = vld [vmem:[%s248 + $0xc18] sm:$0xff]
        %v713 = vld [vmem:[%s248 + $0xc20] sm:$0xff]
        %v714 = vld [vmem:[%s248 + $0xc28] sm:$0xff]
        %v715 = vld [vmem:[%s248 + $0xc30] sm:$0xff]
        %v716 = vld [vmem:[%s248 + $0xc38] sm:$0xff]
        %v717 = vld [vmem:[%s248 + $0xc40] sm:$0xff]
        %v718 = vld [vmem:[%s248 + $0xc48] sm:$0xff]
        %v719 = vld [vmem:[%s248 + $0xc50] sm:$0xff]
        %v720 = vld [vmem:[%s248 + $0xc58] sm:$0xff]
        %v721 = vld [vmem:[%s248 + $0xc60] sm:$0xff]
        %v722 = vld [vmem:[%s248 + $0xc68] sm:$0xff]
        %v723 = vld [vmem:[%s248 + $0xc70] sm:$0xff]
        %v724 = vld [vmem:[%s248 + $0xc78] sm:$0xff]
        %v725 = vld [vmem:[%s248 + $0xc80] sm:$0xff]
        %v726 = vld [vmem:[%s248 + $0xc88] sm:$0xff]
        %v727 = vld [vmem:[%s248 + $0xc90] sm:$0xff]
        %v728 = vld [vmem:[%s248 + $0xc98] sm:$0xff]
        %v729 = vld [vmem:[%s248 + $0xca0] sm:$0xff]
        %v730 = vld [vmem:[%s248 + $0xca8] sm:$0xff]
        %v731 = vld [vmem:[%s248 + $0xcb0] sm:$0xff]
        %v732 = vld [vmem:[%s248 + $0xcb8] sm:$0xff]
        %v733 = vld [vmem:[%s248 + $0xcc0] sm:$0xff]
        %v734 = vld [vmem:[%s248 + $0xcc8] sm:$0xff]
        %v735 = vld [vmem:[%s248 + $0xcd0] sm:$0xff]
        %v736 = vld [vmem:[%s248 + $0xcd8] sm:$0xff]
        %v737 = vld [vmem:[%s248 + $0xce0] sm:$0xff]
        %v738 = vld [vmem:[%s248 + $0xce8] sm:$0xff]
        %v739 = vld [vmem:[%s248 + $0xcf0] sm:$0xff]
        %v740 = vld [vmem:[%s248 + $0xcf8] sm:$0xff]
        %v741 = vld [vmem:[%s248 + $0xd00] sm:$0xff]
        %v742 = vld [vmem:[%s248 + $0xd08] sm:$0xff]
        %v743 = vld [vmem:[%s248 + $0xd10] sm:$0xff]
        %v744 = vld [vmem:[%s248 + $0xd18] sm:$0xff]
        %v745 = vld [vmem:[%s248 + $0xd20] sm:$0xff]
        %v746 = vld [vmem:[%s248 + $0xd28] sm:$0xff]
        %v747 = vld [vmem:[%s248 + $0xd30] sm:$0xff]
        %v748 = vld [vmem:[%s248 + $0xd38] sm:$0xff]
        %v749 = vld [vmem:[%s248 + $0xd40] sm:$0xff]
        %v750 = vld [vmem:[%s248 + $0xd48] sm:$0xff]
        %v751 = vld [vmem:[%s248 + $0xd50] sm:$0xff]
        %v752 = vld [vmem:[%s248 + $0xd58] sm:$0xff]
        %v753 = vld [vmem:[%s248 + $0xd60] sm:$0xff]
        %v754 = vld [vmem:[%s248 + $0xd68] sm:$0xff]
        %v755 = vld [vmem:[%s248 + $0xd70] sm:$0xff]
        %v756 = vld [vmem:[%s248 + $0xd78] sm:$0xff]
        %v757 = vld [vmem:[%s248 + $0xd80] sm:$0xff]
        %v758 = vld [vmem:[%s248 + $0xd88] sm:$0xff]
        %v759 = vld [vmem:[%s248 + $0xd90] sm:$0xff]
        %v760 = vld [vmem:[%s248 + $0xd98] sm:$0xff]
        %v761 = vld [vmem:[%s248 + $0xda0] sm:$0xff]
        %v762 = vld [vmem:[%s248 + $0xda8] sm:$0xff]
        %v763 = vld [vmem:[%s248 + $0xdb0] sm:$0xff]
        %v764 = vld [vmem:[%s248 + $0xdb8] sm:$0xff]
        %v765 = vld [vmem:[%s248 + $0xdc0] sm:$0xff]
        %v766 = vld [vmem:[%s248 + $0xdc8] sm:$0xff]
        %v767 = vld [vmem:[%s248 + $0xdd0] sm:$0xff]
        %v768 = vld [vmem:[%s248 + $0xdd8] sm:$0xff]
        %v769 = vld [vmem:[%s248 + $0xde0] sm:$0xff]
        %v770 = vld [vmem:[%s248 + $0xde8] sm:$0xff]
        %v771 = vld [vmem:[%s248 + $0xdf0] sm:$0xff]
        %v772 = vld [vmem:[%s248 + $0xdf8] sm:$0xff]
        %v773 = vld [vmem:[%s248 + $0xe00] sm:$0xff]
        %v774 = vld [vmem:[%s248 + $0xe08] sm:$0xff]
        %v775 = vld [vmem:[%s248 + $0xe10] sm:$0xff]
        %v776 = vld [vmem:[%s248 + $0xe18] sm:$0xff]
        %v777 = vld [vmem:[%s248 + $0xe20] sm:$0xff]
        %v778 = vld [vmem:[%s248 + $0xe28] sm:$0xff]
        %v779 = vld [vmem:[%s248 + $0xe30] sm:$0xff]
        %v780 = vld [vmem:[%s248 + $0xe38] sm:$0xff]
        %v781 = vld [vmem:[%s248 + $0xe40] sm:$0xff]
        %v782 = vld [vmem:[%s248 + $0xe48] sm:$0xff]
        %v783 = vld [vmem:[%s248 + $0xe50] sm:$0xff]
        %v784 = vld [vmem:[%s248 + $0xe58] sm:$0xff]
        %v785 = vld [vmem:[%s248 + $0xe60] sm:$0xff]
        %v786 = vld [vmem:[%s248 + $0xe68] sm:$0xff]
        %v787 = vld [vmem:[%s248 + $0xe70] sm:$0xff]
        %v788 = vld [vmem:[%s248 + $0xe78] sm:$0xff]
        %v789 = vld [vmem:[%s248 + $0xe80] sm:$0xff]
        %v790 = vld [vmem:[%s248 + $0xe88] sm:$0xff]
        %v791 = vld [vmem:[%s248 + $0xe90] sm:$0xff]
        %v792 = vld [vmem:[%s248 + $0xe98] sm:$0xff]
        %v793 = vld [vmem:[%s248 + $0xea0] sm:$0xff]
        %v794 = vld [vmem:[%s248 + $0xea8] sm:$0xff]
        %v795 = vld [vmem:[%s248 + $0xeb0] sm:$0xff]
        %v796 = vld [vmem:[%s248 + $0xeb8] sm:$0xff]
        %v797 = vld [vmem:[%s248 + $0xec0] sm:$0xff]
        %v798 = vld [vmem:[%s248 + $0xec8] sm:$0xff]
        %v799 = vld [vmem:[%s248 + $0xed0] sm:$0xff]
        %v800 = vld [vmem:[%s248 + $0xed8] sm:$0xff]
        %v801 = vld [vmem:[%s248 + $0xee0] sm:$0xff]
        %v802 = vld [vmem:[%s248 + $0xee8] sm:$0xff]
        %v803 = vld [vmem:[%s248 + $0xef0] sm:$0xff]
        %v804 = vld [vmem:[%s248 + $0xef8] sm:$0xff]
        %v805 = vld [vmem:[%s248 + $0xf00] sm:$0xff]
        %v806 = vld [vmem:[%s248 + $0xf08] sm:$0xff]
        %v807 = vld [vmem:[%s248 + $0xf10] sm:$0xff]
        %v808 = vld [vmem:[%s248 + $0xf18] sm:$0xff]
        %v809 = vld [vmem:[%s248 + $0xf20] sm:$0xff]
        %v810 = vld [vmem:[%s248 + $0xf28] sm:$0xff]
        %v811 = vld [vmem:[%s248 + $0xf30] sm:$0xff]
        %v812 = vld [vmem:[%s248 + $0xf38] sm:$0xff]
        %v813 = vld [vmem:[%s248 + $0xf40] sm:$0xff]
        %v814 = vld [vmem:[%s248 + $0xf48] sm:$0xff]
        %v815 = vld [vmem:[%s248 + $0xf50] sm:$0xff]
        %v816 = vld [vmem:[%s248 + $0xf58] sm:$0xff]
        %v817 = vld [vmem:[%s248 + $0xf60] sm:$0xff]
        %v818 = vld [vmem:[%s248 + $0xf68] sm:$0xff]
        %v819 = vld [vmem:[%s248 + $0xf70] sm:$0xff]
        %v820 = vld [vmem:[%s248 + $0xf78] sm:$0xff]
        %v821 = vld [vmem:[%s248 + $0xf80] sm:$0xff]
        %v822 = vld [vmem:[%s248 + $0xf88] sm:$0xff]
        %v823 = vld [vmem:[%s248 + $0xf90] sm:$0xff]
        %v824 = vld [vmem:[%s248 + $0xf98] sm:$0xff]
        %v825 = vld [vmem:[%s248 + $0xfa0] sm:$0xff]
        %v826 = vld [vmem:[%s248 + $0xfa8] sm:$0xff]
        %v827 = vld [vmem:[%s248 + $0xfb0] sm:$0xff]
        %v828 = vld [vmem:[%s248 + $0xfb8] sm:$0xff]
        %v829 = vld [vmem:[%s248 + $0xfc0] sm:$0xff]
        %v830 = vld [vmem:[%s248 + $0xfc8] sm:$0xff]
        %v831 = vld [vmem:[%s248 + $0xfd0] sm:$0xff]
        %v832 = vld [vmem:[%s248 + $0xfd8] sm:$0xff]
        %v833 = vld [vmem:[%s248 + $0xfe0] sm:$0xff]
        %v834 = vld [vmem:[%s248 + $0xfe8] sm:$0xff]
        %v835 = vld [vmem:[%s248 + $0xff0] sm:$0xff]
        %v836 = vld [vmem:[%s248 + $0xff8] sm:$0xff]
        %v837 = vld [vmem:[%s248 + $0x1000] sm:$0xff]
        %v838 = vld [vmem:[%s248 + $0x1008] sm:$0xff]
        %v839 = vld [vmem:[%s248 + $0x1010] sm:$0xff]
        %v840 = vld [vmem:[%s248 + $0x1018] sm:$0xff]
        %v841 = vld [vmem:[%s248 + $0x1020] sm:$0xff]
        %v842 = vld [vmem:[%s248 + $0x1028] sm:$0xff]
        %v843 = vld [vmem:[%s248 + $0x1030] sm:$0xff]
        %v844 = vld [vmem:[%s248 + $0x1038] sm:$0xff]
        %v845 = vld [vmem:[%s248 + $0x1040] sm:$0xff]
        %v846 = vld [vmem:[%s248 + $0x1048] sm:$0xff]
        %v847 = vld [vmem:[%s248 + $0x1050] sm:$0xff]
        %v848 = vld [vmem:[%s248 + $0x1058] sm:$0xff]
        %v849 = vld [vmem:[%s248 + $0x1060] sm:$0xff]
        %v850 = vld [vmem:[%s248 + $0x1068] sm:$0xff]
        %v851 = vld [vmem:[%s248 + $0x1070] sm:$0xff]
        %v852 = vld [vmem:[%s248 + $0x1078] sm:$0xff]
        %v853 = vld [vmem:[%s248 + $0x1080] sm:$0xff]
        %v854 = vld [vmem:[%s248 + $0x1088] sm:$0xff]
        %v855 = vld [vmem:[%s248 + $0x1090] sm:$0xff]
        %v856 = vld [vmem:[%s248 + $0x1098] sm:$0xff]
        %v857 = vld [vmem:[%s248 + $0x10a0] sm:$0xff]
        %v858 = vld [vmem:[%s248 + $0x10a8] sm:$0xff]
        %v859 = vld [vmem:[%s248 + $0x10b0] sm:$0xff]
        %v860 = vld [vmem:[%s248 + $0x10b8] sm:$0xff]
        %v861 = vld [vmem:[%s248 + $0x10c0] sm:$0xff]
        %v862 = vld [vmem:[%s248 + $0x10c8] sm:$0xff]
        %v863 = vld [vmem:[%s248 + $0x10d0] sm:$0xff]
        %v864 = vld [vmem:[%s248 + $0x10d8] sm:$0xff]
        %v865 = vld [vmem:[%s248 + $0x10e0] sm:$0xff]
        %v866 = vld [vmem:[%s248 + $0x10e8] sm:$0xff]
        %v867 = vld [vmem:[%s248 + $0x10f0] sm:$0xff]
        %v868 = vld [vmem:[%s248 + $0x10f8] sm:$0xff]
        %v869 = vld [vmem:[%s248 + $0x1100] sm:$0xff]
        %v870 = vld [vmem:[%s248 + $0x1108] sm:$0xff]
        %v871 = vld [vmem:[%s248 + $0x1110] sm:$0xff]
        %v872 = vld [vmem:[%s248 + $0x1118] sm:$0xff]
        %v873 = vld [vmem:[%s248 + $0x1120] sm:$0xff]
        %v874 = vld [vmem:[%s248 + $0x1128] sm:$0xff]
        %v875 = vld [vmem:[%s248 + $0x1130] sm:$0xff]
        %v876 = vld [vmem:[%s248 + $0x1138] sm:$0xff]
        %v877 = vld [vmem:[%s248 + $0x1140] sm:$0xff]
        %v878 = vld [vmem:[%s248 + $0x1148] sm:$0xff]
        %v879 = vld [vmem:[%s248 + $0x1150] sm:$0xff]
        %v880 = vld [vmem:[%s248 + $0x1158] sm:$0xff]
        %v881 = vld [vmem:[%s248 + $0x1160] sm:$0xff]
        %v882 = vld [vmem:[%s248 + $0x1168] sm:$0xff]
        %v883 = vld [vmem:[%s248 + $0x1170] sm:$0xff]
        %v884 = vld [vmem:[%s248 + $0x1178] sm:$0xff]
        %v885 = vld [vmem:[%s248 + $0x1180] sm:$0xff]
        %v886 = vld [vmem:[%s248 + $0x1188] sm:$0xff]
        %v887 = vld [vmem:[%s248 + $0x1190] sm:$0xff]
        %v888 = vld [vmem:[%s248 + $0x1198] sm:$0xff]
        %v889 = vld [vmem:[%s248 + $0x11a0] sm:$0xff]
        %v890 = vld [vmem:[%s248 + $0x11a8] sm:$0xff]
        %v891 = vld [vmem:[%s248 + $0x11b0] sm:$0xff]
        %v892 = vld [vmem:[%s248 + $0x11b8] sm:$0xff]
        %v893 = vld [vmem:[%s248 + $0x11c0] sm:$0xff]
        %v894 = vld [vmem:[%s248 + $0x11c8] sm:$0xff]
        %v895 = vld [vmem:[%s248 + $0x11d0] sm:$0xff]
        %v896 = vld [vmem:[%s248 + $0x11d8] sm:$0xff]
        %v897 = vld [vmem:[%s248 + $0x11e0] sm:$0xff]
        %v898 = vld [vmem:[%s248 + $0x11e8] sm:$0xff]
        %v899 = vld [vmem:[%s248 + $0x11f0] sm:$0xff]
        %v900 = vld [vmem:[%s248 + $0x11f8] sm:$0xff]
        %v901 = vld [vmem:[%s248 + $0x1200] sm:$0xff]
        %v902 = vld [vmem:[%s248 + $0x1208] sm:$0xff]
        %v903 = vld [vmem:[%s248 + $0x1210] sm:$0xff]
        %v904 = vld [vmem:[%s248 + $0x1218] sm:$0xff]
        %v905 = vld [vmem:[%s248 + $0x1220] sm:$0xff]
        %v906 = vld [vmem:[%s248 + $0x1228] sm:$0xff]
        %v907 = vld [vmem:[%s248 + $0x1230] sm:$0xff]
        %v908 = vld [vmem:[%s248 + $0x1238] sm:$0xff]
        %v909 = vld [vmem:[%s248 + $0x1240] sm:$0xff]
        %v910 = vld [vmem:[%s248 + $0x1248] sm:$0xff]
        %v911 = vld [vmem:[%s248 + $0x1250] sm:$0xff]
        %v912 = vld [vmem:[%s248 + $0x1258] sm:$0xff]
        %v913 = vld [vmem:[%s248 + $0x1260] sm:$0xff]
        %v914 = vld [vmem:[%s248 + $0x1268] sm:$0xff]
        %v915 = vld [vmem:[%s248 + $0x1270] sm:$0xff]
        %v916 = vld [vmem:[%s248 + $0x1278] sm:$0xff]
        %v917 = vld [vmem:[%s248 + $0x1280] sm:$0xff]
        %v918 = vld [vmem:[%s248 + $0x1288] sm:$0xff]
        %v919 = vld [vmem:[%s248 + $0x1290] sm:$0xff]
        %v920 = vld [vmem:[%s248 + $0x1298] sm:$0xff]
        %v921 = vld [vmem:[%s248 + $0x12a0] sm:$0xff]
        %v922 = vld [vmem:[%s248 + $0x12a8] sm:$0xff]
        %v923 = vld [vmem:[%s248 + $0x12b0] sm:$0xff]
        %v924 = vld [vmem:[%s248 + $0x12b8] sm:$0xff]
        %v925 = vld [vmem:[%s248 + $0x12c0] sm:$0xff]
        %v926 = vld [vmem:[%s248 + $0x12c8] sm:$0xff]
        %v927 = vld [vmem:[%s248 + $0x12d0] sm:$0xff]
        %v928 = vld [vmem:[%s248 + $0x12d8] sm:$0xff]
        %v929 = vld [vmem:[%s248 + $0x12e0] sm:$0xff]
        %v930 = vld [vmem:[%s248 + $0x12e8] sm:$0xff]
        %v931 = vld [vmem:[%s248 + $0x12f0] sm:$0xff]
        %v932 = vld [vmem:[%s248 + $0x12f8] sm:$0xff]
        %v933 = vld [vmem:[%s248 + $0x1300] sm:$0xff]
        %v934 = vld [vmem:[%s248 + $0x1308] sm:$0xff]
        %v935 = vld [vmem:[%s248 + $0x1310] sm:$0xff]
        %v936 = vld [vmem:[%s248 + $0x1318] sm:$0xff]
        %v937 = vld [vmem:[%s248 + $0x1320] sm:$0xff]
        %v938 = vld [vmem:[%s248 + $0x1328] sm:$0xff]
        %v939 = vld [vmem:[%s248 + $0x1330] sm:$0xff]
        %v940 = vld [vmem:[%s248 + $0x1338] sm:$0xff]
        %v941 = vld [vmem:[%s248 + $0x1340] sm:$0xff]
        %v942 = vld [vmem:[%s248 + $0x1348] sm:$0xff]
        %v943 = vld [vmem:[%s248 + $0x1350] sm:$0xff]
        %v944 = vld [vmem:[%s248 + $0x1358] sm:$0xff]
        %v945 = vld [vmem:[%s248 + $0x1360] sm:$0xff]
        %v946 = vld [vmem:[%s248 + $0x1368] sm:$0xff]
        %v947 = vld [vmem:[%s248 + $0x1370] sm:$0xff]
        %v948 = vld [vmem:[%s248 + $0x1378] sm:$0xff]
        %v949 = vld [vmem:[%s248 + $0x1380] sm:$0xff]
        %v950 = vld [vmem:[%s248 + $0x1388] sm:$0xff]
        %v951 = vld [vmem:[%s248 + $0x1390] sm:$0xff]
        %v952 = vld [vmem:[%s248 + $0x1398] sm:$0xff]
        %v953 = vld [vmem:[%s248 + $0x13a0] sm:$0xff]
        %v954 = vld [vmem:[%s248 + $0x13a8] sm:$0xff]
        %v955 = vld [vmem:[%s248 + $0x13b0] sm:$0xff]
        %v956 = vld [vmem:[%s248 + $0x13b8] sm:$0xff]
        %v957 = vld [vmem:[%s248 + $0x13c0] sm:$0xff]
        %v958 = vld [vmem:[%s248 + $0x13c8] sm:$0xff]
        %v959 = vld [vmem:[%s248 + $0x13d0] sm:$0xff]
        %v960 = vld [vmem:[%s248 + $0x13d8] sm:$0xff]
        %v961 = vld [vmem:[%s248 + $0x13e0] sm:$0xff]
        %v962 = vld [vmem:[%s248 + $0x13e8] sm:$0xff]
        %v963 = vld [vmem:[%s248 + $0x13f0] sm:$0xff]
        %v964 = vld [vmem:[%s248 + $0x13f8] sm:$0xff]
        %v965 = vld [vmem:[%s248 + $0x1400] sm:$0xff]
        %v966 = vld [vmem:[%s248 + $0x1408] sm:$0xff]
        %v967 = vld [vmem:[%s248 + $0x1410] sm:$0xff]
        %v968 = vld [vmem:[%s248 + $0x1418] sm:$0xff]
        %v969 = vld [vmem:[%s248 + $0x1420] sm:$0xff]
        %v970 = vld [vmem:[%s248 + $0x1428] sm:$0xff]
        %v971 = vld [vmem:[%s248 + $0x1430] sm:$0xff]
        %v972 = vld [vmem:[%s248 + $0x1438] sm:$0xff]
        %v973 = vld [vmem:[%s248 + $0x1440] sm:$0xff]
        %v974 = vld [vmem:[%s248 + $0x1448] sm:$0xff]
        %v975 = vld [vmem:[%s248 + $0x1450] sm:$0xff]
        %v976 = vld [vmem:[%s248 + $0x1458] sm:$0xff]
        %v977 = vld [vmem:[%s248 + $0x1460] sm:$0xff]
        %v978 = vld [vmem:[%s248 + $0x1468] sm:$0xff]
        %v979 = vld [vmem:[%s248 + $0x1470] sm:$0xff]
        %v980 = vld [vmem:[%s248 + $0x1478] sm:$0xff]
        %v981 = vld [vmem:[%s248 + $0x1480] sm:$0xff]
        %v982 = vld [vmem:[%s248 + $0x1488] sm:$0xff]
        %v983 = vld [vmem:[%s248 + $0x1490] sm:$0xff]
        %v984 = vld [vmem:[%s248 + $0x1498] sm:$0xff]
        %v985 = vld [vmem:[%s248 + $0x14a0] sm:$0xff]
        %v986 = vld [vmem:[%s248 + $0x14a8] sm:$0xff]
        %v987 = vld [vmem:[%s248 + $0x14b0] sm:$0xff]
        %v988 = vld [vmem:[%s248 + $0x14b8] sm:$0xff]
        %v989 = vld [vmem:[%s248 + $0x14c0] sm:$0xff]
        %v990 = vld [vmem:[%s248 + $0x14c8] sm:$0xff]
        %v991 = vld [vmem:[%s248 + $0x14d0] sm:$0xff]
        %v992 = vld [vmem:[%s248 + $0x14d8] sm:$0xff]
        %v993 = vld [vmem:[%s248 + $0x14e0] sm:$0xff]
        %v994 = vld [vmem:[%s248 + $0x14e8] sm:$0xff]
        %v995 = vld [vmem:[%s248 + $0x14f0] sm:$0xff]
        %v996 = vld [vmem:[%s248 + $0x14f8] sm:$0xff]
        %v997 = vld [vmem:[%s248 + $0x1500] sm:$0xff]
        %v998 = vld [vmem:[%s248 + $0x1508] sm:$0xff]
        %v999 = vld [vmem:[%s248 + $0x1510] sm:$0xff]
        %v1000 = vld [vmem:[%s248 + $0x1518] sm:$0xff]
        %v1001 = vld [vmem:[%s248 + $0x1520] sm:$0xff]
        %v1002 = vld [vmem:[%s248 + $0x1528] sm:$0xff]
        %v1003 = vld [vmem:[%s248 + $0x1530] sm:$0xff]
        %v1004 = vld [vmem:[%s248 + $0x1538] sm:$0xff]
        %v1005 = vld [vmem:[%s248 + $0x1540] sm:$0xff]
        %v1006 = vld [vmem:[%s248 + $0x1548] sm:$0xff]
        %v1007 = vld [vmem:[%s248 + $0x1550] sm:$0xff]
        %v1008 = vld [vmem:[%s248 + $0x1558] sm:$0xff]
        %v1009 = vld [vmem:[%s248 + $0x1560] sm:$0xff]
        %v1010 = vld [vmem:[%s248 + $0x1568] sm:$0xff]
        %v1011 = vld [vmem:[%s248 + $0x1570] sm:$0xff]
        %v1012 = vld [vmem:[%s248 + $0x1578] sm:$0xff]
        %v1013 = vld [vmem:[%s248 + $0x1580] sm:$0xff]
        %v1014 = vld [vmem:[%s248 + $0x1588] sm:$0xff]
        %v1015 = vld [vmem:[%s248 + $0x1590] sm:$0xff]
        %v1016 = vld [vmem:[%s248 + $0x1598] sm:$0xff]
        %v1017 = vld [vmem:[%s248 + $0x15a0] sm:$0xff]
        %v1018 = vld [vmem:[%s248 + $0x15a8] sm:$0xff]
        %v1019 = vld [vmem:[%s248 + $0x15b0] sm:$0xff]
        %v1020 = vld [vmem:[%s248 + $0x15b8] sm:$0xff]
        %v1021 = vld [vmem:[%s248 + $0x15c0] sm:$0xff]
        %v1022 = vld [vmem:[%s248 + $0x15c8] sm:$0xff]
        %v1023 = vld [vmem:[%s248 + $0x15d0] sm:$0xff]
        %v1024 = vld [vmem:[%s248 + $0x15d8] sm:$0xff]
        %v1025 = vld [vmem:[%s248 + $0x15e0] sm:$0xff]
        %v1026 = vld [vmem:[%s248 + $0x15e8] sm:$0xff]
        %v1027 = vld [vmem:[%s248 + $0x15f0] sm:$0xff]
        %v1028 = vld [vmem:[%s248 + $0x15f8] sm:$0xff]
        %v1029 = vld [vmem:[%s248 + $0x1600] sm:$0xff]
        %v1030 = vld [vmem:[%s248 + $0x1608] sm:$0xff]
        %v1031 = vld [vmem:[%s248 + $0x1610] sm:$0xff]
        %v1032 = vld [vmem:[%s248 + $0x1618] sm:$0xff]
        %v1033 = vld [vmem:[%s248 + $0x1620] sm:$0xff]
        %v1034 = vld [vmem:[%s248 + $0x1628] sm:$0xff]
        %v1035 = vld [vmem:[%s248 + $0x1630] sm:$0xff]
        %v1036 = vld [vmem:[%s248 + $0x1638] sm:$0xff]
        %v1037 = vld [vmem:[%s248 + $0x1640] sm:$0xff]
        %v1038 = vld [vmem:[%s248 + $0x1648] sm:$0xff]
        %v1039 = vld [vmem:[%s248 + $0x1650] sm:$0xff]
        %v1040 = vld [vmem:[%s248 + $0x1658] sm:$0xff]
        %v1041 = vld [vmem:[%s248 + $0x1660] sm:$0xff]
        %v1042 = vld [vmem:[%s248 + $0x1668] sm:$0xff]
        %v1043 = vld [vmem:[%s248 + $0x1670] sm:$0xff]
        %v1044 = vld [vmem:[%s248 + $0x1678] sm:$0xff]
        %v1045 = vld [vmem:[%s248 + $0x1680] sm:$0xff]
        %v1046 = vld [vmem:[%s248 + $0x1688] sm:$0xff]
        %v1047 = vld [vmem:[%s248 + $0x1690] sm:$0xff]
        %v1048 = vld [vmem:[%s248 + $0x1698] sm:$0xff]
        %v1049 = vld [vmem:[%s248 + $0x16a0] sm:$0xff]
        %v1050 = vld [vmem:[%s248 + $0x16a8] sm:$0xff]
        %v1051 = vld [vmem:[%s248 + $0x16b0] sm:$0xff]
        %v1052 = vld [vmem:[%s248 + $0x16b8] sm:$0xff]
        %v1053 = vld [vmem:[%s248 + $0x16c0] sm:$0xff]
        %v1054 = vld [vmem:[%s248 + $0x16c8] sm:$0xff]
        %v1055 = vld [vmem:[%s248 + $0x16d0] sm:$0xff]
        %v1056 = vld [vmem:[%s248 + $0x16d8] sm:$0xff]
        %v1057 = vld [vmem:[%s248 + $0x16e0] sm:$0xff]
        %v1058 = vld [vmem:[%s248 + $0x16e8] sm:$0xff]
        %v1059 = vld [vmem:[%s248 + $0x16f0] sm:$0xff]
        %v1060 = vld [vmem:[%s248 + $0x16f8] sm:$0xff]
        %v1061 = vld [vmem:[%s248 + $0x1700] sm:$0xff]
        %v1062 = vld [vmem:[%s248 + $0x1708] sm:$0xff]
        %v1063 = vld [vmem:[%s248 + $0x1710] sm:$0xff]
        %v1064 = vld [vmem:[%s248 + $0x1718] sm:$0xff]
        %v1065 = vld [vmem:[%s248 + $0x1720] sm:$0xff]
        %v1066 = vld [vmem:[%s248 + $0x1728] sm:$0xff]
        %v1067 = vld [vmem:[%s248 + $0x1730] sm:$0xff]
        %v1068 = vld [vmem:[%s248 + $0x1738] sm:$0xff]
        %v1069 = vld [vmem:[%s248 + $0x1740] sm:$0xff]
        %v1070 = vld [vmem:[%s248 + $0x1748] sm:$0xff]
        %v1071 = vld [vmem:[%s248 + $0x1750] sm:$0xff]
        %v1072 = vld [vmem:[%s248 + $0x1758] sm:$0xff]
        %v1073 = vld [vmem:[%s248 + $0x1760] sm:$0xff]
        %v1074 = vld [vmem:[%s248 + $0x1768] sm:$0xff]
        %v1075 = vld [vmem:[%s248 + $0x1770] sm:$0xff]
        %v1076 = vld [vmem:[%s248 + $0x1778] sm:$0xff]
        %v1077 = vld [vmem:[%s248 + $0x1780] sm:$0xff]
        %v1078 = vld [vmem:[%s248 + $0x1788] sm:$0xff]
        %v1079 = vld [vmem:[%s248 + $0x1790] sm:$0xff]
        %v1080 = vld [vmem:[%s248 + $0x1798] sm:$0xff]
        %v1081 = vld [vmem:[%s248 + $0x17a0] sm:$0xff]
        %v1082 = vld [vmem:[%s248 + $0x17a8] sm:$0xff]
        %v1083 = vld [vmem:[%s248 + $0x17b0] sm:$0xff]
        %v1084 = vld [vmem:[%s248 + $0x17b8] sm:$0xff]
        %v1085 = vld [vmem:[%s248 + $0x17c0] sm:$0xff]
        %v1086 = vld [vmem:[%s248 + $0x17c8] sm:$0xff]
        %v1087 = vld [vmem:[%s248 + $0x17d0] sm:$0xff]
        %v1088 = vld [vmem:[%s248 + $0x17d8] sm:$0xff]
        %v1089 = vld [vmem:[%s248 + $0x17e0] sm:$0xff]
        %v1090 = vld [vmem:[%s248 + $0x17e8] sm:$0xff]
        %v1091 = vld [vmem:[%s248 + $0x17f0] sm:$0xff]
        %v1092 = vld [vmem:[%s248 + $0x17f8] sm:$0xff]
        %v1093 = vld [vmem:[%s248 + $0x1800] sm:$0xff]
        %v1094 = vld [vmem:[%s248 + $0x1808] sm:$0xff]
        %v1095 = vld [vmem:[%s248 + $0x1810] sm:$0xff]
        %v1096 = vld [vmem:[%s248 + $0x1818] sm:$0xff]
        %v1097 = vld [vmem:[%s248 + $0x1820] sm:$0xff]
        %v1098 = vld [vmem:[%s248 + $0x1828] sm:$0xff]
        %v1099 = vld [vmem:[%s248 + $0x1830] sm:$0xff]
        %v1100 = vld [vmem:[%s248 + $0x1838] sm:$0xff]
        %v1101 = vld [vmem:[%s248 + $0x1840] sm:$0xff]
        %v1102 = vld [vmem:[%s248 + $0x1848] sm:$0xff]
        %v1103 = vld [vmem:[%s248 + $0x1850] sm:$0xff]
        %v1104 = vld [vmem:[%s248 + $0x1858] sm:$0xff]
        %v1105 = vld [vmem:[%s248 + $0x1860] sm:$0xff]
        %v1106 = vld [vmem:[%s248 + $0x1868] sm:$0xff]
        %v1107 = vld [vmem:[%s248 + $0x1870] sm:$0xff]
        %v1108 = vld [vmem:[%s248 + $0x1878] sm:$0xff]
        %v1109 = vld [vmem:[%s248 + $0x1880] sm:$0xff]
        %v1110 = vld [vmem:[%s248 + $0x1888] sm:$0xff]
        %v1111 = vld [vmem:[%s248 + $0x1890] sm:$0xff]
        %v1112 = vld [vmem:[%s248 + $0x1898] sm:$0xff]
        %v1113 = vld [vmem:[%s248 + $0x18a0] sm:$0xff]
        %v1114 = vld [vmem:[%s248 + $0x18a8] sm:$0xff]
        %v1115 = vld [vmem:[%s248 + $0x18b0] sm:$0xff]
        %v1116 = vld [vmem:[%s248 + $0x18b8] sm:$0xff]
        %v1117 = vld [vmem:[%s248 + $0x18c0] sm:$0xff]
        %v1118 = vld [vmem:[%s248 + $0x18c8] sm:$0xff]
        %v1119 = vld [vmem:[%s248 + $0x18d0] sm:$0xff]
        %v1120 = vld [vmem:[%s248 + $0x18d8] sm:$0xff]
        %v1121 = vld [vmem:[%s248 + $0x18e0] sm:$0xff]
        %v1122 = vld [vmem:[%s248 + $0x18e8] sm:$0xff]
        %v1123 = vld [vmem:[%s248 + $0x18f0] sm:$0xff]
        %v1124 = vld [vmem:[%s248 + $0x18f8] sm:$0xff]
        %v1125 = vld [vmem:[%s248 + $0x1900] sm:$0xff]
        %v1126 = vld [vmem:[%s248 + $0x1908] sm:$0xff]
        %v1127 = vld [vmem:[%s248 + $0x1910] sm:$0xff]
        %v1128 = vld [vmem:[%s248 + $0x1918] sm:$0xff]
        %v1129 = vld [vmem:[%s248 + $0x1920] sm:$0xff]
        %v1130 = vld [vmem:[%s248 + $0x1928] sm:$0xff]
        %v1131 = vld [vmem:[%s248 + $0x1930] sm:$0xff]
        %v1132 = vld [vmem:[%s248 + $0x1938] sm:$0xff]
        %v1133 = vld [vmem:[%s248 + $0x1940] sm:$0xff]
        %v1134 = vld [vmem:[%s248 + $0x1948] sm:$0xff]
        %v1135 = vld [vmem:[%s248 + $0x1950] sm:$0xff]
        %v1136 = vld [vmem:[%s248 + $0x1958] sm:$0xff]
        %v1137 = vld [vmem:[%s248 + $0x1960] sm:$0xff]
        %v1138 = vld [vmem:[%s248 + $0x1968] sm:$0xff]
        %v1139 = vld [vmem:[%s248 + $0x1970] sm:$0xff]
        %v1140 = vld [vmem:[%s248 + $0x1978] sm:$0xff]
        %v1141 = vld [vmem:[%s248 + $0x1980] sm:$0xff]
        %v1142 = vld [vmem:[%s248 + $0x1988] sm:$0xff]
        %v1143 = vld [vmem:[%s248 + $0x1990] sm:$0xff]
        %v1144 = vld [vmem:[%s248 + $0x1998] sm:$0xff]
        %v1145 = vld [vmem:[%s248 + $0x19a0] sm:$0xff]
        %v1146 = vld [vmem:[%s248 + $0x19a8] sm:$0xff]
        %v1147 = vld [vmem:[%s248 + $0x19b0] sm:$0xff]
        %v1148 = vld [vmem:[%s248 + $0x19b8] sm:$0xff]
        %v1149 = vld [vmem:[%s248 + $0x19c0] sm:$0xff]
        %v1150 = vld [vmem:[%s248 + $0x19c8] sm:$0xff]
        %v1151 = vld [vmem:[%s248 + $0x19d0] sm:$0xff]
        %v1152 = vld [vmem:[%s248 + $0x19d8] sm:$0xff]
        %v1153 = vld [vmem:[%s248 + $0x19e0] sm:$0xff]
        %v1154 = vld [vmem:[%s248 + $0x19e8] sm:$0xff]
        %v1155 = vld [vmem:[%s248 + $0x19f0] sm:$0xff]
        %v1156 = vld [vmem:[%s248 + $0x19f8] sm:$0xff]
        %v1157 = vld [vmem:[%s248 + $0x1a00] sm:$0xff]
        %v1158 = vld [vmem:[%s248 + $0x1a08] sm:$0xff]
        %v1159 = vld [vmem:[%s248 + $0x1a10] sm:$0xff]
        %v1160 = vld [vmem:[%s248 + $0x1a18] sm:$0xff]
        %v1161 = vld [vmem:[%s248 + $0x1a20] sm:$0xff]
        %v1162 = vld [vmem:[%s248 + $0x1a28] sm:$0xff]
        %v1163 = vld [vmem:[%s248 + $0x1a30] sm:$0xff]
        %v1164 = vld [vmem:[%s248 + $0x1a38] sm:$0xff]
        %v1165 = vld [vmem:[%s248 + $0x1a40] sm:$0xff]
        %v1166 = vld [vmem:[%s248 + $0x1a48] sm:$0xff]
        %v1167 = vld [vmem:[%s248 + $0x1a50] sm:$0xff]
        %v1168 = vld [vmem:[%s248 + $0x1a58] sm:$0xff]
        %v1169 = vld [vmem:[%s248 + $0x1a60] sm:$0xff]
        %v1170 = vld [vmem:[%s248 + $0x1a68] sm:$0xff]
        %v1171 = vld [vmem:[%s248 + $0x1a70] sm:$0xff]
        %v1172 = vld [vmem:[%s248 + $0x1a78] sm:$0xff]
        %v1173 = vld [vmem:[%s248 + $0x1a80] sm:$0xff]
        %v1174 = vld [vmem:[%s248 + $0x1a88] sm:$0xff]
        %v1175 = vld [vmem:[%s248 + $0x1a90] sm:$0xff]
        %v1176 = vld [vmem:[%s248 + $0x1a98] sm:$0xff]
        %v1177 = vld [vmem:[%s248 + $0x1aa0] sm:$0xff]
        %v1178 = vld [vmem:[%s248 + $0x1aa8] sm:$0xff]
        %v1179 = vld [vmem:[%s248 + $0x1ab0] sm:$0xff]
        %v1180 = vld [vmem:[%s248 + $0x1ab8] sm:$0xff]
        %v1181 = vld [vmem:[%s248 + $0x1ac0] sm:$0xff]
        %v1182 = vld [vmem:[%s248 + $0x1ac8] sm:$0xff]
        %v1183 = vld [vmem:[%s248 + $0x1ad0] sm:$0xff]
        %v1184 = vld [vmem:[%s248 + $0x1ad8] sm:$0xff]
        %v1185 = vld [vmem:[%s248 + $0x1ae0] sm:$0xff]
        %v1186 = vld [vmem:[%s248 + $0x1ae8] sm:$0xff]
        %v1187 = vld [vmem:[%s248 + $0x1af0] sm:$0xff]
        %v1188 = vld [vmem:[%s248 + $0x1af8] sm:$0xff]
        %v1189 = vld [vmem:[%s248 + $0x1b00] sm:$0xff]
        %v1190 = vld [vmem:[%s248 + $0x1b08] sm:$0xff]
        %v1191 = vld [vmem:[%s248 + $0x1b10] sm:$0xff]
        %v1192 = vld [vmem:[%s248 + $0x1b18] sm:$0xff]
        %v1193 = vld [vmem:[%s248 + $0x1b20] sm:$0xff]
        %v1194 = vld [vmem:[%s248 + $0x1b28] sm:$0xff]
        %v1195 = vld [vmem:[%s248 + $0x1b30] sm:$0xff]
        %v1196 = vld [vmem:[%s248 + $0x1b38] sm:$0xff]
        %v1197 = vld [vmem:[%s248 + $0x1b40] sm:$0xff]
        %v1198 = vld [vmem:[%s248 + $0x1b48] sm:$0xff]
        %v1199 = vld [vmem:[%s248 + $0x1b50] sm:$0xff]
        %v1200 = vld [vmem:[%s248 + $0x1b58] sm:$0xff]
        %v1201 = vld [vmem:[%s248 + $0x1b60] sm:$0xff]
        %v1202 = vld [vmem:[%s248 + $0x1b68] sm:$0xff]
        %v1203 = vld [vmem:[%s248 + $0x1b70] sm:$0xff]
        %v1204 = vld [vmem:[%s248 + $0x1b78] sm:$0xff]
        %v1205 = vld [vmem:[%s248 + $0x1b80] sm:$0xff]
        %v1206 = vld [vmem:[%s248 + $0x1b88] sm:$0xff]
        %v1207 = vld [vmem:[%s248 + $0x1b90] sm:$0xff]
        %v1208 = vld [vmem:[%s248 + $0x1b98] sm:$0xff]
        %v1209 = vld [vmem:[%s248 + $0x1ba0] sm:$0xff]
        %v1210 = vld [vmem:[%s248 + $0x1ba8] sm:$0xff]
        %v1211 = vld [vmem:[%s248 + $0x1bb0] sm:$0xff]
        %v1212 = vld [vmem:[%s248 + $0x1bb8] sm:$0xff]
        %v1213 = vld [vmem:[%s248 + $0x1bc0] sm:$0xff]
        %v1214 = vld [vmem:[%s248 + $0x1bc8] sm:$0xff]
        %v1215 = vld [vmem:[%s248 + $0x1bd0] sm:$0xff]
        %v1216 = vld [vmem:[%s248 + $0x1bd8] sm:$0xff]
        %v1217 = vld [vmem:[%s248 + $0x1be0] sm:$0xff]
        %v1218 = vld [vmem:[%s248 + $0x1be8] sm:$0xff]
        %v1219 = vld [vmem:[%s248 + $0x1bf0] sm:$0xff]
        %v1220 = vld [vmem:[%s248 + $0x1bf8] sm:$0xff]
        %v1221 = vld [vmem:[%s248 + $0x1c00] sm:$0xff]
        %v1222 = vld [vmem:[%s248 + $0x1c08] sm:$0xff]
        %v1223 = vld [vmem:[%s248 + $0x1c10] sm:$0xff]
        %v1224 = vld [vmem:[%s248 + $0x1c18] sm:$0xff]
        %v1225 = vld [vmem:[%s248 + $0x1c20] sm:$0xff]
        %v1226 = vld [vmem:[%s248 + $0x1c28] sm:$0xff]
        %v1227 = vld [vmem:[%s248 + $0x1c30] sm:$0xff]
        %v1228 = vld [vmem:[%s248 + $0x1c38] sm:$0xff]
        %v1229 = vld [vmem:[%s248 + $0x1c40] sm:$0xff]
        %v1230 = vld [vmem:[%s248 + $0x1c48] sm:$0xff]
        %v1231 = vld [vmem:[%s248 + $0x1c50] sm:$0xff]
        %v1232 = vld [vmem:[%s248 + $0x1c58] sm:$0xff]
        %v1233 = vld [vmem:[%s248 + $0x1c60] sm:$0xff]
        %v1234 = vld [vmem:[%s248 + $0x1c68] sm:$0xff]
        %v1235 = vld [vmem:[%s248 + $0x1c70] sm:$0xff]
        %v1236 = vld [vmem:[%s248 + $0x1c78] sm:$0xff]
        %v1237 = vld [vmem:[%s248 + $0x1c80] sm:$0xff]
        %v1238 = vld [vmem:[%s248 + $0x1c88] sm:$0xff]
        %v1239 = vld [vmem:[%s248 + $0x1c90] sm:$0xff]
        %v1240 = vld [vmem:[%s248 + $0x1c98] sm:$0xff]
        %v1241 = vld [vmem:[%s248 + $0x1ca0] sm:$0xff]
        %v1242 = vld [vmem:[%s248 + $0x1ca8] sm:$0xff]
        %v1243 = vld [vmem:[%s248 + $0x1cb0] sm:$0xff]
        %v1244 = vld [vmem:[%s248 + $0x1cb8] sm:$0xff]
        %v1245 = vld [vmem:[%s248 + $0x1cc0] sm:$0xff]
        %v1246 = vld [vmem:[%s248 + $0x1cc8] sm:$0xff]
        %v1247 = vld [vmem:[%s248 + $0x1cd0] sm:$0xff]
        %v1248 = vld [vmem:[%s248 + $0x1cd8] sm:$0xff]
        %v1249 = vld [vmem:[%s248 + $0x1ce0] sm:$0xff]
        %v1250 = vld [vmem:[%s248 + $0x1ce8] sm:$0xff]
        %v1251 = vld [vmem:[%s248 + $0x1cf0] sm:$0xff]
        %v1252 = vld [vmem:[%s248 + $0x1cf8] sm:$0xff]
        %v1253 = vld [vmem:[%s248 + $0x1d00] sm:$0xff]
        %v1254 = vld [vmem:[%s248 + $0x1d08] sm:$0xff]
        %v1255 = vld [vmem:[%s248 + $0x1d10] sm:$0xff]
        %v1256 = vld [vmem:[%s248 + $0x1d18] sm:$0xff]
        %v1257 = vld [vmem:[%s248 + $0x1d20] sm:$0xff]
        %v1258 = vld [vmem:[%s248 + $0x1d28] sm:$0xff]
        %v1259 = vld [vmem:[%s248 + $0x1d30] sm:$0xff]
        %v1260 = vld [vmem:[%s248 + $0x1d38] sm:$0xff]
        %v1261 = vld [vmem:[%s248 + $0x1d40] sm:$0xff]
        %v1262 = vld [vmem:[%s248 + $0x1d48] sm:$0xff]
        %v1263 = vld [vmem:[%s248 + $0x1d50] sm:$0xff]
        %v1264 = vld [vmem:[%s248 + $0x1d58] sm:$0xff]
        %v1265 = vld [vmem:[%s248 + $0x1d60] sm:$0xff]
        %v1266 = vld [vmem:[%s248 + $0x1d68] sm:$0xff]
        %v1267 = vld [vmem:[%s248 + $0x1d70] sm:$0xff]
        %v1268 = vld [vmem:[%s248 + $0x1d78] sm:$0xff]
        %v1269 = vld [vmem:[%s248 + $0x1d80] sm:$0xff]
        %v1270 = vld [vmem:[%s248 + $0x1d88] sm:$0xff]
        %v1271 = vld [vmem:[%s248 + $0x1d90] sm:$0xff]
        %v1272 = vld [vmem:[%s248 + $0x1d98] sm:$0xff]
        %v1273 = vld [vmem:[%s248 + $0x1da0] sm:$0xff]
        %v1274 = vld [vmem:[%s248 + $0x1da8] sm:$0xff]
        %v1275 = vld [vmem:[%s248 + $0x1db0] sm:$0xff]
        %v1276 = vld [vmem:[%s248 + $0x1db8] sm:$0xff]
        %v1277 = vld [vmem:[%s248 + $0x1dc0] sm:$0xff]
        %v1278 = vld [vmem:[%s248 + $0x1dc8] sm:$0xff]
        %v1279 = vld [vmem:[%s248 + $0x1dd0] sm:$0xff]
        %v1280 = vld [vmem:[%s248 + $0x1dd8] sm:$0xff]
        %v1281 = vld [vmem:[%s248 + $0x1de0] sm:$0xff]
        %v1282 = vld [vmem:[%s248 + $0x1de8] sm:$0xff]
        %v1283 = vld [vmem:[%s248 + $0x1df0] sm:$0xff]
        %v1284 = vld [vmem:[%s248 + $0x1df8] sm:$0xff]
        %v1285 = vld [vmem:[%s248 + $0x1e00] sm:$0xff]
        %v1286 = vld [vmem:[%s248 + $0x1e08] sm:$0xff]
        %v1287 = vld [vmem:[%s248 + $0x1e10] sm:$0xff]
        %v1288 = vld [vmem:[%s248 + $0x1e18] sm:$0xff]
        %v1289 = vld [vmem:[%s248 + $0x1e20] sm:$0xff]
        %v1290 = vld [vmem:[%s248 + $0x1e28] sm:$0xff]
        %v1291 = vld [vmem:[%s248 + $0x1e30] sm:$0xff]
        %v1292 = vld [vmem:[%s248 + $0x1e38] sm:$0xff]
        %v1293 = vld [vmem:[%s248 + $0x1e40] sm:$0xff]
        %v1294 = vld [vmem:[%s248 + $0x1e48] sm:$0xff]
        %v1295 = vld [vmem:[%s248 + $0x1e50] sm:$0xff]
        %v1296 = vld [vmem:[%s248 + $0x1e58] sm:$0xff]
        %v1297 = vld [vmem:[%s248 + $0x1e60] sm:$0xff]
        %v1298 = vld [vmem:[%s248 + $0x1e68] sm:$0xff]
        %v1299 = vld [vmem:[%s248 + $0x1e70] sm:$0xff]
        %v1300 = vld [vmem:[%s248 + $0x1e78] sm:$0xff]
        %v1301 = vld [vmem:[%s248 + $0x1e80] sm:$0xff]
        %v1302 = vld [vmem:[%s248 + $0x1e88] sm:$0xff]
        %v1303 = vld [vmem:[%s248 + $0x1e90] sm:$0xff]
        %v1304 = vld [vmem:[%s248 + $0x1e98] sm:$0xff]
        %v1305 = vld [vmem:[%s248 + $0x1ea0] sm:$0xff]
        %v1306 = vld [vmem:[%s248 + $0x1ea8] sm:$0xff]
        %v1307 = vld [vmem:[%s248 + $0x1eb0] sm:$0xff]
        %v1308 = vld [vmem:[%s248 + $0x1eb8] sm:$0xff]
        %v1309 = vld [vmem:[%s248 + $0x1ec0] sm:$0xff]
        %v1310 = vld [vmem:[%s248 + $0x1ec8] sm:$0xff]
        %v1311 = vld [vmem:[%s248 + $0x1ed0] sm:$0xff]
        %v1312 = vld [vmem:[%s248 + $0x1ed8] sm:$0xff]
        %v1313 = vld [vmem:[%s248 + $0x1ee0] sm:$0xff]
        %v1314 = vld [vmem:[%s248 + $0x1ee8] sm:$0xff]
        %v1315 = vld [vmem:[%s248 + $0x1ef0] sm:$0xff]
        %v1316 = vld [vmem:[%s248 + $0x1ef8] sm:$0xff]
        %v1317 = vld [vmem:[%s248 + $0x1f00] sm:$0xff]
        %v1318 = vld [vmem:[%s248 + $0x1f08] sm:$0xff]
        %v1319 = vld [vmem:[%s248 + $0x1f10] sm:$0xff]
        %v1320 = vld [vmem:[%s248 + $0x1f18] sm:$0xff]
        %v1321 = vld [vmem:[%s248 + $0x1f20] sm:$0xff]
        %v1322 = vld [vmem:[%s248 + $0x1f28] sm:$0xff]
        %v1323 = vld [vmem:[%s248 + $0x1f30] sm:$0xff]
        %v1324 = vld [vmem:[%s248 + $0x1f38] sm:$0xff]
        %v1325 = vld [vmem:[%s248 + $0x1f40] sm:$0xff]
        %v1326 = vld [vmem:[%s248 + $0x1f48] sm:$0xff]
        %v1327 = vld [vmem:[%s248 + $0x1f50] sm:$0xff]
        %v1328 = vld [vmem:[%s248 + $0x1f58] sm:$0xff]
        %v1329 = vld [vmem:[%s248 + $0x1f60] sm:$0xff]
        %v1330 = vld [vmem:[%s248 + $0x1f68] sm:$0xff]
        %v1331 = vld [vmem:[%s248 + $0x1f70] sm:$0xff]
        %v1332 = vld [vmem:[%s248 + $0x1f78] sm:$0xff]
        %v1333 = vld [vmem:[%s248 + $0x1f80] sm:$0xff]
        %v1334 = vld [vmem:[%s248 + $0x1f88] sm:$0xff]
        %v1335 = vld [vmem:[%s248 + $0x1f90] sm:$0xff]
        %v1336 = vld [vmem:[%s248 + $0x1f98] sm:$0xff]
        %v1337 = vld [vmem:[%s248 + $0x1fa0] sm:$0xff]
        %v1338 = vld [vmem:[%s248 + $0x1fa8] sm:$0xff]
        %v1339 = vld [vmem:[%s248 + $0x1fb0] sm:$0xff]
        %v1340 = vld [vmem:[%s248 + $0x1fb8] sm:$0xff]
        %v1341 = vld [vmem:[%s248 + $0x1fc0] sm:$0xff]
        %v1342 = vld [vmem:[%s248 + $0x1fc8] sm:$0xff]
        %v1343 = vld [vmem:[%s248 + $0x1fd0] sm:$0xff]
        %v1344 = vld [vmem:[%s248 + $0x1fd8] sm:$0xff]
        %v1345 = vld [vmem:[%s248 + $0x1fe0] sm:$0xff]
        %v1346 = vld [vmem:[%s248 + $0x1fe8] sm:$0xff]
        %v1347 = vld [vmem:[%s248 + $0x1ff0] sm:$0xff]
        %v1348 = vld [vmem:[%s248 + $0x1ff8] sm:$0xff]
        %v1349 = vld [vmem:[%s248 + $0x2000] sm:$0xff]
        %v1350 = vld [vmem:[%s248 + $0x2008] sm:$0xff]
        %v1351 = vld [vmem:[%s248 + $0x2010] sm:$0xff]
        %v1352 = vld [vmem:[%s248 + $0x2018] sm:$0xff]
        %v1353 = vld [vmem:[%s248 + $0x2020] sm:$0xff]
        %v1354 = vld [vmem:[%s248 + $0x2028] sm:$0xff]
        %v1355 = vld [vmem:[%s248 + $0x2030] sm:$0xff]
        %v1356 = vld [vmem:[%s248 + $0x2038] sm:$0xff]
        %v1357 = vld [vmem:[%s248 + $0x2040] sm:$0xff]
        %v1358 = vld [vmem:[%s248 + $0x2048] sm:$0xff]
        %v1359 = vld [vmem:[%s248 + $0x2050] sm:$0xff]
        %v1360 = vld [vmem:[%s248 + $0x2058] sm:$0xff]
        %v1361 = vld [vmem:[%s248 + $0x2060] sm:$0xff]
        %v1362 = vld [vmem:[%s248 + $0x2068] sm:$0xff]
        %v1363 = vld [vmem:[%s248 + $0x2070] sm:$0xff]
        %v1364 = vld [vmem:[%s248 + $0x2078] sm:$0xff]
        %v1365 = vld [vmem:[%s248 + $0x2080] sm:$0xff]
        %v1366 = vld [vmem:[%s248 + $0x2088] sm:$0xff]
        %v1367 = vld [vmem:[%s248 + $0x2090] sm:$0xff]
        %v1368 = vld [vmem:[%s248 + $0x2098] sm:$0xff]
        %v1369 = vld [vmem:[%s248 + $0x20a0] sm:$0xff]
        %v1370 = vld [vmem:[%s248 + $0x20a8] sm:$0xff]
        %v1371 = vld [vmem:[%s248 + $0x20b0] sm:$0xff]
        %v1372 = vld [vmem:[%s248 + $0x20b8] sm:$0xff]
        %v1373 = vld [vmem:[%s248 + $0x20c0] sm:$0xff]
        %v1374 = vld [vmem:[%s248 + $0x20c8] sm:$0xff]
        %v1375 = vld [vmem:[%s248 + $0x20d0] sm:$0xff]
        %v1376 = vld [vmem:[%s248 + $0x20d8] sm:$0xff]
        %v1377 = vld [vmem:[%s248 + $0x20e0] sm:$0xff]
        %v1378 = vld [vmem:[%s248 + $0x20e8] sm:$0xff]
        %v1379 = vld [vmem:[%s248 + $0x20f0] sm:$0xff]
        %v1380 = vld [vmem:[%s248 + $0x20f8] sm:$0xff]
        %v1381 = vld [vmem:[%s248 + $0x2100] sm:$0xff]
        %v1382 = vld [vmem:[%s248 + $0x2108] sm:$0xff]
        %v1383 = vld [vmem:[%s248 + $0x2110] sm:$0xff]
        %v1384 = vld [vmem:[%s248 + $0x2118] sm:$0xff]
        %v1385 = vld [vmem:[%s248 + $0x2120] sm:$0xff]
        %v1386 = vld [vmem:[%s248 + $0x2128] sm:$0xff]
        %v1387 = vld [vmem:[%s248 + $0x2130] sm:$0xff]
        %v1388 = vld [vmem:[%s248 + $0x2138] sm:$0xff]
        %v1389 = vld [vmem:[%s248 + $0x2140] sm:$0xff]
        %v1390 = vld [vmem:[%s248 + $0x2148] sm:$0xff]
        %v1391 = vld [vmem:[%s248 + $0x2150] sm:$0xff]
        %v1392 = vld [vmem:[%s248 + $0x2158] sm:$0xff]
        %v1393 = vld [vmem:[%s248 + $0x2160] sm:$0xff]
        %v1394 = vld [vmem:[%s248 + $0x2168] sm:$0xff]
        %v1395 = vld [vmem:[%s248 + $0x2170] sm:$0xff]
        %v1396 = vld [vmem:[%s248 + $0x2178] sm:$0xff]
        %v1397 = vld [vmem:[%s248 + $0x2180] sm:$0xff]
        %v1398 = vld [vmem:[%s248 + $0x2188] sm:$0xff]
        %v1399 = vld [vmem:[%s248 + $0x2190] sm:$0xff]
        %v1400 = vld [vmem:[%s248 + $0x2198] sm:$0xff]
        %v1401 = vld [vmem:[%s248 + $0x21a0] sm:$0xff]
        %v1402 = vld [vmem:[%s248 + $0x21a8] sm:$0xff]
        %v1403 = vld [vmem:[%s248 + $0x21b0] sm:$0xff]
        %v1404 = vld [vmem:[%s248 + $0x21b8] sm:$0xff]
        %v1405 = vld [vmem:[%s248 + $0x21c0] sm:$0xff]
        %v1406 = vld [vmem:[%s248 + $0x21c8] sm:$0xff]
        %v1407 = vld [vmem:[%s248 + $0x21d0] sm:$0xff]
        %v1408 = vld [vmem:[%s248 + $0x21d8] sm:$0xff]
        %v1409 = vld [vmem:[%s248 + $0x21e0] sm:$0xff]
        %v1410 = vld [vmem:[%s248 + $0x21e8] sm:$0xff]
        %v1411 = vld [vmem:[%s248 + $0x21f0] sm:$0xff]
        %v1412 = vld [vmem:[%s248 + $0x21f8] sm:$0xff]
        %v1413 = vld [vmem:[%s248 + $0x2200] sm:$0xff]
        %v1414 = vld [vmem:[%s248 + $0x2208] sm:$0xff]
        %v1415 = vld [vmem:[%s248 + $0x2210] sm:$0xff]
        %v1416 = vld [vmem:[%s248 + $0x2218] sm:$0xff]
        %v1417 = vld [vmem:[%s248 + $0x2220] sm:$0xff]
        %v1418 = vld [vmem:[%s248 + $0x2228] sm:$0xff]
        %v1419 = vld [vmem:[%s248 + $0x2230] sm:$0xff]
        %v1420 = vld [vmem:[%s248 + $0x2238] sm:$0xff]
        %v1421 = vld [vmem:[%s248 + $0x2240] sm:$0xff]
        %v1422 = vld [vmem:[%s248 + $0x2248] sm:$0xff]
        %v1423 = vld [vmem:[%s248 + $0x2250] sm:$0xff]
        %v1424 = vld [vmem:[%s248 + $0x2258] sm:$0xff]
        %v1425 = vld [vmem:[%s248 + $0x2260] sm:$0xff]
        %v1426 = vld [vmem:[%s248 + $0x2268] sm:$0xff]
        %v1427 = vld [vmem:[%s248 + $0x2270] sm:$0xff]
        %v1428 = vld [vmem:[%s248 + $0x2278] sm:$0xff]
        %v1429 = vld [vmem:[%s248 + $0x2280] sm:$0xff]
        %v1430 = vld [vmem:[%s248 + $0x2288] sm:$0xff]
        %v1431 = vld [vmem:[%s248 + $0x2290] sm:$0xff]
        %v1432 = vld [vmem:[%s248 + $0x2298] sm:$0xff]
        %v1433 = vld [vmem:[%s248 + $0x22a0] sm:$0xff]
        %v1434 = vld [vmem:[%s248 + $0x22a8] sm:$0xff]
        %v1435 = vld [vmem:[%s248 + $0x22b0] sm:$0xff]
        %v1436 = vld [vmem:[%s248 + $0x22b8] sm:$0xff]
        %v1437 = vld [vmem:[%s248 + $0x22c0] sm:$0xff]
        %v1438 = vld [vmem:[%s248 + $0x22c8] sm:$0xff]
        %v1439 = vld [vmem:[%s248 + $0x22d0] sm:$0xff]
        %v1440 = vld [vmem:[%s248 + $0x22d8] sm:$0xff]
        %v1441 = vld [vmem:[%s248 + $0x22e0] sm:$0xff]
        %v1442 = vld [vmem:[%s248 + $0x22e8] sm:$0xff]
        %v1443 = vld [vmem:[%s248 + $0x22f0] sm:$0xff]
        %v1444 = vld [vmem:[%s248 + $0x22f8] sm:$0xff]
        %v1463 = vunpack.c.l.b16 %v307
        %v1464 = vunpack.c.h.b16 %v307
        %v1465 = vunpack.c.l.b16 %v308
        %v1466 = vunpack.c.h.b16 %v308
        %v1467 = vunpack.c.l.b16 %v309
        %v1468 = vunpack.c.h.b16 %v309
        %v1469 = vunpack.c.l.b16 %v310
        %v1470 = vunpack.c.h.b16 %v310
        %v1471 = vunpack.c.l.b16 %v311
        %v1472 = vunpack.c.h.b16 %v311
        %v1473 = vunpack.c.l.b16 %v312
        %v1474 = vunpack.c.h.b16 %v312
        %v1475 = vunpack.c.l.b16 %v313
        %v1476 = vunpack.c.h.b16 %v313
        %v1477 = vunpack.c.l.b16 %v314
        %v1478 = vunpack.c.h.b16 %v314
        %v1479 = vunpack.c.l.b16 %v315
        %v1480 = vunpack.c.h.b16 %v315
        %v1481 = vunpack.c.l.b16 %v316
        %v1482 = vunpack.c.h.b16 %v316
        %v1483 = vunpack.c.l.b16 %v317
        %v1484 = vunpack.c.h.b16 %v317
        %v1485 = vunpack.c.l.b16 %v318
        %v1486 = vunpack.c.h.b16 %v318
        %v1487 = vunpack.c.l.b16 %v319
        %v1488 = vunpack.c.h.b16 %v319
        %v1489 = vunpack.c.l.b16 %v320
        %v1490 = vunpack.c.h.b16 %v320
        %v1491 = vunpack.c.l.b16 %v321
        %v1492 = vunpack.c.h.b16 %v321
        %v1493 = vunpack.c.l.b16 %v322
        %v1494 = vunpack.c.h.b16 %v322
        %v1495 = vunpack.c.l.b16 %v323
        %v1496 = vunpack.c.h.b16 %v323
        %v1497 = vunpack.c.l.b16 %v324
        %v1498 = vpack.c.b16 %v1463, %v1463
        %v1499 = vpack.c.b16 %v1464, %v1464
        %v1500 = vpack.c.b16 %v1465, %v1465
        %v1501 = vpack.c.b16 %v1466, %v1466
        %v1502 = vpack.c.b16 %v1467, %v1467
        %v1503 = vpack.c.b16 %v1468, %v1468
        %v1504 = vpack.c.b16 %v1469, %v1469
        %v1505 = vpack.c.b16 %v1470, %v1470
        %v1506 = vpack.c.b16 %v1471, %v1471
        %v1507 = vpack.c.b16 %v1472, %v1472
        %v1508 = vpack.c.b16 %v1473, %v1473
        %v1509 = vpack.c.b16 %v1474, %v1474
        %v1510 = vpack.c.b16 %v1475, %v1475
        %v1511 = vpack.c.b16 %v1476, %v1476
        %v1512 = vpack.c.b16 %v1477, %v1477
        %v1513 = vpack.c.b16 %v1478, %v1478
        %v1514 = vpack.c.b16 %v1479, %v1479
        %v1515 = vpack.c.b16 %v1480, %v1480
        %v1516 = vpack.c.b16 %v1481, %v1481
        %v1517 = vpack.c.b16 %v1482, %v1482
        %v1518 = vpack.c.b16 %v1483, %v1483
        %v1519 = vpack.c.b16 %v1484, %v1484
        %v1520 = vpack.c.b16 %v1485, %v1485
        %v1521 = vpack.c.b16 %v1486, %v1486
        %v1522 = vpack.c.b16 %v1487, %v1487
        %v1523 = vpack.c.b16 %v1488, %v1488
        %v1524 = vpack.c.b16 %v1489, %v1489
        %v1525 = vpack.c.b16 %v1490, %v1490
        %v1526 = vpack.c.b16 %v1491, %v1491
        %v1527 = vpack.c.b16 %v1492, %v1492
        %v1528 = vpack.c.b16 %v1493, %v1493
        %v1529 = vpack.c.b16 %v1494, %v1494
        %v1530 = vpack.c.b16 %v1495, %v1495
        %v1531 = vpack.c.b16 %v1496, %v1496
        %v1532 = vpack.c.b16 %v1497, %v1497
        %v2688 = vunpack.c.l.b16 %v325
        %v2689 = vunpack.c.h.b16 %v325
        %v2690 = vunpack.c.l.b16 %v326
        %v2691 = vunpack.c.h.b16 %v326
        %v2692 = vunpack.c.l.b16 %v327
        %v2693 = vunpack.c.h.b16 %v327
        %v2694 = vunpack.c.l.b16 %v328
        %v2695 = vunpack.c.h.b16 %v328
        %v2696 = vunpack.c.l.b16 %v329
        %v2697 = vunpack.c.h.b16 %v329
        %v2698 = vunpack.c.l.b16 %v330
        %v2699 = vunpack.c.h.b16 %v330
        %v2700 = vunpack.c.l.b16 %v331
        %v2701 = vunpack.c.h.b16 %v331
        %v2702 = vunpack.c.l.b16 %v332
        %v2703 = vunpack.c.h.b16 %v332
        %v2704 = vunpack.c.l.b16 %v333
        %v2705 = vunpack.c.h.b16 %v333
        %v2706 = vunpack.c.l.b16 %v334
        %v2707 = vunpack.c.h.b16 %v334
        %v2708 = vunpack.c.l.b16 %v335
        %v2709 = vunpack.c.h.b16 %v335
        %v2710 = vunpack.c.l.b16 %v336
        %v2711 = vunpack.c.h.b16 %v336
        %v2712 = vunpack.c.l.b16 %v337
        %v2713 = vunpack.c.h.b16 %v337
        %v2714 = vunpack.c.l.b16 %v338
        %v2715 = vunpack.c.h.b16 %v338
        %v2716 = vunpack.c.l.b16 %v339
        %v2717 = vunpack.c.h.b16 %v339
        %v2718 = vunpack.c.l.b16 %v340
        %v2719 = vunpack.c.h.b16 %v340
        %v2720 = vunpack.c.l.b16 %v341
        %v2721 = vunpack.c.h.b16 %v341
        %v2722 = vunpack.c.l.b16 %v342
        %v2723 = vunpack.c.h.b16 %v342
        %v2724 = vunpack.c.l.b16 %v343
        %v2725 = vunpack.c.h.b16 %v343
        %v2726 = vunpack.c.l.b16 %v344
        %v2727 = vunpack.c.h.b16 %v344
        %v2728 = vunpack.c.l.b16 %v345
        %v2729 = vunpack.c.h.b16 %v345
        %v2730 = vunpack.c.l.b16 %v346
        %v2731 = vunpack.c.h.b16 %v346
        %v2732 = vunpack.c.l.b16 %v347
        %v2733 = vunpack.c.h.b16 %v347
        %v2734 = vunpack.c.l.b16 %v348
        %v2735 = vunpack.c.h.b16 %v348
        %v2736 = vunpack.c.l.b16 %v349
        %v2737 = vunpack.c.h.b16 %v349
        %v2738 = vunpack.c.l.b16 %v350
        %v2739 = vunpack.c.h.b16 %v350
        %v2740 = vunpack.c.l.b16 %v351
        %v2741 = vunpack.c.h.b16 %v351
        %v2742 = vunpack.c.l.b16 %v352
        %v2743 = vunpack.c.h.b16 %v352
        %v2744 = vunpack.c.l.b16 %v353
        %v2745 = vunpack.c.h.b16 %v353
        %v2746 = vunpack.c.l.b16 %v354
        %v2747 = vunpack.c.h.b16 %v354
        %v2748 = vunpack.c.l.b16 %v355
        %v2749 = vunpack.c.h.b16 %v355
        %v2750 = vunpack.c.l.b16 %v356
        %v2751 = vunpack.c.h.b16 %v356
        %v2752 = vunpack.c.l.b16 %v357
        %v2753 = vunpack.c.h.b16 %v357
        %v2754 = vunpack.c.l.b16 %v358
        %v2755 = vunpack.c.h.b16 %v358
        %v2756 = vunpack.c.l.b16 %v359
        %v2757 = vunpack.c.h.b16 %v359
        %v2758 = vunpack.c.l.b16 %v360
        %v2759 = vunpack.c.h.b16 %v360
        %v2760 = vunpack.c.l.b16 %v361
        %v2761 = vunpack.c.h.b16 %v361
        %v2762 = vunpack.c.l.b16 %v362
        %v2763 = vunpack.c.h.b16 %v362
        %v2764 = vunpack.c.l.b16 %v363
        %v2765 = vunpack.c.h.b16 %v363
        %v2766 = vunpack.c.l.b16 %v364
        %v2767 = vunpack.c.h.b16 %v364
        %v2768 = vunpack.c.l.b16 %v365
        %v2769 = vunpack.c.h.b16 %v365
        %v2770 = vunpack.c.l.b16 %v366
        %v2771 = vunpack.c.h.b16 %v366
        %v2772 = vunpack.c.l.b16 %v367
        %v2773 = vunpack.c.h.b16 %v367
        %v2774 = vunpack.c.l.b16 %v368
        %v2775 = vunpack.c.h.b16 %v368
        %v2776 = vunpack.c.l.b16 %v369
        %v2777 = vunpack.c.h.b16 %v369
        %v2778 = vunpack.c.l.b16 %v370
        %v2779 = vunpack.c.h.b16 %v370
        %v2780 = vunpack.c.l.b16 %v371
        %v2781 = vunpack.c.h.b16 %v371
        %v2782 = vunpack.c.l.b16 %v372
        %v2783 = vunpack.c.h.b16 %v372
        %v2784 = vunpack.c.l.b16 %v373
        %v2785 = vunpack.c.h.b16 %v373
        %v2786 = vunpack.c.l.b16 %v374
        %v2787 = vunpack.c.h.b16 %v374
        %v2788 = vunpack.c.l.b16 %v375
        %v2789 = vunpack.c.h.b16 %v375
        %v2790 = vunpack.c.l.b16 %v376
        %v2791 = vunpack.c.h.b16 %v376
        %v2792 = vunpack.c.l.b16 %v377
        %v2793 = vunpack.c.h.b16 %v377
        %v2794 = vunpack.c.l.b16 %v378
        %v2795 = vunpack.c.h.b16 %v378
        %v2796 = vunpack.c.l.b16 %v379
        %v2797 = vunpack.c.h.b16 %v379
        %v2798 = vunpack.c.l.b16 %v380
        %v2799 = vunpack.c.h.b16 %v380
        %v2800 = vunpack.c.l.b16 %v381
        %v2801 = vunpack.c.h.b16 %v381
        %v2802 = vunpack.c.l.b16 %v382
        %v2803 = vunpack.c.h.b16 %v382
        %v2804 = vunpack.c.l.b16 %v383
        %v2805 = vunpack.c.h.b16 %v383
        %v2806 = vunpack.c.l.b16 %v384
        %v2807 = vunpack.c.h.b16 %v384
        %v2808 = vunpack.c.l.b16 %v385
        %v2809 = vunpack.c.h.b16 %v385
        %v2810 = vunpack.c.l.b16 %v386
        %v2811 = vunpack.c.h.b16 %v386
        %v2812 = vunpack.c.l.b16 %v387
        %v2813 = vunpack.c.h.b16 %v387
        %v2814 = vunpack.c.l.b16 %v388
        %v2815 = vunpack.c.h.b16 %v388
        %v2816 = vunpack.c.l.b16 %v389
        %v2817 = vunpack.c.h.b16 %v389
        %v2818 = vunpack.c.l.b16 %v390
        %v2819 = vunpack.c.h.b16 %v390
        %v2820 = vunpack.c.l.b16 %v391
        %v2821 = vunpack.c.h.b16 %v391
        %v2822 = vunpack.c.l.b16 %v392
        %v2823 = vunpack.c.h.b16 %v392
        %v2824 = vunpack.c.l.b16 %v393
        %v2825 = vunpack.c.h.b16 %v393
        %v2826 = vunpack.c.l.b16 %v394
        %v2827 = vunpack.c.h.b16 %v394
        %v2828 = vunpack.c.l.b16 %v395
        %v2829 = vunpack.c.h.b16 %v395
        %v2830 = vunpack.c.l.b16 %v396
        %v2831 = vunpack.c.h.b16 %v396
        %v2832 = vunpack.c.l.b16 %v397
        %v2833 = vunpack.c.h.b16 %v397
        %v2834 = vunpack.c.l.b16 %v398
        %v2835 = vunpack.c.h.b16 %v398
        %v2836 = vunpack.c.l.b16 %v399
        %v2837 = vunpack.c.h.b16 %v399
        %v2838 = vunpack.c.l.b16 %v400
        %v2839 = vunpack.c.h.b16 %v400
        %v2840 = vunpack.c.l.b16 %v401
        %v2841 = vunpack.c.h.b16 %v401
        %v2842 = vunpack.c.l.b16 %v402
        %v2843 = vunpack.c.h.b16 %v402
        %v2844 = vunpack.c.l.b16 %v403
        %v2845 = vunpack.c.h.b16 %v403
        %v2846 = vunpack.c.l.b16 %v404
        %v2847 = vunpack.c.h.b16 %v404
        %v2848 = vunpack.c.l.b16 %v405
        %v2849 = vunpack.c.h.b16 %v405
        %v2850 = vunpack.c.l.b16 %v406
        %v2851 = vunpack.c.h.b16 %v406
        %v2852 = vunpack.c.l.b16 %v407
        %v2853 = vunpack.c.h.b16 %v407
        %v2854 = vunpack.c.l.b16 %v408
        %v2855 = vunpack.c.h.b16 %v408
        %v2856 = vunpack.c.l.b16 %v409
        %v2857 = vunpack.c.h.b16 %v409
        %v2858 = vunpack.c.l.b16 %v410
        %v2859 = vunpack.c.h.b16 %v410
        %v2860 = vunpack.c.l.b16 %v411
        %v2861 = vunpack.c.h.b16 %v411
        %v2862 = vunpack.c.l.b16 %v412
        %v2863 = vunpack.c.h.b16 %v412
        %v2864 = vunpack.c.l.b16 %v413
        %v2865 = vunpack.c.h.b16 %v413
        %v2866 = vunpack.c.l.b16 %v414
        %v2867 = vunpack.c.h.b16 %v414
        %v2868 = vunpack.c.l.b16 %v415
        %v2869 = vunpack.c.h.b16 %v415
        %v2870 = vunpack.c.l.b16 %v416
        %v2871 = vunpack.c.h.b16 %v416
        %v2872 = vunpack.c.l.b16 %v417
        %v2873 = vunpack.c.h.b16 %v417
        %v2874 = vunpack.c.l.b16 %v418
        %v2875 = vunpack.c.h.b16 %v418
        %v2876 = vunpack.c.l.b16 %v419
        %v2877 = vunpack.c.h.b16 %v419
        %v2878 = vunpack.c.l.b16 %v420
        %v2879 = vunpack.c.h.b16 %v420
        %v2880 = vunpack.c.l.b16 %v421
        %v2881 = vunpack.c.h.b16 %v421
        %v2882 = vunpack.c.l.b16 %v422
        %v2883 = vunpack.c.h.b16 %v422
        %v2884 = vunpack.c.l.b16 %v423
        %v2885 = vunpack.c.h.b16 %v423
        %v2886 = vunpack.c.l.b16 %v424
        %v2887 = vunpack.c.h.b16 %v424
        %v2888 = vunpack.c.l.b16 %v425
        %v2889 = vunpack.c.h.b16 %v425
        %v2890 = vunpack.c.l.b16 %v426
        %v2891 = vunpack.c.h.b16 %v426
        %v2892 = vunpack.c.l.b16 %v427
        %v2893 = vunpack.c.h.b16 %v427
        %v2894 = vunpack.c.l.b16 %v428
        %v2895 = vunpack.c.h.b16 %v428
        %v2896 = vunpack.c.l.b16 %v429
        %v2897 = vunpack.c.h.b16 %v429
        %v2898 = vunpack.c.l.b16 %v430
        %v2899 = vunpack.c.h.b16 %v430
        %v2900 = vunpack.c.l.b16 %v431
        %v2901 = vunpack.c.h.b16 %v431
        %v2902 = vunpack.c.l.b16 %v432
        %v2903 = vunpack.c.h.b16 %v432
        %v2904 = vunpack.c.l.b16 %v433
        %v2905 = vunpack.c.h.b16 %v433
        %v2906 = vunpack.c.l.b16 %v434
        %v2907 = vunpack.c.h.b16 %v434
        %v2908 = vunpack.c.l.b16 %v435
        %v2909 = vunpack.c.h.b16 %v435
        %v2910 = vunpack.c.l.b16 %v436
        %v2911 = vunpack.c.h.b16 %v436
        %v2912 = vunpack.c.l.b16 %v437
        %v2913 = vunpack.c.h.b16 %v437
        %v2914 = vunpack.c.l.b16 %v438
        %v2915 = vunpack.c.h.b16 %v438
        %v2916 = vunpack.c.l.b16 %v439
        %v2917 = vunpack.c.h.b16 %v439
        %v2918 = vunpack.c.l.b16 %v440
        %v2919 = vunpack.c.h.b16 %v440
        %v2920 = vunpack.c.l.b16 %v441
        %v2921 = vunpack.c.h.b16 %v441
        %v2922 = vunpack.c.l.b16 %v442
        %v2923 = vunpack.c.h.b16 %v442
        %v2924 = vunpack.c.l.b16 %v443
        %v2925 = vunpack.c.h.b16 %v443
        %v2926 = vunpack.c.l.b16 %v444
        %v2927 = vunpack.c.h.b16 %v444
        %v2928 = vunpack.c.l.b16 %v445
        %v2929 = vunpack.c.h.b16 %v445
        %v2930 = vunpack.c.l.b16 %v446
        %v2931 = vunpack.c.h.b16 %v446
        %v2932 = vunpack.c.l.b16 %v447
        %v2933 = vunpack.c.h.b16 %v447
        %v2934 = vunpack.c.l.b16 %v448
        %v2935 = vunpack.c.h.b16 %v448
        %v2936 = vunpack.c.l.b16 %v449
        %v2937 = vunpack.c.h.b16 %v449
        %v2938 = vunpack.c.l.b16 %v450
        %v2939 = vunpack.c.h.b16 %v450
        %v2940 = vunpack.c.l.b16 %v451
        %v2941 = vunpack.c.h.b16 %v451
        %v2942 = vunpack.c.l.b16 %v452
        %v2943 = vunpack.c.h.b16 %v452
        %v2944 = vunpack.c.l.b16 %v453
        %v2945 = vunpack.c.h.b16 %v453
        %v2946 = vunpack.c.l.b16 %v454
        %v2947 = vunpack.c.h.b16 %v454
        %v2948 = vunpack.c.l.b16 %v455
        %v2949 = vunpack.c.h.b16 %v455
        %v2950 = vunpack.c.l.b16 %v456
        %v2951 = vunpack.c.h.b16 %v456
        %v2952 = vunpack.c.l.b16 %v457
        %v2953 = vunpack.c.h.b16 %v457
        %v2954 = vunpack.c.l.b16 %v458
        %v2955 = vunpack.c.h.b16 %v458
        %v2956 = vunpack.c.l.b16 %v459
        %v2957 = vunpack.c.h.b16 %v459
        %v2958 = vunpack.c.l.b16 %v460
        %v2959 = vunpack.c.h.b16 %v460
        %v2960 = vunpack.c.l.b16 %v461
        %v2961 = vunpack.c.h.b16 %v461
        %v2962 = vunpack.c.l.b16 %v462
        %v2963 = vunpack.c.h.b16 %v462
        %v2964 = vunpack.c.l.b16 %v463
        %v2965 = vunpack.c.h.b16 %v463
        %v2966 = vunpack.c.l.b16 %v464
        %v2967 = vunpack.c.h.b16 %v464
        %v2968 = vunpack.c.l.b16 %v465
        %v2969 = vunpack.c.h.b16 %v465
        %v2970 = vunpack.c.l.b16 %v466
        %v2971 = vunpack.c.h.b16 %v466
        %v2972 = vunpack.c.l.b16 %v467
        %v2973 = vunpack.c.h.b16 %v467
        %v2974 = vunpack.c.l.b16 %v468
        %v2975 = vunpack.c.h.b16 %v468
        %v2976 = vunpack.c.l.b16 %v469
        %v2977 = vunpack.c.h.b16 %v469
        %v2978 = vunpack.c.l.b16 %v470
        %v2979 = vunpack.c.h.b16 %v470
        %v2980 = vunpack.c.l.b16 %v471
        %v2981 = vunpack.c.h.b16 %v471
        %v2982 = vunpack.c.l.b16 %v472
        %v2983 = vunpack.c.h.b16 %v472
        %v2984 = vunpack.c.l.b16 %v473
        %v2985 = vunpack.c.h.b16 %v473
        %v2986 = vunpack.c.l.b16 %v474
        %v2987 = vunpack.c.h.b16 %v474
        %v2988 = vunpack.c.l.b16 %v475
        %v2989 = vunpack.c.h.b16 %v475
        %v2990 = vunpack.c.l.b16 %v476
        %v2991 = vunpack.c.h.b16 %v476
        %v2992 = vunpack.c.l.b16 %v477
        %v2993 = vunpack.c.h.b16 %v477
        %v2994 = vunpack.c.l.b16 %v478
        %v2995 = vunpack.c.h.b16 %v478
        %v2996 = vunpack.c.l.b16 %v479
        %v2997 = vunpack.c.h.b16 %v479
        %v2998 = vunpack.c.l.b16 %v480
        %v2999 = vunpack.c.h.b16 %v480
        %v3000 = vunpack.c.l.b16 %v481
        %v3001 = vunpack.c.h.b16 %v481
        %v3002 = vunpack.c.l.b16 %v482
        %v3003 = vunpack.c.h.b16 %v482
        %v3004 = vunpack.c.l.b16 %v483
        %v3005 = vunpack.c.h.b16 %v483
        %v3006 = vunpack.c.l.b16 %v484
        %v3007 = vunpack.c.h.b16 %v484
        %v3008 = vunpack.c.l.b16 %v485
        %v3009 = vunpack.c.h.b16 %v485
        %v3010 = vunpack.c.l.b16 %v486
        %v3011 = vunpack.c.h.b16 %v486
        %v3012 = vunpack.c.l.b16 %v487
        %v3013 = vunpack.c.h.b16 %v487
        %v3014 = vunpack.c.l.b16 %v488
        %v3015 = vunpack.c.h.b16 %v488
        %v3016 = vunpack.c.l.b16 %v489
        %v3017 = vunpack.c.h.b16 %v489
        %v3018 = vunpack.c.l.b16 %v490
        %v3019 = vunpack.c.h.b16 %v490
        %v3020 = vunpack.c.l.b16 %v491
        %v3021 = vunpack.c.h.b16 %v491
        %v3022 = vunpack.c.l.b16 %v492
        %v3023 = vunpack.c.h.b16 %v492
        %v3024 = vunpack.c.l.b16 %v493
        %v3025 = vunpack.c.h.b16 %v493
        %v3026 = vunpack.c.l.b16 %v494
        %v3027 = vunpack.c.h.b16 %v494
        %v3028 = vunpack.c.l.b16 %v495
        %v3029 = vunpack.c.h.b16 %v495
        %v3030 = vunpack.c.l.b16 %v496
        %v3031 = vunpack.c.h.b16 %v496
        %v3032 = vunpack.c.l.b16 %v497
        %v3033 = vunpack.c.h.b16 %v497
        %v3034 = vunpack.c.l.b16 %v498
        %v3035 = vunpack.c.h.b16 %v498
        %v3036 = vunpack.c.l.b16 %v499
        %v3037 = vunpack.c.h.b16 %v499
        %v3038 = vunpack.c.l.b16 %v500
        %v3039 = vunpack.c.h.b16 %v500
        %v3040 = vunpack.c.l.b16 %v501
        %v3041 = vunpack.c.h.b16 %v501
        %v3042 = vunpack.c.l.b16 %v502
        %v3043 = vunpack.c.h.b16 %v502
        %v3044 = vunpack.c.l.b16 %v503
        %v3045 = vunpack.c.h.b16 %v503
        %v3046 = vunpack.c.l.b16 %v504
        %v3047 = vunpack.c.h.b16 %v504
        %v3048 = vunpack.c.l.b16 %v505
        %v3049 = vunpack.c.h.b16 %v505
        %v3050 = vunpack.c.l.b16 %v506
        %v3051 = vunpack.c.h.b16 %v506
        %v3052 = vunpack.c.l.b16 %v507
        %v3053 = vunpack.c.h.b16 %v507
        %v3054 = vunpack.c.l.b16 %v508
        %v3055 = vunpack.c.h.b16 %v508
        %v3056 = vunpack.c.l.b16 %v509
        %v3057 = vunpack.c.h.b16 %v509
        %v3058 = vunpack.c.l.b16 %v510
        %v3059 = vunpack.c.h.b16 %v510
        %v3060 = vunpack.c.l.b16 %v511
        %v3061 = vunpack.c.h.b16 %v511
        %v3062 = vunpack.c.l.b16 %v512
        %v3063 = vunpack.c.h.b16 %v512
        %v3064 = vunpack.c.l.b16 %v513
        %v3065 = vunpack.c.h.b16 %v513
        %v3066 = vunpack.c.l.b16 %v514
        %v3067 = vunpack.c.h.b16 %v514
        %v3068 = vunpack.c.l.b16 %v515
        %v3069 = vunpack.c.h.b16 %v515
        %v3070 = vunpack.c.l.b16 %v516
        %v3071 = vunpack.c.h.b16 %v516
        %v3072 = vunpack.c.l.b16 %v517
        %v3073 = vunpack.c.h.b16 %v517
        %v3074 = vunpack.c.l.b16 %v518
        %v3075 = vunpack.c.h.b16 %v518
        %v3076 = vunpack.c.l.b16 %v519
        %v3077 = vunpack.c.h.b16 %v519
        %v3078 = vunpack.c.l.b16 %v520
        %v3079 = vunpack.c.h.b16 %v520
        %v3080 = vunpack.c.l.b16 %v521
        %v3081 = vunpack.c.h.b16 %v521
        %v3082 = vunpack.c.l.b16 %v522
        %v3083 = vunpack.c.h.b16 %v522
        %v3084 = vunpack.c.l.b16 %v523
        %v3085 = vunpack.c.h.b16 %v523
        %v3086 = vunpack.c.l.b16 %v524
        %v3087 = vunpack.c.h.b16 %v524
        %v3088 = vunpack.c.l.b16 %v525
        %v3089 = vunpack.c.h.b16 %v525
        %v3090 = vunpack.c.l.b16 %v526
        %v3091 = vunpack.c.h.b16 %v526
        %v3092 = vunpack.c.l.b16 %v527
        %v3093 = vunpack.c.h.b16 %v527
        %v3094 = vunpack.c.l.b16 %v528
        %v3095 = vunpack.c.h.b16 %v528
        %v3096 = vunpack.c.l.b16 %v529
        %v3097 = vunpack.c.h.b16 %v529
        %v3098 = vunpack.c.l.b16 %v530
        %v3099 = vunpack.c.h.b16 %v530
        %v3100 = vunpack.c.l.b16 %v531
        %v3101 = vunpack.c.h.b16 %v531
        %v3102 = vunpack.c.l.b16 %v532
        %v3103 = vunpack.c.h.b16 %v532
        %v3104 = vunpack.c.l.b16 %v533
        %v3105 = vunpack.c.h.b16 %v533
        %v3106 = vunpack.c.l.b16 %v534
        %v3107 = vunpack.c.h.b16 %v534
        %v3108 = vunpack.c.l.b16 %v535
        %v3109 = vunpack.c.h.b16 %v535
        %v3110 = vunpack.c.l.b16 %v536
        %v3111 = vunpack.c.h.b16 %v536
        %v3112 = vunpack.c.l.b16 %v537
        %v3113 = vunpack.c.h.b16 %v537
        %v3114 = vunpack.c.l.b16 %v538
        %v3115 = vunpack.c.h.b16 %v538
        %v3116 = vunpack.c.l.b16 %v539
        %v3117 = vunpack.c.h.b16 %v539
        %v3118 = vunpack.c.l.b16 %v540
        %v3119 = vunpack.c.h.b16 %v540
        %v3120 = vunpack.c.l.b16 %v541
        %v3121 = vunpack.c.h.b16 %v541
        %v3122 = vunpack.c.l.b16 %v542
        %v3123 = vunpack.c.h.b16 %v542
        %v3124 = vunpack.c.l.b16 %v543
        %v3125 = vunpack.c.h.b16 %v543
        %v3126 = vunpack.c.l.b16 %v544
        %v3127 = vunpack.c.h.b16 %v544
        %v3128 = vunpack.c.l.b16 %v545
        %v3129 = vunpack.c.h.b16 %v545
        %v3130 = vunpack.c.l.b16 %v546
        %v3131 = vunpack.c.h.b16 %v546
        %v3132 = vunpack.c.l.b16 %v547
        %v3133 = vunpack.c.h.b16 %v547
        %v3134 = vunpack.c.l.b16 %v548
        %v3135 = vunpack.c.h.b16 %v548
        %v3136 = vunpack.c.l.b16 %v549
        %v3137 = vunpack.c.h.b16 %v549
        %v3138 = vunpack.c.l.b16 %v550
        %v3139 = vunpack.c.h.b16 %v550
        %v3140 = vunpack.c.l.b16 %v551
        %v3141 = vunpack.c.h.b16 %v551
        %v3142 = vunpack.c.l.b16 %v552
        %v3143 = vunpack.c.h.b16 %v552
        %v3144 = vunpack.c.l.b16 %v553
        %v3145 = vunpack.c.h.b16 %v553
        %v3146 = vunpack.c.l.b16 %v554
        %v3147 = vunpack.c.h.b16 %v554
        %v3148 = vunpack.c.l.b16 %v555
        %v3149 = vunpack.c.h.b16 %v555
        %v3150 = vunpack.c.l.b16 %v556
        %v3151 = vunpack.c.h.b16 %v556
        %v3152 = vunpack.c.l.b16 %v557
        %v3153 = vunpack.c.h.b16 %v557
        %v3154 = vunpack.c.l.b16 %v558
        %v3155 = vunpack.c.h.b16 %v558
        %v3156 = vunpack.c.l.b16 %v559
        %v3157 = vunpack.c.h.b16 %v559
        %v3158 = vunpack.c.l.b16 %v560
        %v3159 = vunpack.c.h.b16 %v560
        %v3160 = vunpack.c.l.b16 %v561
        %v3161 = vunpack.c.h.b16 %v561
        %v3162 = vunpack.c.l.b16 %v562
        %v3163 = vunpack.c.h.b16 %v562
        %v3164 = vunpack.c.l.b16 %v563
        %v3165 = vunpack.c.h.b16 %v563
        %v3166 = vunpack.c.l.b16 %v564
        %v3167 = vunpack.c.h.b16 %v564
        %v3168 = vunpack.c.l.b16 %v565
        %v3169 = vunpack.c.h.b16 %v565
        %v3170 = vunpack.c.l.b16 %v566
        %v3171 = vunpack.c.h.b16 %v566
        %v3172 = vunpack.c.l.b16 %v567
        %v3173 = vunpack.c.h.b16 %v567
        %v3174 = vunpack.c.l.b16 %v568
        %v3175 = vunpack.c.h.b16 %v568
        %v3176 = vunpack.c.l.b16 %v569
        %v3177 = vunpack.c.h.b16 %v569
        %v3178 = vunpack.c.l.b16 %v570
        %v3179 = vunpack.c.h.b16 %v570
        %v3180 = vunpack.c.l.b16 %v571
        %v3181 = vunpack.c.h.b16 %v571
        %v3182 = vunpack.c.l.b16 %v572
        %v3183 = vunpack.c.h.b16 %v572
        %v3184 = vunpack.c.l.b16 %v573
        %v3185 = vunpack.c.h.b16 %v573
        %v3186 = vunpack.c.l.b16 %v574
        %v3187 = vunpack.c.h.b16 %v574
        %v3188 = vunpack.c.l.b16 %v575
        %v3189 = vunpack.c.h.b16 %v575
        %v3190 = vunpack.c.l.b16 %v576
        %v3191 = vunpack.c.h.b16 %v576
        %v3192 = vunpack.c.l.b16 %v577
        %v3193 = vunpack.c.h.b16 %v577
        %v3194 = vunpack.c.l.b16 %v578
        %v3195 = vunpack.c.h.b16 %v578
        %v3196 = vunpack.c.l.b16 %v579
        %v3197 = vunpack.c.h.b16 %v579
        %v3198 = vunpack.c.l.b16 %v580
        %v3199 = vunpack.c.h.b16 %v580
        %v3200 = vunpack.c.l.b16 %v581
        %v3201 = vunpack.c.h.b16 %v581
        %v3202 = vunpack.c.l.b16 %v582
        %v3203 = vunpack.c.h.b16 %v582
        %v3204 = vunpack.c.l.b16 %v583
        %v3205 = vunpack.c.h.b16 %v583
        %v3206 = vunpack.c.l.b16 %v584
        %v3207 = vunpack.c.h.b16 %v584
        %v3208 = vunpack.c.l.b16 %v585
        %v3209 = vunpack.c.h.b16 %v585
        %v3210 = vunpack.c.l.b16 %v586
        %v3211 = vunpack.c.h.b16 %v586
        %v3212 = vunpack.c.l.b16 %v587
        %v3213 = vunpack.c.h.b16 %v587
        %v3214 = vunpack.c.l.b16 %v588
        %v3215 = vunpack.c.h.b16 %v588
        %v3216 = vunpack.c.l.b16 %v589
        %v3217 = vunpack.c.h.b16 %v589
        %v3218 = vunpack.c.l.b16 %v590
        %v3219 = vunpack.c.h.b16 %v590
        %v3220 = vunpack.c.l.b16 %v591
        %v3221 = vunpack.c.h.b16 %v591
        %v3222 = vunpack.c.l.b16 %v592
        %v3223 = vunpack.c.h.b16 %v592
        %v3224 = vunpack.c.l.b16 %v593
        %v3225 = vunpack.c.h.b16 %v593
        %v3226 = vunpack.c.l.b16 %v594
        %v3227 = vunpack.c.h.b16 %v594
        %v3228 = vunpack.c.l.b16 %v595
        %v3229 = vunpack.c.h.b16 %v595
        %v3230 = vunpack.c.l.b16 %v596
        %v3231 = vunpack.c.h.b16 %v596
        %v3232 = vunpack.c.l.b16 %v597
        %v3233 = vunpack.c.h.b16 %v597
        %v3234 = vunpack.c.l.b16 %v598
        %v3235 = vunpack.c.h.b16 %v598
        %v3236 = vunpack.c.l.b16 %v599
        %v3237 = vunpack.c.h.b16 %v599
        %v3238 = vunpack.c.l.b16 %v600
        %v3239 = vunpack.c.h.b16 %v600
        %v3240 = vunpack.c.l.b16 %v601
        %v3241 = vunpack.c.h.b16 %v601
        %v3242 = vunpack.c.l.b16 %v602
        %v3243 = vunpack.c.h.b16 %v602
        %v3244 = vunpack.c.l.b16 %v603
        %v3245 = vunpack.c.h.b16 %v603
        %v3246 = vunpack.c.l.b16 %v604
        %v3247 = vunpack.c.h.b16 %v604
        %v3248 = vunpack.c.l.b16 %v605
        %v3249 = vunpack.c.h.b16 %v605
        %v3250 = vunpack.c.l.b16 %v606
        %v3251 = vunpack.c.h.b16 %v606
        %v3252 = vunpack.c.l.b16 %v607
        %v3253 = vunpack.c.h.b16 %v607
        %v3254 = vunpack.c.l.b16 %v608
        %v3255 = vunpack.c.h.b16 %v608
        %v3256 = vunpack.c.l.b16 %v609
        %v3257 = vunpack.c.h.b16 %v609
        %v3258 = vunpack.c.l.b16 %v610
        %v3259 = vunpack.c.h.b16 %v610
        %v3260 = vunpack.c.l.b16 %v611
        %v3261 = vunpack.c.h.b16 %v611
        %v3262 = vunpack.c.l.b16 %v612
        %v3263 = vunpack.c.h.b16 %v612
        %v3264 = vunpack.c.l.b16 %v613
        %v3265 = vunpack.c.h.b16 %v613
        %v3266 = vunpack.c.l.b16 %v614
        %v3267 = vunpack.c.h.b16 %v614
        %v3268 = vunpack.c.l.b16 %v615
        %v3269 = vunpack.c.h.b16 %v615
        %v3270 = vunpack.c.l.b16 %v616
        %v3271 = vunpack.c.h.b16 %v616
        %v3272 = vunpack.c.l.b16 %v617
        %v3273 = vunpack.c.h.b16 %v617
        %v3274 = vunpack.c.l.b16 %v618
        %v3275 = vunpack.c.h.b16 %v618
        %v3276 = vunpack.c.l.b16 %v619
        %v3277 = vunpack.c.h.b16 %v619
        %v3278 = vunpack.c.l.b16 %v620
        %v3279 = vunpack.c.h.b16 %v620
        %v3280 = vunpack.c.l.b16 %v621
        %v3281 = vunpack.c.h.b16 %v621
        %v3282 = vunpack.c.l.b16 %v622
        %v3283 = vunpack.c.h.b16 %v622
        %v3284 = vunpack.c.l.b16 %v623
        %v3285 = vunpack.c.h.b16 %v623
        %v3286 = vunpack.c.l.b16 %v624
        %v3287 = vunpack.c.h.b16 %v624
        %v3288 = vunpack.c.l.b16 %v625
        %v3289 = vunpack.c.h.b16 %v625
        %v3290 = vunpack.c.l.b16 %v626
        %v3291 = vunpack.c.h.b16 %v626
        %v3292 = vunpack.c.l.b16 %v627
        %v3293 = vunpack.c.h.b16 %v627
        %v3294 = vunpack.c.l.b16 %v628
        %v3295 = vunpack.c.h.b16 %v628
        %v3296 = vunpack.c.l.b16 %v629
        %v3297 = vunpack.c.h.b16 %v629
        %v3298 = vunpack.c.l.b16 %v630
        %v3299 = vunpack.c.h.b16 %v630
        %v3300 = vunpack.c.l.b16 %v631
        %v3301 = vunpack.c.h.b16 %v631
        %v3302 = vunpack.c.l.b16 %v632
        %v3303 = vunpack.c.h.b16 %v632
        %v3304 = vunpack.c.l.b16 %v633
        %v3305 = vunpack.c.h.b16 %v633
        %v3306 = vunpack.c.l.b16 %v634
        %v3307 = vunpack.c.h.b16 %v634
        %v3308 = vunpack.c.l.b16 %v635
        %v3309 = vunpack.c.h.b16 %v635
        %v3310 = vunpack.c.l.b16 %v636
        %v3311 = vunpack.c.h.b16 %v636
        %v3312 = vunpack.c.l.b16 %v637
        %v3313 = vunpack.c.h.b16 %v637
        %v3314 = vunpack.c.l.b16 %v638
        %v3315 = vunpack.c.h.b16 %v638
        %v3316 = vunpack.c.l.b16 %v639
        %v3317 = vunpack.c.h.b16 %v639
        %v3318 = vunpack.c.l.b16 %v640
        %v3319 = vunpack.c.h.b16 %v640
        %v3320 = vunpack.c.l.b16 %v641
        %v3321 = vunpack.c.h.b16 %v641
        %v3322 = vunpack.c.l.b16 %v642
        %v3323 = vunpack.c.h.b16 %v642
        %v3324 = vunpack.c.l.b16 %v643
        %v3325 = vunpack.c.h.b16 %v643
        %v3326 = vunpack.c.l.b16 %v644
        %v3327 = vunpack.c.h.b16 %v644
        %v3328 = vunpack.c.l.b16 %v645
        %v3329 = vunpack.c.h.b16 %v645
        %v3330 = vunpack.c.l.b16 %v646
        %v3331 = vunpack.c.h.b16 %v646
        %v3332 = vunpack.c.l.b16 %v647
        %v3333 = vunpack.c.h.b16 %v647
        %v3334 = vunpack.c.l.b16 %v648
        %v3335 = vunpack.c.h.b16 %v648
        %v3336 = vunpack.c.l.b16 %v649
        %v3337 = vunpack.c.h.b16 %v649
        %v3338 = vunpack.c.l.b16 %v650
        %v3339 = vunpack.c.h.b16 %v650
        %v3340 = vunpack.c.l.b16 %v651
        %v3341 = vunpack.c.h.b16 %v651
        %v3342 = vunpack.c.l.b16 %v652
        %v3343 = vunpack.c.h.b16 %v652
        %v3344 = vunpack.c.l.b16 %v653
        %v3345 = vunpack.c.h.b16 %v653
        %v3346 = vunpack.c.l.b16 %v654
        %v3347 = vunpack.c.h.b16 %v654
        %v3348 = vunpack.c.l.b16 %v655
        %v3349 = vunpack.c.h.b16 %v655
        %v3350 = vunpack.c.l.b16 %v656
        %v3351 = vunpack.c.h.b16 %v656
        %v3352 = vunpack.c.l.b16 %v657
        %v3353 = vunpack.c.h.b16 %v657
        %v3354 = vunpack.c.l.b16 %v658
        %v3355 = vunpack.c.h.b16 %v658
        %v3356 = vunpack.c.l.b16 %v659
        %v3357 = vunpack.c.h.b16 %v659
        %v3358 = vunpack.c.l.b16 %v660
        %v3359 = vunpack.c.h.b16 %v660
        %v3360 = vunpack.c.l.b16 %v661
        %v3361 = vunpack.c.h.b16 %v661
        %v3362 = vunpack.c.l.b16 %v662
        %v3363 = vunpack.c.h.b16 %v662
        %v3364 = vunpack.c.l.b16 %v663
        %v3365 = vunpack.c.h.b16 %v663
        %v3366 = vunpack.c.l.b16 %v664
        %v3367 = vunpack.c.h.b16 %v664
        %v3368 = vunpack.c.l.b16 %v665
        %v3369 = vunpack.c.h.b16 %v665
        %v3370 = vunpack.c.l.b16 %v666
        %v3371 = vunpack.c.h.b16 %v666
        %v3372 = vunpack.c.l.b16 %v667
        %v3373 = vunpack.c.h.b16 %v667
        %v3374 = vunpack.c.l.b16 %v668
        %v3375 = vunpack.c.h.b16 %v668
        %v3376 = vunpack.c.l.b16 %v669
        %v3377 = vunpack.c.h.b16 %v669
        %v3378 = vunpack.c.l.b16 %v670
        %v3379 = vunpack.c.h.b16 %v670
        %v3380 = vunpack.c.l.b16 %v671
        %v3381 = vunpack.c.h.b16 %v671
        %v3382 = vunpack.c.l.b16 %v672
        %v3383 = vunpack.c.h.b16 %v672
        %v3384 = vunpack.c.l.b16 %v673
        %v3385 = vunpack.c.h.b16 %v673
        %v3386 = vunpack.c.l.b16 %v674
        %v3387 = vunpack.c.h.b16 %v674
        %v3388 = vunpack.c.l.b16 %v675
        %v3389 = vunpack.c.h.b16 %v675
        %v3390 = vunpack.c.l.b16 %v676
        %v3391 = vunpack.c.h.b16 %v676
        %v3392 = vunpack.c.l.b16 %v677
        %v3393 = vunpack.c.h.b16 %v677
        %v3394 = vunpack.c.l.b16 %v678
        %v3395 = vunpack.c.h.b16 %v678
        %v3396 = vunpack.c.l.b16 %v679
        %v3397 = vunpack.c.h.b16 %v679
        %v3398 = vunpack.c.l.b16 %v680
        %v3399 = vunpack.c.h.b16 %v680
        %v3400 = vunpack.c.l.b16 %v681
        %v3401 = vunpack.c.h.b16 %v681
        %v3402 = vunpack.c.l.b16 %v682
        %v3403 = vunpack.c.h.b16 %v682
        %v3404 = vunpack.c.l.b16 %v683
        %v3405 = vunpack.c.h.b16 %v683
        %v3406 = vunpack.c.l.b16 %v684
        %v3407 = vunpack.c.h.b16 %v684
        %v3408 = vunpack.c.l.b16 %v685
        %v3409 = vunpack.c.h.b16 %v685
        %v3410 = vunpack.c.l.b16 %v686
        %v3411 = vunpack.c.h.b16 %v686
        %v3412 = vunpack.c.l.b16 %v687
        %v3413 = vunpack.c.h.b16 %v687
        %v3414 = vunpack.c.l.b16 %v688
        %v3415 = vunpack.c.h.b16 %v688
        %v3416 = vunpack.c.l.b16 %v689
        %v3417 = vunpack.c.h.b16 %v689
        %v3418 = vunpack.c.l.b16 %v690
        %v3419 = vunpack.c.h.b16 %v690
        %v3420 = vunpack.c.l.b16 %v691
        %v3421 = vunpack.c.h.b16 %v691
        %v3422 = vunpack.c.l.b16 %v692
        %v3423 = vunpack.c.h.b16 %v692
        %v3424 = vunpack.c.l.b16 %v693
        %v3425 = vunpack.c.h.b16 %v693
        %v3426 = vunpack.c.l.b16 %v694
        %v3427 = vunpack.c.h.b16 %v694
        %v3428 = vunpack.c.l.b16 %v695
        %v3429 = vunpack.c.h.b16 %v695
        %v3430 = vunpack.c.l.b16 %v696
        %v3431 = vunpack.c.h.b16 %v696
        %v3432 = vunpack.c.l.b16 %v697
        %v3433 = vunpack.c.h.b16 %v697
        %v3434 = vunpack.c.l.b16 %v698
        %v3435 = vunpack.c.h.b16 %v698
        %v3436 = vunpack.c.l.b16 %v699
        %v3437 = vunpack.c.h.b16 %v699
        %v3438 = vunpack.c.l.b16 %v700
        %v3439 = vunpack.c.h.b16 %v700
        %v3440 = vunpack.c.l.b16 %v701
        %v3441 = vunpack.c.h.b16 %v701
        %v3442 = vunpack.c.l.b16 %v702
        %v3443 = vunpack.c.h.b16 %v702
        %v3444 = vunpack.c.l.b16 %v703
        %v3445 = vunpack.c.h.b16 %v703
        %v3446 = vunpack.c.l.b16 %v704
        %v3447 = vunpack.c.h.b16 %v704
        %v3448 = vunpack.c.l.b16 %v705
        %v3449 = vunpack.c.h.b16 %v705
        %v3450 = vunpack.c.l.b16 %v706
        %v3451 = vunpack.c.h.b16 %v706
        %v3452 = vunpack.c.l.b16 %v707
        %v3453 = vunpack.c.h.b16 %v707
        %v3454 = vunpack.c.l.b16 %v708
        %v3455 = vunpack.c.h.b16 %v708
        %v3456 = vunpack.c.l.b16 %v709
        %v3457 = vunpack.c.h.b16 %v709
        %v3458 = vunpack.c.l.b16 %v710
        %v3459 = vunpack.c.h.b16 %v710
        %v3460 = vunpack.c.l.b16 %v711
        %v3461 = vunpack.c.h.b16 %v711
        %v3462 = vunpack.c.l.b16 %v712
        %v3463 = vunpack.c.h.b16 %v712
        %v3464 = vunpack.c.l.b16 %v713
        %v3465 = vunpack.c.h.b16 %v713
        %v3466 = vunpack.c.l.b16 %v714
        %v3467 = vunpack.c.h.b16 %v714
        %v3468 = vunpack.c.l.b16 %v715
        %v3469 = vunpack.c.h.b16 %v715
        %v3470 = vunpack.c.l.b16 %v716
        %v3471 = vunpack.c.h.b16 %v716
        %v3472 = vunpack.c.l.b16 %v717
        %v3473 = vunpack.c.h.b16 %v717
        %v3474 = vunpack.c.l.b16 %v718
        %v3475 = vunpack.c.h.b16 %v718
        %v3476 = vunpack.c.l.b16 %v719
        %v3477 = vunpack.c.h.b16 %v719
        %v3478 = vunpack.c.l.b16 %v720
        %v3479 = vunpack.c.h.b16 %v720
        %v3480 = vunpack.c.l.b16 %v721
        %v3481 = vunpack.c.h.b16 %v721
        %v3482 = vunpack.c.l.b16 %v722
        %v3483 = vunpack.c.h.b16 %v722
        %v3484 = vunpack.c.l.b16 %v723
        %v3485 = vunpack.c.h.b16 %v723
        %v3486 = vunpack.c.l.b16 %v724
        %v3487 = vunpack.c.h.b16 %v724
        %v3488 = vunpack.c.l.b16 %v725
        %v3489 = vunpack.c.h.b16 %v725
        %v3490 = vunpack.c.l.b16 %v726
        %v3491 = vunpack.c.h.b16 %v726
        %v3492 = vunpack.c.l.b16 %v727
        %v3493 = vunpack.c.h.b16 %v727
        %v3494 = vunpack.c.l.b16 %v728
        %v3495 = vunpack.c.h.b16 %v728
        %v3496 = vunpack.c.l.b16 %v729
        %v3497 = vunpack.c.h.b16 %v729
        %v3498 = vunpack.c.l.b16 %v730
        %v3499 = vunpack.c.h.b16 %v730
        %v3500 = vunpack.c.l.b16 %v731
        %v3501 = vunpack.c.h.b16 %v731
        %v3502 = vunpack.c.l.b16 %v732
        %v3503 = vunpack.c.h.b16 %v732
        %v3504 = vunpack.c.l.b16 %v733
        %v3505 = vunpack.c.h.b16 %v733
        %v3506 = vunpack.c.l.b16 %v734
        %v3507 = vunpack.c.h.b16 %v734
        %v3508 = vunpack.c.l.b16 %v735
        %v3509 = vunpack.c.h.b16 %v735
        %v3510 = vunpack.c.l.b16 %v736
        %v3511 = vunpack.c.h.b16 %v736
        %v3512 = vunpack.c.l.b16 %v737
        %v3513 = vunpack.c.h.b16 %v737
        %v3514 = vunpack.c.l.b16 %v738
        %v3515 = vunpack.c.h.b16 %v738
        %v3516 = vunpack.c.l.b16 %v739
        %v3517 = vunpack.c.h.b16 %v739
        %v3518 = vunpack.c.l.b16 %v740
        %v3519 = vunpack.c.h.b16 %v740
        %v3520 = vunpack.c.l.b16 %v741
        %v3521 = vunpack.c.h.b16 %v741
        %v3522 = vunpack.c.l.b16 %v742
        %v3523 = vunpack.c.h.b16 %v742
        %v3524 = vunpack.c.l.b16 %v743
        %v3525 = vunpack.c.h.b16 %v743
        %v3526 = vunpack.c.l.b16 %v744
        %v3527 = vunpack.c.h.b16 %v744
        %v3528 = vunpack.c.l.b16 %v745
        %v3529 = vunpack.c.h.b16 %v745
        %v3530 = vunpack.c.l.b16 %v746
        %v3531 = vunpack.c.h.b16 %v746
        %v3532 = vunpack.c.l.b16 %v747
        %v3533 = vunpack.c.h.b16 %v747
        %v3534 = vunpack.c.l.b16 %v748
        %v3535 = vunpack.c.h.b16 %v748
        %v3536 = vunpack.c.l.b16 %v749
        %v3537 = vunpack.c.h.b16 %v749
        %v3538 = vunpack.c.l.b16 %v750
        %v3539 = vunpack.c.h.b16 %v750
        %v3540 = vunpack.c.l.b16 %v751
        %v3541 = vunpack.c.h.b16 %v751
        %v3542 = vunpack.c.l.b16 %v752
        %v3543 = vunpack.c.h.b16 %v752
        %v3544 = vunpack.c.l.b16 %v753
        %v3545 = vunpack.c.h.b16 %v753
        %v3546 = vunpack.c.l.b16 %v754
        %v3547 = vunpack.c.h.b16 %v754
        %v3548 = vunpack.c.l.b16 %v755
        %v3549 = vunpack.c.h.b16 %v755
        %v3550 = vunpack.c.l.b16 %v756
        %v3551 = vunpack.c.h.b16 %v756
        %v3552 = vunpack.c.l.b16 %v757
        %v3553 = vunpack.c.h.b16 %v757
        %v3554 = vunpack.c.l.b16 %v758
        %v3555 = vunpack.c.h.b16 %v758
        %v3556 = vunpack.c.l.b16 %v759
        %v3557 = vunpack.c.h.b16 %v759
        %v3558 = vunpack.c.l.b16 %v760
        %v3559 = vunpack.c.h.b16 %v760
        %v3560 = vunpack.c.l.b16 %v761
        %v3561 = vunpack.c.h.b16 %v761
        %v3562 = vunpack.c.l.b16 %v762
        %v3563 = vunpack.c.h.b16 %v762
        %v3564 = vunpack.c.l.b16 %v763
        %v3565 = vunpack.c.h.b16 %v763
        %v3566 = vunpack.c.l.b16 %v764
        %v3567 = vunpack.c.h.b16 %v764
        %v3568 = vunpack.c.l.b16 %v765
        %v3569 = vunpack.c.h.b16 %v765
        %v3570 = vunpack.c.l.b16 %v766
        %v3571 = vunpack.c.h.b16 %v766
        %v3572 = vunpack.c.l.b16 %v767
        %v3573 = vunpack.c.h.b16 %v767
        %v3574 = vunpack.c.l.b16 %v768
        %v3575 = vunpack.c.h.b16 %v768
        %v3576 = vunpack.c.l.b16 %v769
        %v3577 = vunpack.c.h.b16 %v769
        %v3578 = vunpack.c.l.b16 %v770
        %v3579 = vunpack.c.h.b16 %v770
        %v3580 = vunpack.c.l.b16 %v771
        %v3581 = vunpack.c.h.b16 %v771
        %v3582 = vunpack.c.l.b16 %v772
        %v3583 = vunpack.c.h.b16 %v772
        %v3584 = vunpack.c.l.b16 %v773
        %v3585 = vunpack.c.h.b16 %v773
        %v3586 = vunpack.c.l.b16 %v774
        %v3587 = vunpack.c.h.b16 %v774
        %v3588 = vunpack.c.l.b16 %v775
        %v3589 = vunpack.c.h.b16 %v775
        %v3590 = vunpack.c.l.b16 %v776
        %v3591 = vunpack.c.h.b16 %v776
        %v3592 = vunpack.c.l.b16 %v777
        %v3593 = vunpack.c.h.b16 %v777
        %v3594 = vunpack.c.l.b16 %v778
        %v3595 = vunpack.c.h.b16 %v778
        %v3596 = vunpack.c.l.b16 %v779
        %v3597 = vunpack.c.h.b16 %v779
        %v3598 = vunpack.c.l.b16 %v780
        %v3599 = vunpack.c.h.b16 %v780
        %v3600 = vunpack.c.l.b16 %v781
        %v3601 = vunpack.c.h.b16 %v781
        %v3602 = vunpack.c.l.b16 %v782
        %v3603 = vunpack.c.h.b16 %v782
        %v3604 = vunpack.c.l.b16 %v783
        %v3605 = vunpack.c.h.b16 %v783
        %v3606 = vunpack.c.l.b16 %v784
        %v3607 = vunpack.c.h.b16 %v784
        %v3608 = vunpack.c.l.b16 %v785
        %v3609 = vunpack.c.h.b16 %v785
        %v3610 = vunpack.c.l.b16 %v786
        %v3611 = vunpack.c.h.b16 %v786
        %v3612 = vunpack.c.l.b16 %v787
        %v3613 = vunpack.c.h.b16 %v787
        %v3614 = vunpack.c.l.b16 %v788
        %v3615 = vunpack.c.h.b16 %v788
        %v3616 = vunpack.c.l.b16 %v789
        %v3617 = vunpack.c.h.b16 %v789
        %v3618 = vunpack.c.l.b16 %v790
        %v3619 = vunpack.c.h.b16 %v790
        %v3620 = vunpack.c.l.b16 %v791
        %v3621 = vunpack.c.h.b16 %v791
        %v3622 = vunpack.c.l.b16 %v792
        %v3623 = vunpack.c.h.b16 %v792
        %v3624 = vunpack.c.l.b16 %v793
        %v3625 = vunpack.c.h.b16 %v793
        %v3626 = vunpack.c.l.b16 %v794
        %v3627 = vunpack.c.h.b16 %v794
        %v3628 = vunpack.c.l.b16 %v795
        %v3629 = vunpack.c.h.b16 %v795
        %v3630 = vunpack.c.l.b16 %v796
        %v3631 = vunpack.c.h.b16 %v796
        %v3632 = vunpack.c.l.b16 %v797
        %v3633 = vunpack.c.h.b16 %v797
        %v3634 = vunpack.c.l.b16 %v798
        %v3635 = vunpack.c.h.b16 %v798
        %v3636 = vunpack.c.l.b16 %v799
        %v3637 = vunpack.c.h.b16 %v799
        %v3638 = vunpack.c.l.b16 %v800
        %v3639 = vunpack.c.h.b16 %v800
        %v3640 = vunpack.c.l.b16 %v801
        %v3641 = vunpack.c.h.b16 %v801
        %v3642 = vunpack.c.l.b16 %v802
        %v3643 = vunpack.c.h.b16 %v802
        %v3644 = vunpack.c.l.b16 %v803
        %v3645 = vunpack.c.h.b16 %v803
        %v3646 = vunpack.c.l.b16 %v804
        %v3647 = vunpack.c.h.b16 %v804
        %v3648 = vunpack.c.l.b16 %v805
        %v3649 = vunpack.c.h.b16 %v805
        %v3650 = vunpack.c.l.b16 %v806
        %v3651 = vunpack.c.h.b16 %v806
        %v3652 = vunpack.c.l.b16 %v807
        %v3653 = vunpack.c.h.b16 %v807
        %v3654 = vunpack.c.l.b16 %v808
        %v3655 = vunpack.c.h.b16 %v808
        %v3656 = vunpack.c.l.b16 %v809
        %v3657 = vunpack.c.h.b16 %v809
        %v3658 = vunpack.c.l.b16 %v810
        %v3659 = vunpack.c.h.b16 %v810
        %v3660 = vunpack.c.l.b16 %v811
        %v3661 = vunpack.c.h.b16 %v811
        %v3662 = vunpack.c.l.b16 %v812
        %v3663 = vunpack.c.h.b16 %v812
        %v3664 = vunpack.c.l.b16 %v813
        %v3665 = vunpack.c.h.b16 %v813
        %v3666 = vunpack.c.l.b16 %v814
        %v3667 = vunpack.c.h.b16 %v814
        %v3668 = vunpack.c.l.b16 %v815
        %v3669 = vunpack.c.h.b16 %v815
        %v3670 = vunpack.c.l.b16 %v816
        %v3671 = vunpack.c.h.b16 %v816
        %v3672 = vunpack.c.l.b16 %v817
        %v3673 = vunpack.c.h.b16 %v817
        %v3674 = vunpack.c.l.b16 %v818
        %v3675 = vunpack.c.h.b16 %v818
        %v3676 = vunpack.c.l.b16 %v819
        %v3677 = vunpack.c.h.b16 %v819
        %v3678 = vunpack.c.l.b16 %v820
        %v3679 = vunpack.c.h.b16 %v820
        %v3680 = vunpack.c.l.b16 %v821
        %v3681 = vunpack.c.h.b16 %v821
        %v3682 = vunpack.c.l.b16 %v822
        %v3683 = vunpack.c.h.b16 %v822
        %v3684 = vunpack.c.l.b16 %v823
        %v3685 = vunpack.c.h.b16 %v823
        %v3686 = vunpack.c.l.b16 %v824
        %v3687 = vunpack.c.h.b16 %v824
        %v3688 = vunpack.c.l.b16 %v825
        %v3689 = vunpack.c.h.b16 %v825
        %v3690 = vunpack.c.l.b16 %v826
        %v3691 = vunpack.c.h.b16 %v826
        %v3692 = vunpack.c.l.b16 %v827
        %v3693 = vunpack.c.h.b16 %v827
        %v3694 = vunpack.c.l.b16 %v828
        %v3695 = vunpack.c.h.b16 %v828
        %v3696 = vunpack.c.l.b16 %v829
        %v3697 = vunpack.c.h.b16 %v829
        %v3698 = vunpack.c.l.b16 %v830
        %v3699 = vunpack.c.h.b16 %v830
        %v3700 = vunpack.c.l.b16 %v831
        %v3701 = vunpack.c.h.b16 %v831
        %v3702 = vunpack.c.l.b16 %v832
        %v3703 = vunpack.c.h.b16 %v832
        %v3704 = vunpack.c.l.b16 %v833
        %v3705 = vunpack.c.h.b16 %v833
        %v3706 = vunpack.c.l.b16 %v834
        %v3707 = vunpack.c.h.b16 %v834
        %v3708 = vunpack.c.l.b16 %v835
        %v3709 = vunpack.c.h.b16 %v835
        %v3710 = vunpack.c.l.b16 %v836
        %v3711 = vunpack.c.h.b16 %v836
        %v3712 = vunpack.c.l.b16 %v837
        %v3713 = vunpack.c.h.b16 %v837
        %v3714 = vunpack.c.l.b16 %v838
        %v3715 = vunpack.c.h.b16 %v838
        %v3716 = vunpack.c.l.b16 %v839
        %v3717 = vunpack.c.h.b16 %v839
        %v3718 = vunpack.c.l.b16 %v840
        %v3719 = vunpack.c.h.b16 %v840
        %v3720 = vunpack.c.l.b16 %v841
        %v3721 = vunpack.c.h.b16 %v841
        %v3722 = vunpack.c.l.b16 %v842
        %v3723 = vunpack.c.h.b16 %v842
        %v3724 = vunpack.c.l.b16 %v843
        %v3725 = vunpack.c.h.b16 %v843
        %v3726 = vunpack.c.l.b16 %v844
        %v3727 = vunpack.c.h.b16 %v844
        %v3728 = vunpack.c.l.b16 %v845
        %v3729 = vunpack.c.h.b16 %v845
        %v3730 = vunpack.c.l.b16 %v846
        %v3731 = vunpack.c.h.b16 %v846
        %v3732 = vunpack.c.l.b16 %v847
        %v3733 = vunpack.c.h.b16 %v847
        %v3734 = vunpack.c.l.b16 %v848
        %v3735 = vunpack.c.h.b16 %v848
        %v3736 = vunpack.c.l.b16 %v849
        %v3737 = vunpack.c.h.b16 %v849
        %v3738 = vunpack.c.l.b16 %v850
        %v3739 = vunpack.c.h.b16 %v850
        %v3740 = vunpack.c.l.b16 %v851
        %v3741 = vunpack.c.h.b16 %v851
        %v3742 = vunpack.c.l.b16 %v852
        %v3743 = vunpack.c.h.b16 %v852
        %v3744 = vunpack.c.l.b16 %v853
        %v3745 = vunpack.c.h.b16 %v853
        %v3746 = vunpack.c.l.b16 %v854
        %v3747 = vunpack.c.h.b16 %v854
        %v3748 = vunpack.c.l.b16 %v855
        %v3749 = vunpack.c.h.b16 %v855
        %v3750 = vunpack.c.l.b16 %v856
        %v3751 = vunpack.c.h.b16 %v856
        %v3752 = vunpack.c.l.b16 %v857
        %v3753 = vunpack.c.h.b16 %v857
        %v3754 = vunpack.c.l.b16 %v858
        %v3755 = vunpack.c.h.b16 %v858
        %v3756 = vunpack.c.l.b16 %v859
        %v3757 = vunpack.c.h.b16 %v859
        %v3758 = vunpack.c.l.b16 %v860
        %v3759 = vunpack.c.h.b16 %v860
        %v3760 = vunpack.c.l.b16 %v861
        %v3761 = vunpack.c.h.b16 %v861
        %v3762 = vunpack.c.l.b16 %v862
        %v3763 = vunpack.c.h.b16 %v862
        %v3764 = vunpack.c.l.b16 %v863
        %v3765 = vunpack.c.h.b16 %v863
        %v3766 = vunpack.c.l.b16 %v864
        %v3767 = vunpack.c.h.b16 %v864
        %v3768 = vunpack.c.l.b16 %v865
        %v3769 = vunpack.c.h.b16 %v865
        %v3770 = vunpack.c.l.b16 %v866
        %v3771 = vunpack.c.h.b16 %v866
        %v3772 = vunpack.c.l.b16 %v867
        %v3773 = vunpack.c.h.b16 %v867
        %v3774 = vunpack.c.l.b16 %v868
        %v3775 = vunpack.c.h.b16 %v868
        %v3776 = vunpack.c.l.b16 %v869
        %v3777 = vunpack.c.h.b16 %v869
        %v3778 = vunpack.c.l.b16 %v870
        %v3779 = vunpack.c.h.b16 %v870
        %v3780 = vunpack.c.l.b16 %v871
        %v3781 = vunpack.c.h.b16 %v871
        %v3782 = vunpack.c.l.b16 %v872
        %v3783 = vunpack.c.h.b16 %v872
        %v3784 = vunpack.c.l.b16 %v873
        %v3785 = vunpack.c.h.b16 %v873
        %v3786 = vunpack.c.l.b16 %v874
        %v3787 = vunpack.c.h.b16 %v874
        %v3788 = vunpack.c.l.b16 %v875
        %v3789 = vunpack.c.h.b16 %v875
        %v3790 = vunpack.c.l.b16 %v876
        %v3791 = vunpack.c.h.b16 %v876
        %v3792 = vunpack.c.l.b16 %v877
        %v3793 = vunpack.c.h.b16 %v877
        %v3794 = vunpack.c.l.b16 %v878
        %v3795 = vunpack.c.h.b16 %v878
        %v3796 = vunpack.c.l.b16 %v879
        %v3797 = vunpack.c.h.b16 %v879
        %v3798 = vunpack.c.l.b16 %v880
        %v3799 = vunpack.c.h.b16 %v880
        %v3800 = vunpack.c.l.b16 %v881
        %v3801 = vunpack.c.h.b16 %v881
        %v3802 = vunpack.c.l.b16 %v882
        %v3803 = vunpack.c.h.b16 %v882
        %v3804 = vunpack.c.l.b16 %v883
        %v3805 = vunpack.c.h.b16 %v883
        %v3806 = vunpack.c.l.b16 %v884
        %v3807 = vunpack.c.h.b16 %v884
        %v3808 = vunpack.c.l.b16 %v885
        %v3809 = vunpack.c.h.b16 %v885
        %v3810 = vunpack.c.l.b16 %v886
        %v3811 = vunpack.c.h.b16 %v886
        %v3812 = vunpack.c.l.b16 %v887
        %v3813 = vunpack.c.h.b16 %v887
        %v3814 = vunpack.c.l.b16 %v888
        %v3815 = vunpack.c.h.b16 %v888
        %v3816 = vunpack.c.l.b16 %v889
        %v3817 = vunpack.c.h.b16 %v889
        %v3818 = vunpack.c.l.b16 %v890
        %v3819 = vunpack.c.h.b16 %v890
        %v3820 = vunpack.c.l.b16 %v891
        %v3821 = vunpack.c.h.b16 %v891
        %v3822 = vunpack.c.l.b16 %v892
        %v3823 = vunpack.c.h.b16 %v892
        %v3824 = vunpack.c.l.b16 %v893
        %v3825 = vunpack.c.h.b16 %v893
        %v3826 = vunpack.c.l.b16 %v894
        %v3827 = vunpack.c.h.b16 %v894
        %v3828 = vunpack.c.l.b16 %v895
        %v3829 = vunpack.c.h.b16 %v895
        %v3830 = vunpack.c.l.b16 %v896
        %v3831 = vunpack.c.h.b16 %v896
        %v3832 = vunpack.c.l.b16 %v897
        %v3833 = vunpack.c.h.b16 %v897
        %v3834 = vunpack.c.l.b16 %v898
        %v3835 = vunpack.c.h.b16 %v898
        %v3836 = vunpack.c.l.b16 %v899
        %v3837 = vunpack.c.h.b16 %v899
        %v3838 = vunpack.c.l.b16 %v900
        %v3839 = vunpack.c.h.b16 %v900
        %v3840 = vunpack.c.l.b16 %v901
        %v3841 = vunpack.c.h.b16 %v901
        %v3842 = vunpack.c.l.b16 %v902
        %v3843 = vunpack.c.h.b16 %v902
        %v3844 = vunpack.c.l.b16 %v903
        %v3845 = vunpack.c.h.b16 %v903
        %v3846 = vunpack.c.l.b16 %v904
        %v3847 = vunpack.c.h.b16 %v904
        %v3848 = vunpack.c.l.b16 %v905
        %v3849 = vunpack.c.h.b16 %v905
        %v3850 = vunpack.c.l.b16 %v906
        %v3851 = vunpack.c.h.b16 %v906
        %v3852 = vunpack.c.l.b16 %v907
        %v3853 = vunpack.c.h.b16 %v907
        %v3854 = vunpack.c.l.b16 %v908
        %v3855 = vunpack.c.h.b16 %v908
        %v3856 = vunpack.c.l.b16 %v909
        %v3857 = vunpack.c.h.b16 %v909
        %v3858 = vunpack.c.l.b16 %v910
        %v3859 = vunpack.c.h.b16 %v910
        %v3860 = vunpack.c.l.b16 %v911
        %v3861 = vunpack.c.h.b16 %v911
        %v3862 = vunpack.c.l.b16 %v912
        %v3863 = vunpack.c.h.b16 %v912
        %v3864 = vunpack.c.l.b16 %v913
        %v3865 = vunpack.c.h.b16 %v913
        %v3866 = vunpack.c.l.b16 %v914
        %v3867 = vunpack.c.h.b16 %v914
        %v3868 = vunpack.c.l.b16 %v915
        %v3869 = vunpack.c.h.b16 %v915
        %v3870 = vunpack.c.l.b16 %v916
        %v3871 = vunpack.c.h.b16 %v916
        %v3872 = vunpack.c.l.b16 %v917
        %v3873 = vunpack.c.h.b16 %v917
        %v3874 = vunpack.c.l.b16 %v918
        %v3875 = vunpack.c.h.b16 %v918
        %v3876 = vunpack.c.l.b16 %v919
        %v3877 = vunpack.c.h.b16 %v919
        %v3878 = vunpack.c.l.b16 %v920
        %v3879 = vunpack.c.h.b16 %v920
        %v3880 = vunpack.c.l.b16 %v921
        %v3881 = vunpack.c.h.b16 %v921
        %v3882 = vunpack.c.l.b16 %v922
        %v3883 = vunpack.c.h.b16 %v922
        %v3884 = vunpack.c.l.b16 %v923
        %v3885 = vunpack.c.h.b16 %v923
        %v3886 = vunpack.c.l.b16 %v924
        %v3887 = vunpack.c.h.b16 %v924
        %v3888 = vunpack.c.l.b16 %v925
        %v3889 = vunpack.c.h.b16 %v925
        %v3890 = vunpack.c.l.b16 %v926
        %v3891 = vunpack.c.h.b16 %v926
        %v3892 = vunpack.c.l.b16 %v927
        %v3893 = vunpack.c.h.b16 %v927
        %v3894 = vunpack.c.l.b16 %v928
        %v3895 = vunpack.c.h.b16 %v928
        %v3896 = vunpack.c.l.b16 %v929
        %v3897 = vunpack.c.h.b16 %v929
        %v3898 = vunpack.c.l.b16 %v930
        %v3899 = vunpack.c.h.b16 %v930
        %v3900 = vunpack.c.l.b16 %v931
        %v3901 = vunpack.c.h.b16 %v931
        %v3902 = vunpack.c.l.b16 %v932
        %v3903 = vunpack.c.h.b16 %v932
        %v3904 = vunpack.c.l.b16 %v933
        %v3905 = vunpack.c.h.b16 %v933
        %v3906 = vunpack.c.l.b16 %v934
        %v3907 = vunpack.c.h.b16 %v934
        %v3908 = vunpack.c.l.b16 %v935
        %v3909 = vunpack.c.h.b16 %v935
        %v3910 = vunpack.c.l.b16 %v936
        %v3911 = vunpack.c.h.b16 %v936
        %v3912 = vunpack.c.l.b16 %v937
        %v3913 = vunpack.c.h.b16 %v937
        %v3914 = vunpack.c.l.b16 %v938
        %v3915 = vunpack.c.h.b16 %v938
        %v3916 = vunpack.c.l.b16 %v939
        %v3917 = vunpack.c.h.b16 %v939
        %v3918 = vunpack.c.l.b16 %v940
        %v3919 = vunpack.c.h.b16 %v940
        %v3920 = vunpack.c.l.b16 %v941
        %v3921 = vunpack.c.h.b16 %v941
        %v3922 = vunpack.c.l.b16 %v942
        %v3923 = vunpack.c.h.b16 %v942
        %v3924 = vunpack.c.l.b16 %v943
        %v3925 = vunpack.c.h.b16 %v943
        %v3926 = vunpack.c.l.b16 %v944
        %v3927 = vunpack.c.h.b16 %v944
        %v3928 = vunpack.c.l.b16 %v945
        %v3929 = vunpack.c.h.b16 %v945
        %v3930 = vunpack.c.l.b16 %v946
        %v3931 = vunpack.c.h.b16 %v946
        %v3932 = vunpack.c.l.b16 %v947
        %v3933 = vunpack.c.h.b16 %v947
        %v3934 = vunpack.c.l.b16 %v948
        %v3935 = vunpack.c.h.b16 %v948
        %v3936 = vunpack.c.l.b16 %v949
        %v3937 = vunpack.c.h.b16 %v949
        %v3938 = vunpack.c.l.b16 %v950
        %v3939 = vunpack.c.h.b16 %v950
        %v3940 = vunpack.c.l.b16 %v951
        %v3941 = vunpack.c.h.b16 %v951
        %v3942 = vunpack.c.l.b16 %v952
        %v3943 = vunpack.c.h.b16 %v952
        %v3944 = vunpack.c.l.b16 %v953
        %v3945 = vunpack.c.h.b16 %v953
        %v3946 = vunpack.c.l.b16 %v954
        %v3947 = vunpack.c.h.b16 %v954
        %v3948 = vunpack.c.l.b16 %v955
        %v3949 = vunpack.c.h.b16 %v955
        %v3950 = vunpack.c.l.b16 %v956
        %v3951 = vunpack.c.h.b16 %v956
        %v3952 = vunpack.c.l.b16 %v957
        %v3953 = vunpack.c.h.b16 %v957
        %v3954 = vunpack.c.l.b16 %v958
        %v3955 = vunpack.c.h.b16 %v958
        %v3956 = vunpack.c.l.b16 %v959
        %v3957 = vunpack.c.h.b16 %v959
        %v3958 = vunpack.c.l.b16 %v960
        %v3959 = vunpack.c.h.b16 %v960
        %v3960 = vunpack.c.l.b16 %v961
        %v3961 = vunpack.c.h.b16 %v961
        %v3962 = vunpack.c.l.b16 %v962
        %v3963 = vunpack.c.h.b16 %v962
        %v3964 = vunpack.c.l.b16 %v963
        %v3965 = vunpack.c.h.b16 %v963
        %v3966 = vunpack.c.l.b16 %v964
        %v3967 = vunpack.c.h.b16 %v964
        %v3968 = vunpack.c.l.b16 %v965
        %v3969 = vunpack.c.h.b16 %v965
        %v3970 = vunpack.c.l.b16 %v966
        %v3971 = vunpack.c.h.b16 %v966
        %v3972 = vunpack.c.l.b16 %v967
        %v3973 = vunpack.c.h.b16 %v967
        %v3974 = vunpack.c.l.b16 %v968
        %v3975 = vunpack.c.h.b16 %v968
        %v3976 = vunpack.c.l.b16 %v969
        %v3977 = vunpack.c.h.b16 %v969
        %v3978 = vunpack.c.l.b16 %v970
        %v3979 = vunpack.c.h.b16 %v970
        %v3980 = vunpack.c.l.b16 %v971
        %v3981 = vunpack.c.h.b16 %v971
        %v3982 = vunpack.c.l.b16 %v972
        %v3983 = vunpack.c.h.b16 %v972
        %v3984 = vunpack.c.l.b16 %v973
        %v3985 = vunpack.c.h.b16 %v973
        %v3986 = vunpack.c.l.b16 %v974
        %v3987 = vunpack.c.h.b16 %v974
        %v3988 = vunpack.c.l.b16 %v975
        %v3989 = vunpack.c.h.b16 %v975
        %v3990 = vunpack.c.l.b16 %v976
        %v3991 = vunpack.c.h.b16 %v976
        %v3992 = vunpack.c.l.b16 %v977
        %v3993 = vunpack.c.h.b16 %v977
        %v3994 = vunpack.c.l.b16 %v978
        %v3995 = vunpack.c.h.b16 %v978
        %v3996 = vunpack.c.l.b16 %v979
        %v3997 = vunpack.c.h.b16 %v979
        %v3998 = vunpack.c.l.b16 %v980
        %v3999 = vunpack.c.h.b16 %v980
        %v4000 = vunpack.c.l.b16 %v981
        %v4001 = vunpack.c.h.b16 %v981
        %v4002 = vunpack.c.l.b16 %v982
        %v4003 = vunpack.c.h.b16 %v982
        %v4004 = vunpack.c.l.b16 %v983
        %v4005 = vunpack.c.h.b16 %v983
        %v4006 = vunpack.c.l.b16 %v984
        %v4007 = vunpack.c.h.b16 %v984
        %v4008 = vunpack.c.l.b16 %v985
        %v4009 = vunpack.c.h.b16 %v985
        %v4010 = vunpack.c.l.b16 %v986
        %v4011 = vunpack.c.h.b16 %v986
        %v4012 = vunpack.c.l.b16 %v987
        %v4013 = vunpack.c.h.b16 %v987
        %v4014 = vunpack.c.l.b16 %v988
        %v4015 = vunpack.c.h.b16 %v988
        %v4016 = vunpack.c.l.b16 %v989
        %v4017 = vunpack.c.h.b16 %v989
        %v4018 = vunpack.c.l.b16 %v990
        %v4019 = vunpack.c.h.b16 %v990
        %v4020 = vunpack.c.l.b16 %v991
        %v4021 = vunpack.c.h.b16 %v991
        %v4022 = vunpack.c.l.b16 %v992
        %v4023 = vunpack.c.h.b16 %v992
        %v4024 = vunpack.c.l.b16 %v993
        %v4025 = vunpack.c.h.b16 %v993
        %v4026 = vunpack.c.l.b16 %v994
        %v4027 = vunpack.c.h.b16 %v994
        %v4028 = vunpack.c.l.b16 %v995
        %v4029 = vunpack.c.h.b16 %v995
        %v4030 = vunpack.c.l.b16 %v996
        %v4031 = vunpack.c.h.b16 %v996
        %v4032 = vunpack.c.l.b16 %v997
        %v4033 = vunpack.c.h.b16 %v997
        %v4034 = vunpack.c.l.b16 %v998
        %v4035 = vunpack.c.h.b16 %v998
        %v4036 = vunpack.c.l.b16 %v999
        %v4037 = vunpack.c.h.b16 %v999
        %v4038 = vunpack.c.l.b16 %v1000
        %v4039 = vunpack.c.h.b16 %v1000
        %v4040 = vunpack.c.l.b16 %v1001
        %v4041 = vunpack.c.h.b16 %v1001
        %v4042 = vunpack.c.l.b16 %v1002
        %v4043 = vunpack.c.h.b16 %v1002
        %v4044 = vunpack.c.l.b16 %v1003
        %v4045 = vunpack.c.h.b16 %v1003
        %v4046 = vunpack.c.l.b16 %v1004
        %v4047 = vunpack.c.h.b16 %v1004
        %v4048 = vunpack.c.l.b16 %v1005
        %v4049 = vunpack.c.h.b16 %v1005
        %v4050 = vunpack.c.l.b16 %v1006
        %v4051 = vunpack.c.h.b16 %v1006
        %v4052 = vunpack.c.l.b16 %v1007
        %v4053 = vunpack.c.h.b16 %v1007
        %v4054 = vunpack.c.l.b16 %v1008
        %v4055 = vunpack.c.h.b16 %v1008
        %v4056 = vunpack.c.l.b16 %v1009
        %v4057 = vunpack.c.h.b16 %v1009
        %v4058 = vunpack.c.l.b16 %v1010
        %v4059 = vunpack.c.h.b16 %v1010
        %v4060 = vunpack.c.l.b16 %v1011
        %v4061 = vunpack.c.h.b16 %v1011
        %v4062 = vunpack.c.l.b16 %v1012
        %v4063 = vunpack.c.h.b16 %v1012
        %v4064 = vunpack.c.l.b16 %v1013
        %v4065 = vunpack.c.h.b16 %v1013
        %v4066 = vunpack.c.l.b16 %v1014
        %v4067 = vunpack.c.h.b16 %v1014
        %v4068 = vunpack.c.l.b16 %v1015
        %v4069 = vunpack.c.h.b16 %v1015
        %v4070 = vunpack.c.l.b16 %v1016
        %v4071 = vunpack.c.h.b16 %v1016
        %v4072 = vunpack.c.l.b16 %v1017
        %v4073 = vunpack.c.h.b16 %v1017
        %v4074 = vunpack.c.l.b16 %v1018
        %v4075 = vunpack.c.h.b16 %v1018
        %v4076 = vunpack.c.l.b16 %v1019
        %v4077 = vunpack.c.h.b16 %v1019
        %v4078 = vunpack.c.l.b16 %v1020
        %v4079 = vunpack.c.h.b16 %v1020
        %v4080 = vunpack.c.l.b16 %v1021
        %v4081 = vunpack.c.h.b16 %v1021
        %v4082 = vunpack.c.l.b16 %v1022
        %v4083 = vunpack.c.h.b16 %v1022
        %v4084 = vunpack.c.l.b16 %v1023
        %v4085 = vunpack.c.h.b16 %v1023
        %v4086 = vunpack.c.l.b16 %v1024
        %v4087 = vunpack.c.h.b16 %v1024
        %v4088 = vunpack.c.l.b16 %v1025
        %v4089 = vunpack.c.h.b16 %v1025
        %v4090 = vunpack.c.l.b16 %v1026
        %v4091 = vunpack.c.h.b16 %v1026
        %v4092 = vunpack.c.l.b16 %v1027
        %v4093 = vunpack.c.h.b16 %v1027
        %v4094 = vunpack.c.l.b16 %v1028
        %v4095 = vunpack.c.h.b16 %v1028
        %v4096 = vunpack.c.l.b16 %v1029
        %v4097 = vunpack.c.h.b16 %v1029
        %v4098 = vunpack.c.l.b16 %v1030
        %v4099 = vunpack.c.h.b16 %v1030
        %v4100 = vunpack.c.l.b16 %v1031
        %v4101 = vunpack.c.h.b16 %v1031
        %v4102 = vunpack.c.l.b16 %v1032
        %v4103 = vunpack.c.h.b16 %v1032
        %v4104 = vunpack.c.l.b16 %v1033
        %v4105 = vunpack.c.h.b16 %v1033
        %v4106 = vunpack.c.l.b16 %v1034
        %v4107 = vunpack.c.h.b16 %v1034
        %v4108 = vunpack.c.l.b16 %v1035
        %v4109 = vunpack.c.h.b16 %v1035
        %v4110 = vunpack.c.l.b16 %v1036
        %v4111 = vunpack.c.h.b16 %v1036
        %v4112 = vunpack.c.l.b16 %v1037
        %v4113 = vunpack.c.h.b16 %v1037
        %v4114 = vunpack.c.l.b16 %v1038
        %v4115 = vunpack.c.h.b16 %v1038
        %v4116 = vunpack.c.l.b16 %v1039
        %v4117 = vunpack.c.h.b16 %v1039
        %v4118 = vunpack.c.l.b16 %v1040
        %v4119 = vunpack.c.h.b16 %v1040
        %v4120 = vunpack.c.l.b16 %v1041
        %v4121 = vunpack.c.h.b16 %v1041
        %v4122 = vunpack.c.l.b16 %v1042
        %v4123 = vunpack.c.h.b16 %v1042
        %v4124 = vunpack.c.l.b16 %v1043
        %v4125 = vunpack.c.h.b16 %v1043
        %v4126 = vunpack.c.l.b16 %v1044
        %v4127 = vunpack.c.h.b16 %v1044
        %v4128 = vunpack.c.l.b16 %v1045
        %v4129 = vunpack.c.h.b16 %v1045
        %v4130 = vunpack.c.l.b16 %v1046
        %v4131 = vunpack.c.h.b16 %v1046
        %v4132 = vunpack.c.l.b16 %v1047
        %v4133 = vunpack.c.h.b16 %v1047
        %v4134 = vunpack.c.l.b16 %v1048
        %v4135 = vunpack.c.h.b16 %v1048
        %v4136 = vunpack.c.l.b16 %v1049
        %v4137 = vunpack.c.h.b16 %v1049
        %v4138 = vunpack.c.l.b16 %v1050
        %v4139 = vunpack.c.h.b16 %v1050
        %v4140 = vunpack.c.l.b16 %v1051
        %v4141 = vunpack.c.h.b16 %v1051
        %v4142 = vunpack.c.l.b16 %v1052
        %v4143 = vunpack.c.h.b16 %v1052
        %v4144 = vunpack.c.l.b16 %v1053
        %v4145 = vunpack.c.h.b16 %v1053
        %v4146 = vunpack.c.l.b16 %v1054
        %v4147 = vunpack.c.h.b16 %v1054
        %v4148 = vunpack.c.l.b16 %v1055
        %v4149 = vunpack.c.h.b16 %v1055
        %v4150 = vunpack.c.l.b16 %v1056
        %v4151 = vunpack.c.h.b16 %v1056
        %v4152 = vunpack.c.l.b16 %v1057
        %v4153 = vunpack.c.h.b16 %v1057
        %v4154 = vunpack.c.l.b16 %v1058
        %v4155 = vunpack.c.h.b16 %v1058
        %v4156 = vunpack.c.l.b16 %v1059
        %v4157 = vunpack.c.h.b16 %v1059
        %v4158 = vunpack.c.l.b16 %v1060
        %v4159 = vunpack.c.h.b16 %v1060
        %v4160 = vunpack.c.l.b16 %v1061
        %v4161 = vunpack.c.h.b16 %v1061
        %v4162 = vunpack.c.l.b16 %v1062
        %v4163 = vunpack.c.h.b16 %v1062
        %v4164 = vunpack.c.l.b16 %v1063
        %v4165 = vunpack.c.h.b16 %v1063
        %v4166 = vunpack.c.l.b16 %v1064
        %v4167 = vunpack.c.h.b16 %v1064
        %v4168 = vunpack.c.l.b16 %v1065
        %v4169 = vunpack.c.h.b16 %v1065
        %v4170 = vunpack.c.l.b16 %v1066
        %v4171 = vunpack.c.h.b16 %v1066
        %v4172 = vunpack.c.l.b16 %v1067
        %v4173 = vunpack.c.h.b16 %v1067
        %v4174 = vunpack.c.l.b16 %v1068
        %v4175 = vunpack.c.h.b16 %v1068
        %v4176 = vunpack.c.l.b16 %v1069
        %v4177 = vunpack.c.h.b16 %v1069
        %v4178 = vunpack.c.l.b16 %v1070
        %v4179 = vunpack.c.h.b16 %v1070
        %v4180 = vunpack.c.l.b16 %v1071
        %v4181 = vunpack.c.h.b16 %v1071
        %v4182 = vunpack.c.l.b16 %v1072
        %v4183 = vunpack.c.h.b16 %v1072
        %v4184 = vunpack.c.l.b16 %v1073
        %v4185 = vunpack.c.h.b16 %v1073
        %v4186 = vunpack.c.l.b16 %v1074
        %v4187 = vunpack.c.h.b16 %v1074
        %v4188 = vunpack.c.l.b16 %v1075
        %v4189 = vunpack.c.h.b16 %v1075
        %v4190 = vunpack.c.l.b16 %v1076
        %v4191 = vunpack.c.h.b16 %v1076
        %v4192 = vunpack.c.l.b16 %v1077
        %v4193 = vunpack.c.h.b16 %v1077
        %v4194 = vunpack.c.l.b16 %v1078
        %v4195 = vunpack.c.h.b16 %v1078
        %v4196 = vunpack.c.l.b16 %v1079
        %v4197 = vunpack.c.h.b16 %v1079
        %v4198 = vunpack.c.l.b16 %v1080
        %v4199 = vunpack.c.h.b16 %v1080
        %v4200 = vunpack.c.l.b16 %v1081
        %v4201 = vunpack.c.h.b16 %v1081
        %v4202 = vunpack.c.l.b16 %v1082
        %v4203 = vunpack.c.h.b16 %v1082
        %v4204 = vunpack.c.l.b16 %v1083
        %v4205 = vunpack.c.h.b16 %v1083
        %v4206 = vunpack.c.l.b16 %v1084
        %v4207 = vunpack.c.h.b16 %v1084
        %v4208 = vunpack.c.l.b16 %v1085
        %v4209 = vunpack.c.h.b16 %v1085
        %v4210 = vunpack.c.l.b16 %v1086
        %v4211 = vunpack.c.h.b16 %v1086
        %v4212 = vunpack.c.l.b16 %v1087
        %v4213 = vunpack.c.h.b16 %v1087
        %v4214 = vunpack.c.l.b16 %v1088
        %v4215 = vunpack.c.h.b16 %v1088
        %v4216 = vunpack.c.l.b16 %v1089
        %v4217 = vunpack.c.h.b16 %v1089
        %v4218 = vunpack.c.l.b16 %v1090
        %v4219 = vunpack.c.h.b16 %v1090
        %v4220 = vunpack.c.l.b16 %v1091
        %v4221 = vunpack.c.h.b16 %v1091
        %v4222 = vunpack.c.l.b16 %v1092
        %v4223 = vunpack.c.h.b16 %v1092
        %v4224 = vunpack.c.l.b16 %v1093
        %v4225 = vunpack.c.h.b16 %v1093
        %v4226 = vunpack.c.l.b16 %v1094
        %v4227 = vunpack.c.h.b16 %v1094
        %v4228 = vunpack.c.l.b16 %v1095
        %v4229 = vunpack.c.h.b16 %v1095
        %v4230 = vunpack.c.l.b16 %v1096
        %v4231 = vunpack.c.h.b16 %v1096
        %v4232 = vunpack.c.l.b16 %v1097
        %v4233 = vunpack.c.h.b16 %v1097
        %v4234 = vunpack.c.l.b16 %v1098
        %v4235 = vunpack.c.h.b16 %v1098
        %v4236 = vunpack.c.l.b16 %v1099
        %v4237 = vunpack.c.h.b16 %v1099
        %v4238 = vunpack.c.l.b16 %v1100
        %v4239 = vunpack.c.h.b16 %v1100
        %v4240 = vunpack.c.l.b16 %v1101
        %v4241 = vunpack.c.h.b16 %v1101
        %v4242 = vunpack.c.l.b16 %v1102
        %v4243 = vunpack.c.h.b16 %v1102
        %v4244 = vunpack.c.l.b16 %v1103
        %v4245 = vunpack.c.h.b16 %v1103
        %v4246 = vunpack.c.l.b16 %v1104
        %v4247 = vunpack.c.h.b16 %v1104
        %v4248 = vunpack.c.l.b16 %v1105
        %v4249 = vunpack.c.h.b16 %v1105
        %v4250 = vunpack.c.l.b16 %v1106
        %v4251 = vunpack.c.h.b16 %v1106
        %v4252 = vunpack.c.l.b16 %v1107
        %v4253 = vunpack.c.h.b16 %v1107
        %v4254 = vunpack.c.l.b16 %v1108
        %v4255 = vunpack.c.h.b16 %v1108
        %v4256 = vunpack.c.l.b16 %v1109
        %v4257 = vunpack.c.h.b16 %v1109
        %v4258 = vunpack.c.l.b16 %v1110
        %v4259 = vunpack.c.h.b16 %v1110
        %v4260 = vunpack.c.l.b16 %v1111
        %v4261 = vunpack.c.h.b16 %v1111
        %v4262 = vunpack.c.l.b16 %v1112
        %v4263 = vunpack.c.h.b16 %v1112
        %v4264 = vunpack.c.l.b16 %v1113
        %v4265 = vunpack.c.h.b16 %v1113
        %v4266 = vunpack.c.l.b16 %v1114
        %v4267 = vunpack.c.h.b16 %v1114
        %v4268 = vunpack.c.l.b16 %v1115
        %v4269 = vunpack.c.h.b16 %v1115
        %v4270 = vunpack.c.l.b16 %v1116
        %v4271 = vunpack.c.h.b16 %v1116
        %v4272 = vunpack.c.l.b16 %v1117
        %v4273 = vunpack.c.h.b16 %v1117
        %v4274 = vunpack.c.l.b16 %v1118
        %v4275 = vunpack.c.h.b16 %v1118
        %v4276 = vunpack.c.l.b16 %v1119
        %v4277 = vunpack.c.h.b16 %v1119
        %v4278 = vunpack.c.l.b16 %v1120
        %v4279 = vunpack.c.h.b16 %v1120
        %v4280 = vunpack.c.l.b16 %v1121
        %v4281 = vunpack.c.h.b16 %v1121
        %v4282 = vunpack.c.l.b16 %v1122
        %v4283 = vunpack.c.h.b16 %v1122
        %v4284 = vunpack.c.l.b16 %v1123
        %v4285 = vunpack.c.h.b16 %v1123
        %v4286 = vunpack.c.l.b16 %v1124
        %v4287 = vunpack.c.h.b16 %v1124
        %v4288 = vunpack.c.l.b16 %v1125
        %v4289 = vunpack.c.h.b16 %v1125
        %v4290 = vunpack.c.l.b16 %v1126
        %v4291 = vunpack.c.h.b16 %v1126
        %v4292 = vunpack.c.l.b16 %v1127
        %v4293 = vunpack.c.h.b16 %v1127
        %v4294 = vunpack.c.l.b16 %v1128
        %v4295 = vunpack.c.h.b16 %v1128
        %v4296 = vunpack.c.l.b16 %v1129
        %v4297 = vunpack.c.h.b16 %v1129
        %v4298 = vunpack.c.l.b16 %v1130
        %v4299 = vunpack.c.h.b16 %v1130
        %v4300 = vunpack.c.l.b16 %v1131
        %v4301 = vunpack.c.h.b16 %v1131
        %v4302 = vunpack.c.l.b16 %v1132
        %v4303 = vunpack.c.h.b16 %v1132
        %v4304 = vunpack.c.l.b16 %v1133
        %v4305 = vunpack.c.h.b16 %v1133
        %v4306 = vunpack.c.l.b16 %v1134
        %v4307 = vunpack.c.h.b16 %v1134
        %v4308 = vunpack.c.l.b16 %v1135
        %v4309 = vunpack.c.h.b16 %v1135
        %v4310 = vunpack.c.l.b16 %v1136
        %v4311 = vunpack.c.h.b16 %v1136
        %v4312 = vunpack.c.l.b16 %v1137
        %v4313 = vunpack.c.h.b16 %v1137
        %v4314 = vunpack.c.l.b16 %v1138
        %v4315 = vunpack.c.h.b16 %v1138
        %v4316 = vunpack.c.l.b16 %v1139
        %v4317 = vunpack.c.h.b16 %v1139
        %v4318 = vunpack.c.l.b16 %v1140
        %v4319 = vunpack.c.h.b16 %v1140
        %v4320 = vunpack.c.l.b16 %v1141
        %v4321 = vunpack.c.h.b16 %v1141
        %v4322 = vunpack.c.l.b16 %v1142
        %v4323 = vunpack.c.h.b16 %v1142
        %v4324 = vunpack.c.l.b16 %v1143
        %v4325 = vunpack.c.h.b16 %v1143
        %v4326 = vunpack.c.l.b16 %v1144
        %v4327 = vunpack.c.h.b16 %v1144
        %v4328 = vunpack.c.l.b16 %v1145
        %v4329 = vunpack.c.h.b16 %v1145
        %v4330 = vunpack.c.l.b16 %v1146
        %v4331 = vunpack.c.h.b16 %v1146
        %v4332 = vunpack.c.l.b16 %v1147
        %v4333 = vunpack.c.h.b16 %v1147
        %v4334 = vunpack.c.l.b16 %v1148
        %v4335 = vunpack.c.h.b16 %v1148
        %v4336 = vunpack.c.l.b16 %v1149
        %v4337 = vunpack.c.h.b16 %v1149
        %v4338 = vunpack.c.l.b16 %v1150
        %v4339 = vunpack.c.h.b16 %v1150
        %v4340 = vunpack.c.l.b16 %v1151
        %v4341 = vunpack.c.h.b16 %v1151
        %v4342 = vunpack.c.l.b16 %v1152
        %v4343 = vunpack.c.h.b16 %v1152
        %v4344 = vunpack.c.l.b16 %v1153
        %v4345 = vunpack.c.h.b16 %v1153
        %v4346 = vunpack.c.l.b16 %v1154
        %v4347 = vunpack.c.h.b16 %v1154
        %v4348 = vunpack.c.l.b16 %v1155
        %v4349 = vunpack.c.h.b16 %v1155
        %v4350 = vunpack.c.l.b16 %v1156
        %v4351 = vunpack.c.h.b16 %v1156
        %v4352 = vunpack.c.l.b16 %v1157
        %v4353 = vunpack.c.h.b16 %v1157
        %v4354 = vunpack.c.l.b16 %v1158
        %v4355 = vunpack.c.h.b16 %v1158
        %v4356 = vunpack.c.l.b16 %v1159
        %v4357 = vunpack.c.h.b16 %v1159
        %v4358 = vunpack.c.l.b16 %v1160
        %v4359 = vunpack.c.h.b16 %v1160
        %v4360 = vunpack.c.l.b16 %v1161
        %v4361 = vunpack.c.h.b16 %v1161
        %v4362 = vunpack.c.l.b16 %v1162
        %v4363 = vunpack.c.h.b16 %v1162
        %v4364 = vunpack.c.l.b16 %v1163
        %v4365 = vunpack.c.h.b16 %v1163
        %v4366 = vunpack.c.l.b16 %v1164
        %v4367 = vunpack.c.h.b16 %v1164
        %v4368 = vunpack.c.l.b16 %v1165
        %v4369 = vunpack.c.h.b16 %v1165
        %v4370 = vunpack.c.l.b16 %v1166
        %v4371 = vunpack.c.h.b16 %v1166
        %v4372 = vunpack.c.l.b16 %v1167
        %v4373 = vunpack.c.h.b16 %v1167
        %v4374 = vunpack.c.l.b16 %v1168
        %v4375 = vunpack.c.h.b16 %v1168
        %v4376 = vunpack.c.l.b16 %v1169
        %v4377 = vunpack.c.h.b16 %v1169
        %v4378 = vunpack.c.l.b16 %v1170
        %v4379 = vunpack.c.h.b16 %v1170
        %v4380 = vunpack.c.l.b16 %v1171
        %v4381 = vunpack.c.h.b16 %v1171
        %v4382 = vunpack.c.l.b16 %v1172
        %v4383 = vunpack.c.h.b16 %v1172
        %v4384 = vunpack.c.l.b16 %v1173
        %v4385 = vunpack.c.h.b16 %v1173
        %v4386 = vunpack.c.l.b16 %v1174
        %v4387 = vunpack.c.h.b16 %v1174
        %v4388 = vunpack.c.l.b16 %v1175
        %v4389 = vunpack.c.h.b16 %v1175
        %v4390 = vunpack.c.l.b16 %v1176
        %v4391 = vunpack.c.h.b16 %v1176
        %v4392 = vunpack.c.l.b16 %v1177
        %v4393 = vunpack.c.h.b16 %v1177
        %v4394 = vunpack.c.l.b16 %v1178
        %v4395 = vunpack.c.h.b16 %v1178
        %v4396 = vunpack.c.l.b16 %v1179
        %v4397 = vunpack.c.h.b16 %v1179
        %v4398 = vunpack.c.l.b16 %v1180
        %v4399 = vunpack.c.h.b16 %v1180
        %v4400 = vunpack.c.l.b16 %v1181
        %v4401 = vunpack.c.h.b16 %v1181
        %v4402 = vunpack.c.l.b16 %v1182
        %v4403 = vunpack.c.h.b16 %v1182
        %v4404 = vunpack.c.l.b16 %v1183
        %v4405 = vunpack.c.h.b16 %v1183
        %v4406 = vunpack.c.l.b16 %v1184
        %v4407 = vunpack.c.h.b16 %v1184
        %v4408 = vunpack.c.l.b16 %v1185
        %v4409 = vunpack.c.h.b16 %v1185
        %v4410 = vunpack.c.l.b16 %v1186
        %v4411 = vunpack.c.h.b16 %v1186
        %v4412 = vunpack.c.l.b16 %v1187
        %v4413 = vunpack.c.h.b16 %v1187
        %v4414 = vunpack.c.l.b16 %v1188
        %v4415 = vunpack.c.h.b16 %v1188
        %v4416 = vunpack.c.l.b16 %v1189
        %v4417 = vunpack.c.h.b16 %v1189
        %v4418 = vunpack.c.l.b16 %v1190
        %v4419 = vunpack.c.h.b16 %v1190
        %v4420 = vunpack.c.l.b16 %v1191
        %v4421 = vunpack.c.h.b16 %v1191
        %v4422 = vunpack.c.l.b16 %v1192
        %v4423 = vunpack.c.h.b16 %v1192
        %v4424 = vunpack.c.l.b16 %v1193
        %v4425 = vunpack.c.h.b16 %v1193
        %v4426 = vunpack.c.l.b16 %v1194
        %v4427 = vunpack.c.h.b16 %v1194
        %v4428 = vunpack.c.l.b16 %v1195
        %v4429 = vunpack.c.h.b16 %v1195
        %v4430 = vunpack.c.l.b16 %v1196
        %v4431 = vunpack.c.h.b16 %v1196
        %v4432 = vunpack.c.l.b16 %v1197
        %v4433 = vunpack.c.h.b16 %v1197
        %v4434 = vunpack.c.l.b16 %v1198
        %v4435 = vunpack.c.h.b16 %v1198
        %v4436 = vunpack.c.l.b16 %v1199
        %v4437 = vunpack.c.h.b16 %v1199
        %v4438 = vunpack.c.l.b16 %v1200
        %v4439 = vunpack.c.h.b16 %v1200
        %v4440 = vunpack.c.l.b16 %v1201
        %v4441 = vunpack.c.h.b16 %v1201
        %v4442 = vunpack.c.l.b16 %v1202
        %v4443 = vunpack.c.h.b16 %v1202
        %v4444 = vunpack.c.l.b16 %v1203
        %v4445 = vunpack.c.h.b16 %v1203
        %v4446 = vunpack.c.l.b16 %v1204
        %v4447 = vunpack.c.h.b16 %v1204
        %v4448 = vunpack.c.l.b16 %v1205
        %v4449 = vunpack.c.h.b16 %v1205
        %v4450 = vunpack.c.l.b16 %v1206
        %v4451 = vunpack.c.h.b16 %v1206
        %v4452 = vunpack.c.l.b16 %v1207
        %v4453 = vunpack.c.h.b16 %v1207
        %v4454 = vunpack.c.l.b16 %v1208
        %v4455 = vunpack.c.h.b16 %v1208
        %v4456 = vunpack.c.l.b16 %v1209
        %v4457 = vunpack.c.h.b16 %v1209
        %v4458 = vunpack.c.l.b16 %v1210
        %v4459 = vunpack.c.h.b16 %v1210
        %v4460 = vunpack.c.l.b16 %v1211
        %v4461 = vunpack.c.h.b16 %v1211
        %v4462 = vunpack.c.l.b16 %v1212
        %v4463 = vunpack.c.h.b16 %v1212
        %v4464 = vunpack.c.l.b16 %v1213
        %v4465 = vunpack.c.h.b16 %v1213
        %v4466 = vunpack.c.l.b16 %v1214
        %v4467 = vunpack.c.h.b16 %v1214
        %v4468 = vunpack.c.l.b16 %v1215
        %v4469 = vunpack.c.h.b16 %v1215
        %v4470 = vunpack.c.l.b16 %v1216
        %v4471 = vunpack.c.h.b16 %v1216
        %v4472 = vunpack.c.l.b16 %v1217
        %v4473 = vunpack.c.h.b16 %v1217
        %v4474 = vunpack.c.l.b16 %v1218
        %v4475 = vunpack.c.h.b16 %v1218
        %v4476 = vunpack.c.l.b16 %v1219
        %v4477 = vunpack.c.h.b16 %v1219
        %v4478 = vunpack.c.l.b16 %v1220
        %v4479 = vunpack.c.h.b16 %v1220
        %v4480 = vunpack.c.l.b16 %v1221
        %v4481 = vunpack.c.h.b16 %v1221
        %v4482 = vunpack.c.l.b16 %v1222
        %v4483 = vunpack.c.h.b16 %v1222
        %v4484 = vunpack.c.l.b16 %v1223
        %v4485 = vunpack.c.h.b16 %v1223
        %v4486 = vunpack.c.l.b16 %v1224
        %v4487 = vunpack.c.h.b16 %v1224
        %v4488 = vunpack.c.l.b16 %v1225
        %v4489 = vunpack.c.h.b16 %v1225
        %v4490 = vunpack.c.l.b16 %v1226
        %v4491 = vunpack.c.h.b16 %v1226
        %v4492 = vunpack.c.l.b16 %v1227
        %v4493 = vunpack.c.h.b16 %v1227
        %v4494 = vunpack.c.l.b16 %v1228
        %v4495 = vunpack.c.h.b16 %v1228
        %v4496 = vunpack.c.l.b16 %v1229
        %v4497 = vunpack.c.h.b16 %v1229
        %v4498 = vunpack.c.l.b16 %v1230
        %v4499 = vunpack.c.h.b16 %v1230
        %v4500 = vunpack.c.l.b16 %v1231
        %v4501 = vunpack.c.h.b16 %v1231
        %v4502 = vunpack.c.l.b16 %v1232
        %v4503 = vunpack.c.h.b16 %v1232
        %v4504 = vunpack.c.l.b16 %v1233
        %v4505 = vunpack.c.h.b16 %v1233
        %v4506 = vunpack.c.l.b16 %v1234
        %v4507 = vunpack.c.h.b16 %v1234
        %v4508 = vunpack.c.l.b16 %v1235
        %v4509 = vunpack.c.h.b16 %v1235
        %v4510 = vunpack.c.l.b16 %v1236
        %v4511 = vunpack.c.h.b16 %v1236
        %v4512 = vunpack.c.l.b16 %v1237
        %v4513 = vunpack.c.h.b16 %v1237
        %v4514 = vunpack.c.l.b16 %v1238
        %v4515 = vunpack.c.h.b16 %v1238
        %v4516 = vunpack.c.l.b16 %v1239
        %v4517 = vunpack.c.h.b16 %v1239
        %v4518 = vunpack.c.l.b16 %v1240
        %v4519 = vunpack.c.h.b16 %v1240
        %v4520 = vunpack.c.l.b16 %v1241
        %v4521 = vunpack.c.h.b16 %v1241
        %v4522 = vunpack.c.l.b16 %v1242
        %v4523 = vunpack.c.h.b16 %v1242
        %v4524 = vunpack.c.l.b16 %v1243
        %v4525 = vunpack.c.h.b16 %v1243
        %v4526 = vunpack.c.l.b16 %v1244
        %v4527 = vunpack.c.h.b16 %v1244
        %v4528 = vunpack.c.l.b16 %v1245
        %v4529 = vunpack.c.h.b16 %v1245
        %v4530 = vunpack.c.l.b16 %v1246
        %v4531 = vunpack.c.h.b16 %v1246
        %v4532 = vunpack.c.l.b16 %v1247
        %v4533 = vunpack.c.h.b16 %v1247
        %v4534 = vunpack.c.l.b16 %v1248
        %v4535 = vunpack.c.h.b16 %v1248
        %v4536 = vunpack.c.l.b16 %v1249
        %v4537 = vunpack.c.h.b16 %v1249
        %v4538 = vunpack.c.l.b16 %v1250
        %v4539 = vunpack.c.h.b16 %v1250
        %v4540 = vunpack.c.l.b16 %v1251
        %v4541 = vunpack.c.h.b16 %v1251
        %v4542 = vunpack.c.l.b16 %v1252
        %v4543 = vunpack.c.h.b16 %v1252
        %v4544 = vunpack.c.l.b16 %v1253
        %v4545 = vunpack.c.h.b16 %v1253
        %v4546 = vunpack.c.l.b16 %v1254
        %v4547 = vunpack.c.h.b16 %v1254
        %v4548 = vunpack.c.l.b16 %v1255
        %v4549 = vunpack.c.h.b16 %v1255
        %v4550 = vunpack.c.l.b16 %v1256
        %v4551 = vunpack.c.h.b16 %v1256
        %v4552 = vunpack.c.l.b16 %v1257
        %v4553 = vunpack.c.h.b16 %v1257
        %v4554 = vunpack.c.l.b16 %v1258
        %v4555 = vunpack.c.h.b16 %v1258
        %v4556 = vunpack.c.l.b16 %v1259
        %v4557 = vunpack.c.h.b16 %v1259
        %v4558 = vunpack.c.l.b16 %v1260
        %v4559 = vunpack.c.h.b16 %v1260
        %v4560 = vunpack.c.l.b16 %v1261
        %v4561 = vunpack.c.h.b16 %v1261
        %v4562 = vunpack.c.l.b16 %v1262
        %v4563 = vunpack.c.h.b16 %v1262
        %v4564 = vunpack.c.l.b16 %v1263
        %v4565 = vunpack.c.h.b16 %v1263
        %v4566 = vunpack.c.l.b16 %v1264
        %v4567 = vunpack.c.h.b16 %v1264
        %v4568 = vunpack.c.l.b16 %v1265
        %v4569 = vunpack.c.h.b16 %v1265
        %v4570 = vunpack.c.l.b16 %v1266
        %v4571 = vunpack.c.h.b16 %v1266
        %v4572 = vunpack.c.l.b16 %v1267
        %v4573 = vunpack.c.h.b16 %v1267
        %v4574 = vunpack.c.l.b16 %v1268
        %v4575 = vunpack.c.h.b16 %v1268
        %v4576 = vunpack.c.l.b16 %v1269
        %v4577 = vunpack.c.h.b16 %v1269
        %v4578 = vunpack.c.l.b16 %v1270
        %v4579 = vunpack.c.h.b16 %v1270
        %v4580 = vunpack.c.l.b16 %v1271
        %v4581 = vunpack.c.h.b16 %v1271
        %v4582 = vunpack.c.l.b16 %v1272
        %v4583 = vunpack.c.h.b16 %v1272
        %v4584 = vunpack.c.l.b16 %v1273
        %v4585 = vunpack.c.h.b16 %v1273
        %v4586 = vunpack.c.l.b16 %v1274
        %v4587 = vunpack.c.h.b16 %v1274
        %v4588 = vunpack.c.l.b16 %v1275
        %v4589 = vunpack.c.h.b16 %v1275
        %v4590 = vunpack.c.l.b16 %v1276
        %v4591 = vunpack.c.h.b16 %v1276
        %v4592 = vunpack.c.l.b16 %v1277
        %v4593 = vunpack.c.h.b16 %v1277
        %v4594 = vunpack.c.l.b16 %v1278
        %v4595 = vunpack.c.h.b16 %v1278
        %v4596 = vunpack.c.l.b16 %v1279
        %v4597 = vunpack.c.h.b16 %v1279
        %v4598 = vunpack.c.l.b16 %v1280
        %v4599 = vunpack.c.h.b16 %v1280
        %v4600 = vunpack.c.l.b16 %v1281
        %v4601 = vunpack.c.h.b16 %v1281
        %v4602 = vunpack.c.l.b16 %v1282
        %v4603 = vunpack.c.h.b16 %v1282
        %v4604 = vunpack.c.l.b16 %v1283
        %v4605 = vunpack.c.h.b16 %v1283
        %v4606 = vunpack.c.l.b16 %v1284
        %v4607 = vunpack.c.h.b16 %v1284
        %v4608 = vunpack.c.l.b16 %v1285
        %v4609 = vunpack.c.h.b16 %v1285
        %v4610 = vunpack.c.l.b16 %v1286
        %v4611 = vunpack.c.h.b16 %v1286
        %v4612 = vunpack.c.l.b16 %v1287
        %v4613 = vunpack.c.h.b16 %v1287
        %v4614 = vunpack.c.l.b16 %v1288
        %v4615 = vunpack.c.h.b16 %v1288
        %v4616 = vunpack.c.l.b16 %v1289
        %v4617 = vunpack.c.h.b16 %v1289
        %v4618 = vunpack.c.l.b16 %v1290
        %v4619 = vunpack.c.h.b16 %v1290
        %v4620 = vunpack.c.l.b16 %v1291
        %v4621 = vunpack.c.h.b16 %v1291
        %v4622 = vunpack.c.l.b16 %v1292
        %v4623 = vunpack.c.h.b16 %v1292
        %v4624 = vunpack.c.l.b16 %v1293
        %v4625 = vunpack.c.h.b16 %v1293
        %v4626 = vunpack.c.l.b16 %v1294
        %v4627 = vunpack.c.h.b16 %v1294
        %v4628 = vunpack.c.l.b16 %v1295
        %v4629 = vunpack.c.h.b16 %v1295
        %v4630 = vunpack.c.l.b16 %v1296
        %v4631 = vunpack.c.h.b16 %v1296
        %v4632 = vunpack.c.l.b16 %v1297
        %v4633 = vunpack.c.h.b16 %v1297
        %v4634 = vunpack.c.l.b16 %v1298
        %v4635 = vunpack.c.h.b16 %v1298
        %v4636 = vunpack.c.l.b16 %v1299
        %v4637 = vunpack.c.h.b16 %v1299
        %v4638 = vunpack.c.l.b16 %v1300
        %v4639 = vunpack.c.h.b16 %v1300
        %v4640 = vunpack.c.l.b16 %v1301
        %v4641 = vunpack.c.h.b16 %v1301
        %v4642 = vunpack.c.l.b16 %v1302
        %v4643 = vunpack.c.h.b16 %v1302
        %v4644 = vunpack.c.l.b16 %v1303
        %v4645 = vunpack.c.h.b16 %v1303
        %v4646 = vunpack.c.l.b16 %v1304
        %v4647 = vunpack.c.h.b16 %v1304
        %v4648 = vunpack.c.l.b16 %v1305
        %v4649 = vunpack.c.h.b16 %v1305
        %v4650 = vunpack.c.l.b16 %v1306
        %v4651 = vunpack.c.h.b16 %v1306
        %v4652 = vunpack.c.l.b16 %v1307
        %v4653 = vunpack.c.h.b16 %v1307
        %v4654 = vunpack.c.l.b16 %v1308
        %v4655 = vunpack.c.h.b16 %v1308
        %v4656 = vunpack.c.l.b16 %v1309
        %v4657 = vunpack.c.h.b16 %v1309
        %v4658 = vunpack.c.l.b16 %v1310
        %v4659 = vunpack.c.h.b16 %v1310
        %v4660 = vunpack.c.l.b16 %v1311
        %v4661 = vunpack.c.h.b16 %v1311
        %v4662 = vunpack.c.l.b16 %v1312
        %v4663 = vunpack.c.h.b16 %v1312
        %v4664 = vunpack.c.l.b16 %v1313
        %v4665 = vunpack.c.h.b16 %v1313
        %v4666 = vunpack.c.l.b16 %v1314
        %v4667 = vunpack.c.h.b16 %v1314
        %v4668 = vunpack.c.l.b16 %v1315
        %v4669 = vunpack.c.h.b16 %v1315
        %v4670 = vunpack.c.l.b16 %v1316
        %v4671 = vunpack.c.h.b16 %v1316
        %v4672 = vunpack.c.l.b16 %v1317
        %v4673 = vunpack.c.h.b16 %v1317
        %v4674 = vunpack.c.l.b16 %v1318
        %v4675 = vunpack.c.h.b16 %v1318
        %v4676 = vunpack.c.l.b16 %v1319
        %v4677 = vunpack.c.h.b16 %v1319
        %v4678 = vunpack.c.l.b16 %v1320
        %v4679 = vunpack.c.h.b16 %v1320
        %v4680 = vunpack.c.l.b16 %v1321
        %v4681 = vunpack.c.h.b16 %v1321
        %v4682 = vunpack.c.l.b16 %v1322
        %v4683 = vunpack.c.h.b16 %v1322
        %v4684 = vunpack.c.l.b16 %v1323
        %v4685 = vunpack.c.h.b16 %v1323
        %v4686 = vunpack.c.l.b16 %v1324
        %v4687 = vunpack.c.h.b16 %v1324
        %v4688 = vunpack.c.l.b16 %v1325
        %v4689 = vunpack.c.h.b16 %v1325
        %v4690 = vunpack.c.l.b16 %v1326
        %v4691 = vunpack.c.h.b16 %v1326
        %v4692 = vunpack.c.l.b16 %v1327
        %v4693 = vunpack.c.h.b16 %v1327
        %v4694 = vunpack.c.l.b16 %v1328
        %v4695 = vunpack.c.h.b16 %v1328
        %v4696 = vunpack.c.l.b16 %v1329
        %v4697 = vunpack.c.h.b16 %v1329
        %v4698 = vunpack.c.l.b16 %v1330
        %v4699 = vunpack.c.h.b16 %v1330
        %v4700 = vunpack.c.l.b16 %v1331
        %v4701 = vunpack.c.h.b16 %v1331
        %v4702 = vunpack.c.l.b16 %v1332
        %v4703 = vunpack.c.h.b16 %v1332
        %v4704 = vunpack.c.l.b16 %v1333
        %v4705 = vunpack.c.h.b16 %v1333
        %v4706 = vunpack.c.l.b16 %v1334
        %v4707 = vunpack.c.h.b16 %v1334
        %v4708 = vunpack.c.l.b16 %v1335
        %v4709 = vunpack.c.h.b16 %v1335
        %v4710 = vunpack.c.l.b16 %v1336
        %v4711 = vunpack.c.h.b16 %v1336
        %v4712 = vunpack.c.l.b16 %v1337
        %v4713 = vunpack.c.h.b16 %v1337
        %v4714 = vunpack.c.l.b16 %v1338
        %v4715 = vunpack.c.h.b16 %v1338
        %v4716 = vunpack.c.l.b16 %v1339
        %v4717 = vunpack.c.h.b16 %v1339
        %v4718 = vunpack.c.l.b16 %v1340
        %v4719 = vunpack.c.h.b16 %v1340
        %v4720 = vunpack.c.l.b16 %v1341
        %v4721 = vunpack.c.h.b16 %v1341
        %v4722 = vunpack.c.l.b16 %v1342
        %v4723 = vunpack.c.h.b16 %v1342
        %v4724 = vunpack.c.l.b16 %v1343
        %v4725 = vunpack.c.h.b16 %v1343
        %v4726 = vunpack.c.l.b16 %v1344
        %v4727 = vunpack.c.h.b16 %v1344
        %v4728 = vunpack.c.l.b16 %v1345
        %v4729 = vunpack.c.h.b16 %v1345
        %v4730 = vunpack.c.l.b16 %v1346
        %v4731 = vunpack.c.h.b16 %v1346
        %v4732 = vunpack.c.l.b16 %v1347
        %v4733 = vunpack.c.h.b16 %v1347
        %v4734 = vunpack.c.l.b16 %v1348
        %v4735 = vunpack.c.h.b16 %v1348
        %v4736 = vunpack.c.l.b16 %v1349
        %v4737 = vunpack.c.h.b16 %v1349
        %v4738 = vunpack.c.l.b16 %v1350
        %v4739 = vunpack.c.h.b16 %v1350
        %v4740 = vunpack.c.l.b16 %v1351
        %v4741 = vunpack.c.h.b16 %v1351
        %v4742 = vunpack.c.l.b16 %v1352
        %v4743 = vunpack.c.h.b16 %v1352
        %v4744 = vunpack.c.l.b16 %v1353
        %v4745 = vunpack.c.h.b16 %v1353
        %v4746 = vunpack.c.l.b16 %v1354
        %v4747 = vunpack.c.h.b16 %v1354
        %v4748 = vunpack.c.l.b16 %v1355
        %v4749 = vunpack.c.h.b16 %v1355
        %v4750 = vunpack.c.l.b16 %v1356
        %v4751 = vunpack.c.h.b16 %v1356
        %v4752 = vunpack.c.l.b16 %v1357
        %v4753 = vunpack.c.h.b16 %v1357
        %v4754 = vunpack.c.l.b16 %v1358
        %v4755 = vunpack.c.h.b16 %v1358
        %v4756 = vunpack.c.l.b16 %v1359
        %v4757 = vunpack.c.h.b16 %v1359
        %v4758 = vunpack.c.l.b16 %v1360
        %v4759 = vunpack.c.h.b16 %v1360
        %v4760 = vunpack.c.l.b16 %v1361
        %v4761 = vunpack.c.h.b16 %v1361
        %v4762 = vunpack.c.l.b16 %v1362
        %v4763 = vunpack.c.h.b16 %v1362
        %v4764 = vunpack.c.l.b16 %v1363
        %v4765 = vunpack.c.h.b16 %v1363
        %v4766 = vunpack.c.l.b16 %v1364
        %v4767 = vunpack.c.h.b16 %v1364
        %v4768 = vunpack.c.l.b16 %v1365
        %v4769 = vunpack.c.h.b16 %v1365
        %v4770 = vunpack.c.l.b16 %v1366
        %v4771 = vunpack.c.h.b16 %v1366
        %v4772 = vunpack.c.l.b16 %v1367
        %v4773 = vunpack.c.h.b16 %v1367
        %v4774 = vunpack.c.l.b16 %v1368
        %v4775 = vunpack.c.h.b16 %v1368
        %v4776 = vunpack.c.l.b16 %v1369
        %v4777 = vunpack.c.h.b16 %v1369
        %v4778 = vunpack.c.l.b16 %v1370
        %v4779 = vunpack.c.h.b16 %v1370
        %v4780 = vunpack.c.l.b16 %v1371
        %v4781 = vunpack.c.h.b16 %v1371
        %v4782 = vunpack.c.l.b16 %v1372
        %v4783 = vunpack.c.h.b16 %v1372
        %v4784 = vunpack.c.l.b16 %v1373
        %v4785 = vunpack.c.h.b16 %v1373
        %v4786 = vunpack.c.l.b16 %v1374
        %v4787 = vunpack.c.h.b16 %v1374
        %v4788 = vunpack.c.l.b16 %v1375
        %v4789 = vunpack.c.h.b16 %v1375
        %v4790 = vunpack.c.l.b16 %v1376
        %v4791 = vunpack.c.h.b16 %v1376
        %v4792 = vunpack.c.l.b16 %v1377
        %v4793 = vunpack.c.h.b16 %v1377
        %v4794 = vunpack.c.l.b16 %v1378
        %v4795 = vunpack.c.h.b16 %v1378
        %v4796 = vunpack.c.l.b16 %v1379
        %v4797 = vunpack.c.h.b16 %v1379
        %v4798 = vunpack.c.l.b16 %v1380
        %v4799 = vunpack.c.h.b16 %v1380
        %v4800 = vunpack.c.l.b16 %v1381
        %v4801 = vunpack.c.h.b16 %v1381
        %v4802 = vunpack.c.l.b16 %v1382
        %v4803 = vunpack.c.h.b16 %v1382
        %v4804 = vunpack.c.l.b16 %v1383
        %v4805 = vunpack.c.h.b16 %v1383
        %v4806 = vunpack.c.l.b16 %v1384
        %v4807 = vunpack.c.h.b16 %v1384
        %v4808 = vunpack.c.l.b16 %v1385
        %v4809 = vunpack.c.h.b16 %v1385
        %v4810 = vunpack.c.l.b16 %v1386
        %v4811 = vunpack.c.h.b16 %v1386
        %v4812 = vunpack.c.l.b16 %v1387
        %v4813 = vunpack.c.h.b16 %v1387
        %v4814 = vunpack.c.l.b16 %v1388
        %v4815 = vunpack.c.h.b16 %v1388
        %v4816 = vunpack.c.l.b16 %v1389
        %v4817 = vunpack.c.h.b16 %v1389
        %v4818 = vunpack.c.l.b16 %v1390
        %v4819 = vunpack.c.h.b16 %v1390
        %v4820 = vunpack.c.l.b16 %v1391
        %v4821 = vunpack.c.h.b16 %v1391
        %v4822 = vunpack.c.l.b16 %v1392
        %v4823 = vunpack.c.h.b16 %v1392
        %v4824 = vunpack.c.l.b16 %v1393
        %v4825 = vunpack.c.h.b16 %v1393
        %v4826 = vunpack.c.l.b16 %v1394
        %v4827 = vunpack.c.h.b16 %v1394
        %v4828 = vunpack.c.l.b16 %v1395
        %v4829 = vunpack.c.h.b16 %v1395
        %v4830 = vunpack.c.l.b16 %v1396
        %v4831 = vunpack.c.h.b16 %v1396
        %v4832 = vunpack.c.l.b16 %v1397
        %v4833 = vunpack.c.h.b16 %v1397
        %v4834 = vunpack.c.l.b16 %v1398
        %v4835 = vunpack.c.h.b16 %v1398
        %v4836 = vunpack.c.l.b16 %v1399
        %v4837 = vunpack.c.h.b16 %v1399
        %v4838 = vunpack.c.l.b16 %v1400
        %v4839 = vunpack.c.h.b16 %v1400
        %v4840 = vunpack.c.l.b16 %v1401
        %v4841 = vunpack.c.h.b16 %v1401
        %v4842 = vunpack.c.l.b16 %v1402
        %v4843 = vunpack.c.h.b16 %v1402
        %v4844 = vunpack.c.l.b16 %v1403
        %v4845 = vunpack.c.h.b16 %v1403
        %v4846 = vunpack.c.l.b16 %v1404
        %v4847 = vunpack.c.h.b16 %v1404
        %v4848 = vunpack.c.l.b16 %v1405
        %v4849 = vunpack.c.h.b16 %v1405
        %v4850 = vunpack.c.l.b16 %v1406
        %v4851 = vunpack.c.h.b16 %v1406
        %v4852 = vunpack.c.l.b16 %v1407
        %v4853 = vunpack.c.h.b16 %v1407
        %v4854 = vunpack.c.l.b16 %v1408
        %v4855 = vunpack.c.h.b16 %v1408
        %v4856 = vunpack.c.l.b16 %v1409
        %v4857 = vunpack.c.h.b16 %v1409
        %v4858 = vunpack.c.l.b16 %v1410
        %v4859 = vunpack.c.h.b16 %v1410
        %v4860 = vunpack.c.l.b16 %v1411
        %v4861 = vunpack.c.h.b16 %v1411
        %v4862 = vunpack.c.l.b16 %v1412
        %v4863 = vunpack.c.h.b16 %v1412
        %v4864 = vunpack.c.l.b16 %v1413
        %v4865 = vunpack.c.h.b16 %v1413
        %v4866 = vunpack.c.l.b16 %v1414
        %v4867 = vunpack.c.h.b16 %v1414
        %v4868 = vunpack.c.l.b16 %v1415
        %v4869 = vunpack.c.h.b16 %v1415
        %v4870 = vunpack.c.l.b16 %v1416
        %v4871 = vunpack.c.h.b16 %v1416
        %v4872 = vunpack.c.l.b16 %v1417
        %v4873 = vunpack.c.h.b16 %v1417
        %v4874 = vunpack.c.l.b16 %v1418
        %v4875 = vunpack.c.h.b16 %v1418
        %v4876 = vunpack.c.l.b16 %v1419
        %v4877 = vunpack.c.h.b16 %v1419
        %v4878 = vunpack.c.l.b16 %v1420
        %v4879 = vunpack.c.h.b16 %v1420
        %v4880 = vunpack.c.l.b16 %v1421
        %v4881 = vunpack.c.h.b16 %v1421
        %v4882 = vunpack.c.l.b16 %v1422
        %v4883 = vunpack.c.h.b16 %v1422
        %v4884 = vunpack.c.l.b16 %v1423
        %v4885 = vunpack.c.h.b16 %v1423
        %v4886 = vunpack.c.l.b16 %v1424
        %v4887 = vunpack.c.h.b16 %v1424
        %v4888 = vunpack.c.l.b16 %v1425
        %v4889 = vunpack.c.h.b16 %v1425
        %v4890 = vunpack.c.l.b16 %v1426
        %v4891 = vunpack.c.h.b16 %v1426
        %v4892 = vunpack.c.l.b16 %v1427
        %v4893 = vunpack.c.h.b16 %v1427
        %v4894 = vunpack.c.l.b16 %v1428
        %v4895 = vunpack.c.h.b16 %v1428
        %v4896 = vunpack.c.l.b16 %v1429
        %v4897 = vunpack.c.h.b16 %v1429
        %v4898 = vunpack.c.l.b16 %v1430
        %v4899 = vunpack.c.h.b16 %v1430
        %v4900 = vunpack.c.l.b16 %v1431
        %v4901 = vunpack.c.h.b16 %v1431
        %v4902 = vunpack.c.l.b16 %v1432
        %v4903 = vunpack.c.h.b16 %v1432
        %v4904 = vunpack.c.l.b16 %v1433
        %v4905 = vunpack.c.h.b16 %v1433
        %v4906 = vunpack.c.l.b16 %v1434
        %v4907 = vunpack.c.h.b16 %v1434
        %v4908 = vunpack.c.l.b16 %v1435
        %v4909 = vunpack.c.h.b16 %v1435
        %v4910 = vunpack.c.l.b16 %v1436
        %v4911 = vunpack.c.h.b16 %v1436
        %v4912 = vunpack.c.l.b16 %v1437
        %v4913 = vunpack.c.h.b16 %v1437
        %v4914 = vunpack.c.l.b16 %v1438
        %v4915 = vunpack.c.h.b16 %v1438
        %v4916 = vunpack.c.l.b16 %v1439
        %v4917 = vunpack.c.h.b16 %v1439
        %v4918 = vunpack.c.l.b16 %v1440
        %v4919 = vunpack.c.h.b16 %v1440
        %v4920 = vunpack.c.l.b16 %v1441
        %v4921 = vunpack.c.h.b16 %v1441
        %v4922 = vunpack.c.l.b16 %v1442
        %v4923 = vunpack.c.h.b16 %v1442
        %v4924 = vunpack.c.l.b16 %v1443
        %v4925 = vunpack.c.h.b16 %v1443
        %v4926 = vunpack.c.l.b16 %v1444
        %v4927 = vunpack.c.h.b16 %v1444
        %v4928 = vpack.c.b16 %v2692, %v2688
        %v4929 = vpack.c.b16 %v2693, %v2689
        %v4930 = vpack.c.b16 %v2694, %v2690
        %v4931 = vpack.c.b16 %v2695, %v2691
        %v4932 = vpack.c.b16 %v2700, %v2696
        %v4933 = vpack.c.b16 %v2701, %v2697
        %v4934 = vpack.c.b16 %v2702, %v2698
        %v4935 = vpack.c.b16 %v2703, %v2699
        %v4936 = vpack.c.b16 %v2708, %v2704
        %v4937 = vpack.c.b16 %v2709, %v2705
        %v4938 = vpack.c.b16 %v2710, %v2706
        %v4939 = vpack.c.b16 %v2711, %v2707
        %v4940 = vpack.c.b16 %v2716, %v2712
        %v4941 = vpack.c.b16 %v2717, %v2713
        %v4942 = vpack.c.b16 %v2718, %v2714
        %v4943 = vpack.c.b16 %v2719, %v2715
        %v4944 = vpack.c.b16 %v2724, %v2720
        %v4945 = vpack.c.b16 %v2725, %v2721
        %v4946 = vpack.c.b16 %v2726, %v2722
        %v4947 = vpack.c.b16 %v2727, %v2723
        %v4948 = vpack.c.b16 %v2732, %v2728
        %v4949 = vpack.c.b16 %v2733, %v2729
        %v4950 = vpack.c.b16 %v2734, %v2730
        %v4951 = vpack.c.b16 %v2735, %v2731
        %v4952 = vpack.c.b16 %v2740, %v2736
        %v4953 = vpack.c.b16 %v2741, %v2737
        %v4954 = vpack.c.b16 %v2742, %v2738
        %v4955 = vpack.c.b16 %v2743, %v2739
        %v4956 = vpack.c.b16 %v2748, %v2744
        %v4957 = vpack.c.b16 %v2749, %v2745
        %v4958 = vpack.c.b16 %v2750, %v2746
        %v4959 = vpack.c.b16 %v2751, %v2747
        %v4960 = vpack.c.b16 %v2756, %v2752
        %v4961 = vpack.c.b16 %v2757, %v2753
        %v4962 = vpack.c.b16 %v2758, %v2754
        %v4963 = vpack.c.b16 %v2759, %v2755
        %v4964 = vpack.c.b16 %v2764, %v2760
        %v4965 = vpack.c.b16 %v2765, %v2761
        %v4966 = vpack.c.b16 %v2766, %v2762
        %v4967 = vpack.c.b16 %v2767, %v2763
        %v4968 = vpack.c.b16 %v2772, %v2768
        %v4969 = vpack.c.b16 %v2773, %v2769
        %v4970 = vpack.c.b16 %v2774, %v2770
        %v4971 = vpack.c.b16 %v2775, %v2771
        %v4972 = vpack.c.b16 %v2780, %v2776
        %v4973 = vpack.c.b16 %v2781, %v2777
        %v4974 = vpack.c.b16 %v2782, %v2778
        %v4975 = vpack.c.b16 %v2783, %v2779
        %v4976 = vpack.c.b16 %v2788, %v2784
        %v4977 = vpack.c.b16 %v2789, %v2785
        %v4978 = vpack.c.b16 %v2790, %v2786
        %v4979 = vpack.c.b16 %v2791, %v2787
        %v4980 = vpack.c.b16 %v2796, %v2792
        %v4981 = vpack.c.b16 %v2797, %v2793
        %v4982 = vpack.c.b16 %v2798, %v2794
        %v4983 = vpack.c.b16 %v2799, %v2795
        %v4984 = vpack.c.b16 %v2804, %v2800
        %v4985 = vpack.c.b16 %v2805, %v2801
        %v4986 = vpack.c.b16 %v2806, %v2802
        %v4987 = vpack.c.b16 %v2807, %v2803
        %v4988 = vpack.c.b16 %v2812, %v2808
        %v4989 = vpack.c.b16 %v2813, %v2809
        %v4990 = vpack.c.b16 %v2814, %v2810
        %v4991 = vpack.c.b16 %v2815, %v2811
        %v4992 = vpack.c.b16 %v2820, %v2816
        %v4993 = vpack.c.b16 %v2821, %v2817
        %v4994 = vpack.c.b16 %v2822, %v2818
        %v4995 = vpack.c.b16 %v2823, %v2819
        %v4996 = vpack.c.b16 %v2828, %v2824
        %v4997 = vpack.c.b16 %v2829, %v2825
        %v4998 = vpack.c.b16 %v2830, %v2826
        %v4999 = vpack.c.b16 %v2831, %v2827
        %v5000 = vpack.c.b16 %v2836, %v2832
        %v5001 = vpack.c.b16 %v2837, %v2833
        %v5002 = vpack.c.b16 %v2838, %v2834
        %v5003 = vpack.c.b16 %v2839, %v2835
        %v5004 = vpack.c.b16 %v2844, %v2840
        %v5005 = vpack.c.b16 %v2845, %v2841
        %v5006 = vpack.c.b16 %v2846, %v2842
        %v5007 = vpack.c.b16 %v2847, %v2843
        %v5008 = vpack.c.b16 %v2852, %v2848
        %v5009 = vpack.c.b16 %v2853, %v2849
        %v5010 = vpack.c.b16 %v2854, %v2850
        %v5011 = vpack.c.b16 %v2855, %v2851
        %v5012 = vpack.c.b16 %v2860, %v2856
        %v5013 = vpack.c.b16 %v2861, %v2857
        %v5014 = vpack.c.b16 %v2862, %v2858
        %v5015 = vpack.c.b16 %v2863, %v2859
        %v5016 = vpack.c.b16 %v2868, %v2864
        %v5017 = vpack.c.b16 %v2869, %v2865
        %v5018 = vpack.c.b16 %v2870, %v2866
        %v5019 = vpack.c.b16 %v2871, %v2867
        %v5020 = vpack.c.b16 %v2876, %v2872
        %v5021 = vpack.c.b16 %v2877, %v2873
        %v5022 = vpack.c.b16 %v2878, %v2874
        %v5023 = vpack.c.b16 %v2879, %v2875
        %v5024 = vpack.c.b16 %v2884, %v2880
        %v5025 = vpack.c.b16 %v2885, %v2881
        %v5026 = vpack.c.b16 %v2886, %v2882
        %v5027 = vpack.c.b16 %v2887, %v2883
        %v5028 = vpack.c.b16 %v2892, %v2888
        %v5029 = vpack.c.b16 %v2893, %v2889
        %v5030 = vpack.c.b16 %v2894, %v2890
        %v5031 = vpack.c.b16 %v2895, %v2891
        %v5032 = vpack.c.b16 %v2900, %v2896
        %v5033 = vpack.c.b16 %v2901, %v2897
        %v5034 = vpack.c.b16 %v2902, %v2898
        %v5035 = vpack.c.b16 %v2903, %v2899
        %v5036 = vpack.c.b16 %v2908, %v2904
        %v5037 = vpack.c.b16 %v2909, %v2905
        %v5038 = vpack.c.b16 %v2910, %v2906
        %v5039 = vpack.c.b16 %v2911, %v2907
        %v5040 = vpack.c.b16 %v2916, %v2912
        %v5041 = vpack.c.b16 %v2917, %v2913
        %v5042 = vpack.c.b16 %v2918, %v2914
        %v5043 = vpack.c.b16 %v2919, %v2915
        %v5044 = vpack.c.b16 %v2924, %v2920
        %v5045 = vpack.c.b16 %v2925, %v2921
        %v5046 = vpack.c.b16 %v2926, %v2922
        %v5047 = vpack.c.b16 %v2927, %v2923
        %v5048 = vpack.c.b16 %v2932, %v2928
        %v5049 = vpack.c.b16 %v2933, %v2929
        %v5050 = vpack.c.b16 %v2934, %v2930
        %v5051 = vpack.c.b16 %v2935, %v2931
        %v5052 = vpack.c.b16 %v2940, %v2936
        %v5053 = vpack.c.b16 %v2941, %v2937
        %v5054 = vpack.c.b16 %v2942, %v2938
        %v5055 = vpack.c.b16 %v2943, %v2939
        %v5056 = vpack.c.b16 %v2948, %v2944
        %v5057 = vpack.c.b16 %v2949, %v2945
        %v5058 = vpack.c.b16 %v2950, %v2946
        %v5059 = vpack.c.b16 %v2951, %v2947
        %v5060 = vpack.c.b16 %v2956, %v2952
        %v5061 = vpack.c.b16 %v2957, %v2953
        %v5062 = vpack.c.b16 %v2958, %v2954
        %v5063 = vpack.c.b16 %v2959, %v2955
        %v5064 = vpack.c.b16 %v2964, %v2960
        %v5065 = vpack.c.b16 %v2965, %v2961
        %v5066 = vpack.c.b16 %v2966, %v2962
        %v5067 = vpack.c.b16 %v2967, %v2963
        %v5068 = vpack.c.b16 %v2972, %v2968
        %v5069 = vpack.c.b16 %v2973, %v2969
        %v5070 = vpack.c.b16 %v2974, %v2970
        %v5071 = vpack.c.b16 %v2975, %v2971
        %v5072 = vpack.c.b16 %v2980, %v2976
        %v5073 = vpack.c.b16 %v2981, %v2977
        %v5074 = vpack.c.b16 %v2982, %v2978
        %v5075 = vpack.c.b16 %v2983, %v2979
        %v5076 = vpack.c.b16 %v2988, %v2984
        %v5077 = vpack.c.b16 %v2989, %v2985
        %v5078 = vpack.c.b16 %v2990, %v2986
        %v5079 = vpack.c.b16 %v2991, %v2987
        %v5080 = vpack.c.b16 %v2996, %v2992
        %v5081 = vpack.c.b16 %v2997, %v2993
        %v5082 = vpack.c.b16 %v2998, %v2994
        %v5083 = vpack.c.b16 %v2999, %v2995
        %v5084 = vpack.c.b16 %v3004, %v3000
        %v5085 = vpack.c.b16 %v3005, %v3001
        %v5086 = vpack.c.b16 %v3006, %v3002
        %v5087 = vpack.c.b16 %v3007, %v3003
        %v5088 = vpack.c.b16 %v3012, %v3008
        %v5089 = vpack.c.b16 %v3013, %v3009
        %v5090 = vpack.c.b16 %v3014, %v3010
        %v5091 = vpack.c.b16 %v3015, %v3011
        %v5092 = vpack.c.b16 %v3020, %v3016
        %v5093 = vpack.c.b16 %v3021, %v3017
        %v5094 = vpack.c.b16 %v3022, %v3018
        %v5095 = vpack.c.b16 %v3023, %v3019
        %v5096 = vpack.c.b16 %v3028, %v3024
        %v5097 = vpack.c.b16 %v3029, %v3025
        %v5098 = vpack.c.b16 %v3030, %v3026
        %v5099 = vpack.c.b16 %v3031, %v3027
        %v5100 = vpack.c.b16 %v3036, %v3032
        %v5101 = vpack.c.b16 %v3037, %v3033
        %v5102 = vpack.c.b16 %v3038, %v3034
        %v5103 = vpack.c.b16 %v3039, %v3035
        %v5104 = vpack.c.b16 %v3044, %v3040
        %v5105 = vpack.c.b16 %v3045, %v3041
        %v5106 = vpack.c.b16 %v3046, %v3042
        %v5107 = vpack.c.b16 %v3047, %v3043
        %v5108 = vpack.c.b16 %v3052, %v3048
        %v5109 = vpack.c.b16 %v3053, %v3049
        %v5110 = vpack.c.b16 %v3054, %v3050
        %v5111 = vpack.c.b16 %v3055, %v3051
        %v5112 = vpack.c.b16 %v3060, %v3056
        %v5113 = vpack.c.b16 %v3061, %v3057
        %v5114 = vpack.c.b16 %v3062, %v3058
        %v5115 = vpack.c.b16 %v3063, %v3059
        %v5116 = vpack.c.b16 %v3068, %v3064
        %v5117 = vpack.c.b16 %v3069, %v3065
        %v5118 = vpack.c.b16 %v3070, %v3066
        %v5119 = vpack.c.b16 %v3071, %v3067
        %v5120 = vpack.c.b16 %v3076, %v3072
        %v5121 = vpack.c.b16 %v3077, %v3073
        %v5122 = vpack.c.b16 %v3078, %v3074
        %v5123 = vpack.c.b16 %v3079, %v3075
        %v5124 = vpack.c.b16 %v3084, %v3080
        %v5125 = vpack.c.b16 %v3085, %v3081
        %v5126 = vpack.c.b16 %v3086, %v3082
        %v5127 = vpack.c.b16 %v3087, %v3083
        %v5128 = vpack.c.b16 %v3092, %v3088
        %v5129 = vpack.c.b16 %v3093, %v3089
        %v5130 = vpack.c.b16 %v3094, %v3090
        %v5131 = vpack.c.b16 %v3095, %v3091
        %v5132 = vpack.c.b16 %v3100, %v3096
        %v5133 = vpack.c.b16 %v3101, %v3097
        %v5134 = vpack.c.b16 %v3102, %v3098
        %v5135 = vpack.c.b16 %v3103, %v3099
        %v5136 = vpack.c.b16 %v3108, %v3104
        %v5137 = vpack.c.b16 %v3109, %v3105
        %v5138 = vpack.c.b16 %v3110, %v3106
        %v5139 = vpack.c.b16 %v3111, %v3107
        %v5140 = vpack.c.b16 %v3116, %v3112
        %v5141 = vpack.c.b16 %v3117, %v3113
        %v5142 = vpack.c.b16 %v3118, %v3114
        %v5143 = vpack.c.b16 %v3119, %v3115
        %v5144 = vpack.c.b16 %v3124, %v3120
        %v5145 = vpack.c.b16 %v3125, %v3121
        %v5146 = vpack.c.b16 %v3126, %v3122
        %v5147 = vpack.c.b16 %v3127, %v3123
        %v5148 = vpack.c.b16 %v3132, %v3128
        %v5149 = vpack.c.b16 %v3133, %v3129
        %v5150 = vpack.c.b16 %v3134, %v3130
        %v5151 = vpack.c.b16 %v3135, %v3131
        %v5152 = vpack.c.b16 %v3140, %v3136
        %v5153 = vpack.c.b16 %v3141, %v3137
        %v5154 = vpack.c.b16 %v3142, %v3138
        %v5155 = vpack.c.b16 %v3143, %v3139
        %v5156 = vpack.c.b16 %v3148, %v3144
        %v5157 = vpack.c.b16 %v3149, %v3145
        %v5158 = vpack.c.b16 %v3150, %v3146
        %v5159 = vpack.c.b16 %v3151, %v3147
        %v5160 = vpack.c.b16 %v3156, %v3152
        %v5161 = vpack.c.b16 %v3157, %v3153
        %v5162 = vpack.c.b16 %v3158, %v3154
        %v5163 = vpack.c.b16 %v3159, %v3155
        %v5164 = vpack.c.b16 %v3164, %v3160
        %v5165 = vpack.c.b16 %v3165, %v3161
        %v5166 = vpack.c.b16 %v3166, %v3162
        %v5167 = vpack.c.b16 %v3167, %v3163
        %v5168 = vpack.c.b16 %v3172, %v3168
        %v5169 = vpack.c.b16 %v3173, %v3169
        %v5170 = vpack.c.b16 %v3174, %v3170
        %v5171 = vpack.c.b16 %v3175, %v3171
        %v5172 = vpack.c.b16 %v3180, %v3176
        %v5173 = vpack.c.b16 %v3181, %v3177
        %v5174 = vpack.c.b16 %v3182, %v3178
        %v5175 = vpack.c.b16 %v3183, %v3179
        %v5176 = vpack.c.b16 %v3188, %v3184
        %v5177 = vpack.c.b16 %v3189, %v3185
        %v5178 = vpack.c.b16 %v3190, %v3186
        %v5179 = vpack.c.b16 %v3191, %v3187
        %v5180 = vpack.c.b16 %v3196, %v3192
        %v5181 = vpack.c.b16 %v3197, %v3193
        %v5182 = vpack.c.b16 %v3198, %v3194
        %v5183 = vpack.c.b16 %v3199, %v3195
        %v5184 = vpack.c.b16 %v3204, %v3200
        %v5185 = vpack.c.b16 %v3205, %v3201
        %v5186 = vpack.c.b16 %v3206, %v3202
        %v5187 = vpack.c.b16 %v3207, %v3203
        %v5188 = vpack.c.b16 %v3212, %v3208
        %v5189 = vpack.c.b16 %v3213, %v3209
        %v5190 = vpack.c.b16 %v3214, %v3210
        %v5191 = vpack.c.b16 %v3215, %v3211
        %v5192 = vpack.c.b16 %v3220, %v3216
        %v5193 = vpack.c.b16 %v3221, %v3217
        %v5194 = vpack.c.b16 %v3222, %v3218
        %v5195 = vpack.c.b16 %v3223, %v3219
        %v5196 = vpack.c.b16 %v3228, %v3224
        %v5197 = vpack.c.b16 %v3229, %v3225
        %v5198 = vpack.c.b16 %v3230, %v3226
        %v5199 = vpack.c.b16 %v3231, %v3227
        %v5200 = vpack.c.b16 %v3236, %v3232
        %v5201 = vpack.c.b16 %v3237, %v3233
        %v5202 = vpack.c.b16 %v3238, %v3234
        %v5203 = vpack.c.b16 %v3239, %v3235
        %v5204 = vpack.c.b16 %v3244, %v3240
        %v5205 = vpack.c.b16 %v3245, %v3241
        %v5206 = vpack.c.b16 %v3246, %v3242
        %v5207 = vpack.c.b16 %v3247, %v3243
        %v5208 = vpack.c.b16 %v3252, %v3248
        %v5209 = vpack.c.b16 %v3253, %v3249
        %v5210 = vpack.c.b16 %v3254, %v3250
        %v5211 = vpack.c.b16 %v3255, %v3251
        %v5212 = vpack.c.b16 %v3260, %v3256
        %v5213 = vpack.c.b16 %v3261, %v3257
        %v5214 = vpack.c.b16 %v3262, %v3258
        %v5215 = vpack.c.b16 %v3263, %v3259
        %v5216 = vpack.c.b16 %v3268, %v3264
        %v5217 = vpack.c.b16 %v3269, %v3265
        %v5218 = vpack.c.b16 %v3270, %v3266
        %v5219 = vpack.c.b16 %v3271, %v3267
        %v5220 = vpack.c.b16 %v3276, %v3272
        %v5221 = vpack.c.b16 %v3277, %v3273
        %v5222 = vpack.c.b16 %v3278, %v3274
        %v5223 = vpack.c.b16 %v3279, %v3275
        %v5224 = vpack.c.b16 %v3284, %v3280
        %v5225 = vpack.c.b16 %v3285, %v3281
        %v5226 = vpack.c.b16 %v3286, %v3282
        %v5227 = vpack.c.b16 %v3287, %v3283
        %v5228 = vpack.c.b16 %v3292, %v3288
        %v5229 = vpack.c.b16 %v3293, %v3289
        %v5230 = vpack.c.b16 %v3294, %v3290
        %v5231 = vpack.c.b16 %v3295, %v3291
        %v5232 = vpack.c.b16 %v3300, %v3296
        %v5233 = vpack.c.b16 %v3301, %v3297
        %v5234 = vpack.c.b16 %v3302, %v3298
        %v5235 = vpack.c.b16 %v3303, %v3299
        %v5236 = vpack.c.b16 %v3308, %v3304
        %v5237 = vpack.c.b16 %v3309, %v3305
        %v5238 = vpack.c.b16 %v3310, %v3306
        %v5239 = vpack.c.b16 %v3311, %v3307
        %v5240 = vpack.c.b16 %v3316, %v3312
        %v5241 = vpack.c.b16 %v3317, %v3313
        %v5242 = vpack.c.b16 %v3318, %v3314
        %v5243 = vpack.c.b16 %v3319, %v3315
        %v5244 = vpack.c.b16 %v3324, %v3320
        %v5245 = vpack.c.b16 %v3325, %v3321
        %v5246 = vpack.c.b16 %v3326, %v3322
        %v5247 = vpack.c.b16 %v3327, %v3323
        %v5248 = vpack.c.b16 %v3332, %v3328
        %v5249 = vpack.c.b16 %v3333, %v3329
        %v5250 = vpack.c.b16 %v3334, %v3330
        %v5251 = vpack.c.b16 %v3335, %v3331
        %v5252 = vpack.c.b16 %v3340, %v3336
        %v5253 = vpack.c.b16 %v3341, %v3337
        %v5254 = vpack.c.b16 %v3342, %v3338
        %v5255 = vpack.c.b16 %v3343, %v3339
        %v5256 = vpack.c.b16 %v3348, %v3344
        %v5257 = vpack.c.b16 %v3349, %v3345
        %v5258 = vpack.c.b16 %v3350, %v3346
        %v5259 = vpack.c.b16 %v3351, %v3347
        %v5260 = vpack.c.b16 %v3356, %v3352
        %v5261 = vpack.c.b16 %v3357, %v3353
        %v5262 = vpack.c.b16 %v3358, %v3354
        %v5263 = vpack.c.b16 %v3359, %v3355
        %v5264 = vpack.c.b16 %v3364, %v3360
        %v5265 = vpack.c.b16 %v3365, %v3361
        %v5266 = vpack.c.b16 %v3366, %v3362
        %v5267 = vpack.c.b16 %v3367, %v3363
        %v5268 = vpack.c.b16 %v3372, %v3368
        %v5269 = vpack.c.b16 %v3373, %v3369
        %v5270 = vpack.c.b16 %v3374, %v3370
        %v5271 = vpack.c.b16 %v3375, %v3371
        %v5272 = vpack.c.b16 %v3380, %v3376
        %v5273 = vpack.c.b16 %v3381, %v3377
        %v5274 = vpack.c.b16 %v3382, %v3378
        %v5275 = vpack.c.b16 %v3383, %v3379
        %v5276 = vpack.c.b16 %v3388, %v3384
        %v5277 = vpack.c.b16 %v3389, %v3385
        %v5278 = vpack.c.b16 %v3390, %v3386
        %v5279 = vpack.c.b16 %v3391, %v3387
        %v5280 = vpack.c.b16 %v3396, %v3392
        %v5281 = vpack.c.b16 %v3397, %v3393
        %v5282 = vpack.c.b16 %v3398, %v3394
        %v5283 = vpack.c.b16 %v3399, %v3395
        %v5284 = vpack.c.b16 %v3404, %v3400
        %v5285 = vpack.c.b16 %v3405, %v3401
        %v5286 = vpack.c.b16 %v3406, %v3402
        %v5287 = vpack.c.b16 %v3407, %v3403
        %v5288 = vpack.c.b16 %v3412, %v3408
        %v5289 = vpack.c.b16 %v3413, %v3409
        %v5290 = vpack.c.b16 %v3414, %v3410
        %v5291 = vpack.c.b16 %v3415, %v3411
        %v5292 = vpack.c.b16 %v3420, %v3416
        %v5293 = vpack.c.b16 %v3421, %v3417
        %v5294 = vpack.c.b16 %v3422, %v3418
        %v5295 = vpack.c.b16 %v3423, %v3419
        %v5296 = vpack.c.b16 %v3428, %v3424
        %v5297 = vpack.c.b16 %v3429, %v3425
        %v5298 = vpack.c.b16 %v3430, %v3426
        %v5299 = vpack.c.b16 %v3431, %v3427
        %v5300 = vpack.c.b16 %v3436, %v3432
        %v5301 = vpack.c.b16 %v3437, %v3433
        %v5302 = vpack.c.b16 %v3438, %v3434
        %v5303 = vpack.c.b16 %v3439, %v3435
        %v5304 = vpack.c.b16 %v3444, %v3440
        %v5305 = vpack.c.b16 %v3445, %v3441
        %v5306 = vpack.c.b16 %v3446, %v3442
        %v5307 = vpack.c.b16 %v3447, %v3443
        %v5308 = vpack.c.b16 %v3452, %v3448
        %v5309 = vpack.c.b16 %v3453, %v3449
        %v5310 = vpack.c.b16 %v3454, %v3450
        %v5311 = vpack.c.b16 %v3455, %v3451
        %v5312 = vpack.c.b16 %v3460, %v3456
        %v5313 = vpack.c.b16 %v3461, %v3457
        %v5314 = vpack.c.b16 %v3462, %v3458
        %v5315 = vpack.c.b16 %v3463, %v3459
        %v5316 = vpack.c.b16 %v3468, %v3464
        %v5317 = vpack.c.b16 %v3469, %v3465
        %v5318 = vpack.c.b16 %v3470, %v3466
        %v5319 = vpack.c.b16 %v3471, %v3467
        %v5320 = vpack.c.b16 %v3476, %v3472
        %v5321 = vpack.c.b16 %v3477, %v3473
        %v5322 = vpack.c.b16 %v3478, %v3474
        %v5323 = vpack.c.b16 %v3479, %v3475
        %v5324 = vpack.c.b16 %v3484, %v3480
        %v5325 = vpack.c.b16 %v3485, %v3481
        %v5326 = vpack.c.b16 %v3486, %v3482
        %v5327 = vpack.c.b16 %v3487, %v3483
        %v5328 = vpack.c.b16 %v3492, %v3488
        %v5329 = vpack.c.b16 %v3493, %v3489
        %v5330 = vpack.c.b16 %v3494, %v3490
        %v5331 = vpack.c.b16 %v3495, %v3491
        %v5332 = vpack.c.b16 %v3500, %v3496
        %v5333 = vpack.c.b16 %v3501, %v3497
        %v5334 = vpack.c.b16 %v3502, %v3498
        %v5335 = vpack.c.b16 %v3503, %v3499
        %v5336 = vpack.c.b16 %v3508, %v3504
        %v5337 = vpack.c.b16 %v3509, %v3505
        %v5338 = vpack.c.b16 %v3510, %v3506
        %v5339 = vpack.c.b16 %v3511, %v3507
        %v5340 = vpack.c.b16 %v3516, %v3512
        %v5341 = vpack.c.b16 %v3517, %v3513
        %v5342 = vpack.c.b16 %v3518, %v3514
        %v5343 = vpack.c.b16 %v3519, %v3515
        %v5344 = vpack.c.b16 %v3524, %v3520
        %v5345 = vpack.c.b16 %v3525, %v3521
        %v5346 = vpack.c.b16 %v3526, %v3522
        %v5347 = vpack.c.b16 %v3527, %v3523
        %v5348 = vpack.c.b16 %v3532, %v3528
        %v5349 = vpack.c.b16 %v3533, %v3529
        %v5350 = vpack.c.b16 %v3534, %v3530
        %v5351 = vpack.c.b16 %v3535, %v3531
        %v5352 = vpack.c.b16 %v3540, %v3536
        %v5353 = vpack.c.b16 %v3541, %v3537
        %v5354 = vpack.c.b16 %v3542, %v3538
        %v5355 = vpack.c.b16 %v3543, %v3539
        %v5356 = vpack.c.b16 %v3548, %v3544
        %v5357 = vpack.c.b16 %v3549, %v3545
        %v5358 = vpack.c.b16 %v3550, %v3546
        %v5359 = vpack.c.b16 %v3551, %v3547
        %v5360 = vpack.c.b16 %v3556, %v3552
        %v5361 = vpack.c.b16 %v3557, %v3553
        %v5362 = vpack.c.b16 %v3558, %v3554
        %v5363 = vpack.c.b16 %v3559, %v3555
        %v5364 = vpack.c.b16 %v3564, %v3560
        %v5365 = vpack.c.b16 %v3565, %v3561
        %v5366 = vpack.c.b16 %v3566, %v3562
        %v5367 = vpack.c.b16 %v3567, %v3563
        %v5368 = vpack.c.b16 %v3572, %v3568
        %v5369 = vpack.c.b16 %v3573, %v3569
        %v5370 = vpack.c.b16 %v3574, %v3570
        %v5371 = vpack.c.b16 %v3575, %v3571
        %v5372 = vpack.c.b16 %v3580, %v3576
        %v5373 = vpack.c.b16 %v3581, %v3577
        %v5374 = vpack.c.b16 %v3582, %v3578
        %v5375 = vpack.c.b16 %v3583, %v3579
        %v5376 = vpack.c.b16 %v3588, %v3584
        %v5377 = vpack.c.b16 %v3589, %v3585
        %v5378 = vpack.c.b16 %v3590, %v3586
        %v5379 = vpack.c.b16 %v3591, %v3587
        %v5380 = vpack.c.b16 %v3596, %v3592
        %v5381 = vpack.c.b16 %v3597, %v3593
        %v5382 = vpack.c.b16 %v3598, %v3594
        %v5383 = vpack.c.b16 %v3599, %v3595
        %v5384 = vpack.c.b16 %v3604, %v3600
        %v5385 = vpack.c.b16 %v3605, %v3601
        %v5386 = vpack.c.b16 %v3606, %v3602
        %v5387 = vpack.c.b16 %v3607, %v3603
        %v5388 = vpack.c.b16 %v3612, %v3608
        %v5389 = vpack.c.b16 %v3613, %v3609
        %v5390 = vpack.c.b16 %v3614, %v3610
        %v5391 = vpack.c.b16 %v3615, %v3611
        %v5392 = vpack.c.b16 %v3620, %v3616
        %v5393 = vpack.c.b16 %v3621, %v3617
        %v5394 = vpack.c.b16 %v3622, %v3618
        %v5395 = vpack.c.b16 %v3623, %v3619
        %v5396 = vpack.c.b16 %v3628, %v3624
        %v5397 = vpack.c.b16 %v3629, %v3625
        %v5398 = vpack.c.b16 %v3630, %v3626
        %v5399 = vpack.c.b16 %v3631, %v3627
        %v5400 = vpack.c.b16 %v3636, %v3632
        %v5401 = vpack.c.b16 %v3637, %v3633
        %v5402 = vpack.c.b16 %v3638, %v3634
        %v5403 = vpack.c.b16 %v3639, %v3635
        %v5404 = vpack.c.b16 %v3644, %v3640
        %v5405 = vpack.c.b16 %v3645, %v3641
        %v5406 = vpack.c.b16 %v3646, %v3642
        %v5407 = vpack.c.b16 %v3647, %v3643
        %v5408 = vpack.c.b16 %v3652, %v3648
        %v5409 = vpack.c.b16 %v3653, %v3649
        %v5410 = vpack.c.b16 %v3654, %v3650
        %v5411 = vpack.c.b16 %v3655, %v3651
        %v5412 = vpack.c.b16 %v3660, %v3656
        %v5413 = vpack.c.b16 %v3661, %v3657
        %v5414 = vpack.c.b16 %v3662, %v3658
        %v5415 = vpack.c.b16 %v3663, %v3659
        %v5416 = vpack.c.b16 %v3668, %v3664
        %v5417 = vpack.c.b16 %v3669, %v3665
        %v5418 = vpack.c.b16 %v3670, %v3666
        %v5419 = vpack.c.b16 %v3671, %v3667
        %v5420 = vpack.c.b16 %v3676, %v3672
        %v5421 = vpack.c.b16 %v3677, %v3673
        %v5422 = vpack.c.b16 %v3678, %v3674
        %v5423 = vpack.c.b16 %v3679, %v3675
        %v5424 = vpack.c.b16 %v3684, %v3680
        %v5425 = vpack.c.b16 %v3685, %v3681
        %v5426 = vpack.c.b16 %v3686, %v3682
        %v5427 = vpack.c.b16 %v3687, %v3683
        %v5428 = vpack.c.b16 %v3692, %v3688
        %v5429 = vpack.c.b16 %v3693, %v3689
        %v5430 = vpack.c.b16 %v3694, %v3690
        %v5431 = vpack.c.b16 %v3695, %v3691
        %v5432 = vpack.c.b16 %v3700, %v3696
        %v5433 = vpack.c.b16 %v3701, %v3697
        %v5434 = vpack.c.b16 %v3702, %v3698
        %v5435 = vpack.c.b16 %v3703, %v3699
        %v5436 = vpack.c.b16 %v3708, %v3704
        %v5437 = vpack.c.b16 %v3709, %v3705
        %v5438 = vpack.c.b16 %v3710, %v3706
        %v5439 = vpack.c.b16 %v3711, %v3707
        %v5440 = vpack.c.b16 %v3716, %v3712
        %v5441 = vpack.c.b16 %v3717, %v3713
        %v5442 = vpack.c.b16 %v3718, %v3714
        %v5443 = vpack.c.b16 %v3719, %v3715
        %v5444 = vpack.c.b16 %v3724, %v3720
        %v5445 = vpack.c.b16 %v3725, %v3721
        %v5446 = vpack.c.b16 %v3726, %v3722
        %v5447 = vpack.c.b16 %v3727, %v3723
        %v5448 = vpack.c.b16 %v3732, %v3728
        %v5449 = vpack.c.b16 %v3733, %v3729
        %v5450 = vpack.c.b16 %v3734, %v3730
        %v5451 = vpack.c.b16 %v3735, %v3731
        %v5452 = vpack.c.b16 %v3740, %v3736
        %v5453 = vpack.c.b16 %v3741, %v3737
        %v5454 = vpack.c.b16 %v3742, %v3738
        %v5455 = vpack.c.b16 %v3743, %v3739
        %v5456 = vpack.c.b16 %v3748, %v3744
        %v5457 = vpack.c.b16 %v3749, %v3745
        %v5458 = vpack.c.b16 %v3750, %v3746
        %v5459 = vpack.c.b16 %v3751, %v3747
        %v5460 = vpack.c.b16 %v3756, %v3752
        %v5461 = vpack.c.b16 %v3757, %v3753
        %v5462 = vpack.c.b16 %v3758, %v3754
        %v5463 = vpack.c.b16 %v3759, %v3755
        %v5464 = vpack.c.b16 %v3764, %v3760
        %v5465 = vpack.c.b16 %v3765, %v3761
        %v5466 = vpack.c.b16 %v3766, %v3762
        %v5467 = vpack.c.b16 %v3767, %v3763
        %v5468 = vpack.c.b16 %v3772, %v3768
        %v5469 = vpack.c.b16 %v3773, %v3769
        %v5470 = vpack.c.b16 %v3774, %v3770
        %v5471 = vpack.c.b16 %v3775, %v3771
        %v5472 = vpack.c.b16 %v3780, %v3776
        %v5473 = vpack.c.b16 %v3781, %v3777
        %v5474 = vpack.c.b16 %v3782, %v3778
        %v5475 = vpack.c.b16 %v3783, %v3779
        %v5476 = vpack.c.b16 %v3788, %v3784
        %v5477 = vpack.c.b16 %v3789, %v3785
        %v5478 = vpack.c.b16 %v3790, %v3786
        %v5479 = vpack.c.b16 %v3791, %v3787
        %v5480 = vpack.c.b16 %v3796, %v3792
        %v5481 = vpack.c.b16 %v3797, %v3793
        %v5482 = vpack.c.b16 %v3798, %v3794
        %v5483 = vpack.c.b16 %v3799, %v3795
        %v5484 = vpack.c.b16 %v3804, %v3800
        %v5485 = vpack.c.b16 %v3805, %v3801
        %v5486 = vpack.c.b16 %v3806, %v3802
        %v5487 = vpack.c.b16 %v3807, %v3803
        %v5488 = vpack.c.b16 %v3812, %v3808
        %v5489 = vpack.c.b16 %v3813, %v3809
        %v5490 = vpack.c.b16 %v3814, %v3810
        %v5491 = vpack.c.b16 %v3815, %v3811
        %v5492 = vpack.c.b16 %v3820, %v3816
        %v5493 = vpack.c.b16 %v3821, %v3817
        %v5494 = vpack.c.b16 %v3822, %v3818
        %v5495 = vpack.c.b16 %v3823, %v3819
        %v5496 = vpack.c.b16 %v3828, %v3824
        %v5497 = vpack.c.b16 %v3829, %v3825
        %v5498 = vpack.c.b16 %v3830, %v3826
        %v5499 = vpack.c.b16 %v3831, %v3827
        %v5500 = vpack.c.b16 %v3836, %v3832
        %v5501 = vpack.c.b16 %v3837, %v3833
        %v5502 = vpack.c.b16 %v3838, %v3834
        %v5503 = vpack.c.b16 %v3839, %v3835
        %v5504 = vpack.c.b16 %v3844, %v3840
        %v5505 = vpack.c.b16 %v3845, %v3841
        %v5506 = vpack.c.b16 %v3846, %v3842
        %v5507 = vpack.c.b16 %v3847, %v3843
        %v5508 = vpack.c.b16 %v3852, %v3848
        %v5509 = vpack.c.b16 %v3853, %v3849
        %v5510 = vpack.c.b16 %v3854, %v3850
        %v5511 = vpack.c.b16 %v3855, %v3851
        %v5512 = vpack.c.b16 %v3860, %v3856
        %v5513 = vpack.c.b16 %v3861, %v3857
        %v5514 = vpack.c.b16 %v3862, %v3858
        %v5515 = vpack.c.b16 %v3863, %v3859
        %v5516 = vpack.c.b16 %v3868, %v3864
        %v5517 = vpack.c.b16 %v3869, %v3865
        %v5518 = vpack.c.b16 %v3870, %v3866
        %v5519 = vpack.c.b16 %v3871, %v3867
        %v5520 = vpack.c.b16 %v3876, %v3872
        %v5521 = vpack.c.b16 %v3877, %v3873
        %v5522 = vpack.c.b16 %v3878, %v3874
        %v5523 = vpack.c.b16 %v3879, %v3875
        %v5524 = vpack.c.b16 %v3884, %v3880
        %v5525 = vpack.c.b16 %v3885, %v3881
        %v5526 = vpack.c.b16 %v3886, %v3882
        %v5527 = vpack.c.b16 %v3887, %v3883
        %v5528 = vpack.c.b16 %v3892, %v3888
        %v5529 = vpack.c.b16 %v3893, %v3889
        %v5530 = vpack.c.b16 %v3894, %v3890
        %v5531 = vpack.c.b16 %v3895, %v3891
        %v5532 = vpack.c.b16 %v3900, %v3896
        %v5533 = vpack.c.b16 %v3901, %v3897
        %v5534 = vpack.c.b16 %v3902, %v3898
        %v5535 = vpack.c.b16 %v3903, %v3899
        %v5536 = vpack.c.b16 %v3908, %v3904
        %v5537 = vpack.c.b16 %v3909, %v3905
        %v5538 = vpack.c.b16 %v3910, %v3906
        %v5539 = vpack.c.b16 %v3911, %v3907
        %v5540 = vpack.c.b16 %v3916, %v3912
        %v5541 = vpack.c.b16 %v3917, %v3913
        %v5542 = vpack.c.b16 %v3918, %v3914
        %v5543 = vpack.c.b16 %v3919, %v3915
        %v5544 = vpack.c.b16 %v3924, %v3920
        %v5545 = vpack.c.b16 %v3925, %v3921
        %v5546 = vpack.c.b16 %v3926, %v3922
        %v5547 = vpack.c.b16 %v3927, %v3923
        %v5548 = vpack.c.b16 %v3932, %v3928
        %v5549 = vpack.c.b16 %v3933, %v3929
        %v5550 = vpack.c.b16 %v3934, %v3930
        %v5551 = vpack.c.b16 %v3935, %v3931
        %v5552 = vpack.c.b16 %v3940, %v3936
        %v5553 = vpack.c.b16 %v3941, %v3937
        %v5554 = vpack.c.b16 %v3942, %v3938
        %v5555 = vpack.c.b16 %v3943, %v3939
        %v5556 = vpack.c.b16 %v3948, %v3944
        %v5557 = vpack.c.b16 %v3949, %v3945
        %v5558 = vpack.c.b16 %v3950, %v3946
        %v5559 = vpack.c.b16 %v3951, %v3947
        %v5560 = vpack.c.b16 %v3956, %v3952
        %v5561 = vpack.c.b16 %v3957, %v3953
        %v5562 = vpack.c.b16 %v3958, %v3954
        %v5563 = vpack.c.b16 %v3959, %v3955
        %v5564 = vpack.c.b16 %v3964, %v3960
        %v5565 = vpack.c.b16 %v3965, %v3961
        %v5566 = vpack.c.b16 %v3966, %v3962
        %v5567 = vpack.c.b16 %v3967, %v3963
        %v5568 = vpack.c.b16 %v3972, %v3968
        %v5569 = vpack.c.b16 %v3973, %v3969
        %v5570 = vpack.c.b16 %v3974, %v3970
        %v5571 = vpack.c.b16 %v3975, %v3971
        %v5572 = vpack.c.b16 %v3980, %v3976
        %v5573 = vpack.c.b16 %v3981, %v3977
        %v5574 = vpack.c.b16 %v3982, %v3978
        %v5575 = vpack.c.b16 %v3983, %v3979
        %v5576 = vpack.c.b16 %v3988, %v3984
        %v5577 = vpack.c.b16 %v3989, %v3985
        %v5578 = vpack.c.b16 %v3990, %v3986
        %v5579 = vpack.c.b16 %v3991, %v3987
        %v5580 = vpack.c.b16 %v3996, %v3992
        %v5581 = vpack.c.b16 %v3997, %v3993
        %v5582 = vpack.c.b16 %v3998, %v3994
        %v5583 = vpack.c.b16 %v3999, %v3995
        %v5584 = vpack.c.b16 %v4004, %v4000
        %v5585 = vpack.c.b16 %v4005, %v4001
        %v5586 = vpack.c.b16 %v4006, %v4002
        %v5587 = vpack.c.b16 %v4007, %v4003
        %v5588 = vpack.c.b16 %v4012, %v4008
        %v5589 = vpack.c.b16 %v4013, %v4009
        %v5590 = vpack.c.b16 %v4014, %v4010
        %v5591 = vpack.c.b16 %v4015, %v4011
        %v5592 = vpack.c.b16 %v4020, %v4016
        %v5593 = vpack.c.b16 %v4021, %v4017
        %v5594 = vpack.c.b16 %v4022, %v4018
        %v5595 = vpack.c.b16 %v4023, %v4019
        %v5596 = vpack.c.b16 %v4028, %v4024
        %v5597 = vpack.c.b16 %v4029, %v4025
        %v5598 = vpack.c.b16 %v4030, %v4026
        %v5599 = vpack.c.b16 %v4031, %v4027
        %v5600 = vpack.c.b16 %v4036, %v4032
        %v5601 = vpack.c.b16 %v4037, %v4033
        %v5602 = vpack.c.b16 %v4038, %v4034
        %v5603 = vpack.c.b16 %v4039, %v4035
        %v5604 = vpack.c.b16 %v4044, %v4040
        %v5605 = vpack.c.b16 %v4045, %v4041
        %v5606 = vpack.c.b16 %v4046, %v4042
        %v5607 = vpack.c.b16 %v4047, %v4043
        %v5608 = vpack.c.b16 %v4052, %v4048
        %v5609 = vpack.c.b16 %v4053, %v4049
        %v5610 = vpack.c.b16 %v4054, %v4050
        %v5611 = vpack.c.b16 %v4055, %v4051
        %v5612 = vpack.c.b16 %v4060, %v4056
        %v5613 = vpack.c.b16 %v4061, %v4057
        %v5614 = vpack.c.b16 %v4062, %v4058
        %v5615 = vpack.c.b16 %v4063, %v4059
        %v5616 = vpack.c.b16 %v4068, %v4064
        %v5617 = vpack.c.b16 %v4069, %v4065
        %v5618 = vpack.c.b16 %v4070, %v4066
        %v5619 = vpack.c.b16 %v4071, %v4067
        %v5620 = vpack.c.b16 %v4076, %v4072
        %v5621 = vpack.c.b16 %v4077, %v4073
        %v5622 = vpack.c.b16 %v4078, %v4074
        %v5623 = vpack.c.b16 %v4079, %v4075
        %v5624 = vpack.c.b16 %v4084, %v4080
        %v5625 = vpack.c.b16 %v4085, %v4081
        %v5626 = vpack.c.b16 %v4086, %v4082
        %v5627 = vpack.c.b16 %v4087, %v4083
        %v5628 = vpack.c.b16 %v4092, %v4088
        %v5629 = vpack.c.b16 %v4093, %v4089
        %v5630 = vpack.c.b16 %v4094, %v4090
        %v5631 = vpack.c.b16 %v4095, %v4091
        %v5632 = vpack.c.b16 %v4100, %v4096
        %v5633 = vpack.c.b16 %v4101, %v4097
        %v5634 = vpack.c.b16 %v4102, %v4098
        %v5635 = vpack.c.b16 %v4103, %v4099
        %v5636 = vpack.c.b16 %v4108, %v4104
        %v5637 = vpack.c.b16 %v4109, %v4105
        %v5638 = vpack.c.b16 %v4110, %v4106
        %v5639 = vpack.c.b16 %v4111, %v4107
        %v5640 = vpack.c.b16 %v4116, %v4112
        %v5641 = vpack.c.b16 %v4117, %v4113
        %v5642 = vpack.c.b16 %v4118, %v4114
        %v5643 = vpack.c.b16 %v4119, %v4115
        %v5644 = vpack.c.b16 %v4124, %v4120
        %v5645 = vpack.c.b16 %v4125, %v4121
        %v5646 = vpack.c.b16 %v4126, %v4122
        %v5647 = vpack.c.b16 %v4127, %v4123
        %v5648 = vpack.c.b16 %v4132, %v4128
        %v5649 = vpack.c.b16 %v4133, %v4129
        %v5650 = vpack.c.b16 %v4134, %v4130
        %v5651 = vpack.c.b16 %v4135, %v4131
        %v5652 = vpack.c.b16 %v4140, %v4136
        %v5653 = vpack.c.b16 %v4141, %v4137
        %v5654 = vpack.c.b16 %v4142, %v4138
        %v5655 = vpack.c.b16 %v4143, %v4139
        %v5656 = vpack.c.b16 %v4148, %v4144
        %v5657 = vpack.c.b16 %v4149, %v4145
        %v5658 = vpack.c.b16 %v4150, %v4146
        %v5659 = vpack.c.b16 %v4151, %v4147
        %v5660 = vpack.c.b16 %v4156, %v4152
        %v5661 = vpack.c.b16 %v4157, %v4153
        %v5662 = vpack.c.b16 %v4158, %v4154
        %v5663 = vpack.c.b16 %v4159, %v4155
        %v5664 = vpack.c.b16 %v4164, %v4160
        %v5665 = vpack.c.b16 %v4165, %v4161
        %v5666 = vpack.c.b16 %v4166, %v4162
        %v5667 = vpack.c.b16 %v4167, %v4163
        %v5668 = vpack.c.b16 %v4172, %v4168
        %v5669 = vpack.c.b16 %v4173, %v4169
        %v5670 = vpack.c.b16 %v4174, %v4170
        %v5671 = vpack.c.b16 %v4175, %v4171
        %v5672 = vpack.c.b16 %v4180, %v4176
        %v5673 = vpack.c.b16 %v4181, %v4177
        %v5674 = vpack.c.b16 %v4182, %v4178
        %v5675 = vpack.c.b16 %v4183, %v4179
        %v5676 = vpack.c.b16 %v4188, %v4184
        %v5677 = vpack.c.b16 %v4189, %v4185
        %v5678 = vpack.c.b16 %v4190, %v4186
        %v5679 = vpack.c.b16 %v4191, %v4187
        %v5680 = vpack.c.b16 %v4196, %v4192
        %v5681 = vpack.c.b16 %v4197, %v4193
        %v5682 = vpack.c.b16 %v4198, %v4194
        %v5683 = vpack.c.b16 %v4199, %v4195
        %v5684 = vpack.c.b16 %v4204, %v4200
        %v5685 = vpack.c.b16 %v4205, %v4201
        %v5686 = vpack.c.b16 %v4206, %v4202
        %v5687 = vpack.c.b16 %v4207, %v4203
        %v5688 = vpack.c.b16 %v4212, %v4208
        %v5689 = vpack.c.b16 %v4213, %v4209
        %v5690 = vpack.c.b16 %v4214, %v4210
        %v5691 = vpack.c.b16 %v4215, %v4211
        %v5692 = vpack.c.b16 %v4220, %v4216
        %v5693 = vpack.c.b16 %v4221, %v4217
        %v5694 = vpack.c.b16 %v4222, %v4218
        %v5695 = vpack.c.b16 %v4223, %v4219
        %v5696 = vpack.c.b16 %v4228, %v4224
        %v5697 = vpack.c.b16 %v4229, %v4225
        %v5698 = vpack.c.b16 %v4230, %v4226
        %v5699 = vpack.c.b16 %v4231, %v4227
        %v5700 = vpack.c.b16 %v4236, %v4232
        %v5701 = vpack.c.b16 %v4237, %v4233
        %v5702 = vpack.c.b16 %v4238, %v4234
        %v5703 = vpack.c.b16 %v4239, %v4235
        %v5704 = vpack.c.b16 %v4244, %v4240
        %v5705 = vpack.c.b16 %v4245, %v4241
        %v5706 = vpack.c.b16 %v4246, %v4242
        %v5707 = vpack.c.b16 %v4247, %v4243
        %v5708 = vpack.c.b16 %v4252, %v4248
        %v5709 = vpack.c.b16 %v4253, %v4249
        %v5710 = vpack.c.b16 %v4254, %v4250
        %v5711 = vpack.c.b16 %v4255, %v4251
        %v5712 = vpack.c.b16 %v4260, %v4256
        %v5713 = vpack.c.b16 %v4261, %v4257
        %v5714 = vpack.c.b16 %v4262, %v4258
        %v5715 = vpack.c.b16 %v4263, %v4259
        %v5716 = vpack.c.b16 %v4268, %v4264
        %v5717 = vpack.c.b16 %v4269, %v4265
        %v5718 = vpack.c.b16 %v4270, %v4266
        %v5719 = vpack.c.b16 %v4271, %v4267
        %v5720 = vpack.c.b16 %v4276, %v4272
        %v5721 = vpack.c.b16 %v4277, %v4273
        %v5722 = vpack.c.b16 %v4278, %v4274
        %v5723 = vpack.c.b16 %v4279, %v4275
        %v5724 = vpack.c.b16 %v4284, %v4280
        %v5725 = vpack.c.b16 %v4285, %v4281
        %v5726 = vpack.c.b16 %v4286, %v4282
        %v5727 = vpack.c.b16 %v4287, %v4283
        %v5728 = vpack.c.b16 %v4292, %v4288
        %v5729 = vpack.c.b16 %v4293, %v4289
        %v5730 = vpack.c.b16 %v4294, %v4290
        %v5731 = vpack.c.b16 %v4295, %v4291
        %v5732 = vpack.c.b16 %v4300, %v4296
        %v5733 = vpack.c.b16 %v4301, %v4297
        %v5734 = vpack.c.b16 %v4302, %v4298
        %v5735 = vpack.c.b16 %v4303, %v4299
        %v5736 = vpack.c.b16 %v4308, %v4304
        %v5737 = vpack.c.b16 %v4309, %v4305
        %v5738 = vpack.c.b16 %v4310, %v4306
        %v5739 = vpack.c.b16 %v4311, %v4307
        %v5740 = vpack.c.b16 %v4316, %v4312
        %v5741 = vpack.c.b16 %v4317, %v4313
        %v5742 = vpack.c.b16 %v4318, %v4314
        %v5743 = vpack.c.b16 %v4319, %v4315
        %v5744 = vpack.c.b16 %v4324, %v4320
        %v5745 = vpack.c.b16 %v4325, %v4321
        %v5746 = vpack.c.b16 %v4326, %v4322
        %v5747 = vpack.c.b16 %v4327, %v4323
        %v5748 = vpack.c.b16 %v4332, %v4328
        %v5749 = vpack.c.b16 %v4333, %v4329
        %v5750 = vpack.c.b16 %v4334, %v4330
        %v5751 = vpack.c.b16 %v4335, %v4331
        %v5752 = vpack.c.b16 %v4340, %v4336
        %v5753 = vpack.c.b16 %v4341, %v4337
        %v5754 = vpack.c.b16 %v4342, %v4338
        %v5755 = vpack.c.b16 %v4343, %v4339
        %v5756 = vpack.c.b16 %v4348, %v4344
        %v5757 = vpack.c.b16 %v4349, %v4345
        %v5758 = vpack.c.b16 %v4350, %v4346
        %v5759 = vpack.c.b16 %v4351, %v4347
        %v5760 = vpack.c.b16 %v4356, %v4352
        %v5761 = vpack.c.b16 %v4357, %v4353
        %v5762 = vpack.c.b16 %v4358, %v4354
        %v5763 = vpack.c.b16 %v4359, %v4355
        %v5764 = vpack.c.b16 %v4364, %v4360
        %v5765 = vpack.c.b16 %v4365, %v4361
        %v5766 = vpack.c.b16 %v4366, %v4362
        %v5767 = vpack.c.b16 %v4367, %v4363
        %v5768 = vpack.c.b16 %v4372, %v4368
        %v5769 = vpack.c.b16 %v4373, %v4369
        %v5770 = vpack.c.b16 %v4374, %v4370
        %v5771 = vpack.c.b16 %v4375, %v4371
        %v5772 = vpack.c.b16 %v4380, %v4376
        %v5773 = vpack.c.b16 %v4381, %v4377
        %v5774 = vpack.c.b16 %v4382, %v4378
        %v5775 = vpack.c.b16 %v4383, %v4379
        %v5776 = vpack.c.b16 %v4388, %v4384
        %v5777 = vpack.c.b16 %v4389, %v4385
        %v5778 = vpack.c.b16 %v4390, %v4386
        %v5779 = vpack.c.b16 %v4391, %v4387
        %v5780 = vpack.c.b16 %v4396, %v4392
        %v5781 = vpack.c.b16 %v4397, %v4393
        %v5782 = vpack.c.b16 %v4398, %v4394
        %v5783 = vpack.c.b16 %v4399, %v4395
        %v5784 = vpack.c.b16 %v4404, %v4400
        %v5785 = vpack.c.b16 %v4405, %v4401
        %v5786 = vpack.c.b16 %v4406, %v4402
        %v5787 = vpack.c.b16 %v4407, %v4403
        %v5788 = vpack.c.b16 %v4412, %v4408
        %v5789 = vpack.c.b16 %v4413, %v4409
        %v5790 = vpack.c.b16 %v4414, %v4410
        %v5791 = vpack.c.b16 %v4415, %v4411
        %v5792 = vpack.c.b16 %v4420, %v4416
        %v5793 = vpack.c.b16 %v4421, %v4417
        %v5794 = vpack.c.b16 %v4422, %v4418
        %v5795 = vpack.c.b16 %v4423, %v4419
        %v5796 = vpack.c.b16 %v4428, %v4424
        %v5797 = vpack.c.b16 %v4429, %v4425
        %v5798 = vpack.c.b16 %v4430, %v4426
        %v5799 = vpack.c.b16 %v4431, %v4427
        %v5800 = vpack.c.b16 %v4436, %v4432
        %v5801 = vpack.c.b16 %v4437, %v4433
        %v5802 = vpack.c.b16 %v4438, %v4434
        %v5803 = vpack.c.b16 %v4439, %v4435
        %v5804 = vpack.c.b16 %v4444, %v4440
        %v5805 = vpack.c.b16 %v4445, %v4441
        %v5806 = vpack.c.b16 %v4446, %v4442
        %v5807 = vpack.c.b16 %v4447, %v4443
        %v5808 = vpack.c.b16 %v4452, %v4448
        %v5809 = vpack.c.b16 %v4453, %v4449
        %v5810 = vpack.c.b16 %v4454, %v4450
        %v5811 = vpack.c.b16 %v4455, %v4451
        %v5812 = vpack.c.b16 %v4460, %v4456
        %v5813 = vpack.c.b16 %v4461, %v4457
        %v5814 = vpack.c.b16 %v4462, %v4458
        %v5815 = vpack.c.b16 %v4463, %v4459
        %v5816 = vpack.c.b16 %v4468, %v4464
        %v5817 = vpack.c.b16 %v4469, %v4465
        %v5818 = vpack.c.b16 %v4470, %v4466
        %v5819 = vpack.c.b16 %v4471, %v4467
        %v5820 = vpack.c.b16 %v4476, %v4472
        %v5821 = vpack.c.b16 %v4477, %v4473
        %v5822 = vpack.c.b16 %v4478, %v4474
        %v5823 = vpack.c.b16 %v4479, %v4475
        %v5824 = vpack.c.b16 %v4484, %v4480
        %v5825 = vpack.c.b16 %v4485, %v4481
        %v5826 = vpack.c.b16 %v4486, %v4482
        %v5827 = vpack.c.b16 %v4487, %v4483
        %v5828 = vpack.c.b16 %v4492, %v4488
        %v5829 = vpack.c.b16 %v4493, %v4489
        %v5830 = vpack.c.b16 %v4494, %v4490
        %v5831 = vpack.c.b16 %v4495, %v4491
        %v5832 = vpack.c.b16 %v4500, %v4496
        %v5833 = vpack.c.b16 %v4501, %v4497
        %v5834 = vpack.c.b16 %v4502, %v4498
        %v5835 = vpack.c.b16 %v4503, %v4499
        %v5836 = vpack.c.b16 %v4508, %v4504
        %v5837 = vpack.c.b16 %v4509, %v4505
        %v5838 = vpack.c.b16 %v4510, %v4506
        %v5839 = vpack.c.b16 %v4511, %v4507
        %v5840 = vpack.c.b16 %v4516, %v4512
        %v5841 = vpack.c.b16 %v4517, %v4513
        %v5842 = vpack.c.b16 %v4518, %v4514
        %v5843 = vpack.c.b16 %v4519, %v4515
        %v5844 = vpack.c.b16 %v4524, %v4520
        %v5845 = vpack.c.b16 %v4525, %v4521
        %v5846 = vpack.c.b16 %v4526, %v4522
        %v5847 = vpack.c.b16 %v4527, %v4523
        %v5848 = vpack.c.b16 %v4532, %v4528
        %v5849 = vpack.c.b16 %v4533, %v4529
        %v5850 = vpack.c.b16 %v4534, %v4530
        %v5851 = vpack.c.b16 %v4535, %v4531
        %v5852 = vpack.c.b16 %v4540, %v4536
        %v5853 = vpack.c.b16 %v4541, %v4537
        %v5854 = vpack.c.b16 %v4542, %v4538
        %v5855 = vpack.c.b16 %v4543, %v4539
        %v5856 = vpack.c.b16 %v4548, %v4544
        %v5857 = vpack.c.b16 %v4549, %v4545
        %v5858 = vpack.c.b16 %v4550, %v4546
        %v5859 = vpack.c.b16 %v4551, %v4547
        %v5860 = vpack.c.b16 %v4556, %v4552
        %v5861 = vpack.c.b16 %v4557, %v4553
        %v5862 = vpack.c.b16 %v4558, %v4554
        %v5863 = vpack.c.b16 %v4559, %v4555
        %v5864 = vpack.c.b16 %v4564, %v4560
        %v5865 = vpack.c.b16 %v4565, %v4561
        %v5866 = vpack.c.b16 %v4566, %v4562
        %v5867 = vpack.c.b16 %v4567, %v4563
        %v5868 = vpack.c.b16 %v4572, %v4568
        %v5869 = vpack.c.b16 %v4573, %v4569
        %v5870 = vpack.c.b16 %v4574, %v4570
        %v5871 = vpack.c.b16 %v4575, %v4571
        %v5872 = vpack.c.b16 %v4580, %v4576
        %v5873 = vpack.c.b16 %v4581, %v4577
        %v5874 = vpack.c.b16 %v4582, %v4578
        %v5875 = vpack.c.b16 %v4583, %v4579
        %v5876 = vpack.c.b16 %v4588, %v4584
        %v5877 = vpack.c.b16 %v4589, %v4585
        %v5878 = vpack.c.b16 %v4590, %v4586
        %v5879 = vpack.c.b16 %v4591, %v4587
        %v5880 = vpack.c.b16 %v4596, %v4592
        %v5881 = vpack.c.b16 %v4597, %v4593
        %v5882 = vpack.c.b16 %v4598, %v4594
        %v5883 = vpack.c.b16 %v4599, %v4595
        %v5884 = vpack.c.b16 %v4604, %v4600
        %v5885 = vpack.c.b16 %v4605, %v4601
        %v5886 = vpack.c.b16 %v4606, %v4602
        %v5887 = vpack.c.b16 %v4607, %v4603
        %v5888 = vpack.c.b16 %v4612, %v4608
        %v5889 = vpack.c.b16 %v4613, %v4609
        %v5890 = vpack.c.b16 %v4614, %v4610
        %v5891 = vpack.c.b16 %v4615, %v4611
        %v5892 = vpack.c.b16 %v4620, %v4616
        %v5893 = vpack.c.b16 %v4621, %v4617
        %v5894 = vpack.c.b16 %v4622, %v4618
        %v5895 = vpack.c.b16 %v4623, %v4619
        %v5896 = vpack.c.b16 %v4628, %v4624
        %v5897 = vpack.c.b16 %v4629, %v4625
        %v5898 = vpack.c.b16 %v4630, %v4626
        %v5899 = vpack.c.b16 %v4631, %v4627
        %v5900 = vpack.c.b16 %v4636, %v4632
        %v5901 = vpack.c.b16 %v4637, %v4633
        %v5902 = vpack.c.b16 %v4638, %v4634
        %v5903 = vpack.c.b16 %v4639, %v4635
        %v5904 = vpack.c.b16 %v4644, %v4640
        %v5905 = vpack.c.b16 %v4645, %v4641
        %v5906 = vpack.c.b16 %v4646, %v4642
        %v5907 = vpack.c.b16 %v4647, %v4643
        %v5908 = vpack.c.b16 %v4652, %v4648
        %v5909 = vpack.c.b16 %v4653, %v4649
        %v5910 = vpack.c.b16 %v4654, %v4650
        %v5911 = vpack.c.b16 %v4655, %v4651
        %v5912 = vpack.c.b16 %v4660, %v4656
        %v5913 = vpack.c.b16 %v4661, %v4657
        %v5914 = vpack.c.b16 %v4662, %v4658
        %v5915 = vpack.c.b16 %v4663, %v4659
        %v5916 = vpack.c.b16 %v4668, %v4664
        %v5917 = vpack.c.b16 %v4669, %v4665
        %v5918 = vpack.c.b16 %v4670, %v4666
        %v5919 = vpack.c.b16 %v4671, %v4667
        %v5920 = vpack.c.b16 %v4676, %v4672
        %v5921 = vpack.c.b16 %v4677, %v4673
        %v5922 = vpack.c.b16 %v4678, %v4674
        %v5923 = vpack.c.b16 %v4679, %v4675
        %v5924 = vpack.c.b16 %v4684, %v4680
        %v5925 = vpack.c.b16 %v4685, %v4681
        %v5926 = vpack.c.b16 %v4686, %v4682
        %v5927 = vpack.c.b16 %v4687, %v4683
        %v5928 = vpack.c.b16 %v4692, %v4688
        %v5929 = vpack.c.b16 %v4693, %v4689
        %v5930 = vpack.c.b16 %v4694, %v4690
        %v5931 = vpack.c.b16 %v4695, %v4691
        %v5932 = vpack.c.b16 %v4700, %v4696
        %v5933 = vpack.c.b16 %v4701, %v4697
        %v5934 = vpack.c.b16 %v4702, %v4698
        %v5935 = vpack.c.b16 %v4703, %v4699
        %v5936 = vpack.c.b16 %v4708, %v4704
        %v5937 = vpack.c.b16 %v4709, %v4705
        %v5938 = vpack.c.b16 %v4710, %v4706
        %v5939 = vpack.c.b16 %v4711, %v4707
        %v5940 = vpack.c.b16 %v4716, %v4712
        %v5941 = vpack.c.b16 %v4717, %v4713
        %v5942 = vpack.c.b16 %v4718, %v4714
        %v5943 = vpack.c.b16 %v4719, %v4715
        %v5944 = vpack.c.b16 %v4724, %v4720
        %v5945 = vpack.c.b16 %v4725, %v4721
        %v5946 = vpack.c.b16 %v4726, %v4722
        %v5947 = vpack.c.b16 %v4727, %v4723
        %v5948 = vpack.c.b16 %v4732, %v4728
        %v5949 = vpack.c.b16 %v4733, %v4729
        %v5950 = vpack.c.b16 %v4734, %v4730
        %v5951 = vpack.c.b16 %v4735, %v4731
        %v5952 = vpack.c.b16 %v4740, %v4736
        %v5953 = vpack.c.b16 %v4741, %v4737
        %v5954 = vpack.c.b16 %v4742, %v4738
        %v5955 = vpack.c.b16 %v4743, %v4739
        %v5956 = vpack.c.b16 %v4748, %v4744
        %v5957 = vpack.c.b16 %v4749, %v4745
        %v5958 = vpack.c.b16 %v4750, %v4746
        %v5959 = vpack.c.b16 %v4751, %v4747
        %v5960 = vpack.c.b16 %v4756, %v4752
        %v5961 = vpack.c.b16 %v4757, %v4753
        %v5962 = vpack.c.b16 %v4758, %v4754
        %v5963 = vpack.c.b16 %v4759, %v4755
        %v5964 = vpack.c.b16 %v4764, %v4760
        %v5965 = vpack.c.b16 %v4765, %v4761
        %v5966 = vpack.c.b16 %v4766, %v4762
        %v5967 = vpack.c.b16 %v4767, %v4763
        %v5968 = vpack.c.b16 %v4772, %v4768
        %v5969 = vpack.c.b16 %v4773, %v4769
        %v5970 = vpack.c.b16 %v4774, %v4770
        %v5971 = vpack.c.b16 %v4775, %v4771
        %v5972 = vpack.c.b16 %v4780, %v4776
        %v5973 = vpack.c.b16 %v4781, %v4777
        %v5974 = vpack.c.b16 %v4782, %v4778
        %v5975 = vpack.c.b16 %v4783, %v4779
        %v5976 = vpack.c.b16 %v4788, %v4784
        %v5977 = vpack.c.b16 %v4789, %v4785
        %v5978 = vpack.c.b16 %v4790, %v4786
        %v5979 = vpack.c.b16 %v4791, %v4787
        %v5980 = vpack.c.b16 %v4796, %v4792
        %v5981 = vpack.c.b16 %v4797, %v4793
        %v5982 = vpack.c.b16 %v4798, %v4794
        %v5983 = vpack.c.b16 %v4799, %v4795
        %v5984 = vpack.c.b16 %v4804, %v4800
        %v5985 = vpack.c.b16 %v4805, %v4801
        %v5986 = vpack.c.b16 %v4806, %v4802
        %v5987 = vpack.c.b16 %v4807, %v4803
        %v5988 = vpack.c.b16 %v4812, %v4808
        %v5989 = vpack.c.b16 %v4813, %v4809
        %v5990 = vpack.c.b16 %v4814, %v4810
        %v5991 = vpack.c.b16 %v4815, %v4811
        %v5992 = vpack.c.b16 %v4820, %v4816
        %v5993 = vpack.c.b16 %v4821, %v4817
        %v5994 = vpack.c.b16 %v4822, %v4818
        %v5995 = vpack.c.b16 %v4823, %v4819
        %v5996 = vpack.c.b16 %v4828, %v4824
        %v5997 = vpack.c.b16 %v4829, %v4825
        %v5998 = vpack.c.b16 %v4830, %v4826
        %v5999 = vpack.c.b16 %v4831, %v4827
        %v6000 = vpack.c.b16 %v4836, %v4832
        %v6001 = vpack.c.b16 %v4837, %v4833
        %v6002 = vpack.c.b16 %v4838, %v4834
        %v6003 = vpack.c.b16 %v4839, %v4835
        %v6004 = vpack.c.b16 %v4844, %v4840
        %v6005 = vpack.c.b16 %v4845, %v4841
        %v6006 = vpack.c.b16 %v4846, %v4842
        %v6007 = vpack.c.b16 %v4847, %v4843
        %v6008 = vpack.c.b16 %v4852, %v4848
        %v6009 = vpack.c.b16 %v4853, %v4849
        %v6010 = vpack.c.b16 %v4854, %v4850
        %v6011 = vpack.c.b16 %v4855, %v4851
        %v6012 = vpack.c.b16 %v4860, %v4856
        %v6013 = vpack.c.b16 %v4861, %v4857
        %v6014 = vpack.c.b16 %v4862, %v4858
        %v6015 = vpack.c.b16 %v4863, %v4859
        %v6016 = vpack.c.b16 %v4868, %v4864
        %v6017 = vpack.c.b16 %v4869, %v4865
        %v6018 = vpack.c.b16 %v4870, %v4866
        %v6019 = vpack.c.b16 %v4871, %v4867
        %v6020 = vpack.c.b16 %v4876, %v4872
        %v6021 = vpack.c.b16 %v4877, %v4873
        %v6022 = vpack.c.b16 %v4878, %v4874
        %v6023 = vpack.c.b16 %v4879, %v4875
        %v6024 = vpack.c.b16 %v4884, %v4880
        %v6025 = vpack.c.b16 %v4885, %v4881
        %v6026 = vpack.c.b16 %v4886, %v4882
        %v6027 = vpack.c.b16 %v4887, %v4883
        %v6028 = vpack.c.b16 %v4892, %v4888
        %v6029 = vpack.c.b16 %v4893, %v4889
        %v6030 = vpack.c.b16 %v4894, %v4890
        %v6031 = vpack.c.b16 %v4895, %v4891
        %v6032 = vpack.c.b16 %v4900, %v4896
        %v6033 = vpack.c.b16 %v4901, %v4897
        %v6034 = vpack.c.b16 %v4902, %v4898
        %v6035 = vpack.c.b16 %v4903, %v4899
        %v6036 = vpack.c.b16 %v4908, %v4904
        %v6037 = vpack.c.b16 %v4909, %v4905
        %v6038 = vpack.c.b16 %v4910, %v4906
        %v6039 = vpack.c.b16 %v4911, %v4907
        %v6040 = vpack.c.b16 %v4916, %v4912
        %v6041 = vpack.c.b16 %v4917, %v4913
        %v6042 = vpack.c.b16 %v4918, %v4914
        %v6043 = vpack.c.b16 %v4919, %v4915
        %v6044 = vpack.c.b16 %v4924, %v4920
        %v6045 = vpack.c.b16 %v4925, %v4921
        %v6046 = vpack.c.b16 %v4926, %v4922
        %v6047 = vpack.c.b16 %v4927, %v4923
        %7168 = vmatprep.subr.bf16.mxu0 %v4929
        %7169 = vmatpush1.bf16.msra.mxu0 %v4928
        %7170 = vmatprep.subr.bf16.mxu0 %v4933
        %7171 = vmatpush1.bf16.msra.mxu0 %v4932
        %7172 = vmatprep.subr.bf16.mxu0 %v4937
        %7173 = vmatpush1.bf16.msra.mxu0 %v4936
        %7174 = vmatprep.subr.bf16.mxu0 %v4941
        %7175 = vmatpush1.bf16.msra.mxu0 %v4940
        %7176 = vmatprep.subr.bf16.mxu0 %v4945
        %7177 = vmatpush1.bf16.msra.mxu0 %v4944
        %7178 = vmatprep.subr.bf16.mxu0 %v4949
        %7179 = vmatpush1.bf16.msra.mxu0 %v4948
        %7180 = vmatprep.subr.bf16.mxu0 %v4953
        %7181 = vmatpush1.bf16.msra.mxu0 %v4952
        %7182 = vmatprep.subr.bf16.mxu0 %v4957
        %7183 = vmatpush1.bf16.msra.mxu0 %v4956
        %7184 = vmatprep.subr.bf16.mxu0 %v4961
        %7185 = vmatpush1.bf16.msra.mxu0 %v4960
        %7186 = vmatprep.subr.bf16.mxu0 %v4965
        %7187 = vmatpush1.bf16.msra.mxu0 %v4964
        %7188 = vmatprep.subr.bf16.mxu0 %v4969
        %7189 = vmatpush1.bf16.msra.mxu0 %v4968
        %7190 = vmatprep.subr.bf16.mxu0 %v4973
        %7191 = vmatpush1.bf16.msra.mxu0 %v4972
        %7192 = vmatprep.subr.bf16.mxu0 %v4977
        %7193 = vmatpush1.bf16.msra.mxu0 %v4976
        %7194 = vmatprep.subr.bf16.mxu0 %v4981
        %7195 = vmatpush1.bf16.msra.mxu0 %v4980
        %7196 = vmatprep.subr.bf16.mxu0 %v4985
        %7197 = vmatpush1.bf16.msra.mxu0 %v4984
        %7198 = vmatprep.subr.bf16.mxu0 %v4989
        %7199 = vmatpush1.bf16.msra.mxu0 %v4988
        %7200 = vmatprep.mubr.bf16.mxu0 %v1499
        %7201 = vmatmul.mubr.bf16.gmra.mrb[0].mxu0 %v1498
        %v7202 = vpop.f32.mrb[0].mxu0
        %v7203 = vadd.f32 0.0, %v7202
        %v7204 = vpop.f32.mrb[0].mxu0
        %v7205 = vadd.f32 0.0, %v7204
        %v7206 = vpop.f32.mrb[0].mxu0
        %v7207 = vpop.f32.mrb[0].mxu0
        %7208 = vdwg.mxu0
        %7209 = vmatprep.subr.bf16.mxu0 %v4993
        %7210 = vmatpush1.bf16.msra.mxu0 %v4992
        %7211 = vmatprep.subr.bf16.mxu0 %v4997
        %7212 = vmatpush1.bf16.msra.mxu0 %v4996
        %7213 = vmatprep.subr.bf16.mxu0 %v5001
        %7214 = vmatpush1.bf16.msra.mxu0 %v5000
        %7215 = vmatprep.subr.bf16.mxu0 %v5005
        %7216 = vmatpush1.bf16.msra.mxu0 %v5004
        %7217 = vmatprep.subr.bf16.mxu0 %v5009
        %7218 = vmatpush1.bf16.msra.mxu0 %v5008
        %7219 = vmatprep.subr.bf16.mxu0 %v5013
        %7220 = vmatpush1.bf16.msra.mxu0 %v5012
        %7221 = vmatprep.subr.bf16.mxu0 %v5017
        %7222 = vmatpush1.bf16.msra.mxu0 %v5016
        %7223 = vmatprep.subr.bf16.mxu0 %v5021
        %7224 = vmatpush1.bf16.msra.mxu0 %v5020
        %7225 = vmatprep.subr.bf16.mxu0 %v5025
        %7226 = vmatpush1.bf16.msra.mxu0 %v5024
        %7227 = vmatprep.subr.bf16.mxu0 %v5029
        %7228 = vmatpush1.bf16.msra.mxu0 %v5028
        %7229 = vmatprep.subr.bf16.mxu0 %v5033
        %7230 = vmatpush1.bf16.msra.mxu0 %v5032
        %7231 = vmatprep.subr.bf16.mxu0 %v5037
        %7232 = vmatpush1.bf16.msra.mxu0 %v5036
        %7233 = vmatprep.subr.bf16.mxu0 %v5041
        %7234 = vmatpush1.bf16.msra.mxu0 %v5040
        %7235 = vmatprep.subr.bf16.mxu0 %v5045
        %7236 = vmatpush1.bf16.msra.mxu0 %v5044
        %7237 = vmatprep.subr.bf16.mxu0 %v5049
        %7238 = vmatpush1.bf16.msra.mxu0 %v5048
        %7239 = vmatprep.subr.bf16.mxu0 %v5053
        %7240 = vmatpush1.bf16.msra.mxu0 %v5052
        %7241 = vmatprep.mubr.bf16.mxu0 %v1501
        %7242 = vmatmul.mubr.bf16.gmra.mrb[0].mxu0 %v1500
        %v7243 = vpop.f32.mrb[0].mxu0
        %v7244 = vadd.f32 %v7203, %v7243
        %v7245 = vpop.f32.mrb[0].mxu0
        %v7246 = vadd.f32 %v7205, %v7245
        %v7247 = vpop.f32.mrb[0].mxu0
        %v7248 = vpop.f32.mrb[0].mxu0
        %7249 = vdwg.mxu0
        %7250 = vmatprep.subr.bf16.mxu0 %v5057
        %7251 = vmatpush1.bf16.msra.mxu0 %v5056
        %7252 = vmatprep.subr.bf16.mxu0 %v5061
        %7253 = vmatpush1.bf16.msra.mxu0 %v5060
        %7254 = vmatprep.subr.bf16.mxu0 %v5065
        %7255 = vmatpush1.bf16.msra.mxu0 %v5064
        %7256 = vmatprep.subr.bf16.mxu0 %v5069
        %7257 = vmatpush1.bf16.msra.mxu0 %v5068
        %7258 = vmatprep.subr.bf16.mxu0 %v5073
        %7259 = vmatpush1.bf16.msra.mxu0 %v5072
        %7260 = vmatprep.subr.bf16.mxu0 %v5077
        %7261 = vmatpush1.bf16.msra.mxu0 %v5076
        %7262 = vmatprep.subr.bf16.mxu0 %v5081
        %7263 = vmatpush1.bf16.msra.mxu0 %v5080
        %7264 = vmatprep.subr.bf16.mxu0 %v5085
        %7265 = vmatpush1.bf16.msra.mxu0 %v5084
        %7266 = vmatprep.subr.bf16.mxu0 %v5089
        %7267 = vmatpush1.bf16.msra.mxu0 %v5088
        %7268 = vmatprep.subr.bf16.mxu0 %v5093
        %7269 = vmatpush1.bf16.msra.mxu0 %v5092
        %7270 = vmatprep.subr.bf16.mxu0 %v5097
        %7271 = vmatpush1.bf16.msra.mxu0 %v5096
        %7272 = vmatprep.subr.bf16.mxu0 %v5101
        %7273 = vmatpush1.bf16.msra.mxu0 %v5100
        %7274 = vmatprep.subr.bf16.mxu0 %v5105
        %7275 = vmatpush1.bf16.msra.mxu0 %v5104
        %7276 = vmatprep.subr.bf16.mxu0 %v5109
        %7277 = vmatpush1.bf16.msra.mxu0 %v5108
        %7278 = vmatprep.subr.bf16.mxu0 %v5113
        %7279 = vmatpush1.bf16.msra.mxu0 %v5112
        %7280 = vmatprep.subr.bf16.mxu0 %v5117
        %7281 = vmatpush1.bf16.msra.mxu0 %v5116
        %7282 = vmatprep.mubr.bf16.mxu0 %v1503
        %7283 = vmatmul.mubr.bf16.gmra.mrb[0].mxu0 %v1502
        %v7284 = vpop.f32.mrb[0].mxu0
        %v7285 = vadd.f32 %v7244, %v7284
        %v7286 = vpop.f32.mrb[0].mxu0
        %v7287 = vadd.f32 %v7246, %v7286
        %v7288 = vpop.f32.mrb[0].mxu0
        %v7289 = vpop.f32.mrb[0].mxu0
        %7290 = vdwg.mxu0
        %7291 = vmatprep.subr.bf16.mxu0 %v5121
        %7292 = vmatpush1.bf16.msra.mxu0 %v5120
        %7293 = vmatprep.subr.bf16.mxu0 %v5125
        %7294 = vmatpush1.bf16.msra.mxu0 %v5124
        %7295 = vmatprep.subr.bf16.mxu0 %v5129
        %7296 = vmatpush1.bf16.msra.mxu0 %v5128
        %7297 = vmatprep.subr.bf16.mxu0 %v5133
        %7298 = vmatpush1.bf16.msra.mxu0 %v5132
        %7299 = vmatprep.subr.bf16.mxu0 %v5137
        %7300 = vmatpush1.bf16.msra.mxu0 %v5136
        %7301 = vmatprep.subr.bf16.mxu0 %v5141
        %7302 = vmatpush1.bf16.msra.mxu0 %v5140
        %7303 = vmatprep.subr.bf16.mxu0 %v5145
        %7304 = vmatpush1.bf16.msra.mxu0 %v5144
        %7305 = vmatprep.subr.bf16.mxu0 %v5149
        %7306 = vmatpush1.bf16.msra.mxu0 %v5148
        %7307 = vmatprep.subr.bf16.mxu0 %v5153
        %7308 = vmatpush1.bf16.msra.mxu0 %v5152
        %7309 = vmatprep.subr.bf16.mxu0 %v5157
        %7310 = vmatpush1.bf16.msra.mxu0 %v5156
        %7311 = vmatprep.subr.bf16.mxu0 %v5161
        %7312 = vmatpush1.bf16.msra.mxu0 %v5160
        %7313 = vmatprep.subr.bf16.mxu0 %v5165
        %7314 = vmatpush1.bf16.msra.mxu0 %v5164
        %7315 = vmatprep.subr.bf16.mxu0 %v5169
        %7316 = vmatpush1.bf16.msra.mxu0 %v5168
        %7317 = vmatprep.subr.bf16.mxu0 %v5173
        %7318 = vmatpush1.bf16.msra.mxu0 %v5172
        %7319 = vmatprep.subr.bf16.mxu0 %v5177
        %7320 = vmatpush1.bf16.msra.mxu0 %v5176
        %7321 = vmatprep.subr.bf16.mxu0 %v5181
        %7322 = vmatpush1.bf16.msra.mxu0 %v5180
        %7323 = vmatprep.mubr.bf16.mxu0 %v1505
        %7324 = vmatmul.mubr.bf16.gmra.mrb[0].mxu0 %v1504
        %v7325 = vpop.f32.mrb[0].mxu0
        %v7326 = vadd.f32 %v7285, %v7325
        %v7327 = vpop.f32.mrb[0].mxu0
        %v7328 = vadd.f32 %v7287, %v7327
        %v7329 = vpop.f32.mrb[0].mxu0
        %v7330 = vpop.f32.mrb[0].mxu0
        %7331 = vdwg.mxu0
        %7332 = vmatprep.subr.bf16.mxu0 %v5185
        %7333 = vmatpush1.bf16.msra.mxu0 %v5184
        %7334 = vmatprep.subr.bf16.mxu0 %v5189
        %7335 = vmatpush1.bf16.msra.mxu0 %v5188
        %7336 = vmatprep.subr.bf16.mxu0 %v5193
        %7337 = vmatpush1.bf16.msra.mxu0 %v5192
        %7338 = vmatprep.subr.bf16.mxu0 %v5197
        %7339 = vmatpush1.bf16.msra.mxu0 %v5196
        %7340 = vmatprep.subr.bf16.mxu0 %v5201
        %7341 = vmatpush1.bf16.msra.mxu0 %v5200
        %7342 = vmatprep.subr.bf16.mxu0 %v5205
        %7343 = vmatpush1.bf16.msra.mxu0 %v5204
        %7344 = vmatprep.subr.bf16.mxu0 %v5209
        %7345 = vmatpush1.bf16.msra.mxu0 %v5208
        %7346 = vmatprep.subr.bf16.mxu0 %v5213
        %7347 = vmatpush1.bf16.msra.mxu0 %v5212
        %7348 = vmatprep.subr.bf16.mxu0 %v5217
        %7349 = vmatpush1.bf16.msra.mxu0 %v5216
        %7350 = vmatprep.subr.bf16.mxu0 %v5221
        %7351 = vmatpush1.bf16.msra.mxu0 %v5220
        %7352 = vmatprep.subr.bf16.mxu0 %v5225
        %7353 = vmatpush1.bf16.msra.mxu0 %v5224
        %7354 = vmatprep.subr.bf16.mxu0 %v5229
        %7355 = vmatpush1.bf16.msra.mxu0 %v5228
        %7356 = vmatprep.subr.bf16.mxu0 %v5233
        %7357 = vmatpush1.bf16.msra.mxu0 %v5232
        %7358 = vmatprep.subr.bf16.mxu0 %v5237
        %7359 = vmatpush1.bf16.msra.mxu0 %v5236
        %7360 = vmatprep.subr.bf16.mxu0 %v5241
        %7361 = vmatpush1.bf16.msra.mxu0 %v5240
        %7362 = vmatprep.subr.bf16.mxu0 %v5245
        %7363 = vmatpush1.bf16.msra.mxu0 %v5244
        %7364 = vmatprep.mubr.bf16.mxu0 %v1507
        %7365 = vmatmul.mubr.bf16.gmra.mrb[0].mxu0 %v1506
        %v7366 = vpop.f32.mrb[0].mxu0
        %v7367 = vadd.f32 %v7326, %v7366
        %v7368 = vpop.f32.mrb[0].mxu0
        %v7369 = vadd.f32 %v7328, %v7368
        %v7370 = vpop.f32.mrb[0].mxu0
        %v7371 = vpop.f32.mrb[0].mxu0
        %7372 = vdwg.mxu0
        %7373 = vmatprep.subr.bf16.mxu0 %v5249
        %7374 = vmatpush1.bf16.msra.mxu0 %v5248
        %7375 = vmatprep.subr.bf16.mxu0 %v5253
        %7376 = vmatpush1.bf16.msra.mxu0 %v5252
        %7377 = vmatprep.subr.bf16.mxu0 %v5257
        %7378 = vmatpush1.bf16.msra.mxu0 %v5256
        %7379 = vmatprep.subr.bf16.mxu0 %v5261
        %7380 = vmatpush1.bf16.msra.mxu0 %v5260
        %7381 = vmatprep.subr.bf16.mxu0 %v5265
        %7382 = vmatpush1.bf16.msra.mxu0 %v5264
        %7383 = vmatprep.subr.bf16.mxu0 %v5269
        %7384 = vmatpush1.bf16.msra.mxu0 %v5268
        %7385 = vmatprep.subr.bf16.mxu0 %v5273
        %7386 = vmatpush1.bf16.msra.mxu0 %v5272
        %7387 = vmatprep.subr.bf16.mxu0 %v5277
        %7388 = vmatpush1.bf16.msra.mxu0 %v5276
        %7389 = vmatprep.subr.bf16.mxu0 %v5281
        %7390 = vmatpush1.bf16.msra.mxu0 %v5280
        %7391 = vmatprep.subr.bf16.mxu0 %v5285
        %7392 = vmatpush1.bf16.msra.mxu0 %v5284
        %7393 = vmatprep.subr.bf16.mxu0 %v5289
        %7394 = vmatpush1.bf16.msra.mxu0 %v5288
        %7395 = vmatprep.subr.bf16.mxu0 %v5293
        %7396 = vmatpush1.bf16.msra.mxu0 %v5292
        %7397 = vmatprep.subr.bf16.mxu0 %v5297
        %7398 = vmatpush1.bf16.msra.mxu0 %v5296
        %7399 = vmatprep.subr.bf16.mxu0 %v5301
        %7400 = vmatpush1.bf16.msra.mxu0 %v5300
        %7401 = vmatprep.subr.bf16.mxu0 %v5305
        %7402 = vmatpush1.bf16.msra.mxu0 %v5304
        %7403 = vmatprep.subr.bf16.mxu0 %v5309
        %7404 = vmatpush1.bf16.msra.mxu0 %v5308
        %7405 = vmatprep.mubr.bf16.mxu0 %v1509
        %7406 = vmatmul.mubr.bf16.gmra.mrb[0].mxu0 %v1508
        %v7407 = vpop.f32.mrb[0].mxu0
        %v7408 = vadd.f32 %v7367, %v7407
        %v7409 = vpop.f32.mrb[0].mxu0
        %v7410 = vadd.f32 %v7369, %v7409
        %v7411 = vpop.f32.mrb[0].mxu0
        %v7412 = vpop.f32.mrb[0].mxu0
        %7413 = vdwg.mxu0
        %7414 = vmatprep.subr.bf16.mxu0 %v5313
        %7415 = vmatpush1.bf16.msra.mxu0 %v5312
        %7416 = vmatprep.subr.bf16.mxu0 %v5317
        %7417 = vmatpush1.bf16.msra.mxu0 %v5316
        %7418 = vmatprep.subr.bf16.mxu0 %v5321
        %7419 = vmatpush1.bf16.msra.mxu0 %v5320
        %7420 = vmatprep.subr.bf16.mxu0 %v5325
        %7421 = vmatpush1.bf16.msra.mxu0 %v5324
        %7422 = vmatprep.subr.bf16.mxu0 %v5329
        %7423 = vmatpush1.bf16.msra.mxu0 %v5328
        %7424 = vmatprep.subr.bf16.mxu0 %v5333
        %7425 = vmatpush1.bf16.msra.mxu0 %v5332
        %7426 = vmatprep.subr.bf16.mxu0 %v5337
        %7427 = vmatpush1.bf16.msra.mxu0 %v5336
        %7428 = vmatprep.subr.bf16.mxu0 %v5341
        %7429 = vmatpush1.bf16.msra.mxu0 %v5340
        %7430 = vmatprep.subr.bf16.mxu0 %v5345
        %7431 = vmatpush1.bf16.msra.mxu0 %v5344
        %7432 = vmatprep.subr.bf16.mxu0 %v5349
        %7433 = vmatpush1.bf16.msra.mxu0 %v5348
        %7434 = vmatprep.subr.bf16.mxu0 %v5353
        %7435 = vmatpush1.bf16.msra.mxu0 %v5352
        %7436 = vmatprep.subr.bf16.mxu0 %v5357
        %7437 = vmatpush1.bf16.msra.mxu0 %v5356
        %7438 = vmatprep.subr.bf16.mxu0 %v5361
        %7439 = vmatpush1.bf16.msra.mxu0 %v5360
        %7440 = vmatprep.subr.bf16.mxu0 %v5365
        %7441 = vmatpush1.bf16.msra.mxu0 %v5364
        %7442 = vmatprep.subr.bf16.mxu0 %v5369
        %7443 = vmatpush1.bf16.msra.mxu0 %v5368
        %7444 = vmatprep.subr.bf16.mxu0 %v5373
        %7445 = vmatpush1.bf16.msra.mxu0 %v5372
        %7446 = vmatprep.mubr.bf16.mxu0 %v1511
        %7447 = vmatmul.mubr.bf16.gmra.mrb[0].mxu0 %v1510
        %v7448 = vpop.f32.mrb[0].mxu0
        %v7449 = vadd.f32 %v7408, %v7448
        %v7450 = vpop.f32.mrb[0].mxu0
        %v7451 = vadd.f32 %v7410, %v7450
        %v7452 = vpop.f32.mrb[0].mxu0
        %v7453 = vpop.f32.mrb[0].mxu0
        %7454 = vdwg.mxu0
        %7455 = vmatprep.subr.bf16.mxu0 %v5377
        %7456 = vmatpush1.bf16.msra.mxu0 %v5376
        %7457 = vmatprep.subr.bf16.mxu0 %v5381
        %7458 = vmatpush1.bf16.msra.mxu0 %v5380
        %7459 = vmatprep.subr.bf16.mxu0 %v5385
        %7460 = vmatpush1.bf16.msra.mxu0 %v5384
        %7461 = vmatprep.subr.bf16.mxu0 %v5389
        %7462 = vmatpush1.bf16.msra.mxu0 %v5388
        %7463 = vmatprep.subr.bf16.mxu0 %v5393
        %7464 = vmatpush1.bf16.msra.mxu0 %v5392
        %7465 = vmatprep.subr.bf16.mxu0 %v5397
        %7466 = vmatpush1.bf16.msra.mxu0 %v5396
        %7467 = vmatprep.subr.bf16.mxu0 %v5401
        %7468 = vmatpush1.bf16.msra.mxu0 %v5400
        %7469 = vmatprep.subr.bf16.mxu0 %v5405
        %7470 = vmatpush1.bf16.msra.mxu0 %v5404
        %7471 = vmatprep.subr.bf16.mxu0 %v5409
        %7472 = vmatpush1.bf16.msra.mxu0 %v5408
        %7473 = vmatprep.subr.bf16.mxu0 %v5413
        %7474 = vmatpush1.bf16.msra.mxu0 %v5412
        %7475 = vmatprep.subr.bf16.mxu0 %v5417
        %7476 = vmatpush1.bf16.msra.mxu0 %v5416
        %7477 = vmatprep.subr.bf16.mxu0 %v5421
        %7478 = vmatpush1.bf16.msra.mxu0 %v5420
        %7479 = vmatprep.subr.bf16.mxu0 %v5425
        %7480 = vmatpush1.bf16.msra.mxu0 %v5424
        %7481 = vmatprep.subr.bf16.mxu0 %v5429
        %7482 = vmatpush1.bf16.msra.mxu0 %v5428
        %7483 = vmatprep.subr.bf16.mxu0 %v5433
        %7484 = vmatpush1.bf16.msra.mxu0 %v5432
        %7485 = vmatprep.subr.bf16.mxu0 %v5437
        %7486 = vmatpush1.bf16.msra.mxu0 %v5436
        %7487 = vmatprep.mubr.bf16.mxu0 %v1513
        %7488 = vmatmul.mubr.bf16.gmra.mrb[0].mxu0 %v1512
        %v7489 = vpop.f32.mrb[0].mxu0
        %v7490 = vadd.f32 %v7449, %v7489
        %v7491 = vpop.f32.mrb[0].mxu0
        %v7492 = vadd.f32 %v7451, %v7491
        %v7493 = vpop.f32.mrb[0].mxu0
        %v7494 = vpop.f32.mrb[0].mxu0
        %7495 = vdwg.mxu0
        %7496 = vmatprep.subr.bf16.mxu0 %v5441
        %7497 = vmatpush1.bf16.msra.mxu0 %v5440
        %7498 = vmatprep.subr.bf16.mxu0 %v5445
        %7499 = vmatpush1.bf16.msra.mxu0 %v5444
        %7500 = vmatprep.subr.bf16.mxu0 %v5449
        %7501 = vmatpush1.bf16.msra.mxu0 %v5448
        %7502 = vmatprep.subr.bf16.mxu0 %v5453
        %7503 = vmatpush1.bf16.msra.mxu0 %v5452
        %7504 = vmatprep.subr.bf16.mxu0 %v5457
        %7505 = vmatpush1.bf16.msra.mxu0 %v5456
        %7506 = vmatprep.subr.bf16.mxu0 %v5461
        %7507 = vmatpush1.bf16.msra.mxu0 %v5460
        %7508 = vmatprep.subr.bf16.mxu0 %v5465
        %7509 = vmatpush1.bf16.msra.mxu0 %v5464
        %7510 = vmatprep.subr.bf16.mxu0 %v5469
        %7511 = vmatpush1.bf16.msra.mxu0 %v5468
        %7512 = vmatprep.subr.bf16.mxu0 %v5473
        %7513 = vmatpush1.bf16.msra.mxu0 %v5472
        %7514 = vmatprep.subr.bf16.mxu0 %v5477
        %7515 = vmatpush1.bf16.msra.mxu0 %v5476
        %7516 = vmatprep.subr.bf16.mxu0 %v5481
        %7517 = vmatpush1.bf16.msra.mxu0 %v5480
        %7518 = vmatprep.subr.bf16.mxu0 %v5485
        %7519 = vmatpush1.bf16.msra.mxu0 %v5484
        %7520 = vmatprep.subr.bf16.mxu0 %v5489
        %7521 = vmatpush1.bf16.msra.mxu0 %v5488
        %7522 = vmatprep.subr.bf16.mxu0 %v5493
        %7523 = vmatpush1.bf16.msra.mxu0 %v5492
        %7524 = vmatprep.subr.bf16.mxu0 %v5497
        %7525 = vmatpush1.bf16.msra.mxu0 %v5496
        %7526 = vmatprep.subr.bf16.mxu0 %v5501
        %7527 = vmatpush1.bf16.msra.mxu0 %v5500
        %7528 = vmatprep.mubr.bf16.mxu0 %v1515
        %7529 = vmatmul.mubr.bf16.gmra.mrb[0].mxu0 %v1514
        %v7530 = vpop.f32.mrb[0].mxu0
        %v7531 = vadd.f32 %v7490, %v7530
        %v7532 = vpop.f32.mrb[0].mxu0
        %v7533 = vadd.f32 %v7492, %v7532
        %v7534 = vpop.f32.mrb[0].mxu0
        %v7535 = vpop.f32.mrb[0].mxu0
        %7536 = vdwg.mxu0
        %7537 = vmatprep.subr.bf16.mxu0 %v5505
        %7538 = vmatpush1.bf16.msra.mxu0 %v5504
        %7539 = vmatprep.subr.bf16.mxu0 %v5509
        %7540 = vmatpush1.bf16.msra.mxu0 %v5508
        %7541 = vmatprep.subr.bf16.mxu0 %v5513
        %7542 = vmatpush1.bf16.msra.mxu0 %v5512
        %7543 = vmatprep.subr.bf16.mxu0 %v5517
        %7544 = vmatpush1.bf16.msra.mxu0 %v5516
        %7545 = vmatprep.subr.bf16.mxu0 %v5521
        %7546 = vmatpush1.bf16.msra.mxu0 %v5520
        %7547 = vmatprep.subr.bf16.mxu0 %v5525
        %7548 = vmatpush1.bf16.msra.mxu0 %v5524
        %7549 = vmatprep.subr.bf16.mxu0 %v5529
        %7550 = vmatpush1.bf16.msra.mxu0 %v5528
        %7551 = vmatprep.subr.bf16.mxu0 %v5533
        %7552 = vmatpush1.bf16.msra.mxu0 %v5532
        %7553 = vmatprep.subr.bf16.mxu0 %v5537
        %7554 = vmatpush1.bf16.msra.mxu0 %v5536
        %7555 = vmatprep.subr.bf16.mxu0 %v5541
        %7556 = vmatpush1.bf16.msra.mxu0 %v5540
        %7557 = vmatprep.subr.bf16.mxu0 %v5545
        %7558 = vmatpush1.bf16.msra.mxu0 %v5544
        %7559 = vmatprep.subr.bf16.mxu0 %v5549
        %7560 = vmatpush1.bf16.msra.mxu0 %v5548
        %7561 = vmatprep.subr.bf16.mxu0 %v5553
        %7562 = vmatpush1.bf16.msra.mxu0 %v5552
        %7563 = vmatprep.subr.bf16.mxu0 %v5557
        %7564 = vmatpush1.bf16.msra.mxu0 %v5556
        %7565 = vmatprep.subr.bf16.mxu0 %v5561
        %7566 = vmatpush1.bf16.msra.mxu0 %v5560
        %7567 = vmatprep.subr.bf16.mxu0 %v5565
        %7568 = vmatpush1.bf16.msra.mxu0 %v5564
        %7569 = vmatprep.mubr.bf16.mxu0 %v1517
        %7570 = vmatmul.mubr.bf16.gmra.mrb[0].mxu0 %v1516
        %v7571 = vpop.f32.mrb[0].mxu0
        %v7572 = vadd.f32 %v7531, %v7571
        %v7573 = vpop.f32.mrb[0].mxu0
        %v7574 = vadd.f32 %v7533, %v7573
        %v7575 = vpop.f32.mrb[0].mxu0
        %v7576 = vpop.f32.mrb[0].mxu0
        %7577 = vdwg.mxu0
        %7578 = vmatprep.subr.bf16.mxu0 %v5569
        %7579 = vmatpush1.bf16.msra.mxu0 %v5568
        %7580 = vmatprep.subr.bf16.mxu0 %v5573
        %7581 = vmatpush1.bf16.msra.mxu0 %v5572
        %7582 = vmatprep.subr.bf16.mxu0 %v5577
        %7583 = vmatpush1.bf16.msra.mxu0 %v5576
        %7584 = vmatprep.subr.bf16.mxu0 %v5581
        %7585 = vmatpush1.bf16.msra.mxu0 %v5580
        %7586 = vmatprep.subr.bf16.mxu0 %v5585
        %7587 = vmatpush1.bf16.msra.mxu0 %v5584
        %7588 = vmatprep.subr.bf16.mxu0 %v5589
        %7589 = vmatpush1.bf16.msra.mxu0 %v5588
        %7590 = vmatprep.subr.bf16.mxu0 %v5593
        %7591 = vmatpush1.bf16.msra.mxu0 %v5592
        %7592 = vmatprep.subr.bf16.mxu0 %v5597
        %7593 = vmatpush1.bf16.msra.mxu0 %v5596
        %7594 = vmatprep.subr.bf16.mxu0 %v5601
        %7595 = vmatpush1.bf16.msra.mxu0 %v5600
        %7596 = vmatprep.subr.bf16.mxu0 %v5605
        %7597 = vmatpush1.bf16.msra.mxu0 %v5604
        %7598 = vmatprep.subr.bf16.mxu0 %v5609
        %7599 = vmatpush1.bf16.msra.mxu0 %v5608
        %7600 = vmatprep.subr.bf16.mxu0 %v5613
        %7601 = vmatpush1.bf16.msra.mxu0 %v5612
        %7602 = vmatprep.subr.bf16.mxu0 %v5617
        %7603 = vmatpush1.bf16.msra.mxu0 %v5616
        %7604 = vmatprep.subr.bf16.mxu0 %v5621
        %7605 = vmatpush1.bf16.msra.mxu0 %v5620
        %7606 = vmatprep.subr.bf16.mxu0 %v5625
        %7607 = vmatpush1.bf16.msra.mxu0 %v5624
        %7608 = vmatprep.subr.bf16.mxu0 %v5629
        %7609 = vmatpush1.bf16.msra.mxu0 %v5628
        %7610 = vmatprep.mubr.bf16.mxu0 %v1519
        %7611 = vmatmul.mubr.bf16.gmra.mrb[0].mxu0 %v1518
        %v7612 = vpop.f32.mrb[0].mxu0
        %v7613 = vadd.f32 %v7572, %v7612
        %v7614 = vpop.f32.mrb[0].mxu0
        %v7615 = vadd.f32 %v7574, %v7614
        %v7616 = vpop.f32.mrb[0].mxu0
        %v7617 = vpop.f32.mrb[0].mxu0
        %7618 = vdwg.mxu0
        %7619 = vmatprep.subr.bf16.mxu0 %v5633
        %7620 = vmatpush1.bf16.msra.mxu0 %v5632
        %7621 = vmatprep.subr.bf16.mxu0 %v5637
        %7622 = vmatpush1.bf16.msra.mxu0 %v5636
        %7623 = vmatprep.subr.bf16.mxu0 %v5641
        %7624 = vmatpush1.bf16.msra.mxu0 %v5640
        %7625 = vmatprep.subr.bf16.mxu0 %v5645
        %7626 = vmatpush1.bf16.msra.mxu0 %v5644
        %7627 = vmatprep.subr.bf16.mxu0 %v5649
        %7628 = vmatpush1.bf16.msra.mxu0 %v5648
        %7629 = vmatprep.subr.bf16.mxu0 %v5653
        %7630 = vmatpush1.bf16.msra.mxu0 %v5652
        %7631 = vmatprep.subr.bf16.mxu0 %v5657
        %7632 = vmatpush1.bf16.msra.mxu0 %v5656
        %7633 = vmatprep.subr.bf16.mxu0 %v5661
        %7634 = vmatpush1.bf16.msra.mxu0 %v5660
        %7635 = vmatprep.subr.bf16.mxu0 %v5665
        %7636 = vmatpush1.bf16.msra.mxu0 %v5664
        %7637 = vmatprep.subr.bf16.mxu0 %v5669
        %7638 = vmatpush1.bf16.msra.mxu0 %v5668
        %7639 = vmatprep.subr.bf16.mxu0 %v5673
        %7640 = vmatpush1.bf16.msra.mxu0 %v5672
        %7641 = vmatprep.subr.bf16.mxu0 %v5677
        %7642 = vmatpush1.bf16.msra.mxu0 %v5676
        %7643 = vmatprep.subr.bf16.mxu0 %v5681
        %7644 = vmatpush1.bf16.msra.mxu0 %v5680
        %7645 = vmatprep.subr.bf16.mxu0 %v5685
        %7646 = vmatpush1.bf16.msra.mxu0 %v5684
        %7647 = vmatprep.subr.bf16.mxu0 %v5689
        %7648 = vmatpush1.bf16.msra.mxu0 %v5688
        %7649 = vmatprep.subr.bf16.mxu0 %v5693
        %7650 = vmatpush1.bf16.msra.mxu0 %v5692
        %7651 = vmatprep.mubr.bf16.mxu0 %v1521
        %7652 = vmatmul.mubr.bf16.gmra.mrb[0].mxu0 %v1520
        %v7653 = vpop.f32.mrb[0].mxu0
        %v7654 = vadd.f32 %v7613, %v7653
        %v7655 = vpop.f32.mrb[0].mxu0
        %v7656 = vadd.f32 %v7615, %v7655
        %v7657 = vpop.f32.mrb[0].mxu0
        %v7658 = vpop.f32.mrb[0].mxu0
        %7659 = vdwg.mxu0
        %7660 = vmatprep.subr.bf16.mxu0 %v5697
        %7661 = vmatpush1.bf16.msra.mxu0 %v5696
        %7662 = vmatprep.subr.bf16.mxu0 %v5701
        %7663 = vmatpush1.bf16.msra.mxu0 %v5700
        %7664 = vmatprep.subr.bf16.mxu0 %v5705
        %7665 = vmatpush1.bf16.msra.mxu0 %v5704
        %7666 = vmatprep.subr.bf16.mxu0 %v5709
        %7667 = vmatpush1.bf16.msra.mxu0 %v5708
        %7668 = vmatprep.subr.bf16.mxu0 %v5713
        %7669 = vmatpush1.bf16.msra.mxu0 %v5712
        %7670 = vmatprep.subr.bf16.mxu0 %v5717
        %7671 = vmatpush1.bf16.msra.mxu0 %v5716
        %7672 = vmatprep.subr.bf16.mxu0 %v5721
        %7673 = vmatpush1.bf16.msra.mxu0 %v5720
        %7674 = vmatprep.subr.bf16.mxu0 %v5725
        %7675 = vmatpush1.bf16.msra.mxu0 %v5724
        %7676 = vmatprep.subr.bf16.mxu0 %v5729
        %7677 = vmatpush1.bf16.msra.mxu0 %v5728
        %7678 = vmatprep.subr.bf16.mxu0 %v5733
        %7679 = vmatpush1.bf16.msra.mxu0 %v5732
        %7680 = vmatprep.subr.bf16.mxu0 %v5737
        %7681 = vmatpush1.bf16.msra.mxu0 %v5736
        %7682 = vmatprep.subr.bf16.mxu0 %v5741
        %7683 = vmatpush1.bf16.msra.mxu0 %v5740
        %7684 = vmatprep.subr.bf16.mxu0 %v5745
        %7685 = vmatpush1.bf16.msra.mxu0 %v5744
        %7686 = vmatprep.subr.bf16.mxu0 %v5749
        %7687 = vmatpush1.bf16.msra.mxu0 %v5748
        %7688 = vmatprep.subr.bf16.mxu0 %v5753
        %7689 = vmatpush1.bf16.msra.mxu0 %v5752
        %7690 = vmatprep.subr.bf16.mxu0 %v5757
        %7691 = vmatpush1.bf16.msra.mxu0 %v5756
        %7692 = vmatprep.mubr.bf16.mxu0 %v1523
        %7693 = vmatmul.mubr.bf16.gmra.mrb[0].mxu0 %v1522
        %v7694 = vpop.f32.mrb[0].mxu0
        %v7695 = vadd.f32 %v7654, %v7694
        %v7696 = vpop.f32.mrb[0].mxu0
        %v7697 = vadd.f32 %v7656, %v7696
        %v7698 = vpop.f32.mrb[0].mxu0
        %v7699 = vpop.f32.mrb[0].mxu0
        %7700 = vdwg.mxu0
        %7701 = vmatprep.subr.bf16.mxu0 %v5761
        %7702 = vmatpush1.bf16.msra.mxu0 %v5760
        %7703 = vmatprep.subr.bf16.mxu0 %v5765
        %7704 = vmatpush1.bf16.msra.mxu0 %v5764
        %7705 = vmatprep.subr.bf16.mxu0 %v5769
        %7706 = vmatpush1.bf16.msra.mxu0 %v5768
        %7707 = vmatprep.subr.bf16.mxu0 %v5773
        %7708 = vmatpush1.bf16.msra.mxu0 %v5772
        %7709 = vmatprep.subr.bf16.mxu0 %v5777
        %7710 = vmatpush1.bf16.msra.mxu0 %v5776
        %7711 = vmatprep.subr.bf16.mxu0 %v5781
        %7712 = vmatpush1.bf16.msra.mxu0 %v5780
        %7713 = vmatprep.subr.bf16.mxu0 %v5785
        %7714 = vmatpush1.bf16.msra.mxu0 %v5784
        %7715 = vmatprep.subr.bf16.mxu0 %v5789
        %7716 = vmatpush1.bf16.msra.mxu0 %v5788
        %7717 = vmatprep.subr.bf16.mxu0 %v5793
        %7718 = vmatpush1.bf16.msra.mxu0 %v5792
        %7719 = vmatprep.subr.bf16.mxu0 %v5797
        %7720 = vmatpush1.bf16.msra.mxu0 %v5796
        %7721 = vmatprep.subr.bf16.mxu0 %v5801
        %7722 = vmatpush1.bf16.msra.mxu0 %v5800
        %7723 = vmatprep.subr.bf16.mxu0 %v5805
        %7724 = vmatpush1.bf16.msra.mxu0 %v5804
        %7725 = vmatprep.subr.bf16.mxu0 %v5809
        %7726 = vmatpush1.bf16.msra.mxu0 %v5808
        %7727 = vmatprep.subr.bf16.mxu0 %v5813
        %7728 = vmatpush1.bf16.msra.mxu0 %v5812
        %7729 = vmatprep.subr.bf16.mxu0 %v5817
        %7730 = vmatpush1.bf16.msra.mxu0 %v5816
        %7731 = vmatprep.subr.bf16.mxu0 %v5821
        %7732 = vmatpush1.bf16.msra.mxu0 %v5820
        %7733 = vmatprep.mubr.bf16.mxu0 %v1525
        %7734 = vmatmul.mubr.bf16.gmra.mrb[0].mxu0 %v1524
        %v7735 = vpop.f32.mrb[0].mxu0
        %v7736 = vadd.f32 %v7695, %v7735
        %v7737 = vpop.f32.mrb[0].mxu0
        %v7738 = vadd.f32 %v7697, %v7737
        %v7739 = vpop.f32.mrb[0].mxu0
        %v7740 = vpop.f32.mrb[0].mxu0
        %7741 = vdwg.mxu0
        %7742 = vmatprep.subr.bf16.mxu0 %v5825
        %7743 = vmatpush1.bf16.msra.mxu0 %v5824
        %7744 = vmatprep.subr.bf16.mxu0 %v5829
        %7745 = vmatpush1.bf16.msra.mxu0 %v5828
        %7746 = vmatprep.subr.bf16.mxu0 %v5833
        %7747 = vmatpush1.bf16.msra.mxu0 %v5832
        %7748 = vmatprep.subr.bf16.mxu0 %v5837
        %7749 = vmatpush1.bf16.msra.mxu0 %v5836
        %7750 = vmatprep.subr.bf16.mxu0 %v5841
        %7751 = vmatpush1.bf16.msra.mxu0 %v5840
        %7752 = vmatprep.subr.bf16.mxu0 %v5845
        %7753 = vmatpush1.bf16.msra.mxu0 %v5844
        %7754 = vmatprep.subr.bf16.mxu0 %v5849
        %7755 = vmatpush1.bf16.msra.mxu0 %v5848
        %7756 = vmatprep.subr.bf16.mxu0 %v5853
        %7757 = vmatpush1.bf16.msra.mxu0 %v5852
        %7758 = vmatprep.subr.bf16.mxu0 %v5857
        %7759 = vmatpush1.bf16.msra.mxu0 %v5856
        %7760 = vmatprep.subr.bf16.mxu0 %v5861
        %7761 = vmatpush1.bf16.msra.mxu0 %v5860
        %7762 = vmatprep.subr.bf16.mxu0 %v5865
        %7763 = vmatpush1.bf16.msra.mxu0 %v5864
        %7764 = vmatprep.subr.bf16.mxu0 %v5869
        %7765 = vmatpush1.bf16.msra.mxu0 %v5868
        %7766 = vmatprep.subr.bf16.mxu0 %v5873
        %7767 = vmatpush1.bf16.msra.mxu0 %v5872
        %7768 = vmatprep.subr.bf16.mxu0 %v5877
        %7769 = vmatpush1.bf16.msra.mxu0 %v5876
        %7770 = vmatprep.subr.bf16.mxu0 %v5881
        %7771 = vmatpush1.bf16.msra.mxu0 %v5880
        %7772 = vmatprep.subr.bf16.mxu0 %v5885
        %7773 = vmatpush1.bf16.msra.mxu0 %v5884
        %7774 = vmatprep.mubr.bf16.mxu0 %v1527
        %7775 = vmatmul.mubr.bf16.gmra.mrb[0].mxu0 %v1526
        %v7776 = vpop.f32.mrb[0].mxu0
        %v7777 = vadd.f32 %v7736, %v7776
        %v7778 = vpop.f32.mrb[0].mxu0
        %v7779 = vadd.f32 %v7738, %v7778
        %v7780 = vpop.f32.mrb[0].mxu0
        %v7781 = vpop.f32.mrb[0].mxu0
        %7782 = vdwg.mxu0
        %7783 = vmatprep.subr.bf16.mxu0 %v5889
        %7784 = vmatpush1.bf16.msra.mxu0 %v5888
        %7785 = vmatprep.subr.bf16.mxu0 %v5893
        %7786 = vmatpush1.bf16.msra.mxu0 %v5892
        %7787 = vmatprep.subr.bf16.mxu0 %v5897
        %7788 = vmatpush1.bf16.msra.mxu0 %v5896
        %7789 = vmatprep.subr.bf16.mxu0 %v5901
        %7790 = vmatpush1.bf16.msra.mxu0 %v5900
        %7791 = vmatprep.subr.bf16.mxu0 %v5905
        %7792 = vmatpush1.bf16.msra.mxu0 %v5904
        %7793 = vmatprep.subr.bf16.mxu0 %v5909
        %7794 = vmatpush1.bf16.msra.mxu0 %v5908
        %7795 = vmatprep.subr.bf16.mxu0 %v5913
        %7796 = vmatpush1.bf16.msra.mxu0 %v5912
        %7797 = vmatprep.subr.bf16.mxu0 %v5917
        %7798 = vmatpush1.bf16.msra.mxu0 %v5916
        %7799 = vmatprep.subr.bf16.mxu0 %v5921
        %7800 = vmatpush1.bf16.msra.mxu0 %v5920
        %7801 = vmatprep.subr.bf16.mxu0 %v5925
        %7802 = vmatpush1.bf16.msra.mxu0 %v5924
        %7803 = vmatprep.subr.bf16.mxu0 %v5929
        %7804 = vmatpush1.bf16.msra.mxu0 %v5928
        %7805 = vmatprep.subr.bf16.mxu0 %v5933
        %7806 = vmatpush1.bf16.msra.mxu0 %v5932
        %7807 = vmatprep.subr.bf16.mxu0 %v5937
        %7808 = vmatpush1.bf16.msra.mxu0 %v5936
        %7809 = vmatprep.subr.bf16.mxu0 %v5941
        %7810 = vmatpush1.bf16.msra.mxu0 %v5940
        %7811 = vmatprep.subr.bf16.mxu0 %v5945
        %7812 = vmatpush1.bf16.msra.mxu0 %v5944
        %7813 = vmatprep.subr.bf16.mxu0 %v5949
        %7814 = vmatpush1.bf16.msra.mxu0 %v5948
        %7815 = vmatprep.mubr.bf16.mxu0 %v1529
        %7816 = vmatmul.mubr.bf16.gmra.mrb[0].mxu0 %v1528
        %v7817 = vpop.f32.mrb[0].mxu0
        %v7818 = vadd.f32 %v7777, %v7817
        %v7819 = vpop.f32.mrb[0].mxu0
        %v7820 = vadd.f32 %v7779, %v7819
        %v7821 = vpop.f32.mrb[0].mxu0
        %v7822 = vpop.f32.mrb[0].mxu0
        %7823 = vdwg.mxu0
        %7824 = vmatprep.subr.bf16.mxu0 %v5953
        %7825 = vmatpush1.bf16.msra.mxu0 %v5952
        %7826 = vmatprep.subr.bf16.mxu0 %v5957
        %7827 = vmatpush1.bf16.msra.mxu0 %v5956
        %7828 = vmatprep.subr.bf16.mxu0 %v5961
        %7829 = vmatpush1.bf16.msra.mxu0 %v5960
        %7830 = vmatprep.subr.bf16.mxu0 %v5965
        %7831 = vmatpush1.bf16.msra.mxu0 %v5964
        %7832 = vmatprep.subr.bf16.mxu0 %v5969
        %7833 = vmatpush1.bf16.msra.mxu0 %v5968
        %7834 = vmatprep.subr.bf16.mxu0 %v5973
        %7835 = vmatpush1.bf16.msra.mxu0 %v5972
        %7836 = vmatprep.subr.bf16.mxu0 %v5977
        %7837 = vmatpush1.bf16.msra.mxu0 %v5976
        %7838 = vmatprep.subr.bf16.mxu0 %v5981
        %7839 = vmatpush1.bf16.msra.mxu0 %v5980
        %7840 = vmatprep.subr.bf16.mxu0 %v5985
        %7841 = vmatpush1.bf16.msra.mxu0 %v5984
        %7842 = vmatprep.subr.bf16.mxu0 %v5989
        %7843 = vmatpush1.bf16.msra.mxu0 %v5988
        %7844 = vmatprep.subr.bf16.mxu0 %v5993
        %7845 = vmatpush1.bf16.msra.mxu0 %v5992
        %7846 = vmatprep.subr.bf16.mxu0 %v5997
        %7847 = vmatpush1.bf16.msra.mxu0 %v5996
        %7848 = vmatprep.subr.bf16.mxu0 %v6001
        %7849 = vmatpush1.bf16.msra.mxu0 %v6000
        %7850 = vmatprep.subr.bf16.mxu0 %v6005
        %7851 = vmatpush1.bf16.msra.mxu0 %v6004
        %7852 = vmatprep.subr.bf16.mxu0 %v6009
        %7853 = vmatpush1.bf16.msra.mxu0 %v6008
        %7854 = vmatprep.subr.bf16.mxu0 %v6013
        %7855 = vmatpush1.bf16.msra.mxu0 %v6012
        %7856 = vmatprep.mubr.bf16.mxu0 %v1531
        %7857 = vmatmul.mubr.bf16.gmra.mrb[0].mxu0 %v1530
        %v7858 = vpop.f32.mrb[0].mxu0
        %v7859 = vadd.f32 %v7818, %v7858
        %v7860 = vpop.f32.mrb[0].mxu0
        %v7861 = vadd.f32 %v7820, %v7860
        %v7862 = vpop.f32.mrb[0].mxu0
        %v7863 = vpop.f32.mrb[0].mxu0
        %7864 = vdwg.mxu0
        %7865 = vmatprep.subr.bf16.mxu0 %v6017
        %7866 = vmatpush1.bf16.msra.mxu0 %v6016
        %7867 = vmatprep.subr.bf16.mxu0 %v6021
        %7868 = vmatpush1.bf16.msra.mxu0 %v6020
        %7869 = vmatprep.subr.bf16.mxu0 %v6025
        %7870 = vmatpush1.bf16.msra.mxu0 %v6024
        %7871 = vmatprep.subr.bf16.mxu0 %v6029
        %7872 = vmatpush1.bf16.msra.mxu0 %v6028
        %7873 = vmatprep.subr.bf16.mxu0 %v6033
        %7874 = vmatpush1.bf16.msra.mxu0 %v6032
        %7875 = vmatprep.subr.bf16.mxu0 %v6037
        %7876 = vmatpush1.bf16.msra.mxu0 %v6036
        %7877 = vmatprep.subr.bf16.mxu0 %v6041
        %7878 = vmatpush1.bf16.msra.mxu0 %v6040
        %7879 = vmatprep.subr.bf16.mxu0 %v6045
        %7880 = vmatpush1.bf16.msra.mxu0 %v6044
        %7881 = vmatprep.subr.bf16.mxu0 0
        %7882 = vmatpush1.bf16.msra.mxu0 0
        %7883 = vmatprep.subr.bf16.mxu0 0
        %7884 = vmatpush1.bf16.msra.mxu0 0
        %7885 = vmatprep.subr.bf16.mxu0 0
        %7886 = vmatpush1.bf16.msra.mxu0 0
        %7887 = vmatprep.subr.bf16.mxu0 0
        %7888 = vmatpush1.bf16.msra.mxu0 0
        %7889 = vmatprep.subr.bf16.mxu0 0
        %7890 = vmatpush1.bf16.msra.mxu0 0
        %7891 = vmatprep.subr.bf16.mxu0 0
        %7892 = vmatpush1.bf16.msra.mxu0 0
        %7893 = vmatprep.subr.bf16.mxu0 0
        %7894 = vmatpush1.bf16.msra.mxu0 0
        %7895 = vmatprep.subr.bf16.mxu0 0
        %7896 = vmatpush1.bf16.msra.mxu0 0
        %7897 = vmatprep.mubr.bf16.mxu0 0
        %7898 = vmatmul.mubr.bf16.gmra.mrb[0].mxu0 %v1532
        %v7899 = vpop.f32.mrb[0].mxu0
        %v7900 = vadd.f32 %v7859, %v7899
        %v7901 = vpop.f32.mrb[0].mxu0
        %v7902 = vadd.f32 %v7861, %v7901
        %v7903 = vpop.f32.mrb[0].mxu0
        %v7904 = vpop.f32.mrb[0].mxu0
        %7905 = vdwg.mxu0
        %7906 = vmatprep.subr.bf16.mxu0 %v4931
        %7907 = vmatpush1.bf16.msra.mxu0 %v4930
        %7908 = vmatprep.subr.bf16.mxu0 %v4935
        %7909 = vmatpush1.bf16.msra.mxu0 %v4934
        %7910 = vmatprep.subr.bf16.mxu0 %v4939
        %7911 = vmatpush1.bf16.msra.mxu0 %v4938
        %7912 = vmatprep.subr.bf16.mxu0 %v4943
        %7913 = vmatpush1.bf16.msra.mxu0 %v4942
        %7914 = vmatprep.subr.bf16.mxu0 %v4947
        %7915 = vmatpush1.bf16.msra.mxu0 %v4946
        %7916 = vmatprep.subr.bf16.mxu0 %v4951
        %7917 = vmatpush1.bf16.msra.mxu0 %v4950
        %7918 = vmatprep.subr.bf16.mxu0 %v4955
        %7919 = vmatpush1.bf16.msra.mxu0 %v4954
        %7920 = vmatprep.subr.bf16.mxu0 %v4959
        %7921 = vmatpush1.bf16.msra.mxu0 %v4958
        %7922 = vmatprep.subr.bf16.mxu0 %v4963
        %7923 = vmatpush1.bf16.msra.mxu0 %v4962
        %7924 = vmatprep.subr.bf16.mxu0 %v4967
        %7925 = vmatpush1.bf16.msra.mxu0 %v4966
        %7926 = vmatprep.subr.bf16.mxu0 %v4971
        %7927 = vmatpush1.bf16.msra.mxu0 %v4970
        %7928 = vmatprep.subr.bf16.mxu0 %v4975
        %7929 = vmatpush1.bf16.msra.mxu0 %v4974
        %7930 = vmatprep.subr.bf16.mxu0 %v4979
        %7931 = vmatpush1.bf16.msra.mxu0 %v4978
        %7932 = vmatprep.subr.bf16.mxu0 %v4983
        %7933 = vmatpush1.bf16.msra.mxu0 %v4982
        %7934 = vmatprep.subr.bf16.mxu0 %v4987
        %7935 = vmatpush1.bf16.msra.mxu0 %v4986
        %7936 = vmatprep.subr.bf16.mxu0 %v4991
        %7937 = vmatpush1.bf16.msra.mxu0 %v4990
        %7938 = vmatprep.mubr.bf16.mxu0 %v1499
        %7939 = vmatmul.mubr.bf16.gmra.mrb[0].mxu0 %v1498
        %v7940 = vpop.f32.mrb[0].mxu0
        %v7941 = vadd.f32 0.0, %v7940
        %v7942 = vpop.f32.mrb[0].mxu0
        %v7943 = vadd.f32 0.0, %v7942
        %v7944 = vpop.f32.mrb[0].mxu0
        %v7945 = vpop.f32.mrb[0].mxu0
        %7946 = vdwg.mxu0
        %7947 = vmatprep.subr.bf16.mxu0 %v4995
        %7948 = vmatpush1.bf16.msra.mxu0 %v4994
        %7949 = vmatprep.subr.bf16.mxu0 %v4999
        %7950 = vmatpush1.bf16.msra.mxu0 %v4998
        %7951 = vmatprep.subr.bf16.mxu0 %v5003
        %7952 = vmatpush1.bf16.msra.mxu0 %v5002
        %7953 = vmatprep.subr.bf16.mxu0 %v5007
        %7954 = vmatpush1.bf16.msra.mxu0 %v5006
        %7955 = vmatprep.subr.bf16.mxu0 %v5011
        %7956 = vmatpush1.bf16.msra.mxu0 %v5010
        %7957 = vmatprep.subr.bf16.mxu0 %v5015
        %7958 = vmatpush1.bf16.msra.mxu0 %v5014
        %7959 = vmatprep.subr.bf16.mxu0 %v5019
        %7960 = vmatpush1.bf16.msra.mxu0 %v5018
        %7961 = vmatprep.subr.bf16.mxu0 %v5023
        %7962 = vmatpush1.bf16.msra.mxu0 %v5022
        %7963 = vmatprep.subr.bf16.mxu0 %v5027
        %7964 = vmatpush1.bf16.msra.mxu0 %v5026
        %7965 = vmatprep.subr.bf16.mxu0 %v5031
        %7966 = vmatpush1.bf16.msra.mxu0 %v5030
        %7967 = vmatprep.subr.bf16.mxu0 %v5035
        %7968 = vmatpush1.bf16.msra.mxu0 %v5034
        %7969 = vmatprep.subr.bf16.mxu0 %v5039
        %7970 = vmatpush1.bf16.msra.mxu0 %v5038
        %7971 = vmatprep.subr.bf16.mxu0 %v5043
        %7972 = vmatpush1.bf16.msra.mxu0 %v5042
        %7973 = vmatprep.subr.bf16.mxu0 %v5047
        %7974 = vmatpush1.bf16.msra.mxu0 %v5046
        %7975 = vmatprep.subr.bf16.mxu0 %v5051
        %7976 = vmatpush1.bf16.msra.mxu0 %v5050
        %7977 = vmatprep.subr.bf16.mxu0 %v5055
        %7978 = vmatpush1.bf16.msra.mxu0 %v5054
        %7979 = vmatprep.mubr.bf16.mxu0 %v1501
        %7980 = vmatmul.mubr.bf16.gmra.mrb[0].mxu0 %v1500
        %v7981 = vpop.f32.mrb[0].mxu0
        %v7982 = vadd.f32 %v7941, %v7981
        %v7983 = vpop.f32.mrb[0].mxu0
        %v7984 = vadd.f32 %v7943, %v7983
        %v7985 = vpop.f32.mrb[0].mxu0
        %v7986 = vpop.f32.mrb[0].mxu0
        %7987 = vdwg.mxu0
        %7988 = vmatprep.subr.bf16.mxu0 %v5059
        %7989 = vmatpush1.bf16.msra.mxu0 %v5058
        %7990 = vmatprep.subr.bf16.mxu0 %v5063
        %7991 = vmatpush1.bf16.msra.mxu0 %v5062
        %7992 = vmatprep.subr.bf16.mxu0 %v5067
        %7993 = vmatpush1.bf16.msra.mxu0 %v5066
        %7994 = vmatprep.subr.bf16.mxu0 %v5071
        %7995 = vmatpush1.bf16.msra.mxu0 %v5070
        %7996 = vmatprep.subr.bf16.mxu0 %v5075
        %7997 = vmatpush1.bf16.msra.mxu0 %v5074
        %7998 = vmatprep.subr.bf16.mxu0 %v5079
        %7999 = vmatpush1.bf16.msra.mxu0 %v5078
        %8000 = vmatprep.subr.bf16.mxu0 %v5083
        %8001 = vmatpush1.bf16.msra.mxu0 %v5082
        %8002 = vmatprep.subr.bf16.mxu0 %v5087
        %8003 = vmatpush1.bf16.msra.mxu0 %v5086
        %8004 = vmatprep.subr.bf16.mxu0 %v5091
        %8005 = vmatpush1.bf16.msra.mxu0 %v5090
        %8006 = vmatprep.subr.bf16.mxu0 %v5095
        %8007 = vmatpush1.bf16.msra.mxu0 %v5094
        %8008 = vmatprep.subr.bf16.mxu0 %v5099
        %8009 = vmatpush1.bf16.msra.mxu0 %v5098
        %8010 = vmatprep.subr.bf16.mxu0 %v5103
        %8011 = vmatpush1.bf16.msra.mxu0 %v5102
        %8012 = vmatprep.subr.bf16.mxu0 %v5107
        %8013 = vmatpush1.bf16.msra.mxu0 %v5106
        %8014 = vmatprep.subr.bf16.mxu0 %v5111
        %8015 = vmatpush1.bf16.msra.mxu0 %v5110
        %8016 = vmatprep.subr.bf16.mxu0 %v5115
        %8017 = vmatpush1.bf16.msra.mxu0 %v5114
        %8018 = vmatprep.subr.bf16.mxu0 %v5119
        %8019 = vmatpush1.bf16.msra.mxu0 %v5118
        %8020 = vmatprep.mubr.bf16.mxu0 %v1503
        %8021 = vmatmul.mubr.bf16.gmra.mrb[0].mxu0 %v1502
        %v8022 = vpop.f32.mrb[0].mxu0
        %v8023 = vadd.f32 %v7982, %v8022
        %v8024 = vpop.f32.mrb[0].mxu0
        %v8025 = vadd.f32 %v7984, %v8024
        %v8026 = vpop.f32.mrb[0].mxu0
        %v8027 = vpop.f32.mrb[0].mxu0
        %8028 = vdwg.mxu0
        %8029 = vmatprep.subr.bf16.mxu0 %v5123
        %8030 = vmatpush1.bf16.msra.mxu0 %v5122
        %8031 = vmatprep.subr.bf16.mxu0 %v5127
        %8032 = vmatpush1.bf16.msra.mxu0 %v5126
        %8033 = vmatprep.subr.bf16.mxu0 %v5131
        %8034 = vmatpush1.bf16.msra.mxu0 %v5130
        %8035 = vmatprep.subr.bf16.mxu0 %v5135
        %8036 = vmatpush1.bf16.msra.mxu0 %v5134
        %8037 = vmatprep.subr.bf16.mxu0 %v5139
        %8038 = vmatpush1.bf16.msra.mxu0 %v5138
        %8039 = vmatprep.subr.bf16.mxu0 %v5143
        %8040 = vmatpush1.bf16.msra.mxu0 %v5142
        %8041 = vmatprep.subr.bf16.mxu0 %v5147
        %8042 = vmatpush1.bf16.msra.mxu0 %v5146
        %8043 = vmatprep.subr.bf16.mxu0 %v5151
        %8044 = vmatpush1.bf16.msra.mxu0 %v5150
        %8045 = vmatprep.subr.bf16.mxu0 %v5155
        %8046 = vmatpush1.bf16.msra.mxu0 %v5154
        %8047 = vmatprep.subr.bf16.mxu0 %v5159
        %8048 = vmatpush1.bf16.msra.mxu0 %v5158
        %8049 = vmatprep.subr.bf16.mxu0 %v5163
        %8050 = vmatpush1.bf16.msra.mxu0 %v5162
        %8051 = vmatprep.subr.bf16.mxu0 %v5167
        %8052 = vmatpush1.bf16.msra.mxu0 %v5166
        %8053 = vmatprep.subr.bf16.mxu0 %v5171
        %8054 = vmatpush1.bf16.msra.mxu0 %v5170
        %8055 = vmatprep.subr.bf16.mxu0 %v5175
        %8056 = vmatpush1.bf16.msra.mxu0 %v5174
        %8057 = vmatprep.subr.bf16.mxu0 %v5179
        %8058 = vmatpush1.bf16.msra.mxu0 %v5178
        %8059 = vmatprep.subr.bf16.mxu0 %v5183
        %8060 = vmatpush1.bf16.msra.mxu0 %v5182
        %8061 = vmatprep.mubr.bf16.mxu0 %v1505
        %8062 = vmatmul.mubr.bf16.gmra.mrb[0].mxu0 %v1504
        %v8063 = vpop.f32.mrb[0].mxu0
        %v8064 = vadd.f32 %v8023, %v8063
        %v8065 = vpop.f32.mrb[0].mxu0
        %v8066 = vadd.f32 %v8025, %v8065
        %v8067 = vpop.f32.mrb[0].mxu0
        %v8068 = vpop.f32.mrb[0].mxu0
        %8069 = vdwg.mxu0
        %8070 = vmatprep.subr.bf16.mxu0 %v5187
        %8071 = vmatpush1.bf16.msra.mxu0 %v5186
        %8072 = vmatprep.subr.bf16.mxu0 %v5191
        %8073 = vmatpush1.bf16.msra.mxu0 %v5190
        %8074 = vmatprep.subr.bf16.mxu0 %v5195
        %8075 = vmatpush1.bf16.msra.mxu0 %v5194
        %8076 = vmatprep.subr.bf16.mxu0 %v5199
        %8077 = vmatpush1.bf16.msra.mxu0 %v5198
        %8078 = vmatprep.subr.bf16.mxu0 %v5203
        %8079 = vmatpush1.bf16.msra.mxu0 %v5202
        %8080 = vmatprep.subr.bf16.mxu0 %v5207
        %8081 = vmatpush1.bf16.msra.mxu0 %v5206
        %8082 = vmatprep.subr.bf16.mxu0 %v5211
        %8083 = vmatpush1.bf16.msra.mxu0 %v5210
        %8084 = vmatprep.subr.bf16.mxu0 %v5215
        %8085 = vmatpush1.bf16.msra.mxu0 %v5214
        %8086 = vmatprep.subr.bf16.mxu0 %v5219
        %8087 = vmatpush1.bf16.msra.mxu0 %v5218
        %8088 = vmatprep.subr.bf16.mxu0 %v5223
        %8089 = vmatpush1.bf16.msra.mxu0 %v5222
        %8090 = vmatprep.subr.bf16.mxu0 %v5227
        %8091 = vmatpush1.bf16.msra.mxu0 %v5226
        %8092 = vmatprep.subr.bf16.mxu0 %v5231
        %8093 = vmatpush1.bf16.msra.mxu0 %v5230
        %8094 = vmatprep.subr.bf16.mxu0 %v5235
        %8095 = vmatpush1.bf16.msra.mxu0 %v5234
        %8096 = vmatprep.subr.bf16.mxu0 %v5239
        %8097 = vmatpush1.bf16.msra.mxu0 %v5238
        %8098 = vmatprep.subr.bf16.mxu0 %v5243
        %8099 = vmatpush1.bf16.msra.mxu0 %v5242
        %8100 = vmatprep.subr.bf16.mxu0 %v5247
        %8101 = vmatpush1.bf16.msra.mxu0 %v5246
        %8102 = vmatprep.mubr.bf16.mxu0 %v1507
        %8103 = vmatmul.mubr.bf16.gmra.mrb[0].mxu0 %v1506
        %v8104 = vpop.f32.mrb[0].mxu0
        %v8105 = vadd.f32 %v8064, %v8104
        %v8106 = vpop.f32.mrb[0].mxu0
        %v8107 = vadd.f32 %v8066, %v8106
        %v8108 = vpop.f32.mrb[0].mxu0
        %v8109 = vpop.f32.mrb[0].mxu0
        %8110 = vdwg.mxu0
        %8111 = vmatprep.subr.bf16.mxu0 %v5251
        %8112 = vmatpush1.bf16.msra.mxu0 %v5250
        %8113 = vmatprep.subr.bf16.mxu0 %v5255
        %8114 = vmatpush1.bf16.msra.mxu0 %v5254
        %8115 = vmatprep.subr.bf16.mxu0 %v5259
        %8116 = vmatpush1.bf16.msra.mxu0 %v5258
        %8117 = vmatprep.subr.bf16.mxu0 %v5263
        %8118 = vmatpush1.bf16.msra.mxu0 %v5262
        %8119 = vmatprep.subr.bf16.mxu0 %v5267
        %8120 = vmatpush1.bf16.msra.mxu0 %v5266
        %8121 = vmatprep.subr.bf16.mxu0 %v5271
        %8122 = vmatpush1.bf16.msra.mxu0 %v5270
        %8123 = vmatprep.subr.bf16.mxu0 %v5275
        %8124 = vmatpush1.bf16.msra.mxu0 %v5274
        %8125 = vmatprep.subr.bf16.mxu0 %v5279
        %8126 = vmatpush1.bf16.msra.mxu0 %v5278
        %8127 = vmatprep.subr.bf16.mxu0 %v5283
        %8128 = vmatpush1.bf16.msra.mxu0 %v5282
        %8129 = vmatprep.subr.bf16.mxu0 %v5287
        %8130 = vmatpush1.bf16.msra.mxu0 %v5286
        %8131 = vmatprep.subr.bf16.mxu0 %v5291
        %8132 = vmatpush1.bf16.msra.mxu0 %v5290
        %8133 = vmatprep.subr.bf16.mxu0 %v5295
        %8134 = vmatpush1.bf16.msra.mxu0 %v5294
        %8135 = vmatprep.subr.bf16.mxu0 %v5299
        %8136 = vmatpush1.bf16.msra.mxu0 %v5298
        %8137 = vmatprep.subr.bf16.mxu0 %v5303
        %8138 = vmatpush1.bf16.msra.mxu0 %v5302
        %8139 = vmatprep.subr.bf16.mxu0 %v5307
        %8140 = vmatpush1.bf16.msra.mxu0 %v5306
        %8141 = vmatprep.subr.bf16.mxu0 %v5311
        %8142 = vmatpush1.bf16.msra.mxu0 %v5310
        %8143 = vmatprep.mubr.bf16.mxu0 %v1509
        %8144 = vmatmul.mubr.bf16.gmra.mrb[0].mxu0 %v1508
        %v8145 = vpop.f32.mrb[0].mxu0
        %v8146 = vadd.f32 %v8105, %v8145
        %v8147 = vpop.f32.mrb[0].mxu0
        %v8148 = vadd.f32 %v8107, %v8147
        %v8149 = vpop.f32.mrb[0].mxu0
        %v8150 = vpop.f32.mrb[0].mxu0
        %8151 = vdwg.mxu0
        %8152 = vmatprep.subr.bf16.mxu0 %v5315
        %8153 = vmatpush1.bf16.msra.mxu0 %v5314
        %8154 = vmatprep.subr.bf16.mxu0 %v5319
        %8155 = vmatpush1.bf16.msra.mxu0 %v5318
        %8156 = vmatprep.subr.bf16.mxu0 %v5323
        %8157 = vmatpush1.bf16.msra.mxu0 %v5322
        %8158 = vmatprep.subr.bf16.mxu0 %v5327
        %8159 = vmatpush1.bf16.msra.mxu0 %v5326
        %8160 = vmatprep.subr.bf16.mxu0 %v5331
        %8161 = vmatpush1.bf16.msra.mxu0 %v5330
        %8162 = vmatprep.subr.bf16.mxu0 %v5335
        %8163 = vmatpush1.bf16.msra.mxu0 %v5334
        %8164 = vmatprep.subr.bf16.mxu0 %v5339
        %8165 = vmatpush1.bf16.msra.mxu0 %v5338
        %8166 = vmatprep.subr.bf16.mxu0 %v5343
        %8167 = vmatpush1.bf16.msra.mxu0 %v5342
        %8168 = vmatprep.subr.bf16.mxu0 %v5347
        %8169 = vmatpush1.bf16.msra.mxu0 %v5346
        %8170 = vmatprep.subr.bf16.mxu0 %v5351
        %8171 = vmatpush1.bf16.msra.mxu0 %v5350
        %8172 = vmatprep.subr.bf16.mxu0 %v5355
        %8173 = vmatpush1.bf16.msra.mxu0 %v5354
        %8174 = vmatprep.subr.bf16.mxu0 %v5359
        %8175 = vmatpush1.bf16.msra.mxu0 %v5358
        %8176 = vmatprep.subr.bf16.mxu0 %v5363
        %8177 = vmatpush1.bf16.msra.mxu0 %v5362
        %8178 = vmatprep.subr.bf16.mxu0 %v5367
        %8179 = vmatpush1.bf16.msra.mxu0 %v5366
        %8180 = vmatprep.subr.bf16.mxu0 %v5371
        %8181 = vmatpush1.bf16.msra.mxu0 %v5370
        %8182 = vmatprep.subr.bf16.mxu0 %v5375
        %8183 = vmatpush1.bf16.msra.mxu0 %v5374
        %8184 = vmatprep.mubr.bf16.mxu0 %v1511
        %8185 = vmatmul.mubr.bf16.gmra.mrb[0].mxu0 %v1510
        %v8186 = vpop.f32.mrb[0].mxu0
        %v8187 = vadd.f32 %v8146, %v8186
        %v8188 = vpop.f32.mrb[0].mxu0
        %v8189 = vadd.f32 %v8148, %v8188
        %v8190 = vpop.f32.mrb[0].mxu0
        %v8191 = vpop.f32.mrb[0].mxu0
        %8192 = vdwg.mxu0
        %8193 = vmatprep.subr.bf16.mxu0 %v5379
        %8194 = vmatpush1.bf16.msra.mxu0 %v5378
        %8195 = vmatprep.subr.bf16.mxu0 %v5383
        %8196 = vmatpush1.bf16.msra.mxu0 %v5382
        %8197 = vmatprep.subr.bf16.mxu0 %v5387
        %8198 = vmatpush1.bf16.msra.mxu0 %v5386
        %8199 = vmatprep.subr.bf16.mxu0 %v5391
        %8200 = vmatpush1.bf16.msra.mxu0 %v5390
        %8201 = vmatprep.subr.bf16.mxu0 %v5395
        %8202 = vmatpush1.bf16.msra.mxu0 %v5394
        %8203 = vmatprep.subr.bf16.mxu0 %v5399
        %8204 = vmatpush1.bf16.msra.mxu0 %v5398
        %8205 = vmatprep.subr.bf16.mxu0 %v5403
        %8206 = vmatpush1.bf16.msra.mxu0 %v5402
        %8207 = vmatprep.subr.bf16.mxu0 %v5407
        %8208 = vmatpush1.bf16.msra.mxu0 %v5406
        %8209 = vmatprep.subr.bf16.mxu0 %v5411
        %8210 = vmatpush1.bf16.msra.mxu0 %v5410
        %8211 = vmatprep.subr.bf16.mxu0 %v5415
        %8212 = vmatpush1.bf16.msra.mxu0 %v5414
        %8213 = vmatprep.subr.bf16.mxu0 %v5419
        %8214 = vmatpush1.bf16.msra.mxu0 %v5418
        %8215 = vmatprep.subr.bf16.mxu0 %v5423
        %8216 = vmatpush1.bf16.msra.mxu0 %v5422
        %8217 = vmatprep.subr.bf16.mxu0 %v5427
        %8218 = vmatpush1.bf16.msra.mxu0 %v5426
        %8219 = vmatprep.subr.bf16.mxu0 %v5431
        %8220 = vmatpush1.bf16.msra.mxu0 %v5430
        %8221 = vmatprep.subr.bf16.mxu0 %v5435
        %8222 = vmatpush1.bf16.msra.mxu0 %v5434
        %8223 = vmatprep.subr.bf16.mxu0 %v5439
        %8224 = vmatpush1.bf16.msra.mxu0 %v5438
        %8225 = vmatprep.mubr.bf16.mxu0 %v1513
        %8226 = vmatmul.mubr.bf16.gmra.mrb[0].mxu0 %v1512
        %v8227 = vpop.f32.mrb[0].mxu0
        %v8228 = vadd.f32 %v8187, %v8227
        %v8229 = vpop.f32.mrb[0].mxu0
        %v8230 = vadd.f32 %v8189, %v8229
        %v8231 = vpop.f32.mrb[0].mxu0
        %v8232 = vpop.f32.mrb[0].mxu0
        %8233 = vdwg.mxu0
        %8234 = vmatprep.subr.bf16.mxu0 %v5443
        %8235 = vmatpush1.bf16.msra.mxu0 %v5442
        %8236 = vmatprep.subr.bf16.mxu0 %v5447
        %8237 = vmatpush1.bf16.msra.mxu0 %v5446
        %8238 = vmatprep.subr.bf16.mxu0 %v5451
        %8239 = vmatpush1.bf16.msra.mxu0 %v5450
        %8240 = vmatprep.subr.bf16.mxu0 %v5455
        %8241 = vmatpush1.bf16.msra.mxu0 %v5454
        %8242 = vmatprep.subr.bf16.mxu0 %v5459
        %8243 = vmatpush1.bf16.msra.mxu0 %v5458
        %8244 = vmatprep.subr.bf16.mxu0 %v5463
        %8245 = vmatpush1.bf16.msra.mxu0 %v5462
        %8246 = vmatprep.subr.bf16.mxu0 %v5467
        %8247 = vmatpush1.bf16.msra.mxu0 %v5466
        %8248 = vmatprep.subr.bf16.mxu0 %v5471
        %8249 = vmatpush1.bf16.msra.mxu0 %v5470
        %8250 = vmatprep.subr.bf16.mxu0 %v5475
        %8251 = vmatpush1.bf16.msra.mxu0 %v5474
        %8252 = vmatprep.subr.bf16.mxu0 %v5479
        %8253 = vmatpush1.bf16.msra.mxu0 %v5478
        %8254 = vmatprep.subr.bf16.mxu0 %v5483
        %8255 = vmatpush1.bf16.msra.mxu0 %v5482
        %8256 = vmatprep.subr.bf16.mxu0 %v5487
        %8257 = vmatpush1.bf16.msra.mxu0 %v5486
        %8258 = vmatprep.subr.bf16.mxu0 %v5491
        %8259 = vmatpush1.bf16.msra.mxu0 %v5490
        %8260 = vmatprep.subr.bf16.mxu0 %v5495
        %8261 = vmatpush1.bf16.msra.mxu0 %v5494
        %8262 = vmatprep.subr.bf16.mxu0 %v5499
        %8263 = vmatpush1.bf16.msra.mxu0 %v5498
        %8264 = vmatprep.subr.bf16.mxu0 %v5503
        %8265 = vmatpush1.bf16.msra.mxu0 %v5502
        %8266 = vmatprep.mubr.bf16.mxu0 %v1515
        %8267 = vmatmul.mubr.bf16.gmra.mrb[0].mxu0 %v1514
        %v8268 = vpop.f32.mrb[0].mxu0
        %v8269 = vadd.f32 %v8228, %v8268
        %v8270 = vpop.f32.mrb[0].mxu0
        %v8271 = vadd.f32 %v8230, %v8270
        %v8272 = vpop.f32.mrb[0].mxu0
        %v8273 = vpop.f32.mrb[0].mxu0
        %8274 = vdwg.mxu0
        %8275 = vmatprep.subr.bf16.mxu0 %v5507
        %8276 = vmatpush1.bf16.msra.mxu0 %v5506
        %8277 = vmatprep.subr.bf16.mxu0 %v5511
        %8278 = vmatpush1.bf16.msra.mxu0 %v5510
        %8279 = vmatprep.subr.bf16.mxu0 %v5515
        %8280 = vmatpush1.bf16.msra.mxu0 %v5514
        %8281 = vmatprep.subr.bf16.mxu0 %v5519
        %8282 = vmatpush1.bf16.msra.mxu0 %v5518
        %8283 = vmatprep.subr.bf16.mxu0 %v5523
        %8284 = vmatpush1.bf16.msra.mxu0 %v5522
        %8285 = vmatprep.subr.bf16.mxu0 %v5527
        %8286 = vmatpush1.bf16.msra.mxu0 %v5526
        %8287 = vmatprep.subr.bf16.mxu0 %v5531
        %8288 = vmatpush1.bf16.msra.mxu0 %v5530
        %8289 = vmatprep.subr.bf16.mxu0 %v5535
        %8290 = vmatpush1.bf16.msra.mxu0 %v5534
        %8291 = vmatprep.subr.bf16.mxu0 %v5539
        %8292 = vmatpush1.bf16.msra.mxu0 %v5538
        %8293 = vmatprep.subr.bf16.mxu0 %v5543
        %8294 = vmatpush1.bf16.msra.mxu0 %v5542
        %8295 = vmatprep.subr.bf16.mxu0 %v5547
        %8296 = vmatpush1.bf16.msra.mxu0 %v5546
        %8297 = vmatprep.subr.bf16.mxu0 %v5551
        %8298 = vmatpush1.bf16.msra.mxu0 %v5550
        %8299 = vmatprep.subr.bf16.mxu0 %v5555
        %8300 = vmatpush1.bf16.msra.mxu0 %v5554
        %8301 = vmatprep.subr.bf16.mxu0 %v5559
        %8302 = vmatpush1.bf16.msra.mxu0 %v5558
        %8303 = vmatprep.subr.bf16.mxu0 %v5563
        %8304 = vmatpush1.bf16.msra.mxu0 %v5562
        %8305 = vmatprep.subr.bf16.mxu0 %v5567
        %8306 = vmatpush1.bf16.msra.mxu0 %v5566
        %8307 = vmatprep.mubr.bf16.mxu0 %v1517
        %8308 = vmatmul.mubr.bf16.gmra.mrb[0].mxu0 %v1516
        %v8309 = vpop.f32.mrb[0].mxu0
        %v8310 = vadd.f32 %v8269, %v8309
        %v8311 = vpop.f32.mrb[0].mxu0
        %v8312 = vadd.f32 %v8271, %v8311
        %v8313 = vpop.f32.mrb[0].mxu0
        %v8314 = vpop.f32.mrb[0].mxu0
        %8315 = vdwg.mxu0
        %8316 = vmatprep.subr.bf16.mxu0 %v5571
        %8317 = vmatpush1.bf16.msra.mxu0 %v5570
        %8318 = vmatprep.subr.bf16.mxu0 %v5575
        %8319 = vmatpush1.bf16.msra.mxu0 %v5574
        %8320 = vmatprep.subr.bf16.mxu0 %v5579
        %8321 = vmatpush1.bf16.msra.mxu0 %v5578
        %8322 = vmatprep.subr.bf16.mxu0 %v5583
        %8323 = vmatpush1.bf16.msra.mxu0 %v5582
        %8324 = vmatprep.subr.bf16.mxu0 %v5587
        %8325 = vmatpush1.bf16.msra.mxu0 %v5586
        %8326 = vmatprep.subr.bf16.mxu0 %v5591
        %8327 = vmatpush1.bf16.msra.mxu0 %v5590
        %8328 = vmatprep.subr.bf16.mxu0 %v5595
        %8329 = vmatpush1.bf16.msra.mxu0 %v5594
        %8330 = vmatprep.subr.bf16.mxu0 %v5599
        %8331 = vmatpush1.bf16.msra.mxu0 %v5598
        %8332 = vmatprep.subr.bf16.mxu0 %v5603
        %8333 = vmatpush1.bf16.msra.mxu0 %v5602
        %8334 = vmatprep.subr.bf16.mxu0 %v5607
        %8335 = vmatpush1.bf16.msra.mxu0 %v5606
        %8336 = vmatprep.subr.bf16.mxu0 %v5611
        %8337 = vmatpush1.bf16.msra.mxu0 %v5610
        %8338 = vmatprep.subr.bf16.mxu0 %v5615
        %8339 = vmatpush1.bf16.msra.mxu0 %v5614
        %8340 = vmatprep.subr.bf16.mxu0 %v5619
        %8341 = vmatpush1.bf16.msra.mxu0 %v5618
        %8342 = vmatprep.subr.bf16.mxu0 %v5623
        %8343 = vmatpush1.bf16.msra.mxu0 %v5622
        %8344 = vmatprep.subr.bf16.mxu0 %v5627
        %8345 = vmatpush1.bf16.msra.mxu0 %v5626
        %8346 = vmatprep.subr.bf16.mxu0 %v5631
        %8347 = vmatpush1.bf16.msra.mxu0 %v5630
        %8348 = vmatprep.mubr.bf16.mxu0 %v1519
        %8349 = vmatmul.mubr.bf16.gmra.mrb[0].mxu0 %v1518
        %v8350 = vpop.f32.mrb[0].mxu0
        %v8351 = vadd.f32 %v8310, %v8350
        %v8352 = vpop.f32.mrb[0].mxu0
        %v8353 = vadd.f32 %v8312, %v8352
        %v8354 = vpop.f32.mrb[0].mxu0
        %v8355 = vpop.f32.mrb[0].mxu0
        %8356 = vdwg.mxu0
        %8357 = vmatprep.subr.bf16.mxu0 %v5635
        %8358 = vmatpush1.bf16.msra.mxu0 %v5634
        %8359 = vmatprep.subr.bf16.mxu0 %v5639
        %8360 = vmatpush1.bf16.msra.mxu0 %v5638
        %8361 = vmatprep.subr.bf16.mxu0 %v5643
        %8362 = vmatpush1.bf16.msra.mxu0 %v5642
        %8363 = vmatprep.subr.bf16.mxu0 %v5647
        %8364 = vmatpush1.bf16.msra.mxu0 %v5646
        %8365 = vmatprep.subr.bf16.mxu0 %v5651
        %8366 = vmatpush1.bf16.msra.mxu0 %v5650
        %8367 = vmatprep.subr.bf16.mxu0 %v5655
        %8368 = vmatpush1.bf16.msra.mxu0 %v5654
        %8369 = vmatprep.subr.bf16.mxu0 %v5659
        %8370 = vmatpush1.bf16.msra.mxu0 %v5658
        %8371 = vmatprep.subr.bf16.mxu0 %v5663
        %8372 = vmatpush1.bf16.msra.mxu0 %v5662
        %8373 = vmatprep.subr.bf16.mxu0 %v5667
        %8374 = vmatpush1.bf16.msra.mxu0 %v5666
        %8375 = vmatprep.subr.bf16.mxu0 %v5671
        %8376 = vmatpush1.bf16.msra.mxu0 %v5670
        %8377 = vmatprep.subr.bf16.mxu0 %v5675
        %8378 = vmatpush1.bf16.msra.mxu0 %v5674
        %8379 = vmatprep.subr.bf16.mxu0 %v5679
        %8380 = vmatpush1.bf16.msra.mxu0 %v5678
        %8381 = vmatprep.subr.bf16.mxu0 %v5683
        %8382 = vmatpush1.bf16.msra.mxu0 %v5682
        %8383 = vmatprep.subr.bf16.mxu0 %v5687
        %8384 = vmatpush1.bf16.msra.mxu0 %v5686
        %8385 = vmatprep.subr.bf16.mxu0 %v5691
        %8386 = vmatpush1.bf16.msra.mxu0 %v5690
        %8387 = vmatprep.subr.bf16.mxu0 %v5695
        %8388 = vmatpush1.bf16.msra.mxu0 %v5694
        %8389 = vmatprep.mubr.bf16.mxu0 %v1521
        %8390 = vmatmul.mubr.bf16.gmra.mrb[0].mxu0 %v1520
        %v8391 = vpop.f32.mrb[0].mxu0
        %v8392 = vadd.f32 %v8351, %v8391
        %v8393 = vpop.f32.mrb[0].mxu0
        %v8394 = vadd.f32 %v8353, %v8393
        %v8395 = vpop.f32.mrb[0].mxu0
        %v8396 = vpop.f32.mrb[0].mxu0
        %8397 = vdwg.mxu0
        %8398 = vmatprep.subr.bf16.mxu0 %v5699
        %8399 = vmatpush1.bf16.msra.mxu0 %v5698
        %8400 = vmatprep.subr.bf16.mxu0 %v5703
        %8401 = vmatpush1.bf16.msra.mxu0 %v5702
        %8402 = vmatprep.subr.bf16.mxu0 %v5707
        %8403 = vmatpush1.bf16.msra.mxu0 %v5706
        %8404 = vmatprep.subr.bf16.mxu0 %v5711
        %8405 = vmatpush1.bf16.msra.mxu0 %v5710
        %8406 = vmatprep.subr.bf16.mxu0 %v5715
        %8407 = vmatpush1.bf16.msra.mxu0 %v5714
        %8408 = vmatprep.subr.bf16.mxu0 %v5719
        %8409 = vmatpush1.bf16.msra.mxu0 %v5718
        %8410 = vmatprep.subr.bf16.mxu0 %v5723
        %8411 = vmatpush1.bf16.msra.mxu0 %v5722
        %8412 = vmatprep.subr.bf16.mxu0 %v5727
        %8413 = vmatpush1.bf16.msra.mxu0 %v5726
        %8414 = vmatprep.subr.bf16.mxu0 %v5731
        %8415 = vmatpush1.bf16.msra.mxu0 %v5730
        %8416 = vmatprep.subr.bf16.mxu0 %v5735
        %8417 = vmatpush1.bf16.msra.mxu0 %v5734
        %8418 = vmatprep.subr.bf16.mxu0 %v5739
        %8419 = vmatpush1.bf16.msra.mxu0 %v5738
        %8420 = vmatprep.subr.bf16.mxu0 %v5743
        %8421 = vmatpush1.bf16.msra.mxu0 %v5742
        %8422 = vmatprep.subr.bf16.mxu0 %v5747
        %8423 = vmatpush1.bf16.msra.mxu0 %v5746
        %8424 = vmatprep.subr.bf16.mxu0 %v5751
        %8425 = vmatpush1.bf16.msra.mxu0 %v5750
        %8426 = vmatprep.subr.bf16.mxu0 %v5755
        %8427 = vmatpush1.bf16.msra.mxu0 %v5754
        %8428 = vmatprep.subr.bf16.mxu0 %v5759
        %8429 = vmatpush1.bf16.msra.mxu0 %v5758
        %8430 = vmatprep.mubr.bf16.mxu0 %v1523
        %8431 = vmatmul.mubr.bf16.gmra.mrb[0].mxu0 %v1522
        %v8432 = vpop.f32.mrb[0].mxu0
        %v8433 = vadd.f32 %v8392, %v8432
        %v8434 = vpop.f32.mrb[0].mxu0
        %v8435 = vadd.f32 %v8394, %v8434
        %v8436 = vpop.f32.mrb[0].mxu0
        %v8437 = vpop.f32.mrb[0].mxu0
        %8438 = vdwg.mxu0
        %8439 = vmatprep.subr.bf16.mxu0 %v5763
        %8440 = vmatpush1.bf16.msra.mxu0 %v5762
        %8441 = vmatprep.subr.bf16.mxu0 %v5767
        %8442 = vmatpush1.bf16.msra.mxu0 %v5766
        %8443 = vmatprep.subr.bf16.mxu0 %v5771
        %8444 = vmatpush1.bf16.msra.mxu0 %v5770
        %8445 = vmatprep.subr.bf16.mxu0 %v5775
        %8446 = vmatpush1.bf16.msra.mxu0 %v5774
        %8447 = vmatprep.subr.bf16.mxu0 %v5779
        %8448 = vmatpush1.bf16.msra.mxu0 %v5778
        %8449 = vmatprep.subr.bf16.mxu0 %v5783
        %8450 = vmatpush1.bf16.msra.mxu0 %v5782
        %8451 = vmatprep.subr.bf16.mxu0 %v5787
        %8452 = vmatpush1.bf16.msra.mxu0 %v5786
        %8453 = vmatprep.subr.bf16.mxu0 %v5791
        %8454 = vmatpush1.bf16.msra.mxu0 %v5790
        %8455 = vmatprep.subr.bf16.mxu0 %v5795
        %8456 = vmatpush1.bf16.msra.mxu0 %v5794
        %8457 = vmatprep.subr.bf16.mxu0 %v5799
        %8458 = vmatpush1.bf16.msra.mxu0 %v5798
        %8459 = vmatprep.subr.bf16.mxu0 %v5803
        %8460 = vmatpush1.bf16.msra.mxu0 %v5802
        %8461 = vmatprep.subr.bf16.mxu0 %v5807
        %8462 = vmatpush1.bf16.msra.mxu0 %v5806
        %8463 = vmatprep.subr.bf16.mxu0 %v5811
        %8464 = vmatpush1.bf16.msra.mxu0 %v5810
        %8465 = vmatprep.subr.bf16.mxu0 %v5815
        %8466 = vmatpush1.bf16.msra.mxu0 %v5814
        %8467 = vmatprep.subr.bf16.mxu0 %v5819
        %8468 = vmatpush1.bf16.msra.mxu0 %v5818
        %8469 = vmatprep.subr.bf16.mxu0 %v5823
        %8470 = vmatpush1.bf16.msra.mxu0 %v5822
        %8471 = vmatprep.mubr.bf16.mxu0 %v1525
        %8472 = vmatmul.mubr.bf16.gmra.mrb[0].mxu0 %v1524
        %v8473 = vpop.f32.mrb[0].mxu0
        %v8474 = vadd.f32 %v8433, %v8473
        %v8475 = vpop.f32.mrb[0].mxu0
        %v8476 = vadd.f32 %v8435, %v8475
        %v8477 = vpop.f32.mrb[0].mxu0
        %v8478 = vpop.f32.mrb[0].mxu0
        %8479 = vdwg.mxu0
        %8480 = vmatprep.subr.bf16.mxu0 %v5827
        %8481 = vmatpush1.bf16.msra.mxu0 %v5826
        %8482 = vmatprep.subr.bf16.mxu0 %v5831
        %8483 = vmatpush1.bf16.msra.mxu0 %v5830
        %8484 = vmatprep.subr.bf16.mxu0 %v5835
        %8485 = vmatpush1.bf16.msra.mxu0 %v5834
        %8486 = vmatprep.subr.bf16.mxu0 %v5839
        %8487 = vmatpush1.bf16.msra.mxu0 %v5838
        %8488 = vmatprep.subr.bf16.mxu0 %v5843
        %8489 = vmatpush1.bf16.msra.mxu0 %v5842
        %8490 = vmatprep.subr.bf16.mxu0 %v5847
        %8491 = vmatpush1.bf16.msra.mxu0 %v5846
        %8492 = vmatprep.subr.bf16.mxu0 %v5851
        %8493 = vmatpush1.bf16.msra.mxu0 %v5850
        %8494 = vmatprep.subr.bf16.mxu0 %v5855
        %8495 = vmatpush1.bf16.msra.mxu0 %v5854
        %8496 = vmatprep.subr.bf16.mxu0 %v5859
        %8497 = vmatpush1.bf16.msra.mxu0 %v5858
        %8498 = vmatprep.subr.bf16.mxu0 %v5863
        %8499 = vmatpush1.bf16.msra.mxu0 %v5862
        %8500 = vmatprep.subr.bf16.mxu0 %v5867
        %8501 = vmatpush1.bf16.msra.mxu0 %v5866
        %8502 = vmatprep.subr.bf16.mxu0 %v5871
        %8503 = vmatpush1.bf16.msra.mxu0 %v5870
        %8504 = vmatprep.subr.bf16.mxu0 %v5875
        %8505 = vmatpush1.bf16.msra.mxu0 %v5874
        %8506 = vmatprep.subr.bf16.mxu0 %v5879
        %8507 = vmatpush1.bf16.msra.mxu0 %v5878
        %8508 = vmatprep.subr.bf16.mxu0 %v5883
        %8509 = vmatpush1.bf16.msra.mxu0 %v5882
        %8510 = vmatprep.subr.bf16.mxu0 %v5887
        %8511 = vmatpush1.bf16.msra.mxu0 %v5886
        %8512 = vmatprep.mubr.bf16.mxu0 %v1527
        %8513 = vmatmul.mubr.bf16.gmra.mrb[0].mxu0 %v1526
        %v8514 = vpop.f32.mrb[0].mxu0
        %v8515 = vadd.f32 %v8474, %v8514
        %v8516 = vpop.f32.mrb[0].mxu0
        %v8517 = vadd.f32 %v8476, %v8516
        %v8518 = vpop.f32.mrb[0].mxu0
        %v8519 = vpop.f32.mrb[0].mxu0
        %8520 = vdwg.mxu0
        %8521 = vmatprep.subr.bf16.mxu0 %v5891
        %8522 = vmatpush1.bf16.msra.mxu0 %v5890
        %8523 = vmatprep.subr.bf16.mxu0 %v5895
        %8524 = vmatpush1.bf16.msra.mxu0 %v5894
        %8525 = vmatprep.subr.bf16.mxu0 %v5899
        %8526 = vmatpush1.bf16.msra.mxu0 %v5898
        %8527 = vmatprep.subr.bf16.mxu0 %v5903
        %8528 = vmatpush1.bf16.msra.mxu0 %v5902
        %8529 = vmatprep.subr.bf16.mxu0 %v5907
        %8530 = vmatpush1.bf16.msra.mxu0 %v5906
        %8531 = vmatprep.subr.bf16.mxu0 %v5911
        %8532 = vmatpush1.bf16.msra.mxu0 %v5910
        %8533 = vmatprep.subr.bf16.mxu0 %v5915
        %8534 = vmatpush1.bf16.msra.mxu0 %v5914
        %8535 = vmatprep.subr.bf16.mxu0 %v5919
        %8536 = vmatpush1.bf16.msra.mxu0 %v5918
        %8537 = vmatprep.subr.bf16.mxu0 %v5923
        %8538 = vmatpush1.bf16.msra.mxu0 %v5922
        %8539 = vmatprep.subr.bf16.mxu0 %v5927
        %8540 = vmatpush1.bf16.msra.mxu0 %v5926
        %8541 = vmatprep.subr.bf16.mxu0 %v5931
        %8542 = vmatpush1.bf16.msra.mxu0 %v5930
        %8543 = vmatprep.subr.bf16.mxu0 %v5935
        %8544 = vmatpush1.bf16.msra.mxu0 %v5934
        %8545 = vmatprep.subr.bf16.mxu0 %v5939
        %8546 = vmatpush1.bf16.msra.mxu0 %v5938
        %8547 = vmatprep.subr.bf16.mxu0 %v5943
        %8548 = vmatpush1.bf16.msra.mxu0 %v5942
        %8549 = vmatprep.subr.bf16.mxu0 %v5947
        %8550 = vmatpush1.bf16.msra.mxu0 %v5946
        %8551 = vmatprep.subr.bf16.mxu0 %v5951
        %8552 = vmatpush1.bf16.msra.mxu0 %v5950
        %8553 = vmatprep.mubr.bf16.mxu0 %v1529
        %8554 = vmatmul.mubr.bf16.gmra.mrb[0].mxu0 %v1528
        %v8555 = vpop.f32.mrb[0].mxu0
        %v8556 = vadd.f32 %v8515, %v8555
        %v8557 = vpop.f32.mrb[0].mxu0
        %v8558 = vadd.f32 %v8517, %v8557
        %v8559 = vpop.f32.mrb[0].mxu0
        %v8560 = vpop.f32.mrb[0].mxu0
        %8561 = vdwg.mxu0
        %8562 = vmatprep.subr.bf16.mxu0 %v5955
        %8563 = vmatpush1.bf16.msra.mxu0 %v5954
        %8564 = vmatprep.subr.bf16.mxu0 %v5959
        %8565 = vmatpush1.bf16.msra.mxu0 %v5958
        %8566 = vmatprep.subr.bf16.mxu0 %v5963
        %8567 = vmatpush1.bf16.msra.mxu0 %v5962
        %8568 = vmatprep.subr.bf16.mxu0 %v5967
        %8569 = vmatpush1.bf16.msra.mxu0 %v5966
        %8570 = vmatprep.subr.bf16.mxu0 %v5971
        %8571 = vmatpush1.bf16.msra.mxu0 %v5970
        %8572 = vmatprep.subr.bf16.mxu0 %v5975
        %8573 = vmatpush1.bf16.msra.mxu0 %v5974
        %8574 = vmatprep.subr.bf16.mxu0 %v5979
        %8575 = vmatpush1.bf16.msra.mxu0 %v5978
        %8576 = vmatprep.subr.bf16.mxu0 %v5983
        %8577 = vmatpush1.bf16.msra.mxu0 %v5982
        %8578 = vmatprep.subr.bf16.mxu0 %v5987
        %8579 = vmatpush1.bf16.msra.mxu0 %v5986
        %8580 = vmatprep.subr.bf16.mxu0 %v5991
        %8581 = vmatpush1.bf16.msra.mxu0 %v5990
        %8582 = vmatprep.subr.bf16.mxu0 %v5995
        %8583 = vmatpush1.bf16.msra.mxu0 %v5994
        %8584 = vmatprep.subr.bf16.mxu0 %v5999
        %8585 = vmatpush1.bf16.msra.mxu0 %v5998
        %8586 = vmatprep.subr.bf16.mxu0 %v6003
        %8587 = vmatpush1.bf16.msra.mxu0 %v6002
        %8588 = vmatprep.subr.bf16.mxu0 %v6007
        %8589 = vmatpush1.bf16.msra.mxu0 %v6006
        %8590 = vmatprep.subr.bf16.mxu0 %v6011
        %8591 = vmatpush1.bf16.msra.mxu0 %v6010
        %8592 = vmatprep.subr.bf16.mxu0 %v6015
        %8593 = vmatpush1.bf16.msra.mxu0 %v6014
        %8594 = vmatprep.mubr.bf16.mxu0 %v1531
        %8595 = vmatmul.mubr.bf16.gmra.mrb[0].mxu0 %v1530
        %v8596 = vpop.f32.mrb[0].mxu0
        %v8597 = vadd.f32 %v8556, %v8596
        %v8598 = vpop.f32.mrb[0].mxu0
        %v8599 = vadd.f32 %v8558, %v8598
        %v8600 = vpop.f32.mrb[0].mxu0
        %v8601 = vpop.f32.mrb[0].mxu0
        %8602 = vdwg.mxu0
        %8603 = vmatprep.subr.bf16.mxu0 %v6019
        %8604 = vmatpush1.bf16.msra.mxu0 %v6018
        %8605 = vmatprep.subr.bf16.mxu0 %v6023
        %8606 = vmatpush1.bf16.msra.mxu0 %v6022
        %8607 = vmatprep.subr.bf16.mxu0 %v6027
        %8608 = vmatpush1.bf16.msra.mxu0 %v6026
        %8609 = vmatprep.subr.bf16.mxu0 %v6031
        %8610 = vmatpush1.bf16.msra.mxu0 %v6030
        %8611 = vmatprep.subr.bf16.mxu0 %v6035
        %8612 = vmatpush1.bf16.msra.mxu0 %v6034
        %8613 = vmatprep.subr.bf16.mxu0 %v6039
        %8614 = vmatpush1.bf16.msra.mxu0 %v6038
        %8615 = vmatprep.subr.bf16.mxu0 %v6043
        %8616 = vmatpush1.bf16.msra.mxu0 %v6042
        %8617 = vmatprep.subr.bf16.mxu0 %v6047
        %8618 = vmatpush1.bf16.msra.mxu0 %v6046
        %8619 = vmatprep.subr.bf16.mxu0 0
        %8620 = vmatpush1.bf16.msra.mxu0 0
        %8621 = vmatprep.subr.bf16.mxu0 0
        %8622 = vmatpush1.bf16.msra.mxu0 0
        %8623 = vmatprep.subr.bf16.mxu0 0
        %8624 = vmatpush1.bf16.msra.mxu0 0
        %8625 = vmatprep.subr.bf16.mxu0 0
        %8626 = vmatpush1.bf16.msra.mxu0 0
        %8627 = vmatprep.subr.bf16.mxu0 0
        %8628 = vmatpush1.bf16.msra.mxu0 0
        %8629 = vmatprep.subr.bf16.mxu0 0
        %8630 = vmatpush1.bf16.msra.mxu0 0
        %8631 = vmatprep.subr.bf16.mxu0 0
        %8632 = vmatpush1.bf16.msra.mxu0 0
        %8633 = vmatprep.subr.bf16.mxu0 0
        %8634 = vmatpush1.bf16.msra.mxu0 0
        %8635 = vmatprep.mubr.bf16.mxu0 0
        %8636 = vmatmul.mubr.bf16.gmra.mrb[0].mxu0 %v1532
        %v8637 = vpop.f32.mrb[0].mxu0
        %v8638 = vadd.f32 %v8597, %v8637
        %v8639 = vpop.f32.mrb[0].mxu0
        %v8640 = vadd.f32 %v8599, %v8639
        %v8641 = vpop.f32.mrb[0].mxu0
        %v8642 = vpop.f32.mrb[0].mxu0
        %8643 = vdwg.mxu0
        %v8644 = vadd.f32 %v303, %v7900
        %v8645 = vadd.f32 %v304, %v7902
        %v8646 = vadd.f32 %v305, %v8638
        %v8647 = vadd.f32 %v306, %v8640
        %8648 = vst [vmem:[#allocation2] sm:$0xff] %v8644
        %8649 = vst [vmem:[#allocation2 + $0x8] sm:$0xff] %v8645
        %8650 = vst [vmem:[#allocation2 + $0x10] sm:$0xff] %v8646
        %8651 = vst [vmem:[#allocation2 + $0x18] sm:$0xff] %v8647
        %p8652 = scmp.eq.s32.totalorder %s21, 1
        // Predicated region
        $region61: #{discriminator_forward.1} parent=39 // pred_check
          %p8653 = pneg %p8652
        $region62: #{discriminator_forward.1} parent=39 // pred_check_branch
          %8655 = sbr.rel (%p8653) target = $region64
        $region63: #{discriminator_forward.1} parent=39 // pred_region
          %v8656 = vld [vmem:[#allocation2] sm:$0xff]
          %v8657 = vld [vmem:[#allocation2 + $0x8] sm:$0xff]
          %v8658 = vld [vmem:[#allocation2 + $0x10] sm:$0xff]
          %v8659 = vld [vmem:[#allocation2 + $0x18] sm:$0xff]
          %v8660 = vld [vmem:[#allocation5] sm:$0xf]
          %v8662 = vlaneseq
          %v8663 = vshrl.u32 %v8662, 7
          %v8664 = vsub.s32 0, %v8663
          %v8665 = vrot.slane %v8660, %v8664
          %v8666 = vlaneseq
          %v8667 = vshrl.u32 %v8666, 7
          %v8668 = vsub.s32 1, %v8667
          %v8669 = vrot.slane %v8660, %v8668
          %v8670 = vlaneseq
          %v8671 = vshrl.u32 %v8670, 7
          %v8672 = vsub.s32 2, %v8671
          %v8673 = vrot.slane %v8660, %v8672
          %v8674 = vlaneseq
          %v8675 = vshrl.u32 %v8674, 7
          %v8676 = vsub.s32 3, %v8675
          %v8677 = vrot.slane %v8660, %v8676
          %v8682 = vadd.f32 %v8656, %v8665
          %v8683 = vadd.f32 %v8657, %v8669
          %v8684 = vadd.f32 %v8658, %v8673
          %v8685 = vadd.f32 %v8659, %v8677
          %vm8686 = vcmp.gt.f32.partialorder %v8682, 0.0
          %vm8687 = vcmp.gt.f32.partialorder %v8683, 0.0
          %vm8688 = vcmp.gt.f32.partialorder %v8684, 0.0
          %vm8689 = vcmp.gt.f32.partialorder %v8685, 0.0
          %v8690 = vmul.f32 %v8682, 0.2
          %v8691 = vmul.f32 %v8683, 0.2
          %v8692 = vmul.f32 %v8684, 0.2
          %v8693 = vmul.f32 %v8685, 0.2
          %v8694 = vsel %vm8686, %v8682, %v8690
          %v8695 = vsel %vm8687, %v8683, %v8691
          %v8696 = vsel %vm8688, %v8684, %v8692
          %v8697 = vsel %vm8689, %v8685, %v8693
          %v8698 = vld [vmem:[#allocation7] sm:$0xff]
          %v8699 = vld [vmem:[#allocation7 + $0x8] sm:$0xff]
          %v8700 = vld [vmem:[#allocation7 + $0x10] sm:$0xff]
          %v8701 = vld [vmem:[#allocation7 + $0x18] sm:$0xff]
          %v8702 = vld [vmem:[#allocation7 + $0x20] sm:$0xff]
          %v8703 = vld [vmem:[#allocation7 + $0x28] sm:$0xff]
          %v8704 = vld [vmem:[#allocation7 + $0x30] sm:$0xff]
          %v8705 = vld [vmem:[#allocation7 + $0x38] sm:$0xff]
          %v8706 = vld [vmem:[#allocation7 + $0x40] sm:$0xff]
          %v8707 = vld [vmem:[#allocation7 + $0x48] sm:$0xff]
          %v8708 = vld [vmem:[#allocation7 + $0x50] sm:$0xff]
          %v8709 = vld [vmem:[#allocation7 + $0x58] sm:$0xff]
          %v8710 = vld [vmem:[#allocation7 + $0x60] sm:$0xff]
          %v8711 = vld [vmem:[#allocation7 + $0x68] sm:$0xff]
          %v8712 = vld [vmem:[#allocation7 + $0x70] sm:$0xff]
          %v8713 = vld [vmem:[#allocation7 + $0x78] sm:$0xff]
          %v8714 = vld [vmem:[#allocation7 + $0x80] sm:$0xff]
          %v8715 = vld [vmem:[#allocation7 + $0x88] sm:$0xff]
          %v8716 = vld [vmem:[#allocation7 + $0x90] sm:$0xff]
          %v8717 = vld [vmem:[#allocation7 + $0x98] sm:$0xff]
          %v8718 = vld [vmem:[#allocation7 + $0xa0] sm:$0xff]
          %v8719 = vld [vmem:[#allocation7 + $0xa8] sm:$0xff]
          %v8720 = vld [vmem:[#allocation7 + $0xb0] sm:$0xff]
          %v8721 = vld [vmem:[#allocation7 + $0xb8] sm:$0xff]
          %v8722 = vld [vmem:[#allocation7 + $0xc0] sm:$0xff]
          %v8723 = vld [vmem:[#allocation7 + $0xc8] sm:$0xff]
          %v8724 = vld [vmem:[#allocation7 + $0xd0] sm:$0xff]
          %v8725 = vld [vmem:[#allocation7 + $0xd8] sm:$0xff]
          %v8726 = vld [vmem:[#allocation7 + $0xe0] sm:$0xff]
          %v8727 = vld [vmem:[#allocation7 + $0xe8] sm:$0xff]
          %v8728 = vld [vmem:[#allocation7 + $0xf0] sm:$0xff]
          %v8729 = vld [vmem:[#allocation7 + $0xf8] sm:$0xff]
          %v8730 = vld [vmem:[#allocation7 + $0x100] sm:$0xff]
          %v8731 = vld [vmem:[#allocation7 + $0x108] sm:$0xff]
          %v8732 = vld [vmem:[#allocation7 + $0x110] sm:$0xff]
          %v8733 = vld [vmem:[#allocation7 + $0x118] sm:$0xff]
          %v8734 = vld [vmem:[#allocation7 + $0x120] sm:$0xff]
          %v8735 = vld [vmem:[#allocation7 + $0x128] sm:$0xff]
          %v8736 = vld [vmem:[#allocation7 + $0x130] sm:$0xff]
          %v8737 = vld [vmem:[#allocation7 + $0x138] sm:$0xff]
          %v8738 = vld [vmem:[#allocation7 + $0x140] sm:$0xff]
          %v8739 = vld [vmem:[#allocation7 + $0x148] sm:$0xff]
          %v8740 = vld [vmem:[#allocation7 + $0x150] sm:$0xff]
          %v8741 = vld [vmem:[#allocation7 + $0x158] sm:$0xff]
          %v8742 = vld [vmem:[#allocation7 + $0x160] sm:$0xff]
          %v8743 = vld [vmem:[#allocation7 + $0x168] sm:$0xff]
          %v8744 = vld [vmem:[#allocation7 + $0x170] sm:$0xff]
          %v8745 = vld [vmem:[#allocation7 + $0x178] sm:$0xff]
          %v8746 = vld [vmem:[#allocation7 + $0x180] sm:$0xff]
          %v8747 = vld [vmem:[#allocation7 + $0x188] sm:$0xff]
          %v8748 = vld [vmem:[#allocation7 + $0x190] sm:$0xff]
          %v8749 = vld [vmem:[#allocation7 + $0x198] sm:$0xff]
          %v8750 = vld [vmem:[#allocation7 + $0x1a0] sm:$0xff]
          %v8751 = vld [vmem:[#allocation7 + $0x1a8] sm:$0xff]
          %v8752 = vld [vmem:[#allocation7 + $0x1b0] sm:$0xff]
          %v8753 = vld [vmem:[#allocation7 + $0x1b8] sm:$0xff]
          %v8754 = vld [vmem:[#allocation7 + $0x1c0] sm:$0xff]
          %v8755 = vld [vmem:[#allocation7 + $0x1c8] sm:$0xff]
          %v8756 = vld [vmem:[#allocation7 + $0x1d0] sm:$0xff]
          %v8757 = vld [vmem:[#allocation7 + $0x1d8] sm:$0xff]
          %v8758 = vld [vmem:[#allocation7 + $0x1e0] sm:$0xff]
          %v8759 = vld [vmem:[#allocation7 + $0x1e8] sm:$0xff]
          %v8760 = vld [vmem:[#allocation7 + $0x1f0] sm:$0xff]
          %v8761 = vld [vmem:[#allocation7 + $0x1f8] sm:$0xff]
          %v8762 = vld [vmem:[#allocation8] sm:$0x1]
          %v8764 = vlaneseq
          %v8765 = vshrl.u32 %v8764, 7
          %v8766 = vsub.s32 0, %v8765
          %v8767 = vrot.slane %v8762, %v8766
          %8769 = vmatprep.subr.mxu0 0.0
          %8770 = vmatpush1.msra.mxu0 %v8698
          %8771 = vmatprep.subr.mxu0 0.0
          %8772 = vmatpush1.msra.mxu0 %v8699
          %8773 = vmatprep.subr.mxu0 0.0
          %8774 = vmatpush1.msra.mxu0 %v8700
          %8775 = vmatprep.subr.mxu0 0.0
          %8776 = vmatpush1.msra.mxu0 %v8701
          %8777 = vmatprep.subr.mxu0 0.0
          %8778 = vmatpush1.msra.mxu0 %v8702
          %8779 = vmatprep.subr.mxu0 0.0
          %8780 = vmatpush1.msra.mxu0 %v8703
          %8781 = vmatprep.subr.mxu0 0.0
          %8782 = vmatpush1.msra.mxu0 %v8704
          %8783 = vmatprep.subr.mxu0 0.0
          %8784 = vmatpush1.msra.mxu0 %v8705
          %8785 = vmatprep.subr.mxu0 0.0
          %8786 = vmatpush1.msra.mxu0 %v8706
          %8787 = vmatprep.subr.mxu0 0.0
          %8788 = vmatpush1.msra.mxu0 %v8707
          %8789 = vmatprep.subr.mxu0 0.0
          %8790 = vmatpush1.msra.mxu0 %v8708
          %8791 = vmatprep.subr.mxu0 0.0
          %8792 = vmatpush1.msra.mxu0 %v8709
          %8793 = vmatprep.subr.mxu0 0.0
          %8794 = vmatpush1.msra.mxu0 %v8710
          %8795 = vmatprep.subr.mxu0 0.0
          %8796 = vmatpush1.msra.mxu0 %v8711
          %8797 = vmatprep.subr.mxu0 0.0
          %8798 = vmatpush1.msra.mxu0 %v8712
          %8799 = vmatprep.subr.mxu0 0.0
          %8800 = vmatpush1.msra.mxu0 %v8713
          %8801 = vmatprep.subr.mxu0 0.0
          %8802 = vmatpush1.msra.mxu0 %v8714
          %8803 = vmatprep.subr.mxu0 0.0
          %8804 = vmatpush1.msra.mxu0 %v8715
          %8805 = vmatprep.subr.mxu0 0.0
          %8806 = vmatpush1.msra.mxu0 %v8716
          %8807 = vmatprep.subr.mxu0 0.0
          %8808 = vmatpush1.msra.mxu0 %v8717
          %8809 = vmatprep.subr.mxu0 0.0
          %8810 = vmatpush1.msra.mxu0 %v8718
          %8811 = vmatprep.subr.mxu0 0.0
          %8812 = vmatpush1.msra.mxu0 %v8719
          %8813 = vmatprep.subr.mxu0 0.0
          %8814 = vmatpush1.msra.mxu0 %v8720
          %8815 = vmatprep.subr.mxu0 0.0
          %8816 = vmatpush1.msra.mxu0 %v8721
          %8817 = vmatprep.subr.mxu0 0.0
          %8818 = vmatpush1.msra.mxu0 %v8722
          %8819 = vmatprep.subr.mxu0 0.0
          %8820 = vmatpush1.msra.mxu0 %v8723
          %8821 = vmatprep.subr.mxu0 0.0
          %8822 = vmatpush1.msra.mxu0 %v8724
          %8823 = vmatprep.subr.mxu0 0.0
          %8824 = vmatpush1.msra.mxu0 %v8725
          %8825 = vmatprep.subr.mxu0 0.0
          %8826 = vmatpush1.msra.mxu0 %v8726
          %8827 = vmatprep.subr.mxu0 0.0
          %8828 = vmatpush1.msra.mxu0 %v8727
          %8829 = vmatprep.subr.mxu0 0.0
          %8830 = vmatpush1.msra.mxu0 %v8728
          %8831 = vmatprep.subr.mxu0 0.0
          %8832 = vmatpush1.msra.mxu0 %v8729
          %8833 = vmatprep.mubr.f32.mxu0 %v8695
          %8834 = vmatmul.mubr.f32.gmra.mrb[0].mxu0 %v8694
          %v8835 = vpop.f32.mrb[0].mxu0
          %v8836 = vadd.f32 %v8767, %v8835
          %v8837 = vpop.f32.mrb[0].mxu0
          %8838 = vdwg.mxu0
          %8839 = vmatprep.subr.mxu0 0.0
          %8840 = vmatpush1.msra.mxu0 %v8730
          %8841 = vmatprep.subr.mxu0 0.0
          %8842 = vmatpush1.msra.mxu0 %v8731
          %8843 = vmatprep.subr.mxu0 0.0
          %8844 = vmatpush1.msra.mxu0 %v8732
          %8845 = vmatprep.subr.mxu0 0.0
          %8846 = vmatpush1.msra.mxu0 %v8733
          %8847 = vmatprep.subr.mxu0 0.0
          %8848 = vmatpush1.msra.mxu0 %v8734
          %8849 = vmatprep.subr.mxu0 0.0
          %8850 = vmatpush1.msra.mxu0 %v8735
          %8851 = vmatprep.subr.mxu0 0.0
          %8852 = vmatpush1.msra.mxu0 %v8736
          %8853 = vmatprep.subr.mxu0 0.0
          %8854 = vmatpush1.msra.mxu0 %v8737
          %8855 = vmatprep.subr.mxu0 0.0
          %8856 = vmatpush1.msra.mxu0 %v8738
          %8857 = vmatprep.subr.mxu0 0.0
          %8858 = vmatpush1.msra.mxu0 %v8739
          %8859 = vmatprep.subr.mxu0 0.0
          %8860 = vmatpush1.msra.mxu0 %v8740
          %8861 = vmatprep.subr.mxu0 0.0
          %8862 = vmatpush1.msra.mxu0 %v8741
          %8863 = vmatprep.subr.mxu0 0.0
          %8864 = vmatpush1.msra.mxu0 %v8742
          %8865 = vmatprep.subr.mxu0 0.0
          %8866 = vmatpush1.msra.mxu0 %v8743
          %8867 = vmatprep.subr.mxu0 0.0
          %8868 = vmatpush1.msra.mxu0 %v8744
          %8869 = vmatprep.subr.mxu0 0.0
          %8870 = vmatpush1.msra.mxu0 %v8745
          %8871 = vmatprep.subr.mxu0 0.0
          %8872 = vmatpush1.msra.mxu0 %v8746
          %8873 = vmatprep.subr.mxu0 0.0
          %8874 = vmatpush1.msra.mxu0 %v8747
          %8875 = vmatprep.subr.mxu0 0.0
          %8876 = vmatpush1.msra.mxu0 %v8748
          %8877 = vmatprep.subr.mxu0 0.0
          %8878 = vmatpush1.msra.mxu0 %v8749
          %8879 = vmatprep.subr.mxu0 0.0
          %8880 = vmatpush1.msra.mxu0 %v8750
          %8881 = vmatprep.subr.mxu0 0.0
          %8882 = vmatpush1.msra.mxu0 %v8751
          %8883 = vmatprep.subr.mxu0 0.0
          %8884 = vmatpush1.msra.mxu0 %v8752
          %8885 = vmatprep.subr.mxu0 0.0
          %8886 = vmatpush1.msra.mxu0 %v8753
          %8887 = vmatprep.subr.mxu0 0.0
          %8888 = vmatpush1.msra.mxu0 %v8754
          %8889 = vmatprep.subr.mxu0 0.0
          %8890 = vmatpush1.msra.mxu0 %v8755
          %8891 = vmatprep.subr.mxu0 0.0
          %8892 = vmatpush1.msra.mxu0 %v8756
          %8893 = vmatprep.subr.mxu0 0.0
          %8894 = vmatpush1.msra.mxu0 %v8757
          %8895 = vmatprep.subr.mxu0 0.0
          %8896 = vmatpush1.msra.mxu0 %v8758
          %8897 = vmatprep.subr.mxu0 0.0
          %8898 = vmatpush1.msra.mxu0 %v8759
          %8899 = vmatprep.subr.mxu0 0.0
          %8900 = vmatpush1.msra.mxu0 %v8760
          %8901 = vmatprep.subr.mxu0 0.0
          %8902 = vmatpush1.msra.mxu0 %v8761
          %8903 = vmatprep.mubr.f32.mxu0 %v8697
          %8904 = vmatmul.mubr.f32.gmra.mrb[0].mxu0 %v8696
          %v8905 = vpop.f32.mrb[0].mxu0
          %v8906 = vadd.f32 %v8836, %v8905
          %v8907 = vpop.f32.mrb[0].mxu0
          %8908 = vdwg.mxu0
          %v8909 = vxor.u32 %v8906, 2147483648
          %v8910 = vmul.f32 %v8909, 1.442695
          %v8911 = vpow.pop %v8910
          %v8912 = vadd.f32 %v8911, 1.0
          %v8913 = vrcp.pop %v8912
          %v8914 = vmul.f32 1.0, %v8913
          %8915 = vst [vmem:[%s5] sm:$0xff] %v8914
        $region64: #{discriminator_forward.1} parent=39 // pred_fallthru
          _
        // Predicated region
        $region65: #{discriminator_forward.1} parent=39 // pred_check
          %p8916 = pneg %p149
        $region66: #{discriminator_forward.1} parent=39 // pred_check_branch
          %8918 = sbr.rel (%p8916) target = $region68
        $region67: #{discriminator_forward.1} parent=39 // pred_region
          _
        $region68: #{discriminator_forward.1} parent=39 // pred_fallthru
          _
        // Predicated region
        $region69: #{discriminator_forward.1} parent=39 // pred_check
          %p8919 = pneg %p149
        $region70: #{discriminator_forward.1} parent=39 // pred_check_branch
          %8921 = sbr.rel (%p8919) target = $region72
        $region71: #{discriminator_forward.1} parent=39 // pred_region
          _
        $region72: #{discriminator_forward.1} parent=39 // pred_fallthru
          _
      $region40: #{discriminator_forward.1} parent=5 // pred_fallthru
        _
      %p8922 = scmp.le.s32.totalorder 2, %s16
      // Predicated region
      $region73: #{discriminator_forward.1} parent=5 // pred_check
        %p8923 = pneg %p8922
      $region74: #{discriminator_forward.1} parent=5 // pred_check_branch
        %8925 = sbr.rel (%p8923) target = $region76
      $region75: #{discriminator_forward.1} parent=5 // pred_region
        %s8926 = ssub.s32 %s16, 2
      $region76: #{discriminator_forward.1} parent=5 // pred_fallthru
        _
    $region6: #{discriminator_forward.1} parent=1 // loop_footer
      %s20 = sadd.s32 1, %s16
    $region7: #{discriminator_forward.1} parent=1 // loop_footer_branch
      %15 = sbr.rel target = $region3
    $region8: #{discriminator_forward.1} parent=1 // loop_exit
      _
    %8927 = vsyncpa [#allocation4], 1
    %s8928 = scalar_lea.sflag [#allocation4], 1
    %8929 = vsyncpa %s8928, 1
    %8930 = vsyncpa [#allocation6], 1
    %8931 = vsyncpa [#allocation9], 1

</llo_original>
